<compile_context>
chip_gen: v7x
topology: tpu7x:2x2x1
jax: 0.10.0
libtpu: 0.0.40
codegen_flags: <defaults>
</compile_context>

<pallas_src>
import functools

import jax
import jax.numpy as jnp
from jax.experimental import pallas as pl
from jax.experimental.pallas import tpu as pltpu

KERNEL_SIZE = 7
PAD = 3
EPS_LN = 1e-6
EPS_GRN = 1e-6
HALO = 8          # zero-pad rows on each side of the x slab (>= PAD, multiple of 8)


def fused_convnext_kernel(x_ref, dw_w_ref, dw_b_ref, ln_g_ref, ln_b_ref,
                          w1_ref, b1_ref, grn_g_ref, grn_b_ref, w2_ref, b2_ref,
                          out_ref, x_slab, h_slab, gx2_ref, *, t_tile):
    p = pl.program_id(1)   # phase: 0=stage x, 1=dwconv/LN/pw1/gelu, 2=GRN/pw2/residual
    t = pl.program_id(2)   # time tile
    C = x_ref.shape[1]

    # ---------------- phase 0: stage x tiles (transposed to (time, C)) into VMEM ---------------
    @pl.when(jnp.logical_and(p == 0, t == 0))
    def _zero_pads():
        zpad = jnp.zeros((HALO, C), jnp.float32)
        x_slab[pl.ds(0, HALO), :] = zpad
        x_slab[pl.ds(x_slab.shape[0] - HALO, HALO), :] = zpad

    @pl.when(p == 0)
    def _stage_x():
        row0 = pl.multiple_of(HALO + t * t_tile, 8)
        x_slab[pl.ds(row0, t_tile), :] = jnp.transpose(x_ref[0], (1, 0))

    # ---------------- phase 1: dwconv + LayerNorm + pwconv1 + GELU -> h slab, gx2 ---------------
    @pl.when(jnp.logical_and(p == 1, t == 0))
    def _zero_gx2():
        gx2_ref[...] = jnp.zeros_like(gx2_ref)

    @pl.when(p == 1)
    def _compute_h():
        start = pl.multiple_of(t * t_tile, 8)
        # padded-slab rows covering global rows [t*t_tile - HALO, (t+1)*t_tile + HALO)
        ext = x_slab[pl.ds(start, t_tile + 2 * HALO), :]

        # depthwise Conv1d(dim, dim, kernel_size=7, padding=3, groups=dim)
        y = jnp.zeros((t_tile, C), jnp.float32) + dw_b_ref[...]
        for k in range(KERNEL_SIZE):
            lo = HALO - PAD + k                      # static offset into ext
            y = y + ext[lo:lo + t_tile, :] * dw_w_ref[k:k + 1, :]

        # LayerNorm over channels (eps=1e-6), two-pass variance for stability
        mean = jnp.mean(y, axis=-1, keepdims=True)
        yc = y - mean
        var = jnp.mean(yc * yc, axis=-1, keepdims=True)
        y = yc * jax.lax.rsqrt(var + EPS_LN) * ln_g_ref[...] + ln_b_ref[...]

        # pwconv1 (Linear dim -> intermediate): bf16 MXU operands, f32 accumulation
        h = jnp.dot(y.astype(jnp.bfloat16), w1_ref[...],
                    preferred_element_type=jnp.float32) + b1_ref[...]
        # tanh GELU -> EUP (exact erf is a long VALU polynomial); delta << tolerance
        h = jax.nn.gelu(h, approximate=True)

        gx2_ref[...] += jnp.sum(h * h, axis=0, keepdims=True)
        h_slab[pl.ds(start, t_tile), :] = h

    # ---------------- phase 2: GRN + pwconv2 + residual, store transposed to NCT ----------------
    @pl.when(p == 2)
    def _finalize():
        start = pl.multiple_of(t * t_tile, 8)
        h = h_slab[pl.ds(start, t_tile), :]

        gx = jnp.sqrt(gx2_ref[...])                               # (1, I): ||h||_2 over time
        nx = gx / (jnp.mean(gx, axis=-1, keepdims=True) + EPS_GRN)
        h = grn_g_ref[...] * (h * nx) + grn_b_ref[...] + h

        # pwconv2 (Linear intermediate -> dim): bf16 MXU operands, f32 accumulation
        z = jnp.dot(h.astype(jnp.bfloat16), w2_ref[...],
                    preferred_element_type=jnp.float32) + b2_ref[...]

        res = x_slab[pl.ds(pl.multiple_of(HALO + t * t_tile, 8), t_tile), :]
        out_ref[0] = jnp.transpose(res + z, (1, 0)).astype(out_ref.dtype)


@functools.partial(jax.jit, static_argnames=("t_tile",))
def convnext_block(x_nct, params, *, t_tile=512):
    """x_nct: (B, C, T) float32 -> (B, C, T) float32 (PyTorch Conv1d layout)."""
    B, C, T = x_nct.shape
    I = params["w1"].shape[1]
    t_tile = min(t_tile, T)
    assert T % t_tile == 0 and t_tile % 8 == 0
    n_t = T // t_tile

    # Per-batch VMEM slabs (f32): zero-padded x (conv input + residual) and intermediate h.
    slab_bytes = (T + 2 * HALO) * C * 4 + T * I * 4
    assert slab_bytes < 32 * 1024 * 1024, "x/h slabs exceed VMEM budget; chunk T (see TODO)"

    w1_b = params["w1"].astype(jnp.bfloat16)
    w2_b = params["w2"].astype(jnp.bfloat16)

    # x is DMA'd only during phase 0 (index parks afterwards); output block only advances
    # during phase 2 (nothing is written back during phases 0/1).
    x_map = lambda b, p, t: (b, 0, jnp.where(p == 0, t, n_t - 1))
    out_map = lambda b, p, t: (b, 0, jnp.where(p == 2, t, 0))
    const2 = lambda b, p, t: (0, 0)

    kernel = functools.partial(fused_convnext_kernel, t_tile=t_tile)

    return pl.pallas_call(
        kernel,
        out_shape=jax.ShapeDtypeStruct((B, C, T), jnp.float32),
        grid=(B, 3, n_t),
        in_specs=[
            pl.BlockSpec((1, C, t_tile), x_map),       # x, native NCT layout (f32)
            pl.BlockSpec((KERNEL_SIZE, C), const2),    # depthwise weight (7, C)
            pl.BlockSpec((1, C), const2),              # depthwise bias
            pl.BlockSpec((1, C), const2),              # LayerNorm gamma
            pl.BlockSpec((1, C), const2),              # LayerNorm beta
            pl.BlockSpec((C, I), const2),              # pwconv1 weight (bf16)
            pl.BlockSpec((1, I), const2),              # pwconv1 bias
            pl.BlockSpec((1, I), const2),              # GRN gamma
            pl.BlockSpec((1, I), const2),              # GRN beta
            pl.BlockSpec((I, C), const2),              # pwconv2 weight (bf16)
            pl.BlockSpec((1, C), const2),              # pwconv2 bias
        ],
        out_specs=pl.BlockSpec((1, C, t_tile), out_map),
        scratch_shapes=[
            pltpu.VMEM((T + 2 * HALO, C), jnp.float32),   # zero-padded x slab (time, C)
            pltpu.VMEM((T, I), jnp.float32),              # h slab (time, intermediate)
            pltpu.VMEM((1, I), jnp.float32),              # gx2 = sum_t h^2 (GRN statistic)
        ],
        compiler_params=pltpu.CompilerParams(
            dimension_semantics=("parallel", "arbitrary", "arbitrary"),
            # Above the 32 MiB scoped default (perf review) while staying inside
            # v7x's 64 MiB per-TensorCore VMEM; ample headroom on v5e/v6e (128 MiB).
            vmem_limit_bytes=48 * 1024 * 1024),
    )(x_nct, params["dw_w"], params["dw_b"], params["ln_g"], params["ln_b"],
      w1_b, params["b1"], params["grn_g"], params["grn_b"], w2_b, params["b2"])


def reference_block(x_nct, p):
    """Pure-JAX f32 reference matching the PyTorch forward (exact erf GELU)."""
    B, C, T = x_nct.shape
    x = jnp.transpose(x_nct, (0, 2, 1))                    # (B, T, C)
    xp = jnp.pad(x, ((0, 0), (PAD, PAD), (0, 0)))
    y = jnp.zeros_like(x)
    for k in range(KERNEL_SIZE):
        y = y + xp[:, k:k + T, :] * p["dw_w"][k][None, None, :]
    y = y + p["dw_b"][None]
    mean = y.mean(-1, keepdims=True)
    var = ((y - mean) ** 2).mean(-1, keepdims=True)
    y = (y - mean) / jnp.sqrt(var + EPS_LN) * p["ln_g"] + p["ln_b"]
    h = y @ p["w1"] + p["b1"]
    h = jax.nn.gelu(h, approximate=False)
    gx = jnp.sqrt(jnp.sum(h * h, axis=1, keepdims=True))
    nx = gx / (gx.mean(-1, keepdims=True) + EPS_GRN)
    h = p["grn_g"] * (h * nx) + p["grn_b"] + h
    z = h @ p["w2"] + p["b2"]
    return jnp.transpose(x + z, (0, 2, 1))


def make_params(key, dim, intermediate_dim):
    ks = jax.random.split(key, 11)
    s = 0.05
    return {
        # PyTorch Conv1d depthwise weight is (dim, 1, 7); stored here as (7, dim).
        "dw_w": s * jax.random.normal(ks[0], (KERNEL_SIZE, dim), jnp.float32),
        "dw_b": s * jax.random.normal(ks[1], (1, dim), jnp.float32),
        "ln_g": 1.0 + s * jax.random.normal(ks[2], (1, dim), jnp.float32),
        "ln_b": s * jax.random.normal(ks[3], (1, dim), jnp.float32),
        # PyTorch Linear weight is (out, in); stored here transposed as (in, out).
        "w1": s * jax.random.normal(ks[4], (dim, intermediate_dim), jnp.float32),
        "b1": s * jax.random.normal(ks[5], (1, intermediate_dim), jnp.float32),
        # GRN gamma/beta init to zeros in PyTorch; randomized here to exercise the path.
        "grn_g": s * jax.random.normal(ks[6], (1, intermediate_dim), jnp.float32),
        "grn_b": s * jax.random.normal(ks[7], (1, intermediate_dim), jnp.float32),
        "w2": s * jax.random.normal(ks[8], (intermediate_dim, dim), jnp.float32),
        "b2": s * jax.random.normal(ks[9], (1, dim), jnp.float32),
    }


if __name__ == "__main__":
    # Lane-dense dims (C, I multiples of 128); T chosen so the 512-row tile is exercised
    # over two time tiles per batch (n_t = 2).
    B, DIM, INTER_DIM, T = 2, 128, 384, 1024
    key = jax.random.PRNGKey(0)
    pkey, xkey = jax.random.split(key)
    params = make_params(pkey, DIM, INTER_DIM)
    x = jax.random.normal(xkey, (B, DIM, T), jnp.float32)   # PyTorch NCT layout

    out = convnext_block(x, params)                          # t_tile defaults to 512
    jax.block_until_ready(out)

    ref = reference_block(x, params)
    assert out.shape == (B, DIM, T)
    # Tolerance covers bf16 MXU operands and the tanh-GELU approximation.
    max_err = jnp.max(jnp.abs(out - ref))
    assert jnp.allclose(out, ref, atol=5e-2, rtol=5e-2), \
        f"mismatch vs reference (max abs err {max_err})"

    print("KERNEL_OK")
</pallas_src>

<mosaic_0001>
module attributes {stable_mosaic.version = 11 : i64} {
  func.func @fused_convnext_kernel(%arg0: i32, %arg1: i32, %arg2: i32, %arg3: memref<1x128x512xf32, #tpu.memory_space<vmem>>, %arg4: memref<7x128xf32, #tpu.memory_space<vmem>>, %arg5: memref<1x128xf32, #tpu.memory_space<vmem>>, %arg6: memref<1x128xf32, #tpu.memory_space<vmem>>, %arg7: memref<1x128xf32, #tpu.memory_space<vmem>>, %arg8: memref<128x384xbf16, #tpu.memory_space<vmem>>, %arg9: memref<1x384xf32, #tpu.memory_space<vmem>>, %arg10: memref<1x384xf32, #tpu.memory_space<vmem>>, %arg11: memref<1x384xf32, #tpu.memory_space<vmem>>, %arg12: memref<384x128xbf16, #tpu.memory_space<vmem>>, %arg13: memref<1x128xf32, #tpu.memory_space<vmem>>, %arg14: memref<1x128x512xf32, #tpu.memory_space<vmem>>, %arg15: memref<1040x128xf32, #tpu.memory_space<vmem>>, %arg16: memref<1024x384xf32, #tpu.memory_space<vmem>>, %arg17: memref<1x384xf32, #tpu.memory_space<vmem>>) attributes {dimension_semantics = [#tpu.dimension_semantics<parallel>, #tpu.dimension_semantics<arbitrary>, #tpu.dimension_semantics<arbitrary>], iteration_bounds = array<i64: 2, 3, 2>, scalar_prefetch = 0 : i64, scratch_operands = 3 : i64, tpu.core_type = #tpu.core_type<tc>, window_params = [{transform_indices = @transform_0, window_bounds = array<i64: 1, 128, 512>}, {pipeline_mode = #tpu.pipeline_mode<synchronous>, transform_indices = @transform_1, window_bounds = array<i64: 7, 128>}, {pipeline_mode = #tpu.pipeline_mode<synchronous>, transform_indices = @transform_2, window_bounds = array<i64: 1, 128>}, {pipeline_mode = #tpu.pipeline_mode<synchronous>, transform_indices = @transform_3, window_bounds = array<i64: 1, 128>}, {pipeline_mode = #tpu.pipeline_mode<synchronous>, transform_indices = @transform_4, window_bounds = array<i64: 1, 128>}, {pipeline_mode = #tpu.pipeline_mode<synchronous>, transform_indices = @transform_5, window_bounds = array<i64: 128, 384>}, {pipeline_mode = #tpu.pipeline_mode<synchronous>, transform_indices = @transform_6, window_bounds = array<i64: 1, 384>}, {pipeline_mode = #tpu.pipeline_mode<synchronous>, transform_indices = @transform_7, window_bounds = array<i64: 1, 384>}, {pipeline_mode = #tpu.pipeline_mode<synchronous>, transform_indices = @transform_8, window_bounds = array<i64: 1, 384>}, {pipeline_mode = #tpu.pipeline_mode<synchronous>, transform_indices = @transform_9, window_bounds = array<i64: 384, 128>}, {pipeline_mode = #tpu.pipeline_mode<synchronous>, transform_indices = @transform_10, window_bounds = array<i64: 1, 128>}, {transform_indices = @transform_11, window_bounds = array<i64: 1, 128, 512>}]} {
    %c0_i32 = arith.constant 0 : i32
    %0 = arith.cmpi eq, %arg1, %c0_i32 : i32
    %c0_i32_0 = arith.constant 0 : i32
    %1 = arith.cmpi eq, %arg2, %c0_i32_0 : i32
    %2 = arith.andi %0, %1 : i1
    %3 = arith.extui %2 : i1 to i32
    %c0_i32_1 = arith.constant 0 : i32
    %4 = arith.cmpi ne, %3, %c0_i32_1 : i32
    scf.if %4 {
      %cst = arith.constant 0.000000e+00 : f32
      %19 = vector.broadcast %cst : f32 to vector<8x128xf32>
      %c0 = arith.constant 0 : index
      %c0_9 = arith.constant 0 : index
      %20 = vector.load %arg15[%c0, %c0_9] : memref<1040x128xf32, #tpu.memory_space<vmem>>, vector<8x128xf32>
      tpu.vector_store %arg15[%c0, %c0_9], %19 {strides = array<i32>} : memref<1040x128xf32, #tpu.memory_space<vmem>>, vector<8x128xf32>,
      %c1032 = arith.constant 1032 : index
      %c0_10 = arith.constant 0 : index
      %21 = vector.load %arg15[%c1032, %c0_10] : memref<1040x128xf32, #tpu.memory_space<vmem>>, vector<8x128xf32>
      tpu.vector_store %arg15[%c1032, %c0_10], %19 {strides = array<i32>} : memref<1040x128xf32, #tpu.memory_space<vmem>>, vector<8x128xf32>,
    } else {
    }
    %c0_i32_2 = arith.constant 0 : i32
    %5 = arith.cmpi eq, %arg1, %c0_i32_2 : i32
    %6 = arith.extui %5 : i1 to i32
    %c0_i32_3 = arith.constant 0 : i32
    %7 = arith.cmpi ne, %6, %c0_i32_3 : i32
    scf.if %7 {
      %c512_i32 = arith.constant 512 : i32
      %19 = arith.muli %arg2, %c512_i32 : i32
      %c8_i32 = arith.constant 8 : i32
      %20 = arith.addi %c8_i32, %19 : i32
      %21 = tpu.assume_multiple %20, 8 : i32
      %c0 = arith.constant 0 : index
      %c0_9 = arith.constant 0 : index
      %c0_10 = arith.constant 0 : index
      %22 = vector.load %arg3[%c0, %c0_9, %c0_10] : memref<1x128x512xf32, #tpu.memory_space<vmem>>, vector<1x128x512xf32>
      %23 = vector.shape_cast %22 : vector<1x128x512xf32> to vector<128x512xf32>
      %24 = tpu.transpose %23, [1, 0] : vector<128x512xf32> -> vector<512x128xf32>
      %25 = arith.index_cast %21 : i32 to index
      %c0_11 = arith.constant 0 : index
      %26 = vector.load %arg15[%25, %c0_11] : memref<1040x128xf32, #tpu.memory_space<vmem>>, vector<512x128xf32>
      tpu.vector_store %arg15[%25, %c0_11], %24 {strides = array<i32>} : memref<1040x128xf32, #tpu.memory_space<vmem>>, vector<512x128xf32>,
    } else {
    }
    %c1_i32 = arith.constant 1 : i32
    %8 = arith.cmpi eq, %arg1, %c1_i32 : i32
    %c0_i32_4 = arith.constant 0 : i32
    %9 = arith.cmpi eq, %arg2, %c0_i32_4 : i32
    %10 = arith.andi %8, %9 : i1
    %11 = arith.extui %10 : i1 to i32
    %c0_i32_5 = arith.constant 0 : i32
    %12 = arith.cmpi ne, %11, %c0_i32_5 : i32
    scf.if %12 {
      %cst = arith.constant 0.000000e+00 : f32
      %19 = vector.broadcast %cst : f32 to vector<1x384xf32>
      %c0 = arith.constant 0 : index
      %c0_9 = arith.constant 0 : index
      %20 = vector.load %arg17[%c0, %c0_9] : memref<1x384xf32, #tpu.memory_space<vmem>>, vector<1x384xf32>
      tpu.vector_store %arg17[%c0, %c0_9], %19 {strides = array<i32>} : memref<1x384xf32, #tpu.memory_space<vmem>>, vector<1x384xf32>,
    } else {
    }
    %c1_i32_6 = arith.constant 1 : i32
    %13 = arith.cmpi eq, %arg1, %c1_i32_6 : i32
    %14 = arith.extui %13 : i1 to i32
    %c0_i32_7 = arith.constant 0 : i32
    %15 = arith.cmpi ne, %14, %c0_i32_7 : i32
    scf.if %15 {
      %c512_i32 = arith.constant 512 : i32
      %19 = arith.muli %arg2, %c512_i32 : i32
      %20 = tpu.assume_multiple %19, 8 : i32
      %21 = arith.index_cast %20 : i32 to index
      %c0 = arith.constant 0 : index
      %22 = vector.load %arg15[%21, %c0] : memref<1040x128xf32, #tpu.memory_space<vmem>>, vector<528x128xf32>
      %cst = arith.constant 0.000000e+00 : f32
      %23 = vector.broadcast %cst : f32 to vector<512x128xf32>
      %c0_9 = arith.constant 0 : index
      %c0_10 = arith.constant 0 : index
      %24 = vector.load %arg5[%c0_9, %c0_10] : memref<1x128xf32, #tpu.memory_space<vmem>>, vector<1x128xf32>
      %25 = vector.broadcast %24 : vector<1x128xf32> to vector<512x128xf32>
      %26 = arith.addf %23, %25 : vector<512x128xf32>
      %27 = vector.extract_strided_slice %22 {offsets = [5, 0], sizes = [512, 128], strides = [1, 1]} : vector<528x128xf32> to vector<512x128xf32>
      %c0_11 = arith.constant 0 : index
      %c0_12 = arith.constant 0 : index
      %28 = vector.load %arg4[%c0_11, %c0_12] : memref<7x128xf32, #tpu.memory_space<vmem>>, vector<1x128xf32>
      %29 = vector.broadcast %28 : vector<1x128xf32> to vector<512x128xf32>
      %30 = arith.mulf %27, %29 : vector<512x128xf32>
      %31 = arith.addf %26, %30 : vector<512x128xf32>
      %32 = vector.extract_strided_slice %22 {offsets = [6, 0], sizes = [512, 128], strides = [1, 1]} : vector<528x128xf32> to vector<512x128xf32>
      %c1 = arith.constant 1 : index
      %c0_13 = arith.constant 0 : index
      %33 = vector.load %arg4[%c1, %c0_13] : memref<7x128xf32, #tpu.memory_space<vmem>>, vector<1x128xf32>
      %34 = vector.broadcast %33 : vector<1x128xf32> to vector<512x128xf32>
      %35 = arith.mulf %32, %34 : vector<512x128xf32>
      %36 = arith.addf %31, %35 : vector<512x128xf32>
      %37 = vector.extract_strided_slice %22 {offsets = [7, 0], sizes = [512, 128], strides = [1, 1]} : vector<528x128xf32> to vector<512x128xf32>
      %c2 = arith.constant 2 : index
      %c0_14 = arith.constant 0 : index
      %38 = vector.load %arg4[%c2, %c0_14] : memref<7x128xf32, #tpu.memory_space<vmem>>, vector<1x128xf32>
      %39 = vector.broadcast %38 : vector<1x128xf32> to vector<512x128xf32>
      %40 = arith.mulf %37, %39 : vector<512x128xf32>
      %41 = arith.addf %36, %40 : vector<512x128xf32>
      %42 = vector.extract_strided_slice %22 {offsets = [8, 0], sizes = [512, 128], strides = [1, 1]} : vector<528x128xf32> to vector<512x128xf32>
      %c3 = arith.constant 3 : index
      %c0_15 = arith.constant 0 : index
      %43 = vector.load %arg4[%c3, %c0_15] : memref<7x128xf32, #tpu.memory_space<vmem>>, vector<1x128xf32>
      %44 = vector.broadcast %43 : vector<1x128xf32> to vector<512x128xf32>
      %45 = arith.mulf %42, %44 : vector<512x128xf32>
      %46 = arith.addf %41, %45 : vector<512x128xf32>
      %47 = vector.extract_strided_slice %22 {offsets = [9, 0], sizes = [512, 128], strides = [1, 1]} : vector<528x128xf32> to vector<512x128xf32>
      %c4 = arith.constant 4 : index
      %c0_16 = arith.constant 0 : index
      %48 = vector.load %arg4[%c4, %c0_16] : memref<7x128xf32, #tpu.memory_space<vmem>>, vector<1x128xf32>
      %49 = vector.broadcast %48 : vector<1x128xf32> to vector<512x128xf32>
      %50 = arith.mulf %47, %49 : vector<512x128xf32>
      %51 = arith.addf %46, %50 : vector<512x128xf32>
      %52 = vector.extract_strided_slice %22 {offsets = [10, 0], sizes = [512, 128], strides = [1, 1]} : vector<528x128xf32> to vector<512x128xf32>
      %c5 = arith.constant 5 : index
      %c0_17 = arith.constant 0 : index
      %53 = vector.load %arg4[%c5, %c0_17] : memref<7x128xf32, #tpu.memory_space<vmem>>, vector<1x128xf32>
      %54 = vector.broadcast %53 : vector<1x128xf32> to vector<512x128xf32>
      %55 = arith.mulf %52, %54 : vector<512x128xf32>
      %56 = arith.addf %51, %55 : vector<512x128xf32>
      %57 = vector.extract_strided_slice %22 {offsets = [11, 0], sizes = [512, 128], strides = [1, 1]} : vector<528x128xf32> to vector<512x128xf32>
      %c6 = arith.constant 6 : index
      %c0_18 = arith.constant 0 : index
      %58 = vector.load %arg4[%c6, %c0_18] : memref<7x128xf32, #tpu.memory_space<vmem>>, vector<1x128xf32>
      %59 = vector.broadcast %58 : vector<1x128xf32> to vector<512x128xf32>
      %60 = arith.mulf %57, %59 : vector<512x128xf32>
      %61 = arith.addf %56, %60 : vector<512x128xf32>
      %cst_19 = arith.constant dense<0.000000e+00> : vector<512xf32>
      %62 = vector.multi_reduction <add>, %61, %cst_19 [1] : vector<512x128xf32> to vector<512xf32>
      %63 = vector.shape_cast %62 : vector<512xf32> to vector<512x1xf32>
      %cst_20 = arith.constant 1.280000e+02 : f32
      %64 = vector.broadcast %cst_20 : f32 to vector<512x1xf32>
      %65 = arith.divf %63, %64 : vector<512x1xf32>
      %66 = vector.broadcast %65 : vector<512x1xf32> to vector<512x128xf32>
      %67 = arith.subf %61, %66 : vector<512x128xf32>
      %68 = arith.mulf %67, %67 : vector<512x128xf32>
      %cst_21 = arith.constant dense<0.000000e+00> : vector<512xf32>
      %69 = vector.multi_reduction <add>, %68, %cst_21 [1] : vector<512x128xf32> to vector<512xf32>
      %70 = vector.shape_cast %69 : vector<512xf32> to vector<512x1xf32>
      %cst_22 = arith.constant 1.280000e+02 : f32
      %71 = vector.broadcast %cst_22 : f32 to vector<512x1xf32>
      %72 = arith.divf %70, %71 : vector<512x1xf32>
      %cst_23 = arith.constant 9.99999997E-7 : f32
      %73 = vector.broadcast %cst_23 : f32 to vector<512x1xf32>
      %74 = arith.addf %72, %73 : vector<512x1xf32>
      %75 = math.rsqrt %74 : vector<512x1xf32>
      %76 = vector.broadcast %75 : vector<512x1xf32> to vector<512x128xf32>
      %77 = arith.mulf %67, %76 : vector<512x128xf32>
      %c0_24 = arith.constant 0 : index
      %c0_25 = arith.constant 0 : index
      %78 = vector.load %arg6[%c0_24, %c0_25] : memref<1x128xf32, #tpu.memory_space<vmem>>, vector<1x128xf32>
      %79 = vector.broadcast %78 : vector<1x128xf32> to vector<512x128xf32>
      %80 = arith.mulf %77, %79 : vector<512x128xf32>
      %c0_26 = arith.constant 0 : index
      %c0_27 = arith.constant 0 : index
      %81 = vector.load %arg7[%c0_26, %c0_27] : memref<1x128xf32, #tpu.memory_space<vmem>>, vector<1x128xf32>
      %82 = vector.broadcast %81 : vector<1x128xf32> to vector<512x128xf32>
      %83 = arith.addf %80, %82 : vector<512x128xf32>
      %84 = arith.truncf %83 : vector<512x128xf32> to vector<512x128xbf16>
      %c0_28 = arith.constant 0 : index
      %c0_29 = arith.constant 0 : index
      %85 = vector.load %arg8[%c0_28, %c0_29] : memref<128x384xbf16, #tpu.memory_space<vmem>>, vector<128x384xbf16>
      %cst_30 = arith.constant dense<0.000000e+00> : vector<512x384xf32>
      %86 = tpu.matmul %84, %85, %cst_30 {dimension_numbers = #tpu.dot_dimension_numbers<[1], [0], [0], [1], [0, 0, 1, 1], [], []>} : vector<512x128xbf16>, vector<128x384xbf16>, vector<512x384xf32> -> vector<512x384xf32>
      %c0_31 = arith.constant 0 : index
      %c0_32 = arith.constant 0 : index
      %87 = vector.load %arg9[%c0_31, %c0_32] : memref<1x384xf32, #tpu.memory_space<vmem>>, vector<1x384xf32>
      %88 = vector.broadcast %87 : vector<1x384xf32> to vector<512x384xf32>
      %89 = arith.addf %86, %88 : vector<512x384xf32>
      %90 = arith.mulf %89, %89 : vector<512x384xf32>
      %91 = arith.mulf %89, %90 : vector<512x384xf32>
      %cst_33 = arith.constant 4.471500e-02 : f32
      %92 = vector.broadcast %cst_33 : f32 to vector<512x384xf32>
      %93 = arith.mulf %92, %91 : vector<512x384xf32>
      %94 = arith.addf %89, %93 : vector<512x384xf32>
      %cst_34 = arith.constant 0.797884583 : f32
      %95 = vector.broadcast %cst_34 : f32 to vector<512x384xf32>
      %96 = arith.mulf %95, %94 : vector<512x384xf32>
      %97 = math.tanh %96 : vector<512x384xf32>
      %cst_35 = arith.constant 1.000000e+00 : f32
      %98 = vector.broadcast %cst_35 : f32 to vector<512x384xf32>
      %99 = arith.addf %98, %97 : vector<512x384xf32>
      %cst_36 = arith.constant 5.000000e-01 : f32
      %100 = vector.broadcast %cst_36 : f32 to vector<512x384xf32>
      %101 = arith.mulf %100, %99 : vector<512x384xf32>
      %102 = arith.mulf %89, %101 : vector<512x384xf32>
      %c0_37 = arith.constant 0 : index
      %c0_38 = arith.constant 0 : index
      %103 = vector.load %arg17[%c0_37, %c0_38] : memref<1x384xf32, #tpu.memory_space<vmem>>, vector<1x384xf32>
      %104 = arith.mulf %102, %102 : vector<512x384xf32>
      %cst_39 = arith.constant dense<0.000000e+00> : vector<384xf32>
      %105 = vector.multi_reduction <add>, %104, %cst_39 [0] : vector<512x384xf32> to vector<384xf32>
      %106 = vector.shape_cast %105 : vector<384xf32> to vector<1x384xf32>
      %107 = arith.addf %103, %106 : vector<1x384xf32>
      %c0_40 = arith.constant 0 : index
      %c0_41 = arith.constant 0 : index
      %108 = vector.load %arg17[%c0_40, %c0_41] : memref<1x384xf32, #tpu.memory_space<vmem>>, vector<1x384xf32>
      tpu.vector_store %arg17[%c0_40, %c0_41], %107 {strides = array<i32>} : memref<1x384xf32, #tpu.memory_space<vmem>>, vector<1x384xf32>,
      %109 = arith.index_cast %20 : i32 to index
      %c0_42 = arith.constant 0 : index
      %110 = vector.load %arg16[%109, %c0_42] : memref<1024x384xf32, #tpu.memory_space<vmem>>, vector<512x384xf32>
      tpu.vector_store %arg16[%109, %c0_42], %102 {strides = array<i32>} : memref<1024x384xf32, #tpu.memory_space<vmem>>, vector<512x384xf32>,
    } else {
    }
    %c2_i32 = arith.constant 2 : i32
    %16 = arith.cmpi eq, %arg1, %c2_i32 : i32
    %17 = arith.extui %16 : i1 to i32
    %c0_i32_8 = arith.constant 0 : i32
    %18 = arith.cmpi ne, %17, %c0_i32_8 : i32
    scf.if %18 {
      %c512_i32 = arith.constant 512 : i32
      %19 = arith.muli %arg2, %c512_i32 : i32
      %20 = tpu.assume_multiple %19, 8 : i32
      %21 = arith.index_cast %20 : i32 to index
      %c0 = arith.constant 0 : index
      %22 = vector.load %arg16[%21, %c0] : memref<1024x384xf32, #tpu.memory_space<vmem>>, vector<512x384xf32>
      %c0_9 = arith.constant 0 : index
      %c0_10 = arith.constant 0 : index
      %23 = vector.load %arg17[%c0_9, %c0_10] : memref<1x384xf32, #tpu.memory_space<vmem>>, vector<1x384xf32>
      %24 = math.sqrt %23 : vector<1x384xf32>
      %cst = arith.constant dense<0.000000e+00> : vector<1xf32>
      %25 = vector.multi_reduction <add>, %24, %cst [1] : vector<1x384xf32> to vector<1xf32>
      %26 = vector.shape_cast %25 : vector<1xf32> to vector<1x1xf32>
      %cst_11 = arith.constant 3.840000e+02 : f32
      %27 = vector.broadcast %cst_11 : f32 to vector<1x1xf32>
      %28 = arith.divf %26, %27 : vector<1x1xf32>
      %cst_12 = arith.constant 9.99999997E-7 : f32
      %29 = vector.broadcast %cst_12 : f32 to vector<1x1xf32>
      %30 = arith.addf %28, %29 : vector<1x1xf32>
      %31 = vector.broadcast %30 : vector<1x1xf32> to vector<1x384xf32>
      %32 = arith.divf %24, %31 : vector<1x384xf32>
      %c0_13 = arith.constant 0 : index
      %c0_14 = arith.constant 0 : index
      %33 = vector.load %arg10[%c0_13, %c0_14] : memref<1x384xf32, #tpu.memory_space<vmem>>, vector<1x384xf32>
      %34 = vector.broadcast %32 : vector<1x384xf32> to vector<512x384xf32>
      %35 = arith.mulf %22, %34 : vector<512x384xf32>
      %36 = vector.broadcast %33 : vector<1x384xf32> to vector<512x384xf32>
      %37 = arith.mulf %36, %35 : vector<512x384xf32>
      %c0_15 = arith.constant 0 : index
      %c0_16 = arith.constant 0 : index
      %38 = vector.load %arg11[%c0_15, %c0_16] : memref<1x384xf32, #tpu.memory_space<vmem>>, vector<1x384xf32>
      %39 = vector.broadcast %38 : vector<1x384xf32> to vector<512x384xf32>
      %40 = arith.addf %37, %39 : vector<512x384xf32>
      %41 = arith.addf %40, %22 : vector<512x384xf32>
      %42 = arith.truncf %41 : vector<512x384xf32> to vector<512x384xbf16>
      %c0_17 = arith.constant 0 : index
      %c0_18 = arith.constant 0 : index
      %43 = vector.load %arg12[%c0_17, %c0_18] : memref<384x128xbf16, #tpu.memory_space<vmem>>, vector<384x128xbf16>
      %cst_19 = arith.constant dense<0.000000e+00> : vector<512x128xf32>
      %44 = tpu.matmul %42, %43, %cst_19 {dimension_numbers = #tpu.dot_dimension_numbers<[1], [0], [0], [1], [0, 0, 1, 1], [], []>} : vector<512x384xbf16>, vector<384x128xbf16>, vector<512x128xf32> -> vector<512x128xf32>
      %c0_20 = arith.constant 0 : index
      %c0_21 = arith.constant 0 : index
      %45 = vector.load %arg13[%c0_20, %c0_21] : memref<1x128xf32, #tpu.memory_space<vmem>>, vector<1x128xf32>
      %46 = vector.broadcast %45 : vector<1x128xf32> to vector<512x128xf32>
      %47 = arith.addf %44, %46 : vector<512x128xf32>
      %c512_i32_22 = arith.constant 512 : i32
      %48 = arith.muli %arg2, %c512_i32_22 : i32
      %c8_i32 = arith.constant 8 : i32
      %49 = arith.addi %c8_i32, %48 : i32
      %50 = tpu.assume_multiple %49, 8 : i32
      %51 = arith.index_cast %50 : i32 to index
      %c0_23 = arith.constant 0 : index
      %52 = vector.load %arg15[%51, %c0_23] : memref<1040x128xf32, #tpu.memory_space<vmem>>, vector<512x128xf32>
      %53 = arith.addf %52, %47 : vector<512x128xf32>
      %54 = tpu.transpose %53, [1, 0] : vector<512x128xf32> -> vector<128x512xf32>
      %c0_24 = arith.constant 0 : index
      %c0_25 = arith.constant 0 : index
      %c0_26 = arith.constant 0 : index
      %55 = vector.load %arg14[%c0_24, %c0_25, %c0_26] : memref<1x128x512xf32, #tpu.memory_space<vmem>>, vector<1x128x512xf32>
      %56 = vector.shape_cast %55 : vector<1x128x512xf32> to vector<128x512xf32>
      %57 = vector.shape_cast %54 : vector<128x512xf32> to vector<1x128x512xf32>
      tpu.vector_store %arg14[%c0_24, %c0_25, %c0_26], %57 {strides = array<i32>} : memref<1x128x512xf32, #tpu.memory_space<vmem>>, vector<1x128x512xf32>,
    } else {
    }
    return
  }
  func.func @transform_0(%arg0: i32, %arg1: i32, %arg2: i32) -> (i32, i32, i32) {
    %c0_i32 = arith.constant 0 : i32
    %0 = arith.cmpi eq, %arg1, %c0_i32 : i32
    %c1_i32 = arith.constant 1 : i32
    %1 = arith.select %0, %arg2, %c1_i32 : i32
    %c0_i32_0 = arith.constant 0 : i32
    %c0_i32_1 = arith.constant 0 : i32
    return %arg0, %c0_i32_0, %1 : i32, i32, i32
  }
  func.func @transform_1(%arg0: i32, %arg1: i32, %arg2: i32) -> (i32, i32) {
    %c0_i32 = arith.constant 0 : i32
    %c0_i32_0 = arith.constant 0 : i32
    %c0_i32_1 = arith.constant 0 : i32
    return %c0_i32, %c0_i32_0 : i32, i32
  }
  func.func @transform_2(%arg0: i32, %arg1: i32, %arg2: i32) -> (i32, i32) {
    %c0_i32 = arith.constant 0 : i32
    %c0_i32_0 = arith.constant 0 : i32
    %c0_i32_1 = arith.constant 0 : i32
    return %c0_i32, %c0_i32_0 : i32, i32
  }
  func.func @transform_3(%arg0: i32, %arg1: i32, %arg2: i32) -> (i32, i32) {
    %c0_i32 = arith.constant 0 : i32
    %c0_i32_0 = arith.constant 0 : i32
    %c0_i32_1 = arith.constant 0 : i32
    return %c0_i32, %c0_i32_0 : i32, i32
  }
  func.func @transform_4(%arg0: i32, %arg1: i32, %arg2: i32) -> (i32, i32) {
    %c0_i32 = arith.constant 0 : i32
    %c0_i32_0 = arith.constant 0 : i32
    %c0_i32_1 = arith.constant 0 : i32
    return %c0_i32, %c0_i32_0 : i32, i32
  }
  func.func @transform_5(%arg0: i32, %arg1: i32, %arg2: i32) -> (i32, i32) {
    %c0_i32 = arith.constant 0 : i32
    %c0_i32_0 = arith.constant 0 : i32
    %c0_i32_1 = arith.constant 0 : i32
    return %c0_i32, %c0_i32_0 : i32, i32
  }
  func.func @transform_6(%arg0: i32, %arg1: i32, %arg2: i32) -> (i32, i32) {
    %c0_i32 = arith.constant 0 : i32
    %c0_i32_0 = arith.constant 0 : i32
    %c0_i32_1 = arith.constant 0 : i32
    return %c0_i32, %c0_i32_0 : i32, i32
  }
  func.func @transform_7(%arg0: i32, %arg1: i32, %arg2: i32) -> (i32, i32) {
    %c0_i32 = arith.constant 0 : i32
    %c0_i32_0 = arith.constant 0 : i32
    %c0_i32_1 = arith.constant 0 : i32
    return %c0_i32, %c0_i32_0 : i32, i32
  }
  func.func @transform_8(%arg0: i32, %arg1: i32, %arg2: i32) -> (i32, i32) {
    %c0_i32 = arith.constant 0 : i32
    %c0_i32_0 = arith.constant 0 : i32
    %c0_i32_1 = arith.constant 0 : i32
    return %c0_i32, %c0_i32_0 : i32, i32
  }
  func.func @transform_9(%arg0: i32, %arg1: i32, %arg2: i32) -> (i32, i32) {
    %c0_i32 = arith.constant 0 : i32
    %c0_i32_0 = arith.constant 0 : i32
    %c0_i32_1 = arith.constant 0 : i32
    return %c0_i32, %c0_i32_0 : i32, i32
  }
  func.func @transform_10(%arg0: i32, %arg1: i32, %arg2: i32) -> (i32, i32) {
    %c0_i32 = arith.constant 0 : i32
    %c0_i32_0 = arith.constant 0 : i32
    %c0_i32_1 = arith.constant 0 : i32
    return %c0_i32, %c0_i32_0 : i32, i32
  }
  func.func @transform_11(%arg0: i32, %arg1: i32, %arg2: i32) -> (i32, i32, i32) {
    %c2_i32 = arith.constant 2 : i32
    %0 = arith.cmpi eq, %arg1, %c2_i32 : i32
    %c0_i32 = arith.constant 0 : i32
    %1 = arith.select %0, %arg2, %c0_i32 : i32
    %c0_i32_0 = arith.constant 0 : i32
    %c0_i32_1 = arith.constant 0 : i32
    return %arg0, %c0_i32_0, %1 : i32, i32, i32
  }
}

</mosaic_0001>

<llo_original>
// kernel: convnext_block.1
$region0: #{convnext_block.1}
  #allocation0 [shape = 'u32[]', space=smem, size = 0x4, offset = 0x4, fixed_abs, tag = 'smem constant byte address 0x4 - core index']
  #allocation1 [shape = 'u32[144,128]{1,0:T(1,128)}', space=vmem, size = 0x12000, scoped, tag = 'internal scratch']
  #allocation2 [shape = 'f32[1040,128]{1,0:T(8,128)}', space=vmem, size = 0x82000, scoped, tag = 'scratch operand']
  #allocation3 [shape = 'f32[1024,384]{1,0:T(8,128)}', space=vmem, size = 0x180000, scoped, tag = 'scratch operand']
  #allocation4 [shape = 'f32[1,384]{1,0:T(1,128)}', space=vmem, size = 0x600, scoped, tag = 'scratch operand']
  %s0 = inlined_call_operand.hbm [shape: f32[2,128,1024], index: 0, kind: input, shape index: {}]
  %s1 = inlined_call_operand.vmem [shape: f32[7,128], index: 1, kind: input, shape index: {}]
  %s2 = inlined_call_operand.vmem [shape: f32[1,128], index: 2, kind: input, shape index: {}]
  %s3 = inlined_call_operand.vmem [shape: f32[1,128], index: 3, kind: input, shape index: {}]
  %s4 = inlined_call_operand.vmem [shape: f32[1,128], index: 4, kind: input, shape index: {}]
  %s5 = inlined_call_operand.vmem [shape: bf16[128,384], index: 5, kind: input, shape index: {}]
  %s6 = inlined_call_operand.vmem [shape: f32[1,384], index: 6, kind: input, shape index: {}]
  %s7 = inlined_call_operand.vmem [shape: f32[1,384], index: 7, kind: input, shape index: {}]
  %s8 = inlined_call_operand.vmem [shape: f32[1,384], index: 8, kind: input, shape index: {}]
  %s9 = inlined_call_operand.vmem [shape: bf16[384,128], index: 9, kind: input, shape index: {}]
  %s10 = inlined_call_operand.vmem [shape: f32[1,128], index: 10, kind: input, shape index: {}]
  %s11 = inlined_call_operand.hbm [shape: f32[2,128,1024], index: 11, kind: output, shape index: {}]
  %s12 = sld [smem:[#allocation0]]
  $region101: #{convnext_block.1} parent=0
    _
  %s14 = ssub.s32 1, %s12
  %s15 = scalar_select 0, %s14, %s12
  $region1: #{convnext_block.1} parent=0
    #allocation5 [shape = 'u8[524288]{0}', space=vmem, size = 0x80000, scoped, tag = 'input window, operand 0']
    #allocation6 [shape = 's32[2]{0}', space=sflag, size = 0x8, scoped, tag = 'scoped memory for convnext_block.1']
    #allocation7 [shape = 's32[2]{0}', space=sflag, size = 0x8, scoped, tag = 'scoped memory for convnext_block.1']
    #allocation8 [shape = 'u8[524288]{0}', space=vmem, size = 0x80000, scoped, tag = 'output window, operand 0']
    %16 = vsyncpa [#allocation6], 0
    %s17 = scalar_lea.sflag [#allocation6], 1
    %18 = vsyncpa %s17, 0
    %19 = vsyncpa [#allocation7], 0
    %s20 = scalar_lea.sflag [#allocation7], 1
    %21 = vsyncpa %s20, 0
    loop: start=0, step=1, limit=14
    $region2: #{convnext_block.1} parent=1 // loop_pre_header
      _
    $region3: #{convnext_block.1} parent=1 // loop_header
      %s23 = sphi 0, %s27
      %p24 = scmp.ge.s32.totalorder %s23, 14
      %s30 = sphi 0, %s49
      %s31 = sphi 0, %s45
      %s32 = sphi 0, %s41
      %s33 = sphi 0, %s30
      %s34 = sphi 0, %s31
      %s35 = sphi 0, %s32
      %s36 = sphi 0, %s33
      %s37 = sphi 0, %s34
      %s38 = sphi 0, %s35
      %s58 = sphi 0, %s60
      %s61 = sphi 0, %s58
      %s62 = sphi 0, %s61
      %s78 = sphi 0, %s62
      %s82 = sphi 0, %s82
      %s84 = sphi 0, %s82
      %s85 = sphi 0, %s84
      %s99 = sphi 0, %s85
      %s103 = sphi 0, %s103
      %s105 = sphi 0, %s103
      %s106 = sphi 0, %s105
      %s120 = sphi 0, %s106
      %s124 = sphi 0, %s124
      %s126 = sphi 0, %s124
      %s127 = sphi 0, %s126
      %s141 = sphi 0, %s127
      %s145 = sphi 0, %s145
      %s147 = sphi 0, %s145
      %s148 = sphi 0, %s147
      %s162 = sphi 0, %s148
      %s166 = sphi 0, %s166
      %s168 = sphi 0, %s166
      %s169 = sphi 0, %s168
      %s183 = sphi 0, %s169
      %s187 = sphi 0, %s187
      %s189 = sphi 0, %s187
      %s190 = sphi 0, %s189
      %s204 = sphi 0, %s190
      %s208 = sphi 0, %s208
      %s210 = sphi 0, %s208
      %s211 = sphi 0, %s210
      %s225 = sphi 0, %s211
      %s229 = sphi 0, %s229
      %s231 = sphi 0, %s229
      %s232 = sphi 0, %s231
      %s246 = sphi 0, %s232
      %s250 = sphi 0, %s250
      %s252 = sphi 0, %s250
      %s253 = sphi 0, %s252
      %s267 = sphi 0, %s253
      %s271 = sphi 0, %s271
      %s273 = sphi 0, %s271
      %s274 = sphi 0, %s273
      %s288 = sphi 0, %s274
      %s300 = sphi 0, %s302
      %s303 = sphi 0, %s300
      %s304 = sphi 0, %s303
      %s320 = sphi 0, %s304
    $region4: #{convnext_block.1} parent=1 // loop_header_branch
      %26 = sbr.rel (%p24) target = $region8
    $region5: #{convnext_block.1} parent=1 // loop_body
      %s28 = ssub.s32 %s23, 1
      %s29 = ssub.s32 %s23, 2
      %s39 = sadd.s32 1, %s32
      %p40 = scmp.ge.s32.totalorder %s39, 2
      %s41 = scalar_select %p40, 0, %s39
      %s42 = sadd.s32 1, %s31
      %s43 = scalar_select %p40, %s42, %s31
      %p44 = scmp.ge.s32.totalorder %s43, 3
      %s45 = scalar_select %p44, 0, %s43
      %s46 = sadd.s32 1, %s30
      %s47 = scalar_select %p44, %s46, %s30
      %p48 = scmp.ge.s32.totalorder %s47, 2
      %s49 = scalar_select %p48, 0, %s47
      %p50 = scmp.eq.s32.totalorder %s31, 0
      %s51 = scalar_select %p50, %s32, 1
      %p52 = scmp.eq.s32.totalorder %s45, 0
      %s53 = scalar_select %p52, %s41, 1
      %s54 = ssub.s32 %s30, %s49
      %s55 = ssub.s32 %s51, %s53
      %s56 = sor.u32 %s54, %s55
      %p57 = scmp.eq.s32.totalorder %s56, 0
      %s59 = sadd.s32 %s58, 1
      %s60 = scalar_select %p57, %s58, %s59
      %p63 = pneg %p57
      %p64 = scmp.eq.s32.totalorder %s23, 11
      %p65 = por %p63, %p64
      %p66 = scmp.ne.s32.totalorder %s58, %s61
      %p67 = scmp.eq.s32.totalorder %s23, 0
      %p68 = por %p66, %p67
      %p69 = scmp.ne.s32.totalorder %s58, %s61
      %p70 = scmp.eq.s32.totalorder %s28, 11
      %p71 = por %p69, %p70
      %p72 = scmp.ne.s32.totalorder %s61, %s62
      %p73 = scmp.eq.s32.totalorder %s28, 0
      %p74 = por %p72, %p73
      %p75 = scmp.ne.s32.totalorder %s61, %s62
      %p76 = scmp.eq.s32.totalorder %s29, 11
      %p77 = por %p75, %p76
      %p79 = scmp.ne.s32.totalorder %s62, %s78
      %p80 = scmp.eq.s32.totalorder %s29, 0
      %p81 = por %p79, %p80
      %s83 = sadd.s32 %s82, 1
      %p86 = scmp.eq.s32.totalorder %s23, 11
      %p87 = scmp.ne.s32.totalorder %s82, %s84
      %p88 = scmp.eq.s32.totalorder %s23, 0
      %p89 = por %p87, %p88
      %p90 = scmp.ne.s32.totalorder %s82, %s84
      %p91 = scmp.eq.s32.totalorder %s28, 11
      %p92 = por %p90, %p91
      %p93 = scmp.ne.s32.totalorder %s84, %s85
      %p94 = scmp.eq.s32.totalorder %s28, 0
      %p95 = por %p93, %p94
      %p96 = scmp.ne.s32.totalorder %s84, %s85
      %p97 = scmp.eq.s32.totalorder %s29, 11
      %p98 = por %p96, %p97
      %p100 = scmp.ne.s32.totalorder %s85, %s99
      %p101 = scmp.eq.s32.totalorder %s29, 0
      %p102 = por %p100, %p101
      %s104 = sadd.s32 %s103, 1
      %p107 = scmp.eq.s32.totalorder %s23, 11
      %p108 = scmp.ne.s32.totalorder %s103, %s105
      %p109 = scmp.eq.s32.totalorder %s23, 0
      %p110 = por %p108, %p109
      %p111 = scmp.ne.s32.totalorder %s103, %s105
      %p112 = scmp.eq.s32.totalorder %s28, 11
      %p113 = por %p111, %p112
      %p114 = scmp.ne.s32.totalorder %s105, %s106
      %p115 = scmp.eq.s32.totalorder %s28, 0
      %p116 = por %p114, %p115
      %p117 = scmp.ne.s32.totalorder %s105, %s106
      %p118 = scmp.eq.s32.totalorder %s29, 11
      %p119 = por %p117, %p118
      %p121 = scmp.ne.s32.totalorder %s106, %s120
      %p122 = scmp.eq.s32.totalorder %s29, 0
      %p123 = por %p121, %p122
      %s125 = sadd.s32 %s124, 1
      %p128 = scmp.eq.s32.totalorder %s23, 11
      %p129 = scmp.ne.s32.totalorder %s124, %s126
      %p130 = scmp.eq.s32.totalorder %s23, 0
      %p131 = por %p129, %p130
      %p132 = scmp.ne.s32.totalorder %s124, %s126
      %p133 = scmp.eq.s32.totalorder %s28, 11
      %p134 = por %p132, %p133
      %p135 = scmp.ne.s32.totalorder %s126, %s127
      %p136 = scmp.eq.s32.totalorder %s28, 0
      %p137 = por %p135, %p136
      %p138 = scmp.ne.s32.totalorder %s126, %s127
      %p139 = scmp.eq.s32.totalorder %s29, 11
      %p140 = por %p138, %p139
      %p142 = scmp.ne.s32.totalorder %s127, %s141
      %p143 = scmp.eq.s32.totalorder %s29, 0
      %p144 = por %p142, %p143
      %s146 = sadd.s32 %s145, 1
      %p149 = scmp.eq.s32.totalorder %s23, 11
      %p150 = scmp.ne.s32.totalorder %s145, %s147
      %p151 = scmp.eq.s32.totalorder %s23, 0
      %p152 = por %p150, %p151
      %p153 = scmp.ne.s32.totalorder %s145, %s147
      %p154 = scmp.eq.s32.totalorder %s28, 11
      %p155 = por %p153, %p154
      %p156 = scmp.ne.s32.totalorder %s147, %s148
      %p157 = scmp.eq.s32.totalorder %s28, 0
      %p158 = por %p156, %p157
      %p159 = scmp.ne.s32.totalorder %s147, %s148
      %p160 = scmp.eq.s32.totalorder %s29, 11
      %p161 = por %p159, %p160
      %p163 = scmp.ne.s32.totalorder %s148, %s162
      %p164 = scmp.eq.s32.totalorder %s29, 0
      %p165 = por %p163, %p164
      %s167 = sadd.s32 %s166, 1
      %p170 = scmp.eq.s32.totalorder %s23, 11
      %p171 = scmp.ne.s32.totalorder %s166, %s168
      %p172 = scmp.eq.s32.totalorder %s23, 0
      %p173 = por %p171, %p172
      %p174 = scmp.ne.s32.totalorder %s166, %s168
      %p175 = scmp.eq.s32.totalorder %s28, 11
      %p176 = por %p174, %p175
      %p177 = scmp.ne.s32.totalorder %s168, %s169
      %p178 = scmp.eq.s32.totalorder %s28, 0
      %p179 = por %p177, %p178
      %p180 = scmp.ne.s32.totalorder %s168, %s169
      %p181 = scmp.eq.s32.totalorder %s29, 11
      %p182 = por %p180, %p181
      %p184 = scmp.ne.s32.totalorder %s169, %s183
      %p185 = scmp.eq.s32.totalorder %s29, 0
      %p186 = por %p184, %p185
      %s188 = sadd.s32 %s187, 1
      %p191 = scmp.eq.s32.totalorder %s23, 11
      %p192 = scmp.ne.s32.totalorder %s187, %s189
      %p193 = scmp.eq.s32.totalorder %s23, 0
      %p194 = por %p192, %p193
      %p195 = scmp.ne.s32.totalorder %s187, %s189
      %p196 = scmp.eq.s32.totalorder %s28, 11
      %p197 = por %p195, %p196
      %p198 = scmp.ne.s32.totalorder %s189, %s190
      %p199 = scmp.eq.s32.totalorder %s28, 0
      %p200 = por %p198, %p199
      %p201 = scmp.ne.s32.totalorder %s189, %s190
      %p202 = scmp.eq.s32.totalorder %s29, 11
      %p203 = por %p201, %p202
      %p205 = scmp.ne.s32.totalorder %s190, %s204
      %p206 = scmp.eq.s32.totalorder %s29, 0
      %p207 = por %p205, %p206
      %s209 = sadd.s32 %s208, 1
      %p212 = scmp.eq.s32.totalorder %s23, 11
      %p213 = scmp.ne.s32.totalorder %s208, %s210
      %p214 = scmp.eq.s32.totalorder %s23, 0
      %p215 = por %p213, %p214
      %p216 = scmp.ne.s32.totalorder %s208, %s210
      %p217 = scmp.eq.s32.totalorder %s28, 11
      %p218 = por %p216, %p217
      %p219 = scmp.ne.s32.totalorder %s210, %s211
      %p220 = scmp.eq.s32.totalorder %s28, 0
      %p221 = por %p219, %p220
      %p222 = scmp.ne.s32.totalorder %s210, %s211
      %p223 = scmp.eq.s32.totalorder %s29, 11
      %p224 = por %p222, %p223
      %p226 = scmp.ne.s32.totalorder %s211, %s225
      %p227 = scmp.eq.s32.totalorder %s29, 0
      %p228 = por %p226, %p227
      %s230 = sadd.s32 %s229, 1
      %p233 = scmp.eq.s32.totalorder %s23, 11
      %p234 = scmp.ne.s32.totalorder %s229, %s231
      %p235 = scmp.eq.s32.totalorder %s23, 0
      %p236 = por %p234, %p235
      %p237 = scmp.ne.s32.totalorder %s229, %s231
      %p238 = scmp.eq.s32.totalorder %s28, 11
      %p239 = por %p237, %p238
      %p240 = scmp.ne.s32.totalorder %s231, %s232
      %p241 = scmp.eq.s32.totalorder %s28, 0
      %p242 = por %p240, %p241
      %p243 = scmp.ne.s32.totalorder %s231, %s232
      %p244 = scmp.eq.s32.totalorder %s29, 11
      %p245 = por %p243, %p244
      %p247 = scmp.ne.s32.totalorder %s232, %s246
      %p248 = scmp.eq.s32.totalorder %s29, 0
      %p249 = por %p247, %p248
      %s251 = sadd.s32 %s250, 1
      %p254 = scmp.eq.s32.totalorder %s23, 11
      %p255 = scmp.ne.s32.totalorder %s250, %s252
      %p256 = scmp.eq.s32.totalorder %s23, 0
      %p257 = por %p255, %p256
      %p258 = scmp.ne.s32.totalorder %s250, %s252
      %p259 = scmp.eq.s32.totalorder %s28, 11
      %p260 = por %p258, %p259
      %p261 = scmp.ne.s32.totalorder %s252, %s253
      %p262 = scmp.eq.s32.totalorder %s28, 0
      %p263 = por %p261, %p262
      %p264 = scmp.ne.s32.totalorder %s252, %s253
      %p265 = scmp.eq.s32.totalorder %s29, 11
      %p266 = por %p264, %p265
      %p268 = scmp.ne.s32.totalorder %s253, %s267
      %p269 = scmp.eq.s32.totalorder %s29, 0
      %p270 = por %p268, %p269
      %s272 = sadd.s32 %s271, 1
      %p275 = scmp.eq.s32.totalorder %s23, 11
      %p276 = scmp.ne.s32.totalorder %s271, %s273
      %p277 = scmp.eq.s32.totalorder %s23, 0
      %p278 = por %p276, %p277
      %p279 = scmp.ne.s32.totalorder %s271, %s273
      %p280 = scmp.eq.s32.totalorder %s28, 11
      %p281 = por %p279, %p280
      %p282 = scmp.ne.s32.totalorder %s273, %s274
      %p283 = scmp.eq.s32.totalorder %s28, 0
      %p284 = por %p282, %p283
      %p285 = scmp.ne.s32.totalorder %s273, %s274
      %p286 = scmp.eq.s32.totalorder %s29, 11
      %p287 = por %p285, %p286
      %p289 = scmp.ne.s32.totalorder %s274, %s288
      %p290 = scmp.eq.s32.totalorder %s29, 0
      %p291 = por %p289, %p290
      %p292 = scmp.eq.s32.totalorder %s31, 2
      %s293 = scalar_select %p292, %s32, 0
      %p294 = scmp.eq.s32.totalorder %s45, 2
      %s295 = scalar_select %p294, %s41, 0
      %s296 = ssub.s32 %s30, %s49
      %s297 = ssub.s32 %s293, %s295
      %s298 = sor.u32 %s296, %s297
      %p299 = scmp.eq.s32.totalorder %s298, 0
      %s301 = sadd.s32 %s300, 1
      %s302 = scalar_select %p299, %s300, %s301
      %p305 = pneg %p299
      %p306 = scmp.eq.s32.totalorder %s23, 11
      %p307 = por %p305, %p306
      %p308 = scmp.ne.s32.totalorder %s300, %s303
      %p309 = scmp.eq.s32.totalorder %s23, 0
      %p310 = por %p308, %p309
      %p311 = scmp.ne.s32.totalorder %s300, %s303
      %p312 = scmp.eq.s32.totalorder %s28, 11
      %p313 = por %p311, %p312
      %p314 = scmp.ne.s32.totalorder %s303, %s304
      %p315 = scmp.eq.s32.totalorder %s28, 0
      %p316 = por %p314, %p315
      %p317 = scmp.ne.s32.totalorder %s303, %s304
      %p318 = scmp.eq.s32.totalorder %s29, 11
      %p319 = por %p317, %p318
      %p321 = scmp.ne.s32.totalorder %s304, %s320
      %p322 = scmp.eq.s32.totalorder %s29, 0
      %p323 = por %p321, %p322
      %p324 = scmp.le.s32.totalorder 1, %s23
      %p325 = scmp.lt.s32.totalorder %s23, 13
      %p326 = pnand %p324, %p325
      %p327 = pneg %p326
      // Predicated region
      $region9: #{convnext_block.1} parent=5 // pred_check
        _
      $region10: #{convnext_block.1} parent=5 // pred_check_branch
        %329 = sbr.rel (%p326) target = $region12
      $region11: #{convnext_block.1} parent=5 // pred_region
        %s330 = ssub.s32 %s23, 1
        // Predicated region
        $region13: #{convnext_block.1} parent=11 // pred_check
          %p331 = pneg %p95
        $region14: #{convnext_block.1} parent=11 // pred_check_branch
          %333 = sbr.rel (%p331) target = $region16
        $region15: #{convnext_block.1} parent=11 // pred_region
          _
        $region16: #{convnext_block.1} parent=11 // pred_fallthru
          _
        // Predicated region
        $region17: #{convnext_block.1} parent=11 // pred_check
          %p334 = pneg %p116
        $region18: #{convnext_block.1} parent=11 // pred_check_branch
          %336 = sbr.rel (%p334) target = $region20
        $region19: #{convnext_block.1} parent=11 // pred_region
          _
        $region20: #{convnext_block.1} parent=11 // pred_fallthru
          _
        // Predicated region
        $region21: #{convnext_block.1} parent=11 // pred_check
          %p337 = pneg %p137
        $region22: #{convnext_block.1} parent=11 // pred_check_branch
          %339 = sbr.rel (%p337) target = $region24
        $region23: #{convnext_block.1} parent=11 // pred_region
          _
        $region24: #{convnext_block.1} parent=11 // pred_fallthru
          _
        // Predicated region
        $region25: #{convnext_block.1} parent=11 // pred_check
          %p340 = pneg %p158
        $region26: #{convnext_block.1} parent=11 // pred_check_branch
          %342 = sbr.rel (%p340) target = $region28
        $region27: #{convnext_block.1} parent=11 // pred_region
          _
        $region28: #{convnext_block.1} parent=11 // pred_fallthru
          _
        // Predicated region
        $region29: #{convnext_block.1} parent=11 // pred_check
          %p343 = pneg %p179
        $region30: #{convnext_block.1} parent=11 // pred_check_branch
          %345 = sbr.rel (%p343) target = $region32
        $region31: #{convnext_block.1} parent=11 // pred_region
          _
        $region32: #{convnext_block.1} parent=11 // pred_fallthru
          _
        // Predicated region
        $region33: #{convnext_block.1} parent=11 // pred_check
          %p346 = pneg %p200
        $region34: #{convnext_block.1} parent=11 // pred_check_branch
          %348 = sbr.rel (%p346) target = $region36
        $region35: #{convnext_block.1} parent=11 // pred_region
          _
        $region36: #{convnext_block.1} parent=11 // pred_fallthru
          _
        // Predicated region
        $region37: #{convnext_block.1} parent=11 // pred_check
          %p349 = pneg %p221
        $region38: #{convnext_block.1} parent=11 // pred_check_branch
          %351 = sbr.rel (%p349) target = $region40
        $region39: #{convnext_block.1} parent=11 // pred_region
          _
        $region40: #{convnext_block.1} parent=11 // pred_fallthru
          _
        // Predicated region
        $region41: #{convnext_block.1} parent=11 // pred_check
          %p352 = pneg %p242
        $region42: #{convnext_block.1} parent=11 // pred_check_branch
          %354 = sbr.rel (%p352) target = $region44
        $region43: #{convnext_block.1} parent=11 // pred_region
          _
        $region44: #{convnext_block.1} parent=11 // pred_fallthru
          _
        // Predicated region
        $region45: #{convnext_block.1} parent=11 // pred_check
          %p355 = pneg %p263
        $region46: #{convnext_block.1} parent=11 // pred_check_branch
          %357 = sbr.rel (%p355) target = $region48
        $region47: #{convnext_block.1} parent=11 // pred_region
          _
        $region48: #{convnext_block.1} parent=11 // pred_fallthru
          _
        // Predicated region
        $region49: #{convnext_block.1} parent=11 // pred_check
          %p358 = pneg %p284
        $region50: #{convnext_block.1} parent=11 // pred_check_branch
          %360 = sbr.rel (%p358) target = $region52
        $region51: #{convnext_block.1} parent=11 // pred_region
          _
        $region52: #{convnext_block.1} parent=11 // pred_fallthru
          _
      $region12: #{convnext_block.1} parent=5 // pred_fallthru
        _
      %p361 = scmp.lt.s32.totalorder %s23, 12
      // Predicated region
      $region53: #{convnext_block.1} parent=5 // pred_check
        %p362 = pneg %p361
      $region54: #{convnext_block.1} parent=5 // pred_check_branch
        %364 = sbr.rel (%p362) target = $region56
      $region55: #{convnext_block.1} parent=5 // pred_region
        // Predicated region
        $region57: #{convnext_block.1} parent=55 // pred_check
          %p365 = pneg %p68
        $region58: #{convnext_block.1} parent=55 // pred_check_branch
          %367 = sbr.rel (%p365) target = $region60
        $region59: #{convnext_block.1} parent=55 // pred_region
          %s368 = sand.u32 %s58, 1
          %s369 = scalar_lea.sflag [#allocation6], %s368
          %s370 = sand.u32 %s58, 1
          %s371 = smul.addr %s370, 512
          %s372 = scalar_lea.vmem [#allocation5], %s371
          %p373 = scmp.eq.s32.totalorder %s31, 0
          %s374 = scalar_select %p373, %s32, 1
          %s375 = smul.u32 4, %s374
          %s377 = ssub.s32 8192, 8192
          %378 = vsyncadd %s369, %s377
          %s379 = smul.addr %s30, 128
          %s380 = sadd.s32 %s375, %s379
          %s381 = smul.addr %s380, 128
          %s382 = scalar_lea.hbm %s0, %s381
          %s383 = sshll.u32 %s372, 4
          %s384 = int_to_ptr.vmem [resolvable:$true] %s383
          %389 = dma.hbm_to_vmem [thread:$0]  %s382, 8192, %s384, %s369, 1024, 512, 32
        $region60: #{convnext_block.1} parent=55 // pred_fallthru
          _
      $region56: #{convnext_block.1} parent=5 // pred_fallthru
        _
      %p390 = scmp.le.s32.totalorder 1, %s23
      %p391 = scmp.lt.s32.totalorder %s23, 13
      %p392 = pnand %p390, %p391
      %p393 = pneg %p392
      // Predicated region
      $region61: #{convnext_block.1} parent=5 // pred_check
        _
      $region62: #{convnext_block.1} parent=5 // pred_check_branch
        %395 = sbr.rel (%p392) target = $region64
      $region63: #{convnext_block.1} parent=5 // pred_region
        %s396 = ssub.s32 %s23, 1
        %s397 = sand.u32 %s61, 1
        %s398 = scalar_lea.sflag [#allocation6], %s397
        %s399 = sand.u32 %s61, 1
        %s400 = smul.addr %s399, 512
        %s401 = scalar_lea.vmem [#allocation5], %s400
        // Predicated region
        $region65: #{convnext_block.1} parent=63 // pred_check
          %p402 = pneg %p74
        $region66: #{convnext_block.1} parent=63 // pred_check_branch
          %404 = sbr.rel (%p402) target = $region68
        $region67: #{convnext_block.1} parent=63 // pred_region
          %405 = dma.done %s398, 8192
        $region68: #{convnext_block.1} parent=63 // pred_fallthru
          _
        %s406 = sand.u32 %s61, 1
        %s407 = scalar_lea.sflag [#allocation6], %s406
        %s408 = sand.u32 %s61, 1
        %s409 = smul.addr %s408, 512
        %s410 = scalar_lea.vmem [#allocation5], %s409
        %p411 = pneg %p74
        %p412 = pneg %p71
        %p413 = pneg %p95
        %p414 = pneg %p92
        %p415 = pneg %p116
        %p416 = pneg %p113
        %p417 = pneg %p137
        %p418 = pneg %p134
        %p419 = pneg %p158
        %p420 = pneg %p155
        %p421 = pneg %p179
        %p422 = pneg %p176
        %p423 = pneg %p200
        %p424 = pneg %p197
        %p425 = pneg %p221
        %p426 = pneg %p218
        %p427 = pneg %p242
        %p428 = pneg %p239
        %p429 = pneg %p263
        %p430 = pneg %p260
        %p431 = pneg %p284
        %p432 = pneg %p281
        %p433 = pneg %p316
        %p434 = pneg %p313
        %s435 = sand.u32 %s303, 1
        %s436 = scalar_lea.sflag [#allocation7], %s435
        %s437 = sand.u32 %s303, 1
        %s438 = smul.addr %s437, 512
        %s439 = scalar_lea.vmem [#allocation8], %s438
        %p440 = scmp.eq.s32.totalorder %s34, 0
        %s441 = scalar_select %p440, %s35, 1
        %s442 = smul.u32 4, %s441
        %p443 = scmp.eq.s32.totalorder %s34, 2
        %s444 = scalar_select %p443, %s35, 0
        %s445 = smul.u32 4, %s444
        %p447 = scmp.eq.s32.totalorder %s34, 0
        %p448 = scmp.eq.s32.totalorder %s35, 0
        %p449 = pnand %p447, %p448
        %p450 = pneg %p449
        // Predicated region
        $region69: #{convnext_block.1} parent=63 // pred_check
          _
        $region70: #{convnext_block.1} parent=63 // pred_check_branch
          %452 = sbr.rel (%p449) target = $region72
        $region71: #{convnext_block.1} parent=63 // pred_region
          %453 = vst [vmem:[#allocation2] sm:$0xff] 0.0
          %454 = vst [vmem:[#allocation2 + $0x408] sm:$0xff] 0.0
        $region72: #{convnext_block.1} parent=63 // pred_fallthru
          _
        // Predicated region
        $region73: #{convnext_block.1} parent=63 // pred_check
          %p455 = pneg %p447
        $region74: #{convnext_block.1} parent=63 // pred_check_branch
          %457 = sbr.rel (%p455) target = $region76
        $region75: #{convnext_block.1} parent=63 // pred_region
          %s458 = smul.u32 %s35, 512
          %s459 = sadd.s32 %s458, 8
          %v460 = vld [vmem:[%s401] sm:$0xff]
          %v461 = vld [vmem:[%s401 + $0x8] sm:$0xff]
          %v462 = vld [vmem:[%s401 + $0x10] sm:$0xff]
          %v463 = vld [vmem:[%s401 + $0x18] sm:$0xff]
          %v464 = vld [vmem:[%s401 + $0x20] sm:$0xff]
          %v465 = vld [vmem:[%s401 + $0x28] sm:$0xff]
          %v466 = vld [vmem:[%s401 + $0x30] sm:$0xff]
          %v467 = vld [vmem:[%s401 + $0x38] sm:$0xff]
          %v468 = vld [vmem:[%s401 + $0x40] sm:$0xff]
          %v469 = vld [vmem:[%s401 + $0x48] sm:$0xff]
          %v470 = vld [vmem:[%s401 + $0x50] sm:$0xff]
          %v471 = vld [vmem:[%s401 + $0x58] sm:$0xff]
          %v472 = vld [vmem:[%s401 + $0x60] sm:$0xff]
          %v473 = vld [vmem:[%s401 + $0x68] sm:$0xff]
          %v474 = vld [vmem:[%s401 + $0x70] sm:$0xff]
          %v475 = vld [vmem:[%s401 + $0x78] sm:$0xff]
          %v476 = vld [vmem:[%s401 + $0x80] sm:$0xff]
          %v477 = vld [vmem:[%s401 + $0x88] sm:$0xff]
          %v478 = vld [vmem:[%s401 + $0x90] sm:$0xff]
          %v479 = vld [vmem:[%s401 + $0x98] sm:$0xff]
          %v480 = vld [vmem:[%s401 + $0xa0] sm:$0xff]
          %v481 = vld [vmem:[%s401 + $0xa8] sm:$0xff]
          %v482 = vld [vmem:[%s401 + $0xb0] sm:$0xff]
          %v483 = vld [vmem:[%s401 + $0xb8] sm:$0xff]
          %v484 = vld [vmem:[%s401 + $0xc0] sm:$0xff]
          %v485 = vld [vmem:[%s401 + $0xc8] sm:$0xff]
          %v486 = vld [vmem:[%s401 + $0xd0] sm:$0xff]
          %v487 = vld [vmem:[%s401 + $0xd8] sm:$0xff]
          %v488 = vld [vmem:[%s401 + $0xe0] sm:$0xff]
          %v489 = vld [vmem:[%s401 + $0xe8] sm:$0xff]
          %v490 = vld [vmem:[%s401 + $0xf0] sm:$0xff]
          %v491 = vld [vmem:[%s401 + $0xf8] sm:$0xff]
          %v492 = vld [vmem:[%s401 + $0x100] sm:$0xff]
          %v493 = vld [vmem:[%s401 + $0x108] sm:$0xff]
          %v494 = vld [vmem:[%s401 + $0x110] sm:$0xff]
          %v495 = vld [vmem:[%s401 + $0x118] sm:$0xff]
          %v496 = vld [vmem:[%s401 + $0x120] sm:$0xff]
          %v497 = vld [vmem:[%s401 + $0x128] sm:$0xff]
          %v498 = vld [vmem:[%s401 + $0x130] sm:$0xff]
          %v499 = vld [vmem:[%s401 + $0x138] sm:$0xff]
          %v500 = vld [vmem:[%s401 + $0x140] sm:$0xff]
          %v501 = vld [vmem:[%s401 + $0x148] sm:$0xff]
          %v502 = vld [vmem:[%s401 + $0x150] sm:$0xff]
          %v503 = vld [vmem:[%s401 + $0x158] sm:$0xff]
          %v504 = vld [vmem:[%s401 + $0x160] sm:$0xff]
          %v505 = vld [vmem:[%s401 + $0x168] sm:$0xff]
          %v506 = vld [vmem:[%s401 + $0x170] sm:$0xff]
          %v507 = vld [vmem:[%s401 + $0x178] sm:$0xff]
          %v508 = vld [vmem:[%s401 + $0x180] sm:$0xff]
          %v509 = vld [vmem:[%s401 + $0x188] sm:$0xff]
          %v510 = vld [vmem:[%s401 + $0x190] sm:$0xff]
          %v511 = vld [vmem:[%s401 + $0x198] sm:$0xff]
          %v512 = vld [vmem:[%s401 + $0x1a0] sm:$0xff]
          %v513 = vld [vmem:[%s401 + $0x1a8] sm:$0xff]
          %v514 = vld [vmem:[%s401 + $0x1b0] sm:$0xff]
          %v515 = vld [vmem:[%s401 + $0x1b8] sm:$0xff]
          %v516 = vld [vmem:[%s401 + $0x1c0] sm:$0xff]
          %v517 = vld [vmem:[%s401 + $0x1c8] sm:$0xff]
          %v518 = vld [vmem:[%s401 + $0x1d0] sm:$0xff]
          %v519 = vld [vmem:[%s401 + $0x1d8] sm:$0xff]
          %v520 = vld [vmem:[%s401 + $0x1e0] sm:$0xff]
          %v521 = vld [vmem:[%s401 + $0x1e8] sm:$0xff]
          %v522 = vld [vmem:[%s401 + $0x1f0] sm:$0xff]
          %v523 = vld [vmem:[%s401 + $0x1f8] sm:$0xff]
          %524 = vxpose.xlu0.b32.start [1/16] %v460, 128
          %525 = vxpose.xlu0.b32.cont [2/16] %v464, 128
          %526 = vxpose.xlu0.b32.cont [3/16] %v468, 128
          %527 = vxpose.xlu0.b32.cont [4/16] %v472, 128
          %528 = vxpose.xlu0.b32.cont [5/16] %v476, 128
          %529 = vxpose.xlu0.b32.cont [6/16] %v480, 128
          %530 = vxpose.xlu0.b32.cont [7/16] %v484, 128
          %531 = vxpose.xlu0.b32.cont [8/16] %v488, 128
          %532 = vxpose.xlu0.b32.cont [9/16] %v492, 128
          %533 = vxpose.xlu0.b32.cont [10/16] %v496, 128
          %534 = vxpose.xlu0.b32.cont [11/16] %v500, 128
          %535 = vxpose.xlu0.b32.cont [12/16] %v504, 128
          %536 = vxpose.xlu0.b32.cont [13/16] %v508, 128
          %537 = vxpose.xlu0.b32.cont [14/16] %v512, 128
          %538 = vxpose.xlu0.b32.cont [15/16] %v516, 128
          %539 = vxpose.xlu0.b32.end [16/16] %v520, 128
          %v540 = vpop.trf.xlu0
          %v541 = vpop.trf.xlu0
          %v542 = vpop.trf.xlu0
          %v543 = vpop.trf.xlu0
          %v544 = vpop.trf.xlu0
          %v545 = vpop.trf.xlu0
          %v546 = vpop.trf.xlu0
          %v547 = vpop.trf.xlu0
          %v548 = vpop.trf.xlu0
          %v549 = vpop.trf.xlu0
          %v550 = vpop.trf.xlu0
          %v551 = vpop.trf.xlu0
          %v552 = vpop.trf.xlu0
          %v553 = vpop.trf.xlu0
          %v554 = vpop.trf.xlu0
          %v555 = vpop.trf.xlu0
          %556 = vxpose.xlu0.b32.start [1/16] %v461, 128
          %557 = vxpose.xlu0.b32.cont [2/16] %v465, 128
          %558 = vxpose.xlu0.b32.cont [3/16] %v469, 128
          %559 = vxpose.xlu0.b32.cont [4/16] %v473, 128
          %560 = vxpose.xlu0.b32.cont [5/16] %v477, 128
          %561 = vxpose.xlu0.b32.cont [6/16] %v481, 128
          %562 = vxpose.xlu0.b32.cont [7/16] %v485, 128
          %563 = vxpose.xlu0.b32.cont [8/16] %v489, 128
          %564 = vxpose.xlu0.b32.cont [9/16] %v493, 128
          %565 = vxpose.xlu0.b32.cont [10/16] %v497, 128
          %566 = vxpose.xlu0.b32.cont [11/16] %v501, 128
          %567 = vxpose.xlu0.b32.cont [12/16] %v505, 128
          %568 = vxpose.xlu0.b32.cont [13/16] %v509, 128
          %569 = vxpose.xlu0.b32.cont [14/16] %v513, 128
          %570 = vxpose.xlu0.b32.cont [15/16] %v517, 128
          %571 = vxpose.xlu0.b32.end [16/16] %v521, 128
          %v572 = vpop.trf.xlu0
          %v573 = vpop.trf.xlu0
          %v574 = vpop.trf.xlu0
          %v575 = vpop.trf.xlu0
          %v576 = vpop.trf.xlu0
          %v577 = vpop.trf.xlu0
          %v578 = vpop.trf.xlu0
          %v579 = vpop.trf.xlu0
          %v580 = vpop.trf.xlu0
          %v581 = vpop.trf.xlu0
          %v582 = vpop.trf.xlu0
          %v583 = vpop.trf.xlu0
          %v584 = vpop.trf.xlu0
          %v585 = vpop.trf.xlu0
          %v586 = vpop.trf.xlu0
          %v587 = vpop.trf.xlu0
          %588 = vxpose.xlu0.b32.start [1/16] %v462, 128
          %589 = vxpose.xlu0.b32.cont [2/16] %v466, 128
          %590 = vxpose.xlu0.b32.cont [3/16] %v470, 128
          %591 = vxpose.xlu0.b32.cont [4/16] %v474, 128
          %592 = vxpose.xlu0.b32.cont [5/16] %v478, 128
          %593 = vxpose.xlu0.b32.cont [6/16] %v482, 128
          %594 = vxpose.xlu0.b32.cont [7/16] %v486, 128
          %595 = vxpose.xlu0.b32.cont [8/16] %v490, 128
          %596 = vxpose.xlu0.b32.cont [9/16] %v494, 128
          %597 = vxpose.xlu0.b32.cont [10/16] %v498, 128
          %598 = vxpose.xlu0.b32.cont [11/16] %v502, 128
          %599 = vxpose.xlu0.b32.cont [12/16] %v506, 128
          %600 = vxpose.xlu0.b32.cont [13/16] %v510, 128
          %601 = vxpose.xlu0.b32.cont [14/16] %v514, 128
          %602 = vxpose.xlu0.b32.cont [15/16] %v518, 128
          %603 = vxpose.xlu0.b32.end [16/16] %v522, 128
          %v604 = vpop.trf.xlu0
          %v605 = vpop.trf.xlu0
          %v606 = vpop.trf.xlu0
          %v607 = vpop.trf.xlu0
          %v608 = vpop.trf.xlu0
          %v609 = vpop.trf.xlu0
          %v610 = vpop.trf.xlu0
          %v611 = vpop.trf.xlu0
          %v612 = vpop.trf.xlu0
          %v613 = vpop.trf.xlu0
          %v614 = vpop.trf.xlu0
          %v615 = vpop.trf.xlu0
          %v616 = vpop.trf.xlu0
          %v617 = vpop.trf.xlu0
          %v618 = vpop.trf.xlu0
          %v619 = vpop.trf.xlu0
          %620 = vxpose.xlu0.b32.start [1/16] %v463, 128
          %621 = vxpose.xlu0.b32.cont [2/16] %v467, 128
          %622 = vxpose.xlu0.b32.cont [3/16] %v471, 128
          %623 = vxpose.xlu0.b32.cont [4/16] %v475, 128
          %624 = vxpose.xlu0.b32.cont [5/16] %v479, 128
          %625 = vxpose.xlu0.b32.cont [6/16] %v483, 128
          %626 = vxpose.xlu0.b32.cont [7/16] %v487, 128
          %627 = vxpose.xlu0.b32.cont [8/16] %v491, 128
          %628 = vxpose.xlu0.b32.cont [9/16] %v495, 128
          %629 = vxpose.xlu0.b32.cont [10/16] %v499, 128
          %630 = vxpose.xlu0.b32.cont [11/16] %v503, 128
          %631 = vxpose.xlu0.b32.cont [12/16] %v507, 128
          %632 = vxpose.xlu0.b32.cont [13/16] %v511, 128
          %633 = vxpose.xlu0.b32.cont [14/16] %v515, 128
          %634 = vxpose.xlu0.b32.cont [15/16] %v519, 128
          %635 = vxpose.xlu0.b32.end [16/16] %v523, 128
          %v636 = vpop.trf.xlu0
          %v637 = vpop.trf.xlu0
          %v638 = vpop.trf.xlu0
          %v639 = vpop.trf.xlu0
          %v640 = vpop.trf.xlu0
          %v641 = vpop.trf.xlu0
          %v642 = vpop.trf.xlu0
          %v643 = vpop.trf.xlu0
          %v644 = vpop.trf.xlu0
          %v645 = vpop.trf.xlu0
          %v646 = vpop.trf.xlu0
          %v647 = vpop.trf.xlu0
          %v648 = vpop.trf.xlu0
          %v649 = vpop.trf.xlu0
          %v650 = vpop.trf.xlu0
          %v651 = vpop.trf.xlu0
          %s652 = scalar_lea.vmem [#allocation2], %s459
          %653 = vst [vmem:[%s652] sm:$0xff] %v540
          %654 = vst [vmem:[%s652 + $0x8] sm:$0xff] %v541
          %655 = vst [vmem:[%s652 + $0x10] sm:$0xff] %v542
          %656 = vst [vmem:[%s652 + $0x18] sm:$0xff] %v543
          %657 = vst [vmem:[%s652 + $0x20] sm:$0xff] %v544
          %658 = vst [vmem:[%s652 + $0x28] sm:$0xff] %v545
          %659 = vst [vmem:[%s652 + $0x30] sm:$0xff] %v546
          %660 = vst [vmem:[%s652 + $0x38] sm:$0xff] %v547
          %661 = vst [vmem:[%s652 + $0x40] sm:$0xff] %v548
          %662 = vst [vmem:[%s652 + $0x48] sm:$0xff] %v549
          %663 = vst [vmem:[%s652 + $0x50] sm:$0xff] %v550
          %664 = vst [vmem:[%s652 + $0x58] sm:$0xff] %v551
          %665 = vst [vmem:[%s652 + $0x60] sm:$0xff] %v552
          %666 = vst [vmem:[%s652 + $0x68] sm:$0xff] %v553
          %667 = vst [vmem:[%s652 + $0x70] sm:$0xff] %v554
          %668 = vst [vmem:[%s652 + $0x78] sm:$0xff] %v555
          %669 = vst [vmem:[%s652 + $0x80] sm:$0xff] %v572
          %670 = vst [vmem:[%s652 + $0x88] sm:$0xff] %v573
          %671 = vst [vmem:[%s652 + $0x90] sm:$0xff] %v574
          %672 = vst [vmem:[%s652 + $0x98] sm:$0xff] %v575
          %673 = vst [vmem:[%s652 + $0xa0] sm:$0xff] %v576
          %674 = vst [vmem:[%s652 + $0xa8] sm:$0xff] %v577
          %675 = vst [vmem:[%s652 + $0xb0] sm:$0xff] %v578
          %676 = vst [vmem:[%s652 + $0xb8] sm:$0xff] %v579
          %677 = vst [vmem:[%s652 + $0xc0] sm:$0xff] %v580
          %678 = vst [vmem:[%s652 + $0xc8] sm:$0xff] %v581
          %679 = vst [vmem:[%s652 + $0xd0] sm:$0xff] %v582
          %680 = vst [vmem:[%s652 + $0xd8] sm:$0xff] %v583
          %681 = vst [vmem:[%s652 + $0xe0] sm:$0xff] %v584
          %682 = vst [vmem:[%s652 + $0xe8] sm:$0xff] %v585
          %683 = vst [vmem:[%s652 + $0xf0] sm:$0xff] %v586
          %684 = vst [vmem:[%s652 + $0xf8] sm:$0xff] %v587
          %685 = vst [vmem:[%s652 + $0x100] sm:$0xff] %v604
          %686 = vst [vmem:[%s652 + $0x108] sm:$0xff] %v605
          %687 = vst [vmem:[%s652 + $0x110] sm:$0xff] %v606
          %688 = vst [vmem:[%s652 + $0x118] sm:$0xff] %v607
          %689 = vst [vmem:[%s652 + $0x120] sm:$0xff] %v608
          %690 = vst [vmem:[%s652 + $0x128] sm:$0xff] %v609
          %691 = vst [vmem:[%s652 + $0x130] sm:$0xff] %v610
          %692 = vst [vmem:[%s652 + $0x138] sm:$0xff] %v611
          %693 = vst [vmem:[%s652 + $0x140] sm:$0xff] %v612
          %694 = vst [vmem:[%s652 + $0x148] sm:$0xff] %v613
          %695 = vst [vmem:[%s652 + $0x150] sm:$0xff] %v614
          %696 = vst [vmem:[%s652 + $0x158] sm:$0xff] %v615
          %697 = vst [vmem:[%s652 + $0x160] sm:$0xff] %v616
          %698 = vst [vmem:[%s652 + $0x168] sm:$0xff] %v617
          %699 = vst [vmem:[%s652 + $0x170] sm:$0xff] %v618
          %700 = vst [vmem:[%s652 + $0x178] sm:$0xff] %v619
          %701 = vst [vmem:[%s652 + $0x180] sm:$0xff] %v636
          %702 = vst [vmem:[%s652 + $0x188] sm:$0xff] %v637
          %703 = vst [vmem:[%s652 + $0x190] sm:$0xff] %v638
          %704 = vst [vmem:[%s652 + $0x198] sm:$0xff] %v639
          %705 = vst [vmem:[%s652 + $0x1a0] sm:$0xff] %v640
          %706 = vst [vmem:[%s652 + $0x1a8] sm:$0xff] %v641
          %707 = vst [vmem:[%s652 + $0x1b0] sm:$0xff] %v642
          %708 = vst [vmem:[%s652 + $0x1b8] sm:$0xff] %v643
          %709 = vst [vmem:[%s652 + $0x1c0] sm:$0xff] %v644
          %710 = vst [vmem:[%s652 + $0x1c8] sm:$0xff] %v645
          %711 = vst [vmem:[%s652 + $0x1d0] sm:$0xff] %v646
          %712 = vst [vmem:[%s652 + $0x1d8] sm:$0xff] %v647
          %713 = vst [vmem:[%s652 + $0x1e0] sm:$0xff] %v648
          %714 = vst [vmem:[%s652 + $0x1e8] sm:$0xff] %v649
          %715 = vst [vmem:[%s652 + $0x1f0] sm:$0xff] %v650
          %716 = vst [vmem:[%s652 + $0x1f8] sm:$0xff] %v651
        $region76: #{convnext_block.1} parent=63 // pred_fallthru
          _
        %p717 = scmp.eq.s32.totalorder %s34, 1
        %p718 = pnand %p717, %p448
        %p719 = pneg %p718
        // Predicated region
        $region77: #{convnext_block.1} parent=63 // pred_check
          _
        $region78: #{convnext_block.1} parent=63 // pred_check_branch
          %721 = sbr.rel (%p718) target = $region80
        $region79: #{convnext_block.1} parent=63 // pred_region
          %v722 = vlaneseq
          %vm723 = vcmp.ge.s32.totalorder %v722, 0
          %vm724 = vcmp.lt.s32.totalorder %v722, 384
          %vm725 = vmand %vm723, %vm724
          %726 = vst.msk [vmem:[#allocation4] sm:$0x7] %vm725, 0.0
        $region80: #{convnext_block.1} parent=63 // pred_fallthru
          _
        // Predicated region
        $region81: #{convnext_block.1} parent=63 // pred_check
          %p727 = pneg %p717
        $region82: #{convnext_block.1} parent=63 // pred_check_branch
          %729 = sbr.rel (%p727) target = $region84
        $region83: #{convnext_block.1} parent=63 // pred_region
          %s730 = smul.u32 %s35, 512
          %s731 = scalar_lea.vmem [#allocation2], %s730
          %v732 = vld [vmem:[%s731] sm:$0xff]
          %v733 = vld [vmem:[%s731 + $0x8] sm:$0xff]
          %v734 = vld [vmem:[%s731 + $0x10] sm:$0xff]
          %v735 = vld [vmem:[%s731 + $0x18] sm:$0xff]
          %v736 = vld [vmem:[%s731 + $0x20] sm:$0xff]
          %v737 = vld [vmem:[%s731 + $0x28] sm:$0xff]
          %v738 = vld [vmem:[%s731 + $0x30] sm:$0xff]
          %v739 = vld [vmem:[%s731 + $0x38] sm:$0xff]
          %v740 = vld [vmem:[%s731 + $0x40] sm:$0xff]
          %v741 = vld [vmem:[%s731 + $0x48] sm:$0xff]
          %v742 = vld [vmem:[%s731 + $0x50] sm:$0xff]
          %v743 = vld [vmem:[%s731 + $0x58] sm:$0xff]
          %v744 = vld [vmem:[%s731 + $0x60] sm:$0xff]
          %v745 = vld [vmem:[%s731 + $0x68] sm:$0xff]
          %v746 = vld [vmem:[%s731 + $0x70] sm:$0xff]
          %v747 = vld [vmem:[%s731 + $0x78] sm:$0xff]
          %v748 = vld [vmem:[%s731 + $0x80] sm:$0xff]
          %v749 = vld [vmem:[%s731 + $0x88] sm:$0xff]
          %v750 = vld [vmem:[%s731 + $0x90] sm:$0xff]
          %v751 = vld [vmem:[%s731 + $0x98] sm:$0xff]
          %v752 = vld [vmem:[%s731 + $0xa0] sm:$0xff]
          %v753 = vld [vmem:[%s731 + $0xa8] sm:$0xff]
          %v754 = vld [vmem:[%s731 + $0xb0] sm:$0xff]
          %v755 = vld [vmem:[%s731 + $0xb8] sm:$0xff]
          %v756 = vld [vmem:[%s731 + $0xc0] sm:$0xff]
          %v757 = vld [vmem:[%s731 + $0xc8] sm:$0xff]
          %v758 = vld [vmem:[%s731 + $0xd0] sm:$0xff]
          %v759 = vld [vmem:[%s731 + $0xd8] sm:$0xff]
          %v760 = vld [vmem:[%s731 + $0xe0] sm:$0xff]
          %v761 = vld [vmem:[%s731 + $0xe8] sm:$0xff]
          %v762 = vld [vmem:[%s731 + $0xf0] sm:$0xff]
          %v763 = vld [vmem:[%s731 + $0xf8] sm:$0xff]
          %v764 = vld [vmem:[%s731 + $0x100] sm:$0xff]
          %v765 = vld [vmem:[%s731 + $0x108] sm:$0xff]
          %v766 = vld [vmem:[%s731 + $0x110] sm:$0xff]
          %v767 = vld [vmem:[%s731 + $0x118] sm:$0xff]
          %v768 = vld [vmem:[%s731 + $0x120] sm:$0xff]
          %v769 = vld [vmem:[%s731 + $0x128] sm:$0xff]
          %v770 = vld [vmem:[%s731 + $0x130] sm:$0xff]
          %v771 = vld [vmem:[%s731 + $0x138] sm:$0xff]
          %v772 = vld [vmem:[%s731 + $0x140] sm:$0xff]
          %v773 = vld [vmem:[%s731 + $0x148] sm:$0xff]
          %v774 = vld [vmem:[%s731 + $0x150] sm:$0xff]
          %v775 = vld [vmem:[%s731 + $0x158] sm:$0xff]
          %v776 = vld [vmem:[%s731 + $0x160] sm:$0xff]
          %v777 = vld [vmem:[%s731 + $0x168] sm:$0xff]
          %v778 = vld [vmem:[%s731 + $0x170] sm:$0xff]
          %v779 = vld [vmem:[%s731 + $0x178] sm:$0xff]
          %v780 = vld [vmem:[%s731 + $0x180] sm:$0xff]
          %v781 = vld [vmem:[%s731 + $0x188] sm:$0xff]
          %v782 = vld [vmem:[%s731 + $0x190] sm:$0xff]
          %v783 = vld [vmem:[%s731 + $0x198] sm:$0xff]
          %v784 = vld [vmem:[%s731 + $0x1a0] sm:$0xff]
          %v785 = vld [vmem:[%s731 + $0x1a8] sm:$0xff]
          %v786 = vld [vmem:[%s731 + $0x1b0] sm:$0xff]
          %v787 = vld [vmem:[%s731 + $0x1b8] sm:$0xff]
          %v788 = vld [vmem:[%s731 + $0x1c0] sm:$0xff]
          %v789 = vld [vmem:[%s731 + $0x1c8] sm:$0xff]
          %v790 = vld [vmem:[%s731 + $0x1d0] sm:$0xff]
          %v791 = vld [vmem:[%s731 + $0x1d8] sm:$0xff]
          %v792 = vld [vmem:[%s731 + $0x1e0] sm:$0xff]
          %v793 = vld [vmem:[%s731 + $0x1e8] sm:$0xff]
          %v794 = vld [vmem:[%s731 + $0x1f0] sm:$0xff]
          %v795 = vld [vmem:[%s731 + $0x1f8] sm:$0xff]
          %v796 = vld [vmem:[%s731 + $0x200] sm:$0xff]
          %v797 = vld [vmem:[%s731 + $0x208] sm:$0xff]
          %v798 = vld [vmem:[%s2] sm:$0x1]
          %v800 = vlaneseq
          %v801 = vshrl.u32 %v800, 7
          %v802 = vsub.s32 0, %v801
          %v803 = vrot.slane %v798, %v802
          %v805 = vadd.f32 %v803, 0.0
          %v806 = vld [vmem:[%s1] sm:$0x1]
          %v807 = vlaneseq
          %v808 = vshrl.u32 %v807, 7
          %v809 = vsub.s32 0, %v808
          %v810 = vrot.slane %v806, %v809
          %v811 = vmul.f32 %v732, %v810
          %v812 = vmul.f32 %v733, %v810
          %v813 = vmul.f32 %v734, %v810
          %v814 = vmul.f32 %v735, %v810
          %v815 = vmul.f32 %v736, %v810
          %v816 = vmul.f32 %v737, %v810
          %v817 = vmul.f32 %v738, %v810
          %v818 = vmul.f32 %v739, %v810
          %v819 = vmul.f32 %v740, %v810
          %v820 = vmul.f32 %v741, %v810
          %v821 = vmul.f32 %v742, %v810
          %v822 = vmul.f32 %v743, %v810
          %v823 = vmul.f32 %v744, %v810
          %v824 = vmul.f32 %v745, %v810
          %v825 = vmul.f32 %v746, %v810
          %v826 = vmul.f32 %v747, %v810
          %v827 = vmul.f32 %v748, %v810
          %v828 = vmul.f32 %v749, %v810
          %v829 = vmul.f32 %v750, %v810
          %v830 = vmul.f32 %v751, %v810
          %v831 = vmul.f32 %v752, %v810
          %v832 = vmul.f32 %v753, %v810
          %v833 = vmul.f32 %v754, %v810
          %v834 = vmul.f32 %v755, %v810
          %v835 = vmul.f32 %v756, %v810
          %v836 = vmul.f32 %v757, %v810
          %v837 = vmul.f32 %v758, %v810
          %v838 = vmul.f32 %v759, %v810
          %v839 = vmul.f32 %v760, %v810
          %v840 = vmul.f32 %v761, %v810
          %v841 = vmul.f32 %v762, %v810
          %v842 = vmul.f32 %v763, %v810
          %v843 = vmul.f32 %v764, %v810
          %v844 = vmul.f32 %v765, %v810
          %v845 = vmul.f32 %v766, %v810
          %v846 = vmul.f32 %v767, %v810
          %v847 = vmul.f32 %v768, %v810
          %v848 = vmul.f32 %v769, %v810
          %v849 = vmul.f32 %v770, %v810
          %v850 = vmul.f32 %v771, %v810
          %v851 = vmul.f32 %v772, %v810
          %v852 = vmul.f32 %v773, %v810
          %v853 = vmul.f32 %v774, %v810
          %v854 = vmul.f32 %v775, %v810
          %v855 = vmul.f32 %v776, %v810
          %v856 = vmul.f32 %v777, %v810
          %v857 = vmul.f32 %v778, %v810
          %v858 = vmul.f32 %v779, %v810
          %v859 = vmul.f32 %v780, %v810
          %v860 = vmul.f32 %v781, %v810
          %v861 = vmul.f32 %v782, %v810
          %v862 = vmul.f32 %v783, %v810
          %v863 = vmul.f32 %v784, %v810
          %v864 = vmul.f32 %v785, %v810
          %v865 = vmul.f32 %v786, %v810
          %v866 = vmul.f32 %v787, %v810
          %v867 = vmul.f32 %v788, %v810
          %v868 = vmul.f32 %v789, %v810
          %v869 = vmul.f32 %v790, %v810
          %v870 = vmul.f32 %v791, %v810
          %v871 = vmul.f32 %v792, %v810
          %v872 = vmul.f32 %v793, %v810
          %v873 = vmul.f32 %v794, %v810
          %v874 = vmul.f32 %v795, %v810
          %v875 = vmul.f32 %v796, %v810
          %v876 = vadd.f32 %v805, %v811
          %v877 = vadd.f32 %v805, %v812
          %v878 = vadd.f32 %v805, %v813
          %v879 = vadd.f32 %v805, %v814
          %v880 = vadd.f32 %v805, %v815
          %v881 = vadd.f32 %v805, %v816
          %v882 = vadd.f32 %v805, %v817
          %v883 = vadd.f32 %v805, %v818
          %v884 = vadd.f32 %v805, %v819
          %v885 = vadd.f32 %v805, %v820
          %v886 = vadd.f32 %v805, %v821
          %v887 = vadd.f32 %v805, %v822
          %v888 = vadd.f32 %v805, %v823
          %v889 = vadd.f32 %v805, %v824
          %v890 = vadd.f32 %v805, %v825
          %v891 = vadd.f32 %v805, %v826
          %v892 = vadd.f32 %v805, %v827
          %v893 = vadd.f32 %v805, %v828
          %v894 = vadd.f32 %v805, %v829
          %v895 = vadd.f32 %v805, %v830
          %v896 = vadd.f32 %v805, %v831
          %v897 = vadd.f32 %v805, %v832
          %v898 = vadd.f32 %v805, %v833
          %v899 = vadd.f32 %v805, %v834
          %v900 = vadd.f32 %v805, %v835
          %v901 = vadd.f32 %v805, %v836
          %v902 = vadd.f32 %v805, %v837
          %v903 = vadd.f32 %v805, %v838
          %v904 = vadd.f32 %v805, %v839
          %v905 = vadd.f32 %v805, %v840
          %v906 = vadd.f32 %v805, %v841
          %v907 = vadd.f32 %v805, %v842
          %v908 = vadd.f32 %v805, %v843
          %v909 = vadd.f32 %v805, %v844
          %v910 = vadd.f32 %v805, %v845
          %v911 = vadd.f32 %v805, %v846
          %v912 = vadd.f32 %v805, %v847
          %v913 = vadd.f32 %v805, %v848
          %v914 = vadd.f32 %v805, %v849
          %v915 = vadd.f32 %v805, %v850
          %v916 = vadd.f32 %v805, %v851
          %v917 = vadd.f32 %v805, %v852
          %v918 = vadd.f32 %v805, %v853
          %v919 = vadd.f32 %v805, %v854
          %v920 = vadd.f32 %v805, %v855
          %v921 = vadd.f32 %v805, %v856
          %v922 = vadd.f32 %v805, %v857
          %v923 = vadd.f32 %v805, %v858
          %v924 = vadd.f32 %v805, %v859
          %v925 = vadd.f32 %v805, %v860
          %v926 = vadd.f32 %v805, %v861
          %v927 = vadd.f32 %v805, %v862
          %v928 = vadd.f32 %v805, %v863
          %v929 = vadd.f32 %v805, %v864
          %v930 = vadd.f32 %v805, %v865
          %v931 = vadd.f32 %v805, %v866
          %v932 = vadd.f32 %v805, %v867
          %v933 = vadd.f32 %v805, %v868
          %v934 = vadd.f32 %v805, %v869
          %v935 = vadd.f32 %v805, %v870
          %v936 = vadd.f32 %v805, %v871
          %v937 = vadd.f32 %v805, %v872
          %v938 = vadd.f32 %v805, %v873
          %v939 = vadd.f32 %v805, %v874
          %v940 = vadd.f32 %v805, %v875
          %v941 = vld [vmem:[%s1 + $0x1] sm:$0x1]
          %v942 = vlaneseq
          %v943 = vshrl.u32 %v942, 7
          %v944 = vsub.s32 0, %v943
          %v945 = vrot.slane %v941, %v944
          %v946 = vmul.f32 %v732, %v945
          %v947 = vmul.f32 %v733, %v945
          %v948 = vmul.f32 %v734, %v945
          %v949 = vmul.f32 %v735, %v945
          %v950 = vmul.f32 %v736, %v945
          %v951 = vmul.f32 %v737, %v945
          %v952 = vmul.f32 %v738, %v945
          %v953 = vmul.f32 %v739, %v945
          %v954 = vmul.f32 %v740, %v945
          %v955 = vmul.f32 %v741, %v945
          %v956 = vmul.f32 %v742, %v945
          %v957 = vmul.f32 %v743, %v945
          %v958 = vmul.f32 %v744, %v945
          %v959 = vmul.f32 %v745, %v945
          %v960 = vmul.f32 %v746, %v945
          %v961 = vmul.f32 %v747, %v945
          %v962 = vmul.f32 %v748, %v945
          %v963 = vmul.f32 %v749, %v945
          %v964 = vmul.f32 %v750, %v945
          %v965 = vmul.f32 %v751, %v945
          %v966 = vmul.f32 %v752, %v945
          %v967 = vmul.f32 %v753, %v945
          %v968 = vmul.f32 %v754, %v945
          %v969 = vmul.f32 %v755, %v945
          %v970 = vmul.f32 %v756, %v945
          %v971 = vmul.f32 %v757, %v945
          %v972 = vmul.f32 %v758, %v945
          %v973 = vmul.f32 %v759, %v945
          %v974 = vmul.f32 %v760, %v945
          %v975 = vmul.f32 %v761, %v945
          %v976 = vmul.f32 %v762, %v945
          %v977 = vmul.f32 %v763, %v945
          %v978 = vmul.f32 %v764, %v945
          %v979 = vmul.f32 %v765, %v945
          %v980 = vmul.f32 %v766, %v945
          %v981 = vmul.f32 %v767, %v945
          %v982 = vmul.f32 %v768, %v945
          %v983 = vmul.f32 %v769, %v945
          %v984 = vmul.f32 %v770, %v945
          %v985 = vmul.f32 %v771, %v945
          %v986 = vmul.f32 %v772, %v945
          %v987 = vmul.f32 %v773, %v945
          %v988 = vmul.f32 %v774, %v945
          %v989 = vmul.f32 %v775, %v945
          %v990 = vmul.f32 %v776, %v945
          %v991 = vmul.f32 %v777, %v945
          %v992 = vmul.f32 %v778, %v945
          %v993 = vmul.f32 %v779, %v945
          %v994 = vmul.f32 %v780, %v945
          %v995 = vmul.f32 %v781, %v945
          %v996 = vmul.f32 %v782, %v945
          %v997 = vmul.f32 %v783, %v945
          %v998 = vmul.f32 %v784, %v945
          %v999 = vmul.f32 %v785, %v945
          %v1000 = vmul.f32 %v786, %v945
          %v1001 = vmul.f32 %v787, %v945
          %v1002 = vmul.f32 %v788, %v945
          %v1003 = vmul.f32 %v789, %v945
          %v1004 = vmul.f32 %v790, %v945
          %v1005 = vmul.f32 %v791, %v945
          %v1006 = vmul.f32 %v792, %v945
          %v1007 = vmul.f32 %v793, %v945
          %v1008 = vmul.f32 %v794, %v945
          %v1009 = vmul.f32 %v795, %v945
          %v1010 = vmul.f32 %v796, %v945
          %vm1076 = vcmask 1046528
          %v1077 = vrot.slane %v946, 1
          %v1078 = vrot.slane %v947, 1
          %v1079 = vsel %vm1076, %v1077, %v1078
          %v1080 = vrot.slane %v948, 1
          %v1081 = vsel %vm1076, %v1078, %v1080
          %v1082 = vrot.slane %v949, 1
          %v1083 = vsel %vm1076, %v1080, %v1082
          %v1084 = vrot.slane %v950, 1
          %v1085 = vsel %vm1076, %v1082, %v1084
          %v1086 = vrot.slane %v951, 1
          %v1087 = vsel %vm1076, %v1084, %v1086
          %v1088 = vrot.slane %v952, 1
          %v1089 = vsel %vm1076, %v1086, %v1088
          %v1090 = vrot.slane %v953, 1
          %v1091 = vsel %vm1076, %v1088, %v1090
          %v1092 = vrot.slane %v954, 1
          %v1093 = vsel %vm1076, %v1090, %v1092
          %v1094 = vrot.slane %v955, 1
          %v1095 = vsel %vm1076, %v1092, %v1094
          %v1096 = vrot.slane %v956, 1
          %v1097 = vsel %vm1076, %v1094, %v1096
          %v1098 = vrot.slane %v957, 1
          %v1099 = vsel %vm1076, %v1096, %v1098
          %v1100 = vrot.slane %v958, 1
          %v1101 = vsel %vm1076, %v1098, %v1100
          %v1102 = vrot.slane %v959, 1
          %v1103 = vsel %vm1076, %v1100, %v1102
          %v1104 = vrot.slane %v960, 1
          %v1105 = vsel %vm1076, %v1102, %v1104
          %v1106 = vrot.slane %v961, 1
          %v1107 = vsel %vm1076, %v1104, %v1106
          %v1108 = vrot.slane %v962, 1
          %v1109 = vsel %vm1076, %v1106, %v1108
          %v1110 = vrot.slane %v963, 1
          %v1111 = vsel %vm1076, %v1108, %v1110
          %v1112 = vrot.slane %v964, 1
          %v1113 = vsel %vm1076, %v1110, %v1112
          %v1114 = vrot.slane %v965, 1
          %v1115 = vsel %vm1076, %v1112, %v1114
          %v1116 = vrot.slane %v966, 1
          %v1117 = vsel %vm1076, %v1114, %v1116
          %v1118 = vrot.slane %v967, 1
          %v1119 = vsel %vm1076, %v1116, %v1118
          %v1120 = vrot.slane %v968, 1
          %v1121 = vsel %vm1076, %v1118, %v1120
          %v1122 = vrot.slane %v969, 1
          %v1123 = vsel %vm1076, %v1120, %v1122
          %v1124 = vrot.slane %v970, 1
          %v1125 = vsel %vm1076, %v1122, %v1124
          %v1126 = vrot.slane %v971, 1
          %v1127 = vsel %vm1076, %v1124, %v1126
          %v1128 = vrot.slane %v972, 1
          %v1129 = vsel %vm1076, %v1126, %v1128
          %v1130 = vrot.slane %v973, 1
          %v1131 = vsel %vm1076, %v1128, %v1130
          %v1132 = vrot.slane %v974, 1
          %v1133 = vsel %vm1076, %v1130, %v1132
          %v1134 = vrot.slane %v975, 1
          %v1135 = vsel %vm1076, %v1132, %v1134
          %v1136 = vrot.slane %v976, 1
          %v1137 = vsel %vm1076, %v1134, %v1136
          %v1138 = vrot.slane %v977, 1
          %v1139 = vsel %vm1076, %v1136, %v1138
          %v1140 = vrot.slane %v978, 1
          %v1141 = vsel %vm1076, %v1138, %v1140
          %v1142 = vrot.slane %v979, 1
          %v1143 = vsel %vm1076, %v1140, %v1142
          %v1144 = vrot.slane %v980, 1
          %v1145 = vsel %vm1076, %v1142, %v1144
          %v1146 = vrot.slane %v981, 1
          %v1147 = vsel %vm1076, %v1144, %v1146
          %v1148 = vrot.slane %v982, 1
          %v1149 = vsel %vm1076, %v1146, %v1148
          %v1150 = vrot.slane %v983, 1
          %v1151 = vsel %vm1076, %v1148, %v1150
          %v1152 = vrot.slane %v984, 1
          %v1153 = vsel %vm1076, %v1150, %v1152
          %v1154 = vrot.slane %v985, 1
          %v1155 = vsel %vm1076, %v1152, %v1154
          %v1156 = vrot.slane %v986, 1
          %v1157 = vsel %vm1076, %v1154, %v1156
          %v1158 = vrot.slane %v987, 1
          %v1159 = vsel %vm1076, %v1156, %v1158
          %v1160 = vrot.slane %v988, 1
          %v1161 = vsel %vm1076, %v1158, %v1160
          %v1162 = vrot.slane %v989, 1
          %v1163 = vsel %vm1076, %v1160, %v1162
          %v1164 = vrot.slane %v990, 1
          %v1165 = vsel %vm1076, %v1162, %v1164
          %v1166 = vrot.slane %v991, 1
          %v1167 = vsel %vm1076, %v1164, %v1166
          %v1168 = vrot.slane %v992, 1
          %v1169 = vsel %vm1076, %v1166, %v1168
          %v1170 = vrot.slane %v993, 1
          %v1171 = vsel %vm1076, %v1168, %v1170
          %v1172 = vrot.slane %v994, 1
          %v1173 = vsel %vm1076, %v1170, %v1172
          %v1174 = vrot.slane %v995, 1
          %v1175 = vsel %vm1076, %v1172, %v1174
          %v1176 = vrot.slane %v996, 1
          %v1177 = vsel %vm1076, %v1174, %v1176
          %v1178 = vrot.slane %v997, 1
          %v1179 = vsel %vm1076, %v1176, %v1178
          %v1180 = vrot.slane %v998, 1
          %v1181 = vsel %vm1076, %v1178, %v1180
          %v1182 = vrot.slane %v999, 1
          %v1183 = vsel %vm1076, %v1180, %v1182
          %v1184 = vrot.slane %v1000, 1
          %v1185 = vsel %vm1076, %v1182, %v1184
          %v1186 = vrot.slane %v1001, 1
          %v1187 = vsel %vm1076, %v1184, %v1186
          %v1188 = vrot.slane %v1002, 1
          %v1189 = vsel %vm1076, %v1186, %v1188
          %v1190 = vrot.slane %v1003, 1
          %v1191 = vsel %vm1076, %v1188, %v1190
          %v1192 = vrot.slane %v1004, 1
          %v1193 = vsel %vm1076, %v1190, %v1192
          %v1194 = vrot.slane %v1005, 1
          %v1195 = vsel %vm1076, %v1192, %v1194
          %v1196 = vrot.slane %v1006, 1
          %v1197 = vsel %vm1076, %v1194, %v1196
          %v1198 = vrot.slane %v1007, 1
          %v1199 = vsel %vm1076, %v1196, %v1198
          %v1200 = vrot.slane %v1008, 1
          %v1201 = vsel %vm1076, %v1198, %v1200
          %v1202 = vrot.slane %v1009, 1
          %v1203 = vsel %vm1076, %v1200, %v1202
          %v1204 = vrot.slane %v1010, 1
          %v1205 = vsel %vm1076, %v1202, %v1204
          %v1271 = vadd.f32 %v876, %v1079
          %v1272 = vadd.f32 %v877, %v1081
          %v1273 = vadd.f32 %v878, %v1083
          %v1274 = vadd.f32 %v879, %v1085
          %v1275 = vadd.f32 %v880, %v1087
          %v1276 = vadd.f32 %v881, %v1089
          %v1277 = vadd.f32 %v882, %v1091
          %v1278 = vadd.f32 %v883, %v1093
          %v1279 = vadd.f32 %v884, %v1095
          %v1280 = vadd.f32 %v885, %v1097
          %v1281 = vadd.f32 %v886, %v1099
          %v1282 = vadd.f32 %v887, %v1101
          %v1283 = vadd.f32 %v888, %v1103
          %v1284 = vadd.f32 %v889, %v1105
          %v1285 = vadd.f32 %v890, %v1107
          %v1286 = vadd.f32 %v891, %v1109
          %v1287 = vadd.f32 %v892, %v1111
          %v1288 = vadd.f32 %v893, %v1113
          %v1289 = vadd.f32 %v894, %v1115
          %v1290 = vadd.f32 %v895, %v1117
          %v1291 = vadd.f32 %v896, %v1119
          %v1292 = vadd.f32 %v897, %v1121
          %v1293 = vadd.f32 %v898, %v1123
          %v1294 = vadd.f32 %v899, %v1125
          %v1295 = vadd.f32 %v900, %v1127
          %v1296 = vadd.f32 %v901, %v1129
          %v1297 = vadd.f32 %v902, %v1131
          %v1298 = vadd.f32 %v903, %v1133
          %v1299 = vadd.f32 %v904, %v1135
          %v1300 = vadd.f32 %v905, %v1137
          %v1301 = vadd.f32 %v906, %v1139
          %v1302 = vadd.f32 %v907, %v1141
          %v1303 = vadd.f32 %v908, %v1143
          %v1304 = vadd.f32 %v909, %v1145
          %v1305 = vadd.f32 %v910, %v1147
          %v1306 = vadd.f32 %v911, %v1149
          %v1307 = vadd.f32 %v912, %v1151
          %v1308 = vadd.f32 %v913, %v1153
          %v1309 = vadd.f32 %v914, %v1155
          %v1310 = vadd.f32 %v915, %v1157
          %v1311 = vadd.f32 %v916, %v1159
          %v1312 = vadd.f32 %v917, %v1161
          %v1313 = vadd.f32 %v918, %v1163
          %v1314 = vadd.f32 %v919, %v1165
          %v1315 = vadd.f32 %v920, %v1167
          %v1316 = vadd.f32 %v921, %v1169
          %v1317 = vadd.f32 %v922, %v1171
          %v1318 = vadd.f32 %v923, %v1173
          %v1319 = vadd.f32 %v924, %v1175
          %v1320 = vadd.f32 %v925, %v1177
          %v1321 = vadd.f32 %v926, %v1179
          %v1322 = vadd.f32 %v927, %v1181
          %v1323 = vadd.f32 %v928, %v1183
          %v1324 = vadd.f32 %v929, %v1185
          %v1325 = vadd.f32 %v930, %v1187
          %v1326 = vadd.f32 %v931, %v1189
          %v1327 = vadd.f32 %v932, %v1191
          %v1328 = vadd.f32 %v933, %v1193
          %v1329 = vadd.f32 %v934, %v1195
          %v1330 = vadd.f32 %v935, %v1197
          %v1331 = vadd.f32 %v936, %v1199
          %v1332 = vadd.f32 %v937, %v1201
          %v1333 = vadd.f32 %v938, %v1203
          %v1334 = vadd.f32 %v939, %v1205
          %v1335 = vadd.f32 %v940, %v1204
          %v1336 = vld [vmem:[%s1 + $0x2] sm:$0x1]
          %v1337 = vlaneseq
          %v1338 = vshrl.u32 %v1337, 7
          %v1339 = vsub.s32 0, %v1338
          %v1340 = vrot.slane %v1336, %v1339
          %v1341 = vmul.f32 %v732, %v1340
          %v1342 = vmul.f32 %v733, %v1340
          %v1343 = vmul.f32 %v734, %v1340
          %v1344 = vmul.f32 %v735, %v1340
          %v1345 = vmul.f32 %v736, %v1340
          %v1346 = vmul.f32 %v737, %v1340
          %v1347 = vmul.f32 %v738, %v1340
          %v1348 = vmul.f32 %v739, %v1340
          %v1349 = vmul.f32 %v740, %v1340
          %v1350 = vmul.f32 %v741, %v1340
          %v1351 = vmul.f32 %v742, %v1340
          %v1352 = vmul.f32 %v743, %v1340
          %v1353 = vmul.f32 %v744, %v1340
          %v1354 = vmul.f32 %v745, %v1340
          %v1355 = vmul.f32 %v746, %v1340
          %v1356 = vmul.f32 %v747, %v1340
          %v1357 = vmul.f32 %v748, %v1340
          %v1358 = vmul.f32 %v749, %v1340
          %v1359 = vmul.f32 %v750, %v1340
          %v1360 = vmul.f32 %v751, %v1340
          %v1361 = vmul.f32 %v752, %v1340
          %v1362 = vmul.f32 %v753, %v1340
          %v1363 = vmul.f32 %v754, %v1340
          %v1364 = vmul.f32 %v755, %v1340
          %v1365 = vmul.f32 %v756, %v1340
          %v1366 = vmul.f32 %v757, %v1340
          %v1367 = vmul.f32 %v758, %v1340
          %v1368 = vmul.f32 %v759, %v1340
          %v1369 = vmul.f32 %v760, %v1340
          %v1370 = vmul.f32 %v761, %v1340
          %v1371 = vmul.f32 %v762, %v1340
          %v1372 = vmul.f32 %v763, %v1340
          %v1373 = vmul.f32 %v764, %v1340
          %v1374 = vmul.f32 %v765, %v1340
          %v1375 = vmul.f32 %v766, %v1340
          %v1376 = vmul.f32 %v767, %v1340
          %v1377 = vmul.f32 %v768, %v1340
          %v1378 = vmul.f32 %v769, %v1340
          %v1379 = vmul.f32 %v770, %v1340
          %v1380 = vmul.f32 %v771, %v1340
          %v1381 = vmul.f32 %v772, %v1340
          %v1382 = vmul.f32 %v773, %v1340
          %v1383 = vmul.f32 %v774, %v1340
          %v1384 = vmul.f32 %v775, %v1340
          %v1385 = vmul.f32 %v776, %v1340
          %v1386 = vmul.f32 %v777, %v1340
          %v1387 = vmul.f32 %v778, %v1340
          %v1388 = vmul.f32 %v779, %v1340
          %v1389 = vmul.f32 %v780, %v1340
          %v1390 = vmul.f32 %v781, %v1340
          %v1391 = vmul.f32 %v782, %v1340
          %v1392 = vmul.f32 %v783, %v1340
          %v1393 = vmul.f32 %v784, %v1340
          %v1394 = vmul.f32 %v785, %v1340
          %v1395 = vmul.f32 %v786, %v1340
          %v1396 = vmul.f32 %v787, %v1340
          %v1397 = vmul.f32 %v788, %v1340
          %v1398 = vmul.f32 %v789, %v1340
          %v1399 = vmul.f32 %v790, %v1340
          %v1400 = vmul.f32 %v791, %v1340
          %v1401 = vmul.f32 %v792, %v1340
          %v1402 = vmul.f32 %v793, %v1340
          %v1403 = vmul.f32 %v794, %v1340
          %v1404 = vmul.f32 %v795, %v1340
          %v1405 = vmul.f32 %v796, %v1340
          %vm1471 = vcmask 1045504
          %v1472 = vrot.slane %v1341, 2
          %v1473 = vrot.slane %v1342, 2
          %v1474 = vsel %vm1471, %v1472, %v1473
          %v1475 = vrot.slane %v1343, 2
          %v1476 = vsel %vm1471, %v1473, %v1475
          %v1477 = vrot.slane %v1344, 2
          %v1478 = vsel %vm1471, %v1475, %v1477
          %v1479 = vrot.slane %v1345, 2
          %v1480 = vsel %vm1471, %v1477, %v1479
          %v1481 = vrot.slane %v1346, 2
          %v1482 = vsel %vm1471, %v1479, %v1481
          %v1483 = vrot.slane %v1347, 2
          %v1484 = vsel %vm1471, %v1481, %v1483
          %v1485 = vrot.slane %v1348, 2
          %v1486 = vsel %vm1471, %v1483, %v1485
          %v1487 = vrot.slane %v1349, 2
          %v1488 = vsel %vm1471, %v1485, %v1487
          %v1489 = vrot.slane %v1350, 2
          %v1490 = vsel %vm1471, %v1487, %v1489
          %v1491 = vrot.slane %v1351, 2
          %v1492 = vsel %vm1471, %v1489, %v1491
          %v1493 = vrot.slane %v1352, 2
          %v1494 = vsel %vm1471, %v1491, %v1493
          %v1495 = vrot.slane %v1353, 2
          %v1496 = vsel %vm1471, %v1493, %v1495
          %v1497 = vrot.slane %v1354, 2
          %v1498 = vsel %vm1471, %v1495, %v1497
          %v1499 = vrot.slane %v1355, 2
          %v1500 = vsel %vm1471, %v1497, %v1499
          %v1501 = vrot.slane %v1356, 2
          %v1502 = vsel %vm1471, %v1499, %v1501
          %v1503 = vrot.slane %v1357, 2
          %v1504 = vsel %vm1471, %v1501, %v1503
          %v1505 = vrot.slane %v1358, 2
          %v1506 = vsel %vm1471, %v1503, %v1505
          %v1507 = vrot.slane %v1359, 2
          %v1508 = vsel %vm1471, %v1505, %v1507
          %v1509 = vrot.slane %v1360, 2
          %v1510 = vsel %vm1471, %v1507, %v1509
          %v1511 = vrot.slane %v1361, 2
          %v1512 = vsel %vm1471, %v1509, %v1511
          %v1513 = vrot.slane %v1362, 2
          %v1514 = vsel %vm1471, %v1511, %v1513
          %v1515 = vrot.slane %v1363, 2
          %v1516 = vsel %vm1471, %v1513, %v1515
          %v1517 = vrot.slane %v1364, 2
          %v1518 = vsel %vm1471, %v1515, %v1517
          %v1519 = vrot.slane %v1365, 2
          %v1520 = vsel %vm1471, %v1517, %v1519
          %v1521 = vrot.slane %v1366, 2
          %v1522 = vsel %vm1471, %v1519, %v1521
          %v1523 = vrot.slane %v1367, 2
          %v1524 = vsel %vm1471, %v1521, %v1523
          %v1525 = vrot.slane %v1368, 2
          %v1526 = vsel %vm1471, %v1523, %v1525
          %v1527 = vrot.slane %v1369, 2
          %v1528 = vsel %vm1471, %v1525, %v1527
          %v1529 = vrot.slane %v1370, 2
          %v1530 = vsel %vm1471, %v1527, %v1529
          %v1531 = vrot.slane %v1371, 2
          %v1532 = vsel %vm1471, %v1529, %v1531
          %v1533 = vrot.slane %v1372, 2
          %v1534 = vsel %vm1471, %v1531, %v1533
          %v1535 = vrot.slane %v1373, 2
          %v1536 = vsel %vm1471, %v1533, %v1535
          %v1537 = vrot.slane %v1374, 2
          %v1538 = vsel %vm1471, %v1535, %v1537
          %v1539 = vrot.slane %v1375, 2
          %v1540 = vsel %vm1471, %v1537, %v1539
          %v1541 = vrot.slane %v1376, 2
          %v1542 = vsel %vm1471, %v1539, %v1541
          %v1543 = vrot.slane %v1377, 2
          %v1544 = vsel %vm1471, %v1541, %v1543
          %v1545 = vrot.slane %v1378, 2
          %v1546 = vsel %vm1471, %v1543, %v1545
          %v1547 = vrot.slane %v1379, 2
          %v1548 = vsel %vm1471, %v1545, %v1547
          %v1549 = vrot.slane %v1380, 2
          %v1550 = vsel %vm1471, %v1547, %v1549
          %v1551 = vrot.slane %v1381, 2
          %v1552 = vsel %vm1471, %v1549, %v1551
          %v1553 = vrot.slane %v1382, 2
          %v1554 = vsel %vm1471, %v1551, %v1553
          %v1555 = vrot.slane %v1383, 2
          %v1556 = vsel %vm1471, %v1553, %v1555
          %v1557 = vrot.slane %v1384, 2
          %v1558 = vsel %vm1471, %v1555, %v1557
          %v1559 = vrot.slane %v1385, 2
          %v1560 = vsel %vm1471, %v1557, %v1559
          %v1561 = vrot.slane %v1386, 2
          %v1562 = vsel %vm1471, %v1559, %v1561
          %v1563 = vrot.slane %v1387, 2
          %v1564 = vsel %vm1471, %v1561, %v1563
          %v1565 = vrot.slane %v1388, 2
          %v1566 = vsel %vm1471, %v1563, %v1565
          %v1567 = vrot.slane %v1389, 2
          %v1568 = vsel %vm1471, %v1565, %v1567
          %v1569 = vrot.slane %v1390, 2
          %v1570 = vsel %vm1471, %v1567, %v1569
          %v1571 = vrot.slane %v1391, 2
          %v1572 = vsel %vm1471, %v1569, %v1571
          %v1573 = vrot.slane %v1392, 2
          %v1574 = vsel %vm1471, %v1571, %v1573
          %v1575 = vrot.slane %v1393, 2
          %v1576 = vsel %vm1471, %v1573, %v1575
          %v1577 = vrot.slane %v1394, 2
          %v1578 = vsel %vm1471, %v1575, %v1577
          %v1579 = vrot.slane %v1395, 2
          %v1580 = vsel %vm1471, %v1577, %v1579
          %v1581 = vrot.slane %v1396, 2
          %v1582 = vsel %vm1471, %v1579, %v1581
          %v1583 = vrot.slane %v1397, 2
          %v1584 = vsel %vm1471, %v1581, %v1583
          %v1585 = vrot.slane %v1398, 2
          %v1586 = vsel %vm1471, %v1583, %v1585
          %v1587 = vrot.slane %v1399, 2
          %v1588 = vsel %vm1471, %v1585, %v1587
          %v1589 = vrot.slane %v1400, 2
          %v1590 = vsel %vm1471, %v1587, %v1589
          %v1591 = vrot.slane %v1401, 2
          %v1592 = vsel %vm1471, %v1589, %v1591
          %v1593 = vrot.slane %v1402, 2
          %v1594 = vsel %vm1471, %v1591, %v1593
          %v1595 = vrot.slane %v1403, 2
          %v1596 = vsel %vm1471, %v1593, %v1595
          %v1597 = vrot.slane %v1404, 2
          %v1598 = vsel %vm1471, %v1595, %v1597
          %v1599 = vrot.slane %v1405, 2
          %v1600 = vsel %vm1471, %v1597, %v1599
          %v1666 = vadd.f32 %v1271, %v1474
          %v1667 = vadd.f32 %v1272, %v1476
          %v1668 = vadd.f32 %v1273, %v1478
          %v1669 = vadd.f32 %v1274, %v1480
          %v1670 = vadd.f32 %v1275, %v1482
          %v1671 = vadd.f32 %v1276, %v1484
          %v1672 = vadd.f32 %v1277, %v1486
          %v1673 = vadd.f32 %v1278, %v1488
          %v1674 = vadd.f32 %v1279, %v1490
          %v1675 = vadd.f32 %v1280, %v1492
          %v1676 = vadd.f32 %v1281, %v1494
          %v1677 = vadd.f32 %v1282, %v1496
          %v1678 = vadd.f32 %v1283, %v1498
          %v1679 = vadd.f32 %v1284, %v1500
          %v1680 = vadd.f32 %v1285, %v1502
          %v1681 = vadd.f32 %v1286, %v1504
          %v1682 = vadd.f32 %v1287, %v1506
          %v1683 = vadd.f32 %v1288, %v1508
          %v1684 = vadd.f32 %v1289, %v1510
          %v1685 = vadd.f32 %v1290, %v1512
          %v1686 = vadd.f32 %v1291, %v1514
          %v1687 = vadd.f32 %v1292, %v1516
          %v1688 = vadd.f32 %v1293, %v1518
          %v1689 = vadd.f32 %v1294, %v1520
          %v1690 = vadd.f32 %v1295, %v1522
          %v1691 = vadd.f32 %v1296, %v1524
          %v1692 = vadd.f32 %v1297, %v1526
          %v1693 = vadd.f32 %v1298, %v1528
          %v1694 = vadd.f32 %v1299, %v1530
          %v1695 = vadd.f32 %v1300, %v1532
          %v1696 = vadd.f32 %v1301, %v1534
          %v1697 = vadd.f32 %v1302, %v1536
          %v1698 = vadd.f32 %v1303, %v1538
          %v1699 = vadd.f32 %v1304, %v1540
          %v1700 = vadd.f32 %v1305, %v1542
          %v1701 = vadd.f32 %v1306, %v1544
          %v1702 = vadd.f32 %v1307, %v1546
          %v1703 = vadd.f32 %v1308, %v1548
          %v1704 = vadd.f32 %v1309, %v1550
          %v1705 = vadd.f32 %v1310, %v1552
          %v1706 = vadd.f32 %v1311, %v1554
          %v1707 = vadd.f32 %v1312, %v1556
          %v1708 = vadd.f32 %v1313, %v1558
          %v1709 = vadd.f32 %v1314, %v1560
          %v1710 = vadd.f32 %v1315, %v1562
          %v1711 = vadd.f32 %v1316, %v1564
          %v1712 = vadd.f32 %v1317, %v1566
          %v1713 = vadd.f32 %v1318, %v1568
          %v1714 = vadd.f32 %v1319, %v1570
          %v1715 = vadd.f32 %v1320, %v1572
          %v1716 = vadd.f32 %v1321, %v1574
          %v1717 = vadd.f32 %v1322, %v1576
          %v1718 = vadd.f32 %v1323, %v1578
          %v1719 = vadd.f32 %v1324, %v1580
          %v1720 = vadd.f32 %v1325, %v1582
          %v1721 = vadd.f32 %v1326, %v1584
          %v1722 = vadd.f32 %v1327, %v1586
          %v1723 = vadd.f32 %v1328, %v1588
          %v1724 = vadd.f32 %v1329, %v1590
          %v1725 = vadd.f32 %v1330, %v1592
          %v1726 = vadd.f32 %v1331, %v1594
          %v1727 = vadd.f32 %v1332, %v1596
          %v1728 = vadd.f32 %v1333, %v1598
          %v1729 = vadd.f32 %v1334, %v1600
          %v1730 = vadd.f32 %v1335, %v1599
          %v1731 = vld [vmem:[%s1 + $0x3] sm:$0x1]
          %v1732 = vlaneseq
          %v1733 = vshrl.u32 %v1732, 7
          %v1734 = vsub.s32 0, %v1733
          %v1735 = vrot.slane %v1731, %v1734
          %v1736 = vmul.f32 %v733, %v1735
          %v1737 = vmul.f32 %v734, %v1735
          %v1738 = vmul.f32 %v735, %v1735
          %v1739 = vmul.f32 %v736, %v1735
          %v1740 = vmul.f32 %v737, %v1735
          %v1741 = vmul.f32 %v738, %v1735
          %v1742 = vmul.f32 %v739, %v1735
          %v1743 = vmul.f32 %v740, %v1735
          %v1744 = vmul.f32 %v741, %v1735
          %v1745 = vmul.f32 %v742, %v1735
          %v1746 = vmul.f32 %v743, %v1735
          %v1747 = vmul.f32 %v744, %v1735
          %v1748 = vmul.f32 %v745, %v1735
          %v1749 = vmul.f32 %v746, %v1735
          %v1750 = vmul.f32 %v747, %v1735
          %v1751 = vmul.f32 %v748, %v1735
          %v1752 = vmul.f32 %v749, %v1735
          %v1753 = vmul.f32 %v750, %v1735
          %v1754 = vmul.f32 %v751, %v1735
          %v1755 = vmul.f32 %v752, %v1735
          %v1756 = vmul.f32 %v753, %v1735
          %v1757 = vmul.f32 %v754, %v1735
          %v1758 = vmul.f32 %v755, %v1735
          %v1759 = vmul.f32 %v756, %v1735
          %v1760 = vmul.f32 %v757, %v1735
          %v1761 = vmul.f32 %v758, %v1735
          %v1762 = vmul.f32 %v759, %v1735
          %v1763 = vmul.f32 %v760, %v1735
          %v1764 = vmul.f32 %v761, %v1735
          %v1765 = vmul.f32 %v762, %v1735
          %v1766 = vmul.f32 %v763, %v1735
          %v1767 = vmul.f32 %v764, %v1735
          %v1768 = vmul.f32 %v765, %v1735
          %v1769 = vmul.f32 %v766, %v1735
          %v1770 = vmul.f32 %v767, %v1735
          %v1771 = vmul.f32 %v768, %v1735
          %v1772 = vmul.f32 %v769, %v1735
          %v1773 = vmul.f32 %v770, %v1735
          %v1774 = vmul.f32 %v771, %v1735
          %v1775 = vmul.f32 %v772, %v1735
          %v1776 = vmul.f32 %v773, %v1735
          %v1777 = vmul.f32 %v774, %v1735
          %v1778 = vmul.f32 %v775, %v1735
          %v1779 = vmul.f32 %v776, %v1735
          %v1780 = vmul.f32 %v777, %v1735
          %v1781 = vmul.f32 %v778, %v1735
          %v1782 = vmul.f32 %v779, %v1735
          %v1783 = vmul.f32 %v780, %v1735
          %v1784 = vmul.f32 %v781, %v1735
          %v1785 = vmul.f32 %v782, %v1735
          %v1786 = vmul.f32 %v783, %v1735
          %v1787 = vmul.f32 %v784, %v1735
          %v1788 = vmul.f32 %v785, %v1735
          %v1789 = vmul.f32 %v786, %v1735
          %v1790 = vmul.f32 %v787, %v1735
          %v1791 = vmul.f32 %v788, %v1735
          %v1792 = vmul.f32 %v789, %v1735
          %v1793 = vmul.f32 %v790, %v1735
          %v1794 = vmul.f32 %v791, %v1735
          %v1795 = vmul.f32 %v792, %v1735
          %v1796 = vmul.f32 %v793, %v1735
          %v1797 = vmul.f32 %v794, %v1735
          %v1798 = vmul.f32 %v795, %v1735
          %v1799 = vmul.f32 %v796, %v1735
          %vm1864 = vcmask 1044480
          %v1865 = vrot.slane %v1736, 3
          %v1866 = vrot.slane %v1737, 3
          %v1867 = vsel %vm1864, %v1865, %v1866
          %v1868 = vrot.slane %v1738, 3
          %v1869 = vsel %vm1864, %v1866, %v1868
          %v1870 = vrot.slane %v1739, 3
          %v1871 = vsel %vm1864, %v1868, %v1870
          %v1872 = vrot.slane %v1740, 3
          %v1873 = vsel %vm1864, %v1870, %v1872
          %v1874 = vrot.slane %v1741, 3
          %v1875 = vsel %vm1864, %v1872, %v1874
          %v1876 = vrot.slane %v1742, 3
          %v1877 = vsel %vm1864, %v1874, %v1876
          %v1878 = vrot.slane %v1743, 3
          %v1879 = vsel %vm1864, %v1876, %v1878
          %v1880 = vrot.slane %v1744, 3
          %v1881 = vsel %vm1864, %v1878, %v1880
          %v1882 = vrot.slane %v1745, 3
          %v1883 = vsel %vm1864, %v1880, %v1882
          %v1884 = vrot.slane %v1746, 3
          %v1885 = vsel %vm1864, %v1882, %v1884
          %v1886 = vrot.slane %v1747, 3
          %v1887 = vsel %vm1864, %v1884, %v1886
          %v1888 = vrot.slane %v1748, 3
          %v1889 = vsel %vm1864, %v1886, %v1888
          %v1890 = vrot.slane %v1749, 3
          %v1891 = vsel %vm1864, %v1888, %v1890
          %v1892 = vrot.slane %v1750, 3
          %v1893 = vsel %vm1864, %v1890, %v1892
          %v1894 = vrot.slane %v1751, 3
          %v1895 = vsel %vm1864, %v1892, %v1894
          %v1896 = vrot.slane %v1752, 3
          %v1897 = vsel %vm1864, %v1894, %v1896
          %v1898 = vrot.slane %v1753, 3
          %v1899 = vsel %vm1864, %v1896, %v1898
          %v1900 = vrot.slane %v1754, 3
          %v1901 = vsel %vm1864, %v1898, %v1900
          %v1902 = vrot.slane %v1755, 3
          %v1903 = vsel %vm1864, %v1900, %v1902
          %v1904 = vrot.slane %v1756, 3
          %v1905 = vsel %vm1864, %v1902, %v1904
          %v1906 = vrot.slane %v1757, 3
          %v1907 = vsel %vm1864, %v1904, %v1906
          %v1908 = vrot.slane %v1758, 3
          %v1909 = vsel %vm1864, %v1906, %v1908
          %v1910 = vrot.slane %v1759, 3
          %v1911 = vsel %vm1864, %v1908, %v1910
          %v1912 = vrot.slane %v1760, 3
          %v1913 = vsel %vm1864, %v1910, %v1912
          %v1914 = vrot.slane %v1761, 3
          %v1915 = vsel %vm1864, %v1912, %v1914
          %v1916 = vrot.slane %v1762, 3
          %v1917 = vsel %vm1864, %v1914, %v1916
          %v1918 = vrot.slane %v1763, 3
          %v1919 = vsel %vm1864, %v1916, %v1918
          %v1920 = vrot.slane %v1764, 3
          %v1921 = vsel %vm1864, %v1918, %v1920
          %v1922 = vrot.slane %v1765, 3
          %v1923 = vsel %vm1864, %v1920, %v1922
          %v1924 = vrot.slane %v1766, 3
          %v1925 = vsel %vm1864, %v1922, %v1924
          %v1926 = vrot.slane %v1767, 3
          %v1927 = vsel %vm1864, %v1924, %v1926
          %v1928 = vrot.slane %v1768, 3
          %v1929 = vsel %vm1864, %v1926, %v1928
          %v1930 = vrot.slane %v1769, 3
          %v1931 = vsel %vm1864, %v1928, %v1930
          %v1932 = vrot.slane %v1770, 3
          %v1933 = vsel %vm1864, %v1930, %v1932
          %v1934 = vrot.slane %v1771, 3
          %v1935 = vsel %vm1864, %v1932, %v1934
          %v1936 = vrot.slane %v1772, 3
          %v1937 = vsel %vm1864, %v1934, %v1936
          %v1938 = vrot.slane %v1773, 3
          %v1939 = vsel %vm1864, %v1936, %v1938
          %v1940 = vrot.slane %v1774, 3
          %v1941 = vsel %vm1864, %v1938, %v1940
          %v1942 = vrot.slane %v1775, 3
          %v1943 = vsel %vm1864, %v1940, %v1942
          %v1944 = vrot.slane %v1776, 3
          %v1945 = vsel %vm1864, %v1942, %v1944
          %v1946 = vrot.slane %v1777, 3
          %v1947 = vsel %vm1864, %v1944, %v1946
          %v1948 = vrot.slane %v1778, 3
          %v1949 = vsel %vm1864, %v1946, %v1948
          %v1950 = vrot.slane %v1779, 3
          %v1951 = vsel %vm1864, %v1948, %v1950
          %v1952 = vrot.slane %v1780, 3
          %v1953 = vsel %vm1864, %v1950, %v1952
          %v1954 = vrot.slane %v1781, 3
          %v1955 = vsel %vm1864, %v1952, %v1954
          %v1956 = vrot.slane %v1782, 3
          %v1957 = vsel %vm1864, %v1954, %v1956
          %v1958 = vrot.slane %v1783, 3
          %v1959 = vsel %vm1864, %v1956, %v1958
          %v1960 = vrot.slane %v1784, 3
          %v1961 = vsel %vm1864, %v1958, %v1960
          %v1962 = vrot.slane %v1785, 3
          %v1963 = vsel %vm1864, %v1960, %v1962
          %v1964 = vrot.slane %v1786, 3
          %v1965 = vsel %vm1864, %v1962, %v1964
          %v1966 = vrot.slane %v1787, 3
          %v1967 = vsel %vm1864, %v1964, %v1966
          %v1968 = vrot.slane %v1788, 3
          %v1969 = vsel %vm1864, %v1966, %v1968
          %v1970 = vrot.slane %v1789, 3
          %v1971 = vsel %vm1864, %v1968, %v1970
          %v1972 = vrot.slane %v1790, 3
          %v1973 = vsel %vm1864, %v1970, %v1972
          %v1974 = vrot.slane %v1791, 3
          %v1975 = vsel %vm1864, %v1972, %v1974
          %v1976 = vrot.slane %v1792, 3
          %v1977 = vsel %vm1864, %v1974, %v1976
          %v1978 = vrot.slane %v1793, 3
          %v1979 = vsel %vm1864, %v1976, %v1978
          %v1980 = vrot.slane %v1794, 3
          %v1981 = vsel %vm1864, %v1978, %v1980
          %v1982 = vrot.slane %v1795, 3
          %v1983 = vsel %vm1864, %v1980, %v1982
          %v1984 = vrot.slane %v1796, 3
          %v1985 = vsel %vm1864, %v1982, %v1984
          %v1986 = vrot.slane %v1797, 3
          %v1987 = vsel %vm1864, %v1984, %v1986
          %v1988 = vrot.slane %v1798, 3
          %v1989 = vsel %vm1864, %v1986, %v1988
          %v1990 = vrot.slane %v1799, 3
          %v1991 = vsel %vm1864, %v1988, %v1990
          %v2057 = vadd.f32 %v1666, %v1865
          %v2058 = vadd.f32 %v1667, %v1867
          %v2059 = vadd.f32 %v1668, %v1869
          %v2060 = vadd.f32 %v1669, %v1871
          %v2061 = vadd.f32 %v1670, %v1873
          %v2062 = vadd.f32 %v1671, %v1875
          %v2063 = vadd.f32 %v1672, %v1877
          %v2064 = vadd.f32 %v1673, %v1879
          %v2065 = vadd.f32 %v1674, %v1881
          %v2066 = vadd.f32 %v1675, %v1883
          %v2067 = vadd.f32 %v1676, %v1885
          %v2068 = vadd.f32 %v1677, %v1887
          %v2069 = vadd.f32 %v1678, %v1889
          %v2070 = vadd.f32 %v1679, %v1891
          %v2071 = vadd.f32 %v1680, %v1893
          %v2072 = vadd.f32 %v1681, %v1895
          %v2073 = vadd.f32 %v1682, %v1897
          %v2074 = vadd.f32 %v1683, %v1899
          %v2075 = vadd.f32 %v1684, %v1901
          %v2076 = vadd.f32 %v1685, %v1903
          %v2077 = vadd.f32 %v1686, %v1905
          %v2078 = vadd.f32 %v1687, %v1907
          %v2079 = vadd.f32 %v1688, %v1909
          %v2080 = vadd.f32 %v1689, %v1911
          %v2081 = vadd.f32 %v1690, %v1913
          %v2082 = vadd.f32 %v1691, %v1915
          %v2083 = vadd.f32 %v1692, %v1917
          %v2084 = vadd.f32 %v1693, %v1919
          %v2085 = vadd.f32 %v1694, %v1921
          %v2086 = vadd.f32 %v1695, %v1923
          %v2087 = vadd.f32 %v1696, %v1925
          %v2088 = vadd.f32 %v1697, %v1927
          %v2089 = vadd.f32 %v1698, %v1929
          %v2090 = vadd.f32 %v1699, %v1931
          %v2091 = vadd.f32 %v1700, %v1933
          %v2092 = vadd.f32 %v1701, %v1935
          %v2093 = vadd.f32 %v1702, %v1937
          %v2094 = vadd.f32 %v1703, %v1939
          %v2095 = vadd.f32 %v1704, %v1941
          %v2096 = vadd.f32 %v1705, %v1943
          %v2097 = vadd.f32 %v1706, %v1945
          %v2098 = vadd.f32 %v1707, %v1947
          %v2099 = vadd.f32 %v1708, %v1949
          %v2100 = vadd.f32 %v1709, %v1951
          %v2101 = vadd.f32 %v1710, %v1953
          %v2102 = vadd.f32 %v1711, %v1955
          %v2103 = vadd.f32 %v1712, %v1957
          %v2104 = vadd.f32 %v1713, %v1959
          %v2105 = vadd.f32 %v1714, %v1961
          %v2106 = vadd.f32 %v1715, %v1963
          %v2107 = vadd.f32 %v1716, %v1965
          %v2108 = vadd.f32 %v1717, %v1967
          %v2109 = vadd.f32 %v1718, %v1969
          %v2110 = vadd.f32 %v1719, %v1971
          %v2111 = vadd.f32 %v1720, %v1973
          %v2112 = vadd.f32 %v1721, %v1975
          %v2113 = vadd.f32 %v1722, %v1977
          %v2114 = vadd.f32 %v1723, %v1979
          %v2115 = vadd.f32 %v1724, %v1981
          %v2116 = vadd.f32 %v1725, %v1983
          %v2117 = vadd.f32 %v1726, %v1985
          %v2118 = vadd.f32 %v1727, %v1987
          %v2119 = vadd.f32 %v1728, %v1989
          %v2120 = vadd.f32 %v1729, %v1991
          %v2121 = vadd.f32 %v1730, %v1990
          %v2122 = vld [vmem:[%s1 + $0x4] sm:$0x1]
          %v2123 = vlaneseq
          %v2124 = vshrl.u32 %v2123, 7
          %v2125 = vsub.s32 0, %v2124
          %v2126 = vrot.slane %v2122, %v2125
          %v2127 = vmul.f32 %v733, %v2126
          %v2128 = vmul.f32 %v734, %v2126
          %v2129 = vmul.f32 %v735, %v2126
          %v2130 = vmul.f32 %v736, %v2126
          %v2131 = vmul.f32 %v737, %v2126
          %v2132 = vmul.f32 %v738, %v2126
          %v2133 = vmul.f32 %v739, %v2126
          %v2134 = vmul.f32 %v740, %v2126
          %v2135 = vmul.f32 %v741, %v2126
          %v2136 = vmul.f32 %v742, %v2126
          %v2137 = vmul.f32 %v743, %v2126
          %v2138 = vmul.f32 %v744, %v2126
          %v2139 = vmul.f32 %v745, %v2126
          %v2140 = vmul.f32 %v746, %v2126
          %v2141 = vmul.f32 %v747, %v2126
          %v2142 = vmul.f32 %v748, %v2126
          %v2143 = vmul.f32 %v749, %v2126
          %v2144 = vmul.f32 %v750, %v2126
          %v2145 = vmul.f32 %v751, %v2126
          %v2146 = vmul.f32 %v752, %v2126
          %v2147 = vmul.f32 %v753, %v2126
          %v2148 = vmul.f32 %v754, %v2126
          %v2149 = vmul.f32 %v755, %v2126
          %v2150 = vmul.f32 %v756, %v2126
          %v2151 = vmul.f32 %v757, %v2126
          %v2152 = vmul.f32 %v758, %v2126
          %v2153 = vmul.f32 %v759, %v2126
          %v2154 = vmul.f32 %v760, %v2126
          %v2155 = vmul.f32 %v761, %v2126
          %v2156 = vmul.f32 %v762, %v2126
          %v2157 = vmul.f32 %v763, %v2126
          %v2158 = vmul.f32 %v764, %v2126
          %v2159 = vmul.f32 %v765, %v2126
          %v2160 = vmul.f32 %v766, %v2126
          %v2161 = vmul.f32 %v767, %v2126
          %v2162 = vmul.f32 %v768, %v2126
          %v2163 = vmul.f32 %v769, %v2126
          %v2164 = vmul.f32 %v770, %v2126
          %v2165 = vmul.f32 %v771, %v2126
          %v2166 = vmul.f32 %v772, %v2126
          %v2167 = vmul.f32 %v773, %v2126
          %v2168 = vmul.f32 %v774, %v2126
          %v2169 = vmul.f32 %v775, %v2126
          %v2170 = vmul.f32 %v776, %v2126
          %v2171 = vmul.f32 %v777, %v2126
          %v2172 = vmul.f32 %v778, %v2126
          %v2173 = vmul.f32 %v779, %v2126
          %v2174 = vmul.f32 %v780, %v2126
          %v2175 = vmul.f32 %v781, %v2126
          %v2176 = vmul.f32 %v782, %v2126
          %v2177 = vmul.f32 %v783, %v2126
          %v2178 = vmul.f32 %v784, %v2126
          %v2179 = vmul.f32 %v785, %v2126
          %v2180 = vmul.f32 %v786, %v2126
          %v2181 = vmul.f32 %v787, %v2126
          %v2182 = vmul.f32 %v788, %v2126
          %v2183 = vmul.f32 %v789, %v2126
          %v2184 = vmul.f32 %v790, %v2126
          %v2185 = vmul.f32 %v791, %v2126
          %v2186 = vmul.f32 %v792, %v2126
          %v2187 = vmul.f32 %v793, %v2126
          %v2188 = vmul.f32 %v794, %v2126
          %v2189 = vmul.f32 %v795, %v2126
          %v2190 = vmul.f32 %v796, %v2126
          %v2191 = vmul.f32 %v797, %v2126
          %vm2257 = vcmask 1043456
          %v2258 = vrot.slane %v2127, 4
          %v2259 = vrot.slane %v2128, 4
          %v2260 = vsel %vm2257, %v2258, %v2259
          %v2261 = vrot.slane %v2129, 4
          %v2262 = vsel %vm2257, %v2259, %v2261
          %v2263 = vrot.slane %v2130, 4
          %v2264 = vsel %vm2257, %v2261, %v2263
          %v2265 = vrot.slane %v2131, 4
          %v2266 = vsel %vm2257, %v2263, %v2265
          %v2267 = vrot.slane %v2132, 4
          %v2268 = vsel %vm2257, %v2265, %v2267
          %v2269 = vrot.slane %v2133, 4
          %v2270 = vsel %vm2257, %v2267, %v2269
          %v2271 = vrot.slane %v2134, 4
          %v2272 = vsel %vm2257, %v2269, %v2271
          %v2273 = vrot.slane %v2135, 4
          %v2274 = vsel %vm2257, %v2271, %v2273
          %v2275 = vrot.slane %v2136, 4
          %v2276 = vsel %vm2257, %v2273, %v2275
          %v2277 = vrot.slane %v2137, 4
          %v2278 = vsel %vm2257, %v2275, %v2277
          %v2279 = vrot.slane %v2138, 4
          %v2280 = vsel %vm2257, %v2277, %v2279
          %v2281 = vrot.slane %v2139, 4
          %v2282 = vsel %vm2257, %v2279, %v2281
          %v2283 = vrot.slane %v2140, 4
          %v2284 = vsel %vm2257, %v2281, %v2283
          %v2285 = vrot.slane %v2141, 4
          %v2286 = vsel %vm2257, %v2283, %v2285
          %v2287 = vrot.slane %v2142, 4
          %v2288 = vsel %vm2257, %v2285, %v2287
          %v2289 = vrot.slane %v2143, 4
          %v2290 = vsel %vm2257, %v2287, %v2289
          %v2291 = vrot.slane %v2144, 4
          %v2292 = vsel %vm2257, %v2289, %v2291
          %v2293 = vrot.slane %v2145, 4
          %v2294 = vsel %vm2257, %v2291, %v2293
          %v2295 = vrot.slane %v2146, 4
          %v2296 = vsel %vm2257, %v2293, %v2295
          %v2297 = vrot.slane %v2147, 4
          %v2298 = vsel %vm2257, %v2295, %v2297
          %v2299 = vrot.slane %v2148, 4
          %v2300 = vsel %vm2257, %v2297, %v2299
          %v2301 = vrot.slane %v2149, 4
          %v2302 = vsel %vm2257, %v2299, %v2301
          %v2303 = vrot.slane %v2150, 4
          %v2304 = vsel %vm2257, %v2301, %v2303
          %v2305 = vrot.slane %v2151, 4
          %v2306 = vsel %vm2257, %v2303, %v2305
          %v2307 = vrot.slane %v2152, 4
          %v2308 = vsel %vm2257, %v2305, %v2307
          %v2309 = vrot.slane %v2153, 4
          %v2310 = vsel %vm2257, %v2307, %v2309
          %v2311 = vrot.slane %v2154, 4
          %v2312 = vsel %vm2257, %v2309, %v2311
          %v2313 = vrot.slane %v2155, 4
          %v2314 = vsel %vm2257, %v2311, %v2313
          %v2315 = vrot.slane %v2156, 4
          %v2316 = vsel %vm2257, %v2313, %v2315
          %v2317 = vrot.slane %v2157, 4
          %v2318 = vsel %vm2257, %v2315, %v2317
          %v2319 = vrot.slane %v2158, 4
          %v2320 = vsel %vm2257, %v2317, %v2319
          %v2321 = vrot.slane %v2159, 4
          %v2322 = vsel %vm2257, %v2319, %v2321
          %v2323 = vrot.slane %v2160, 4
          %v2324 = vsel %vm2257, %v2321, %v2323
          %v2325 = vrot.slane %v2161, 4
          %v2326 = vsel %vm2257, %v2323, %v2325
          %v2327 = vrot.slane %v2162, 4
          %v2328 = vsel %vm2257, %v2325, %v2327
          %v2329 = vrot.slane %v2163, 4
          %v2330 = vsel %vm2257, %v2327, %v2329
          %v2331 = vrot.slane %v2164, 4
          %v2332 = vsel %vm2257, %v2329, %v2331
          %v2333 = vrot.slane %v2165, 4
          %v2334 = vsel %vm2257, %v2331, %v2333
          %v2335 = vrot.slane %v2166, 4
          %v2336 = vsel %vm2257, %v2333, %v2335
          %v2337 = vrot.slane %v2167, 4
          %v2338 = vsel %vm2257, %v2335, %v2337
          %v2339 = vrot.slane %v2168, 4
          %v2340 = vsel %vm2257, %v2337, %v2339
          %v2341 = vrot.slane %v2169, 4
          %v2342 = vsel %vm2257, %v2339, %v2341
          %v2343 = vrot.slane %v2170, 4
          %v2344 = vsel %vm2257, %v2341, %v2343
          %v2345 = vrot.slane %v2171, 4
          %v2346 = vsel %vm2257, %v2343, %v2345
          %v2347 = vrot.slane %v2172, 4
          %v2348 = vsel %vm2257, %v2345, %v2347
          %v2349 = vrot.slane %v2173, 4
          %v2350 = vsel %vm2257, %v2347, %v2349
          %v2351 = vrot.slane %v2174, 4
          %v2352 = vsel %vm2257, %v2349, %v2351
          %v2353 = vrot.slane %v2175, 4
          %v2354 = vsel %vm2257, %v2351, %v2353
          %v2355 = vrot.slane %v2176, 4
          %v2356 = vsel %vm2257, %v2353, %v2355
          %v2357 = vrot.slane %v2177, 4
          %v2358 = vsel %vm2257, %v2355, %v2357
          %v2359 = vrot.slane %v2178, 4
          %v2360 = vsel %vm2257, %v2357, %v2359
          %v2361 = vrot.slane %v2179, 4
          %v2362 = vsel %vm2257, %v2359, %v2361
          %v2363 = vrot.slane %v2180, 4
          %v2364 = vsel %vm2257, %v2361, %v2363
          %v2365 = vrot.slane %v2181, 4
          %v2366 = vsel %vm2257, %v2363, %v2365
          %v2367 = vrot.slane %v2182, 4
          %v2368 = vsel %vm2257, %v2365, %v2367
          %v2369 = vrot.slane %v2183, 4
          %v2370 = vsel %vm2257, %v2367, %v2369
          %v2371 = vrot.slane %v2184, 4
          %v2372 = vsel %vm2257, %v2369, %v2371
          %v2373 = vrot.slane %v2185, 4
          %v2374 = vsel %vm2257, %v2371, %v2373
          %v2375 = vrot.slane %v2186, 4
          %v2376 = vsel %vm2257, %v2373, %v2375
          %v2377 = vrot.slane %v2187, 4
          %v2378 = vsel %vm2257, %v2375, %v2377
          %v2379 = vrot.slane %v2188, 4
          %v2380 = vsel %vm2257, %v2377, %v2379
          %v2381 = vrot.slane %v2189, 4
          %v2382 = vsel %vm2257, %v2379, %v2381
          %v2383 = vrot.slane %v2190, 4
          %v2384 = vsel %vm2257, %v2381, %v2383
          %v2385 = vrot.slane %v2191, 4
          %v2386 = vsel %vm2257, %v2383, %v2385
          %v2452 = vadd.f32 %v2057, %v2258
          %v2453 = vadd.f32 %v2058, %v2260
          %v2454 = vadd.f32 %v2059, %v2262
          %v2455 = vadd.f32 %v2060, %v2264
          %v2456 = vadd.f32 %v2061, %v2266
          %v2457 = vadd.f32 %v2062, %v2268
          %v2458 = vadd.f32 %v2063, %v2270
          %v2459 = vadd.f32 %v2064, %v2272
          %v2460 = vadd.f32 %v2065, %v2274
          %v2461 = vadd.f32 %v2066, %v2276
          %v2462 = vadd.f32 %v2067, %v2278
          %v2463 = vadd.f32 %v2068, %v2280
          %v2464 = vadd.f32 %v2069, %v2282
          %v2465 = vadd.f32 %v2070, %v2284
          %v2466 = vadd.f32 %v2071, %v2286
          %v2467 = vadd.f32 %v2072, %v2288
          %v2468 = vadd.f32 %v2073, %v2290
          %v2469 = vadd.f32 %v2074, %v2292
          %v2470 = vadd.f32 %v2075, %v2294
          %v2471 = vadd.f32 %v2076, %v2296
          %v2472 = vadd.f32 %v2077, %v2298
          %v2473 = vadd.f32 %v2078, %v2300
          %v2474 = vadd.f32 %v2079, %v2302
          %v2475 = vadd.f32 %v2080, %v2304
          %v2476 = vadd.f32 %v2081, %v2306
          %v2477 = vadd.f32 %v2082, %v2308
          %v2478 = vadd.f32 %v2083, %v2310
          %v2479 = vadd.f32 %v2084, %v2312
          %v2480 = vadd.f32 %v2085, %v2314
          %v2481 = vadd.f32 %v2086, %v2316
          %v2482 = vadd.f32 %v2087, %v2318
          %v2483 = vadd.f32 %v2088, %v2320
          %v2484 = vadd.f32 %v2089, %v2322
          %v2485 = vadd.f32 %v2090, %v2324
          %v2486 = vadd.f32 %v2091, %v2326
          %v2487 = vadd.f32 %v2092, %v2328
          %v2488 = vadd.f32 %v2093, %v2330
          %v2489 = vadd.f32 %v2094, %v2332
          %v2490 = vadd.f32 %v2095, %v2334
          %v2491 = vadd.f32 %v2096, %v2336
          %v2492 = vadd.f32 %v2097, %v2338
          %v2493 = vadd.f32 %v2098, %v2340
          %v2494 = vadd.f32 %v2099, %v2342
          %v2495 = vadd.f32 %v2100, %v2344
          %v2496 = vadd.f32 %v2101, %v2346
          %v2497 = vadd.f32 %v2102, %v2348
          %v2498 = vadd.f32 %v2103, %v2350
          %v2499 = vadd.f32 %v2104, %v2352
          %v2500 = vadd.f32 %v2105, %v2354
          %v2501 = vadd.f32 %v2106, %v2356
          %v2502 = vadd.f32 %v2107, %v2358
          %v2503 = vadd.f32 %v2108, %v2360
          %v2504 = vadd.f32 %v2109, %v2362
          %v2505 = vadd.f32 %v2110, %v2364
          %v2506 = vadd.f32 %v2111, %v2366
          %v2507 = vadd.f32 %v2112, %v2368
          %v2508 = vadd.f32 %v2113, %v2370
          %v2509 = vadd.f32 %v2114, %v2372
          %v2510 = vadd.f32 %v2115, %v2374
          %v2511 = vadd.f32 %v2116, %v2376
          %v2512 = vadd.f32 %v2117, %v2378
          %v2513 = vadd.f32 %v2118, %v2380
          %v2514 = vadd.f32 %v2119, %v2382
          %v2515 = vadd.f32 %v2120, %v2384
          %v2516 = vadd.f32 %v2121, %v2386
          %v2517 = vld [vmem:[%s1 + $0x5] sm:$0x1]
          %v2518 = vlaneseq
          %v2519 = vshrl.u32 %v2518, 7
          %v2520 = vsub.s32 0, %v2519
          %v2521 = vrot.slane %v2517, %v2520
          %v2522 = vmul.f32 %v733, %v2521
          %v2523 = vmul.f32 %v734, %v2521
          %v2524 = vmul.f32 %v735, %v2521
          %v2525 = vmul.f32 %v736, %v2521
          %v2526 = vmul.f32 %v737, %v2521
          %v2527 = vmul.f32 %v738, %v2521
          %v2528 = vmul.f32 %v739, %v2521
          %v2529 = vmul.f32 %v740, %v2521
          %v2530 = vmul.f32 %v741, %v2521
          %v2531 = vmul.f32 %v742, %v2521
          %v2532 = vmul.f32 %v743, %v2521
          %v2533 = vmul.f32 %v744, %v2521
          %v2534 = vmul.f32 %v745, %v2521
          %v2535 = vmul.f32 %v746, %v2521
          %v2536 = vmul.f32 %v747, %v2521
          %v2537 = vmul.f32 %v748, %v2521
          %v2538 = vmul.f32 %v749, %v2521
          %v2539 = vmul.f32 %v750, %v2521
          %v2540 = vmul.f32 %v751, %v2521
          %v2541 = vmul.f32 %v752, %v2521
          %v2542 = vmul.f32 %v753, %v2521
          %v2543 = vmul.f32 %v754, %v2521
          %v2544 = vmul.f32 %v755, %v2521
          %v2545 = vmul.f32 %v756, %v2521
          %v2546 = vmul.f32 %v757, %v2521
          %v2547 = vmul.f32 %v758, %v2521
          %v2548 = vmul.f32 %v759, %v2521
          %v2549 = vmul.f32 %v760, %v2521
          %v2550 = vmul.f32 %v761, %v2521
          %v2551 = vmul.f32 %v762, %v2521
          %v2552 = vmul.f32 %v763, %v2521
          %v2553 = vmul.f32 %v764, %v2521
          %v2554 = vmul.f32 %v765, %v2521
          %v2555 = vmul.f32 %v766, %v2521
          %v2556 = vmul.f32 %v767, %v2521
          %v2557 = vmul.f32 %v768, %v2521
          %v2558 = vmul.f32 %v769, %v2521
          %v2559 = vmul.f32 %v770, %v2521
          %v2560 = vmul.f32 %v771, %v2521
          %v2561 = vmul.f32 %v772, %v2521
          %v2562 = vmul.f32 %v773, %v2521
          %v2563 = vmul.f32 %v774, %v2521
          %v2564 = vmul.f32 %v775, %v2521
          %v2565 = vmul.f32 %v776, %v2521
          %v2566 = vmul.f32 %v777, %v2521
          %v2567 = vmul.f32 %v778, %v2521
          %v2568 = vmul.f32 %v779, %v2521
          %v2569 = vmul.f32 %v780, %v2521
          %v2570 = vmul.f32 %v781, %v2521
          %v2571 = vmul.f32 %v782, %v2521
          %v2572 = vmul.f32 %v783, %v2521
          %v2573 = vmul.f32 %v784, %v2521
          %v2574 = vmul.f32 %v785, %v2521
          %v2575 = vmul.f32 %v786, %v2521
          %v2576 = vmul.f32 %v787, %v2521
          %v2577 = vmul.f32 %v788, %v2521
          %v2578 = vmul.f32 %v789, %v2521
          %v2579 = vmul.f32 %v790, %v2521
          %v2580 = vmul.f32 %v791, %v2521
          %v2581 = vmul.f32 %v792, %v2521
          %v2582 = vmul.f32 %v793, %v2521
          %v2583 = vmul.f32 %v794, %v2521
          %v2584 = vmul.f32 %v795, %v2521
          %v2585 = vmul.f32 %v796, %v2521
          %v2586 = vmul.f32 %v797, %v2521
          %vm2652 = vcmask 1042432
          %v2653 = vrot.slane %v2522, 5
          %v2654 = vrot.slane %v2523, 5
          %v2655 = vsel %vm2652, %v2653, %v2654
          %v2656 = vrot.slane %v2524, 5
          %v2657 = vsel %vm2652, %v2654, %v2656
          %v2658 = vrot.slane %v2525, 5
          %v2659 = vsel %vm2652, %v2656, %v2658
          %v2660 = vrot.slane %v2526, 5
          %v2661 = vsel %vm2652, %v2658, %v2660
          %v2662 = vrot.slane %v2527, 5
          %v2663 = vsel %vm2652, %v2660, %v2662
          %v2664 = vrot.slane %v2528, 5
          %v2665 = vsel %vm2652, %v2662, %v2664
          %v2666 = vrot.slane %v2529, 5
          %v2667 = vsel %vm2652, %v2664, %v2666
          %v2668 = vrot.slane %v2530, 5
          %v2669 = vsel %vm2652, %v2666, %v2668
          %v2670 = vrot.slane %v2531, 5
          %v2671 = vsel %vm2652, %v2668, %v2670
          %v2672 = vrot.slane %v2532, 5
          %v2673 = vsel %vm2652, %v2670, %v2672
          %v2674 = vrot.slane %v2533, 5
          %v2675 = vsel %vm2652, %v2672, %v2674
          %v2676 = vrot.slane %v2534, 5
          %v2677 = vsel %vm2652, %v2674, %v2676
          %v2678 = vrot.slane %v2535, 5
          %v2679 = vsel %vm2652, %v2676, %v2678
          %v2680 = vrot.slane %v2536, 5
          %v2681 = vsel %vm2652, %v2678, %v2680
          %v2682 = vrot.slane %v2537, 5
          %v2683 = vsel %vm2652, %v2680, %v2682
          %v2684 = vrot.slane %v2538, 5
          %v2685 = vsel %vm2652, %v2682, %v2684
          %v2686 = vrot.slane %v2539, 5
          %v2687 = vsel %vm2652, %v2684, %v2686
          %v2688 = vrot.slane %v2540, 5
          %v2689 = vsel %vm2652, %v2686, %v2688
          %v2690 = vrot.slane %v2541, 5
          %v2691 = vsel %vm2652, %v2688, %v2690
          %v2692 = vrot.slane %v2542, 5
          %v2693 = vsel %vm2652, %v2690, %v2692
          %v2694 = vrot.slane %v2543, 5
          %v2695 = vsel %vm2652, %v2692, %v2694
          %v2696 = vrot.slane %v2544, 5
          %v2697 = vsel %vm2652, %v2694, %v2696
          %v2698 = vrot.slane %v2545, 5
          %v2699 = vsel %vm2652, %v2696, %v2698
          %v2700 = vrot.slane %v2546, 5
          %v2701 = vsel %vm2652, %v2698, %v2700
          %v2702 = vrot.slane %v2547, 5
          %v2703 = vsel %vm2652, %v2700, %v2702
          %v2704 = vrot.slane %v2548, 5
          %v2705 = vsel %vm2652, %v2702, %v2704
          %v2706 = vrot.slane %v2549, 5
          %v2707 = vsel %vm2652, %v2704, %v2706
          %v2708 = vrot.slane %v2550, 5
          %v2709 = vsel %vm2652, %v2706, %v2708
          %v2710 = vrot.slane %v2551, 5
          %v2711 = vsel %vm2652, %v2708, %v2710
          %v2712 = vrot.slane %v2552, 5
          %v2713 = vsel %vm2652, %v2710, %v2712
          %v2714 = vrot.slane %v2553, 5
          %v2715 = vsel %vm2652, %v2712, %v2714
          %v2716 = vrot.slane %v2554, 5
          %v2717 = vsel %vm2652, %v2714, %v2716
          %v2718 = vrot.slane %v2555, 5
          %v2719 = vsel %vm2652, %v2716, %v2718
          %v2720 = vrot.slane %v2556, 5
          %v2721 = vsel %vm2652, %v2718, %v2720
          %v2722 = vrot.slane %v2557, 5
          %v2723 = vsel %vm2652, %v2720, %v2722
          %v2724 = vrot.slane %v2558, 5
          %v2725 = vsel %vm2652, %v2722, %v2724
          %v2726 = vrot.slane %v2559, 5
          %v2727 = vsel %vm2652, %v2724, %v2726
          %v2728 = vrot.slane %v2560, 5
          %v2729 = vsel %vm2652, %v2726, %v2728
          %v2730 = vrot.slane %v2561, 5
          %v2731 = vsel %vm2652, %v2728, %v2730
          %v2732 = vrot.slane %v2562, 5
          %v2733 = vsel %vm2652, %v2730, %v2732
          %v2734 = vrot.slane %v2563, 5
          %v2735 = vsel %vm2652, %v2732, %v2734
          %v2736 = vrot.slane %v2564, 5
          %v2737 = vsel %vm2652, %v2734, %v2736
          %v2738 = vrot.slane %v2565, 5
          %v2739 = vsel %vm2652, %v2736, %v2738
          %v2740 = vrot.slane %v2566, 5
          %v2741 = vsel %vm2652, %v2738, %v2740
          %v2742 = vrot.slane %v2567, 5
          %v2743 = vsel %vm2652, %v2740, %v2742
          %v2744 = vrot.slane %v2568, 5
          %v2745 = vsel %vm2652, %v2742, %v2744
          %v2746 = vrot.slane %v2569, 5
          %v2747 = vsel %vm2652, %v2744, %v2746
          %v2748 = vrot.slane %v2570, 5
          %v2749 = vsel %vm2652, %v2746, %v2748
          %v2750 = vrot.slane %v2571, 5
          %v2751 = vsel %vm2652, %v2748, %v2750
          %v2752 = vrot.slane %v2572, 5
          %v2753 = vsel %vm2652, %v2750, %v2752
          %v2754 = vrot.slane %v2573, 5
          %v2755 = vsel %vm2652, %v2752, %v2754
          %v2756 = vrot.slane %v2574, 5
          %v2757 = vsel %vm2652, %v2754, %v2756
          %v2758 = vrot.slane %v2575, 5
          %v2759 = vsel %vm2652, %v2756, %v2758
          %v2760 = vrot.slane %v2576, 5
          %v2761 = vsel %vm2652, %v2758, %v2760
          %v2762 = vrot.slane %v2577, 5
          %v2763 = vsel %vm2652, %v2760, %v2762
          %v2764 = vrot.slane %v2578, 5
          %v2765 = vsel %vm2652, %v2762, %v2764
          %v2766 = vrot.slane %v2579, 5
          %v2767 = vsel %vm2652, %v2764, %v2766
          %v2768 = vrot.slane %v2580, 5
          %v2769 = vsel %vm2652, %v2766, %v2768
          %v2770 = vrot.slane %v2581, 5
          %v2771 = vsel %vm2652, %v2768, %v2770
          %v2772 = vrot.slane %v2582, 5
          %v2773 = vsel %vm2652, %v2770, %v2772
          %v2774 = vrot.slane %v2583, 5
          %v2775 = vsel %vm2652, %v2772, %v2774
          %v2776 = vrot.slane %v2584, 5
          %v2777 = vsel %vm2652, %v2774, %v2776
          %v2778 = vrot.slane %v2585, 5
          %v2779 = vsel %vm2652, %v2776, %v2778
          %v2780 = vrot.slane %v2586, 5
          %v2781 = vsel %vm2652, %v2778, %v2780
          %v2847 = vadd.f32 %v2452, %v2653
          %v2848 = vadd.f32 %v2453, %v2655
          %v2849 = vadd.f32 %v2454, %v2657
          %v2850 = vadd.f32 %v2455, %v2659
          %v2851 = vadd.f32 %v2456, %v2661
          %v2852 = vadd.f32 %v2457, %v2663
          %v2853 = vadd.f32 %v2458, %v2665
          %v2854 = vadd.f32 %v2459, %v2667
          %v2855 = vadd.f32 %v2460, %v2669
          %v2856 = vadd.f32 %v2461, %v2671
          %v2857 = vadd.f32 %v2462, %v2673
          %v2858 = vadd.f32 %v2463, %v2675
          %v2859 = vadd.f32 %v2464, %v2677
          %v2860 = vadd.f32 %v2465, %v2679
          %v2861 = vadd.f32 %v2466, %v2681
          %v2862 = vadd.f32 %v2467, %v2683
          %v2863 = vadd.f32 %v2468, %v2685
          %v2864 = vadd.f32 %v2469, %v2687
          %v2865 = vadd.f32 %v2470, %v2689
          %v2866 = vadd.f32 %v2471, %v2691
          %v2867 = vadd.f32 %v2472, %v2693
          %v2868 = vadd.f32 %v2473, %v2695
          %v2869 = vadd.f32 %v2474, %v2697
          %v2870 = vadd.f32 %v2475, %v2699
          %v2871 = vadd.f32 %v2476, %v2701
          %v2872 = vadd.f32 %v2477, %v2703
          %v2873 = vadd.f32 %v2478, %v2705
          %v2874 = vadd.f32 %v2479, %v2707
          %v2875 = vadd.f32 %v2480, %v2709
          %v2876 = vadd.f32 %v2481, %v2711
          %v2877 = vadd.f32 %v2482, %v2713
          %v2878 = vadd.f32 %v2483, %v2715
          %v2879 = vadd.f32 %v2484, %v2717
          %v2880 = vadd.f32 %v2485, %v2719
          %v2881 = vadd.f32 %v2486, %v2721
          %v2882 = vadd.f32 %v2487, %v2723
          %v2883 = vadd.f32 %v2488, %v2725
          %v2884 = vadd.f32 %v2489, %v2727
          %v2885 = vadd.f32 %v2490, %v2729
          %v2886 = vadd.f32 %v2491, %v2731
          %v2887 = vadd.f32 %v2492, %v2733
          %v2888 = vadd.f32 %v2493, %v2735
          %v2889 = vadd.f32 %v2494, %v2737
          %v2890 = vadd.f32 %v2495, %v2739
          %v2891 = vadd.f32 %v2496, %v2741
          %v2892 = vadd.f32 %v2497, %v2743
          %v2893 = vadd.f32 %v2498, %v2745
          %v2894 = vadd.f32 %v2499, %v2747
          %v2895 = vadd.f32 %v2500, %v2749
          %v2896 = vadd.f32 %v2501, %v2751
          %v2897 = vadd.f32 %v2502, %v2753
          %v2898 = vadd.f32 %v2503, %v2755
          %v2899 = vadd.f32 %v2504, %v2757
          %v2900 = vadd.f32 %v2505, %v2759
          %v2901 = vadd.f32 %v2506, %v2761
          %v2902 = vadd.f32 %v2507, %v2763
          %v2903 = vadd.f32 %v2508, %v2765
          %v2904 = vadd.f32 %v2509, %v2767
          %v2905 = vadd.f32 %v2510, %v2769
          %v2906 = vadd.f32 %v2511, %v2771
          %v2907 = vadd.f32 %v2512, %v2773
          %v2908 = vadd.f32 %v2513, %v2775
          %v2909 = vadd.f32 %v2514, %v2777
          %v2910 = vadd.f32 %v2515, %v2779
          %v2911 = vadd.f32 %v2516, %v2781
          %v2912 = vld [vmem:[%s1 + $0x6] sm:$0x1]
          %v2913 = vlaneseq
          %v2914 = vshrl.u32 %v2913, 7
          %v2915 = vsub.s32 0, %v2914
          %v2916 = vrot.slane %v2912, %v2915
          %v2917 = vmul.f32 %v733, %v2916
          %v2918 = vmul.f32 %v734, %v2916
          %v2919 = vmul.f32 %v735, %v2916
          %v2920 = vmul.f32 %v736, %v2916
          %v2921 = vmul.f32 %v737, %v2916
          %v2922 = vmul.f32 %v738, %v2916
          %v2923 = vmul.f32 %v739, %v2916
          %v2924 = vmul.f32 %v740, %v2916
          %v2925 = vmul.f32 %v741, %v2916
          %v2926 = vmul.f32 %v742, %v2916
          %v2927 = vmul.f32 %v743, %v2916
          %v2928 = vmul.f32 %v744, %v2916
          %v2929 = vmul.f32 %v745, %v2916
          %v2930 = vmul.f32 %v746, %v2916
          %v2931 = vmul.f32 %v747, %v2916
          %v2932 = vmul.f32 %v748, %v2916
          %v2933 = vmul.f32 %v749, %v2916
          %v2934 = vmul.f32 %v750, %v2916
          %v2935 = vmul.f32 %v751, %v2916
          %v2936 = vmul.f32 %v752, %v2916
          %v2937 = vmul.f32 %v753, %v2916
          %v2938 = vmul.f32 %v754, %v2916
          %v2939 = vmul.f32 %v755, %v2916
          %v2940 = vmul.f32 %v756, %v2916
          %v2941 = vmul.f32 %v757, %v2916
          %v2942 = vmul.f32 %v758, %v2916
          %v2943 = vmul.f32 %v759, %v2916
          %v2944 = vmul.f32 %v760, %v2916
          %v2945 = vmul.f32 %v761, %v2916
          %v2946 = vmul.f32 %v762, %v2916
          %v2947 = vmul.f32 %v763, %v2916
          %v2948 = vmul.f32 %v764, %v2916
          %v2949 = vmul.f32 %v765, %v2916
          %v2950 = vmul.f32 %v766, %v2916
          %v2951 = vmul.f32 %v767, %v2916
          %v2952 = vmul.f32 %v768, %v2916
          %v2953 = vmul.f32 %v769, %v2916
          %v2954 = vmul.f32 %v770, %v2916
          %v2955 = vmul.f32 %v771, %v2916
          %v2956 = vmul.f32 %v772, %v2916
          %v2957 = vmul.f32 %v773, %v2916
          %v2958 = vmul.f32 %v774, %v2916
          %v2959 = vmul.f32 %v775, %v2916
          %v2960 = vmul.f32 %v776, %v2916
          %v2961 = vmul.f32 %v777, %v2916
          %v2962 = vmul.f32 %v778, %v2916
          %v2963 = vmul.f32 %v779, %v2916
          %v2964 = vmul.f32 %v780, %v2916
          %v2965 = vmul.f32 %v781, %v2916
          %v2966 = vmul.f32 %v782, %v2916
          %v2967 = vmul.f32 %v783, %v2916
          %v2968 = vmul.f32 %v784, %v2916
          %v2969 = vmul.f32 %v785, %v2916
          %v2970 = vmul.f32 %v786, %v2916
          %v2971 = vmul.f32 %v787, %v2916
          %v2972 = vmul.f32 %v788, %v2916
          %v2973 = vmul.f32 %v789, %v2916
          %v2974 = vmul.f32 %v790, %v2916
          %v2975 = vmul.f32 %v791, %v2916
          %v2976 = vmul.f32 %v792, %v2916
          %v2977 = vmul.f32 %v793, %v2916
          %v2978 = vmul.f32 %v794, %v2916
          %v2979 = vmul.f32 %v795, %v2916
          %v2980 = vmul.f32 %v796, %v2916
          %v2981 = vmul.f32 %v797, %v2916
          %vm3047 = vcmask 1041408
          %v3048 = vrot.slane %v2917, 6
          %v3049 = vrot.slane %v2918, 6
          %v3050 = vsel %vm3047, %v3048, %v3049
          %v3051 = vrot.slane %v2919, 6
          %v3052 = vsel %vm3047, %v3049, %v3051
          %v3053 = vrot.slane %v2920, 6
          %v3054 = vsel %vm3047, %v3051, %v3053
          %v3055 = vrot.slane %v2921, 6
          %v3056 = vsel %vm3047, %v3053, %v3055
          %v3057 = vrot.slane %v2922, 6
          %v3058 = vsel %vm3047, %v3055, %v3057
          %v3059 = vrot.slane %v2923, 6
          %v3060 = vsel %vm3047, %v3057, %v3059
          %v3061 = vrot.slane %v2924, 6
          %v3062 = vsel %vm3047, %v3059, %v3061
          %v3063 = vrot.slane %v2925, 6
          %v3064 = vsel %vm3047, %v3061, %v3063
          %v3065 = vrot.slane %v2926, 6
          %v3066 = vsel %vm3047, %v3063, %v3065
          %v3067 = vrot.slane %v2927, 6
          %v3068 = vsel %vm3047, %v3065, %v3067
          %v3069 = vrot.slane %v2928, 6
          %v3070 = vsel %vm3047, %v3067, %v3069
          %v3071 = vrot.slane %v2929, 6
          %v3072 = vsel %vm3047, %v3069, %v3071
          %v3073 = vrot.slane %v2930, 6
          %v3074 = vsel %vm3047, %v3071, %v3073
          %v3075 = vrot.slane %v2931, 6
          %v3076 = vsel %vm3047, %v3073, %v3075
          %v3077 = vrot.slane %v2932, 6
          %v3078 = vsel %vm3047, %v3075, %v3077
          %v3079 = vrot.slane %v2933, 6
          %v3080 = vsel %vm3047, %v3077, %v3079
          %v3081 = vrot.slane %v2934, 6
          %v3082 = vsel %vm3047, %v3079, %v3081
          %v3083 = vrot.slane %v2935, 6
          %v3084 = vsel %vm3047, %v3081, %v3083
          %v3085 = vrot.slane %v2936, 6
          %v3086 = vsel %vm3047, %v3083, %v3085
          %v3087 = vrot.slane %v2937, 6
          %v3088 = vsel %vm3047, %v3085, %v3087
          %v3089 = vrot.slane %v2938, 6
          %v3090 = vsel %vm3047, %v3087, %v3089
          %v3091 = vrot.slane %v2939, 6
          %v3092 = vsel %vm3047, %v3089, %v3091
          %v3093 = vrot.slane %v2940, 6
          %v3094 = vsel %vm3047, %v3091, %v3093
          %v3095 = vrot.slane %v2941, 6
          %v3096 = vsel %vm3047, %v3093, %v3095
          %v3097 = vrot.slane %v2942, 6
          %v3098 = vsel %vm3047, %v3095, %v3097
          %v3099 = vrot.slane %v2943, 6
          %v3100 = vsel %vm3047, %v3097, %v3099
          %v3101 = vrot.slane %v2944, 6
          %v3102 = vsel %vm3047, %v3099, %v3101
          %v3103 = vrot.slane %v2945, 6
          %v3104 = vsel %vm3047, %v3101, %v3103
          %v3105 = vrot.slane %v2946, 6
          %v3106 = vsel %vm3047, %v3103, %v3105
          %v3107 = vrot.slane %v2947, 6
          %v3108 = vsel %vm3047, %v3105, %v3107
          %v3109 = vrot.slane %v2948, 6
          %v3110 = vsel %vm3047, %v3107, %v3109
          %v3111 = vrot.slane %v2949, 6
          %v3112 = vsel %vm3047, %v3109, %v3111
          %v3113 = vrot.slane %v2950, 6
          %v3114 = vsel %vm3047, %v3111, %v3113
          %v3115 = vrot.slane %v2951, 6
          %v3116 = vsel %vm3047, %v3113, %v3115
          %v3117 = vrot.slane %v2952, 6
          %v3118 = vsel %vm3047, %v3115, %v3117
          %v3119 = vrot.slane %v2953, 6
          %v3120 = vsel %vm3047, %v3117, %v3119
          %v3121 = vrot.slane %v2954, 6
          %v3122 = vsel %vm3047, %v3119, %v3121
          %v3123 = vrot.slane %v2955, 6
          %v3124 = vsel %vm3047, %v3121, %v3123
          %v3125 = vrot.slane %v2956, 6
          %v3126 = vsel %vm3047, %v3123, %v3125
          %v3127 = vrot.slane %v2957, 6
          %v3128 = vsel %vm3047, %v3125, %v3127
          %v3129 = vrot.slane %v2958, 6
          %v3130 = vsel %vm3047, %v3127, %v3129
          %v3131 = vrot.slane %v2959, 6
          %v3132 = vsel %vm3047, %v3129, %v3131
          %v3133 = vrot.slane %v2960, 6
          %v3134 = vsel %vm3047, %v3131, %v3133
          %v3135 = vrot.slane %v2961, 6
          %v3136 = vsel %vm3047, %v3133, %v3135
          %v3137 = vrot.slane %v2962, 6
          %v3138 = vsel %vm3047, %v3135, %v3137
          %v3139 = vrot.slane %v2963, 6
          %v3140 = vsel %vm3047, %v3137, %v3139
          %v3141 = vrot.slane %v2964, 6
          %v3142 = vsel %vm3047, %v3139, %v3141
          %v3143 = vrot.slane %v2965, 6
          %v3144 = vsel %vm3047, %v3141, %v3143
          %v3145 = vrot.slane %v2966, 6
          %v3146 = vsel %vm3047, %v3143, %v3145
          %v3147 = vrot.slane %v2967, 6
          %v3148 = vsel %vm3047, %v3145, %v3147
          %v3149 = vrot.slane %v2968, 6
          %v3150 = vsel %vm3047, %v3147, %v3149
          %v3151 = vrot.slane %v2969, 6
          %v3152 = vsel %vm3047, %v3149, %v3151
          %v3153 = vrot.slane %v2970, 6
          %v3154 = vsel %vm3047, %v3151, %v3153
          %v3155 = vrot.slane %v2971, 6
          %v3156 = vsel %vm3047, %v3153, %v3155
          %v3157 = vrot.slane %v2972, 6
          %v3158 = vsel %vm3047, %v3155, %v3157
          %v3159 = vrot.slane %v2973, 6
          %v3160 = vsel %vm3047, %v3157, %v3159
          %v3161 = vrot.slane %v2974, 6
          %v3162 = vsel %vm3047, %v3159, %v3161
          %v3163 = vrot.slane %v2975, 6
          %v3164 = vsel %vm3047, %v3161, %v3163
          %v3165 = vrot.slane %v2976, 6
          %v3166 = vsel %vm3047, %v3163, %v3165
          %v3167 = vrot.slane %v2977, 6
          %v3168 = vsel %vm3047, %v3165, %v3167
          %v3169 = vrot.slane %v2978, 6
          %v3170 = vsel %vm3047, %v3167, %v3169
          %v3171 = vrot.slane %v2979, 6
          %v3172 = vsel %vm3047, %v3169, %v3171
          %v3173 = vrot.slane %v2980, 6
          %v3174 = vsel %vm3047, %v3171, %v3173
          %v3175 = vrot.slane %v2981, 6
          %v3176 = vsel %vm3047, %v3173, %v3175
          %v3242 = vadd.f32 %v2847, %v3048
          %v3243 = vadd.f32 %v2848, %v3050
          %v3244 = vadd.f32 %v2849, %v3052
          %v3245 = vadd.f32 %v2850, %v3054
          %v3246 = vadd.f32 %v2851, %v3056
          %v3247 = vadd.f32 %v2852, %v3058
          %v3248 = vadd.f32 %v2853, %v3060
          %v3249 = vadd.f32 %v2854, %v3062
          %v3250 = vadd.f32 %v2855, %v3064
          %v3251 = vadd.f32 %v2856, %v3066
          %v3252 = vadd.f32 %v2857, %v3068
          %v3253 = vadd.f32 %v2858, %v3070
          %v3254 = vadd.f32 %v2859, %v3072
          %v3255 = vadd.f32 %v2860, %v3074
          %v3256 = vadd.f32 %v2861, %v3076
          %v3257 = vadd.f32 %v2862, %v3078
          %v3258 = vadd.f32 %v2863, %v3080
          %v3259 = vadd.f32 %v2864, %v3082
          %v3260 = vadd.f32 %v2865, %v3084
          %v3261 = vadd.f32 %v2866, %v3086
          %v3262 = vadd.f32 %v2867, %v3088
          %v3263 = vadd.f32 %v2868, %v3090
          %v3264 = vadd.f32 %v2869, %v3092
          %v3265 = vadd.f32 %v2870, %v3094
          %v3266 = vadd.f32 %v2871, %v3096
          %v3267 = vadd.f32 %v2872, %v3098
          %v3268 = vadd.f32 %v2873, %v3100
          %v3269 = vadd.f32 %v2874, %v3102
          %v3270 = vadd.f32 %v2875, %v3104
          %v3271 = vadd.f32 %v2876, %v3106
          %v3272 = vadd.f32 %v2877, %v3108
          %v3273 = vadd.f32 %v2878, %v3110
          %v3274 = vadd.f32 %v2879, %v3112
          %v3275 = vadd.f32 %v2880, %v3114
          %v3276 = vadd.f32 %v2881, %v3116
          %v3277 = vadd.f32 %v2882, %v3118
          %v3278 = vadd.f32 %v2883, %v3120
          %v3279 = vadd.f32 %v2884, %v3122
          %v3280 = vadd.f32 %v2885, %v3124
          %v3281 = vadd.f32 %v2886, %v3126
          %v3282 = vadd.f32 %v2887, %v3128
          %v3283 = vadd.f32 %v2888, %v3130
          %v3284 = vadd.f32 %v2889, %v3132
          %v3285 = vadd.f32 %v2890, %v3134
          %v3286 = vadd.f32 %v2891, %v3136
          %v3287 = vadd.f32 %v2892, %v3138
          %v3288 = vadd.f32 %v2893, %v3140
          %v3289 = vadd.f32 %v2894, %v3142
          %v3290 = vadd.f32 %v2895, %v3144
          %v3291 = vadd.f32 %v2896, %v3146
          %v3292 = vadd.f32 %v2897, %v3148
          %v3293 = vadd.f32 %v2898, %v3150
          %v3294 = vadd.f32 %v2899, %v3152
          %v3295 = vadd.f32 %v2900, %v3154
          %v3296 = vadd.f32 %v2901, %v3156
          %v3297 = vadd.f32 %v2902, %v3158
          %v3298 = vadd.f32 %v2903, %v3160
          %v3299 = vadd.f32 %v2904, %v3162
          %v3300 = vadd.f32 %v2905, %v3164
          %v3301 = vadd.f32 %v2906, %v3166
          %v3302 = vadd.f32 %v2907, %v3168
          %v3303 = vadd.f32 %v2908, %v3170
          %v3304 = vadd.f32 %v2909, %v3172
          %v3305 = vadd.f32 %v2910, %v3174
          %v3306 = vadd.f32 %v2911, %v3176
          %vm3307 = vcmask 1047557
          %v3308 = vsel %vm3307, %v3242, 0.0
          %3309 = vadd.xlane.f32.xlu0 %v3308
          %v3310 = vpop.xlane.xlu0 %3309
          %3311 = vadd.xlane.f32.xlu0 %v3243
          %v3312 = vpop.xlane.xlu0 %3311
          %3313 = vadd.xlane.f32.xlu0 %v3244
          %v3314 = vpop.xlane.xlu0 %3313
          %3315 = vadd.xlane.f32.xlu0 %v3245
          %v3316 = vpop.xlane.xlu0 %3315
          %3317 = vadd.xlane.f32.xlu0 %v3246
          %v3318 = vpop.xlane.xlu0 %3317
          %3319 = vadd.xlane.f32.xlu0 %v3247
          %v3320 = vpop.xlane.xlu0 %3319
          %3321 = vadd.xlane.f32.xlu0 %v3248
          %v3322 = vpop.xlane.xlu0 %3321
          %3323 = vadd.xlane.f32.xlu0 %v3249
          %v3324 = vpop.xlane.xlu0 %3323
          %3325 = vadd.xlane.f32.xlu0 %v3250
          %v3326 = vpop.xlane.xlu0 %3325
          %3327 = vadd.xlane.f32.xlu0 %v3251
          %v3328 = vpop.xlane.xlu0 %3327
          %3329 = vadd.xlane.f32.xlu0 %v3252
          %v3330 = vpop.xlane.xlu0 %3329
          %3331 = vadd.xlane.f32.xlu0 %v3253
          %v3332 = vpop.xlane.xlu0 %3331
          %3333 = vadd.xlane.f32.xlu0 %v3254
          %v3334 = vpop.xlane.xlu0 %3333
          %3335 = vadd.xlane.f32.xlu0 %v3255
          %v3336 = vpop.xlane.xlu0 %3335
          %3337 = vadd.xlane.f32.xlu0 %v3256
          %v3338 = vpop.xlane.xlu0 %3337
          %3339 = vadd.xlane.f32.xlu0 %v3257
          %v3340 = vpop.xlane.xlu0 %3339
          %3341 = vadd.xlane.f32.xlu0 %v3258
          %v3342 = vpop.xlane.xlu0 %3341
          %3343 = vadd.xlane.f32.xlu0 %v3259
          %v3344 = vpop.xlane.xlu0 %3343
          %3345 = vadd.xlane.f32.xlu0 %v3260
          %v3346 = vpop.xlane.xlu0 %3345
          %3347 = vadd.xlane.f32.xlu0 %v3261
          %v3348 = vpop.xlane.xlu0 %3347
          %3349 = vadd.xlane.f32.xlu0 %v3262
          %v3350 = vpop.xlane.xlu0 %3349
          %3351 = vadd.xlane.f32.xlu0 %v3263
          %v3352 = vpop.xlane.xlu0 %3351
          %3353 = vadd.xlane.f32.xlu0 %v3264
          %v3354 = vpop.xlane.xlu0 %3353
          %3355 = vadd.xlane.f32.xlu0 %v3265
          %v3356 = vpop.xlane.xlu0 %3355
          %3357 = vadd.xlane.f32.xlu0 %v3266
          %v3358 = vpop.xlane.xlu0 %3357
          %3359 = vadd.xlane.f32.xlu0 %v3267
          %v3360 = vpop.xlane.xlu0 %3359
          %3361 = vadd.xlane.f32.xlu0 %v3268
          %v3362 = vpop.xlane.xlu0 %3361
          %3363 = vadd.xlane.f32.xlu0 %v3269
          %v3364 = vpop.xlane.xlu0 %3363
          %3365 = vadd.xlane.f32.xlu0 %v3270
          %v3366 = vpop.xlane.xlu0 %3365
          %3367 = vadd.xlane.f32.xlu0 %v3271
          %v3368 = vpop.xlane.xlu0 %3367
          %3369 = vadd.xlane.f32.xlu0 %v3272
          %v3370 = vpop.xlane.xlu0 %3369
          %3371 = vadd.xlane.f32.xlu0 %v3273
          %v3372 = vpop.xlane.xlu0 %3371
          %3373 = vadd.xlane.f32.xlu0 %v3274
          %v3374 = vpop.xlane.xlu0 %3373
          %3375 = vadd.xlane.f32.xlu0 %v3275
          %v3376 = vpop.xlane.xlu0 %3375
          %3377 = vadd.xlane.f32.xlu0 %v3276
          %v3378 = vpop.xlane.xlu0 %3377
          %3379 = vadd.xlane.f32.xlu0 %v3277
          %v3380 = vpop.xlane.xlu0 %3379
          %3381 = vadd.xlane.f32.xlu0 %v3278
          %v3382 = vpop.xlane.xlu0 %3381
          %3383 = vadd.xlane.f32.xlu0 %v3279
          %v3384 = vpop.xlane.xlu0 %3383
          %3385 = vadd.xlane.f32.xlu0 %v3280
          %v3386 = vpop.xlane.xlu0 %3385
          %3387 = vadd.xlane.f32.xlu0 %v3281
          %v3388 = vpop.xlane.xlu0 %3387
          %3389 = vadd.xlane.f32.xlu0 %v3282
          %v3390 = vpop.xlane.xlu0 %3389
          %3391 = vadd.xlane.f32.xlu0 %v3283
          %v3392 = vpop.xlane.xlu0 %3391
          %3393 = vadd.xlane.f32.xlu0 %v3284
          %v3394 = vpop.xlane.xlu0 %3393
          %3395 = vadd.xlane.f32.xlu0 %v3285
          %v3396 = vpop.xlane.xlu0 %3395
          %3397 = vadd.xlane.f32.xlu0 %v3286
          %v3398 = vpop.xlane.xlu0 %3397
          %3399 = vadd.xlane.f32.xlu0 %v3287
          %v3400 = vpop.xlane.xlu0 %3399
          %3401 = vadd.xlane.f32.xlu0 %v3288
          %v3402 = vpop.xlane.xlu0 %3401
          %3403 = vadd.xlane.f32.xlu0 %v3289
          %v3404 = vpop.xlane.xlu0 %3403
          %3405 = vadd.xlane.f32.xlu0 %v3290
          %v3406 = vpop.xlane.xlu0 %3405
          %3407 = vadd.xlane.f32.xlu0 %v3291
          %v3408 = vpop.xlane.xlu0 %3407
          %3409 = vadd.xlane.f32.xlu0 %v3292
          %v3410 = vpop.xlane.xlu0 %3409
          %3411 = vadd.xlane.f32.xlu0 %v3293
          %v3412 = vpop.xlane.xlu0 %3411
          %3413 = vadd.xlane.f32.xlu0 %v3294
          %v3414 = vpop.xlane.xlu0 %3413
          %3415 = vadd.xlane.f32.xlu0 %v3295
          %v3416 = vpop.xlane.xlu0 %3415
          %3417 = vadd.xlane.f32.xlu0 %v3296
          %v3418 = vpop.xlane.xlu0 %3417
          %3419 = vadd.xlane.f32.xlu0 %v3297
          %v3420 = vpop.xlane.xlu0 %3419
          %3421 = vadd.xlane.f32.xlu0 %v3298
          %v3422 = vpop.xlane.xlu0 %3421
          %3423 = vadd.xlane.f32.xlu0 %v3299
          %v3424 = vpop.xlane.xlu0 %3423
          %3425 = vadd.xlane.f32.xlu0 %v3300
          %v3426 = vpop.xlane.xlu0 %3425
          %3427 = vadd.xlane.f32.xlu0 %v3301
          %v3428 = vpop.xlane.xlu0 %3427
          %3429 = vadd.xlane.f32.xlu0 %v3302
          %v3430 = vpop.xlane.xlu0 %3429
          %3431 = vadd.xlane.f32.xlu0 %v3303
          %v3432 = vpop.xlane.xlu0 %3431
          %3433 = vadd.xlane.f32.xlu0 %v3304
          %v3434 = vpop.xlane.xlu0 %3433
          %3435 = vadd.xlane.f32.xlu0 %v3305
          %v3436 = vpop.xlane.xlu0 %3435
          %v3437 = vsel %vm1864, %v3306, 0.0
          %3438 = vadd.xlane.f32.xlu0 %v3437
          %v3439 = vpop.xlane.xlu0 %3438
          %v3440 = vrcp.pop 128.0
          %v3441 = vmul.f32 %v3310, %v3440
          %v3442 = vmul.f32 %v3312, %v3440
          %v3443 = vmul.f32 %v3314, %v3440
          %v3444 = vmul.f32 %v3316, %v3440
          %v3445 = vmul.f32 %v3318, %v3440
          %v3446 = vmul.f32 %v3320, %v3440
          %v3447 = vmul.f32 %v3322, %v3440
          %v3448 = vmul.f32 %v3324, %v3440
          %v3449 = vmul.f32 %v3326, %v3440
          %v3450 = vmul.f32 %v3328, %v3440
          %v3451 = vmul.f32 %v3330, %v3440
          %v3452 = vmul.f32 %v3332, %v3440
          %v3453 = vmul.f32 %v3334, %v3440
          %v3454 = vmul.f32 %v3336, %v3440
          %v3455 = vmul.f32 %v3338, %v3440
          %v3456 = vmul.f32 %v3340, %v3440
          %v3457 = vmul.f32 %v3342, %v3440
          %v3458 = vmul.f32 %v3344, %v3440
          %v3459 = vmul.f32 %v3346, %v3440
          %v3460 = vmul.f32 %v3348, %v3440
          %v3461 = vmul.f32 %v3350, %v3440
          %v3462 = vmul.f32 %v3352, %v3440
          %v3463 = vmul.f32 %v3354, %v3440
          %v3464 = vmul.f32 %v3356, %v3440
          %v3465 = vmul.f32 %v3358, %v3440
          %v3466 = vmul.f32 %v3360, %v3440
          %v3467 = vmul.f32 %v3362, %v3440
          %v3468 = vmul.f32 %v3364, %v3440
          %v3469 = vmul.f32 %v3366, %v3440
          %v3470 = vmul.f32 %v3368, %v3440
          %v3471 = vmul.f32 %v3370, %v3440
          %v3472 = vmul.f32 %v3372, %v3440
          %v3473 = vmul.f32 %v3374, %v3440
          %v3474 = vmul.f32 %v3376, %v3440
          %v3475 = vmul.f32 %v3378, %v3440
          %v3476 = vmul.f32 %v3380, %v3440
          %v3477 = vmul.f32 %v3382, %v3440
          %v3478 = vmul.f32 %v3384, %v3440
          %v3479 = vmul.f32 %v3386, %v3440
          %v3480 = vmul.f32 %v3388, %v3440
          %v3481 = vmul.f32 %v3390, %v3440
          %v3482 = vmul.f32 %v3392, %v3440
          %v3483 = vmul.f32 %v3394, %v3440
          %v3484 = vmul.f32 %v3396, %v3440
          %v3485 = vmul.f32 %v3398, %v3440
          %v3486 = vmul.f32 %v3400, %v3440
          %v3487 = vmul.f32 %v3402, %v3440
          %v3488 = vmul.f32 %v3404, %v3440
          %v3489 = vmul.f32 %v3406, %v3440
          %v3490 = vmul.f32 %v3408, %v3440
          %v3491 = vmul.f32 %v3410, %v3440
          %v3492 = vmul.f32 %v3412, %v3440
          %v3493 = vmul.f32 %v3414, %v3440
          %v3494 = vmul.f32 %v3416, %v3440
          %v3495 = vmul.f32 %v3418, %v3440
          %v3496 = vmul.f32 %v3420, %v3440
          %v3497 = vmul.f32 %v3422, %v3440
          %v3498 = vmul.f32 %v3424, %v3440
          %v3499 = vmul.f32 %v3426, %v3440
          %v3500 = vmul.f32 %v3428, %v3440
          %v3501 = vmul.f32 %v3430, %v3440
          %v3502 = vmul.f32 %v3432, %v3440
          %v3503 = vmul.f32 %v3434, %v3440
          %v3504 = vmul.f32 %v3436, %v3440
          %v3505 = vmul.f32 %v3439, %v3440
          %v3506 = vsub.f32 %v3242, %v3441
          %v3507 = vsub.f32 %v3243, %v3442
          %v3508 = vsub.f32 %v3244, %v3443
          %v3509 = vsub.f32 %v3245, %v3444
          %v3510 = vsub.f32 %v3246, %v3445
          %v3511 = vsub.f32 %v3247, %v3446
          %v3512 = vsub.f32 %v3248, %v3447
          %v3513 = vsub.f32 %v3249, %v3448
          %v3514 = vsub.f32 %v3250, %v3449
          %v3515 = vsub.f32 %v3251, %v3450
          %v3516 = vsub.f32 %v3252, %v3451
          %v3517 = vsub.f32 %v3253, %v3452
          %v3518 = vsub.f32 %v3254, %v3453
          %v3519 = vsub.f32 %v3255, %v3454
          %v3520 = vsub.f32 %v3256, %v3455
          %v3521 = vsub.f32 %v3257, %v3456
          %v3522 = vsub.f32 %v3258, %v3457
          %v3523 = vsub.f32 %v3259, %v3458
          %v3524 = vsub.f32 %v3260, %v3459
          %v3525 = vsub.f32 %v3261, %v3460
          %v3526 = vsub.f32 %v3262, %v3461
          %v3527 = vsub.f32 %v3263, %v3462
          %v3528 = vsub.f32 %v3264, %v3463
          %v3529 = vsub.f32 %v3265, %v3464
          %v3530 = vsub.f32 %v3266, %v3465
          %v3531 = vsub.f32 %v3267, %v3466
          %v3532 = vsub.f32 %v3268, %v3467
          %v3533 = vsub.f32 %v3269, %v3468
          %v3534 = vsub.f32 %v3270, %v3469
          %v3535 = vsub.f32 %v3271, %v3470
          %v3536 = vsub.f32 %v3272, %v3471
          %v3537 = vsub.f32 %v3273, %v3472
          %v3538 = vsub.f32 %v3274, %v3473
          %v3539 = vsub.f32 %v3275, %v3474
          %v3540 = vsub.f32 %v3276, %v3475
          %v3541 = vsub.f32 %v3277, %v3476
          %v3542 = vsub.f32 %v3278, %v3477
          %v3543 = vsub.f32 %v3279, %v3478
          %v3544 = vsub.f32 %v3280, %v3479
          %v3545 = vsub.f32 %v3281, %v3480
          %v3546 = vsub.f32 %v3282, %v3481
          %v3547 = vsub.f32 %v3283, %v3482
          %v3548 = vsub.f32 %v3284, %v3483
          %v3549 = vsub.f32 %v3285, %v3484
          %v3550 = vsub.f32 %v3286, %v3485
          %v3551 = vsub.f32 %v3287, %v3486
          %v3552 = vsub.f32 %v3288, %v3487
          %v3553 = vsub.f32 %v3289, %v3488
          %v3554 = vsub.f32 %v3290, %v3489
          %v3555 = vsub.f32 %v3291, %v3490
          %v3556 = vsub.f32 %v3292, %v3491
          %v3557 = vsub.f32 %v3293, %v3492
          %v3558 = vsub.f32 %v3294, %v3493
          %v3559 = vsub.f32 %v3295, %v3494
          %v3560 = vsub.f32 %v3296, %v3495
          %v3561 = vsub.f32 %v3297, %v3496
          %v3562 = vsub.f32 %v3298, %v3497
          %v3563 = vsub.f32 %v3299, %v3498
          %v3564 = vsub.f32 %v3300, %v3499
          %v3565 = vsub.f32 %v3301, %v3500
          %v3566 = vsub.f32 %v3302, %v3501
          %v3567 = vsub.f32 %v3303, %v3502
          %v3568 = vsub.f32 %v3304, %v3503
          %v3569 = vsub.f32 %v3305, %v3504
          %v3570 = vsub.f32 %v3306, %v3505
          %v3571 = vmul.f32 %v3506, %v3506
          %v3572 = vmul.f32 %v3507, %v3507
          %v3573 = vmul.f32 %v3508, %v3508
          %v3574 = vmul.f32 %v3509, %v3509
          %v3575 = vmul.f32 %v3510, %v3510
          %v3576 = vmul.f32 %v3511, %v3511
          %v3577 = vmul.f32 %v3512, %v3512
          %v3578 = vmul.f32 %v3513, %v3513
          %v3579 = vmul.f32 %v3514, %v3514
          %v3580 = vmul.f32 %v3515, %v3515
          %v3581 = vmul.f32 %v3516, %v3516
          %v3582 = vmul.f32 %v3517, %v3517
          %v3583 = vmul.f32 %v3518, %v3518
          %v3584 = vmul.f32 %v3519, %v3519
          %v3585 = vmul.f32 %v3520, %v3520
          %v3586 = vmul.f32 %v3521, %v3521
          %v3587 = vmul.f32 %v3522, %v3522
          %v3588 = vmul.f32 %v3523, %v3523
          %v3589 = vmul.f32 %v3524, %v3524
          %v3590 = vmul.f32 %v3525, %v3525
          %v3591 = vmul.f32 %v3526, %v3526
          %v3592 = vmul.f32 %v3527, %v3527
          %v3593 = vmul.f32 %v3528, %v3528
          %v3594 = vmul.f32 %v3529, %v3529
          %v3595 = vmul.f32 %v3530, %v3530
          %v3596 = vmul.f32 %v3531, %v3531
          %v3597 = vmul.f32 %v3532, %v3532
          %v3598 = vmul.f32 %v3533, %v3533
          %v3599 = vmul.f32 %v3534, %v3534
          %v3600 = vmul.f32 %v3535, %v3535
          %v3601 = vmul.f32 %v3536, %v3536
          %v3602 = vmul.f32 %v3537, %v3537
          %v3603 = vmul.f32 %v3538, %v3538
          %v3604 = vmul.f32 %v3539, %v3539
          %v3605 = vmul.f32 %v3540, %v3540
          %v3606 = vmul.f32 %v3541, %v3541
          %v3607 = vmul.f32 %v3542, %v3542
          %v3608 = vmul.f32 %v3543, %v3543
          %v3609 = vmul.f32 %v3544, %v3544
          %v3610 = vmul.f32 %v3545, %v3545
          %v3611 = vmul.f32 %v3546, %v3546
          %v3612 = vmul.f32 %v3547, %v3547
          %v3613 = vmul.f32 %v3548, %v3548
          %v3614 = vmul.f32 %v3549, %v3549
          %v3615 = vmul.f32 %v3550, %v3550
          %v3616 = vmul.f32 %v3551, %v3551
          %v3617 = vmul.f32 %v3552, %v3552
          %v3618 = vmul.f32 %v3553, %v3553
          %v3619 = vmul.f32 %v3554, %v3554
          %v3620 = vmul.f32 %v3555, %v3555
          %v3621 = vmul.f32 %v3556, %v3556
          %v3622 = vmul.f32 %v3557, %v3557
          %v3623 = vmul.f32 %v3558, %v3558
          %v3624 = vmul.f32 %v3559, %v3559
          %v3625 = vmul.f32 %v3560, %v3560
          %v3626 = vmul.f32 %v3561, %v3561
          %v3627 = vmul.f32 %v3562, %v3562
          %v3628 = vmul.f32 %v3563, %v3563
          %v3629 = vmul.f32 %v3564, %v3564
          %v3630 = vmul.f32 %v3565, %v3565
          %v3631 = vmul.f32 %v3566, %v3566
          %v3632 = vmul.f32 %v3567, %v3567
          %v3633 = vmul.f32 %v3568, %v3568
          %v3634 = vmul.f32 %v3569, %v3569
          %v3635 = vmul.f32 %v3570, %v3570
          %v3636 = vsel %vm3307, %v3571, 0.0
          %3637 = vadd.xlane.f32.xlu0 %v3636
          %v3638 = vpop.xlane.xlu0 %3637
          %3639 = vadd.xlane.f32.xlu0 %v3572
          %v3640 = vpop.xlane.xlu0 %3639
          %3641 = vadd.xlane.f32.xlu0 %v3573
          %v3642 = vpop.xlane.xlu0 %3641
          %3643 = vadd.xlane.f32.xlu0 %v3574
          %v3644 = vpop.xlane.xlu0 %3643
          %3645 = vadd.xlane.f32.xlu0 %v3575
          %v3646 = vpop.xlane.xlu0 %3645
          %3647 = vadd.xlane.f32.xlu0 %v3576
          %v3648 = vpop.xlane.xlu0 %3647
          %3649 = vadd.xlane.f32.xlu0 %v3577
          %v3650 = vpop.xlane.xlu0 %3649
          %3651 = vadd.xlane.f32.xlu0 %v3578
          %v3652 = vpop.xlane.xlu0 %3651
          %3653 = vadd.xlane.f32.xlu0 %v3579
          %v3654 = vpop.xlane.xlu0 %3653
          %3655 = vadd.xlane.f32.xlu0 %v3580
          %v3656 = vpop.xlane.xlu0 %3655
          %3657 = vadd.xlane.f32.xlu0 %v3581
          %v3658 = vpop.xlane.xlu0 %3657
          %3659 = vadd.xlane.f32.xlu0 %v3582
          %v3660 = vpop.xlane.xlu0 %3659
          %3661 = vadd.xlane.f32.xlu0 %v3583
          %v3662 = vpop.xlane.xlu0 %3661
          %3663 = vadd.xlane.f32.xlu0 %v3584
          %v3664 = vpop.xlane.xlu0 %3663
          %3665 = vadd.xlane.f32.xlu0 %v3585
          %v3666 = vpop.xlane.xlu0 %3665
          %3667 = vadd.xlane.f32.xlu0 %v3586
          %v3668 = vpop.xlane.xlu0 %3667
          %3669 = vadd.xlane.f32.xlu0 %v3587
          %v3670 = vpop.xlane.xlu0 %3669
          %3671 = vadd.xlane.f32.xlu0 %v3588
          %v3672 = vpop.xlane.xlu0 %3671
          %3673 = vadd.xlane.f32.xlu0 %v3589
          %v3674 = vpop.xlane.xlu0 %3673
          %3675 = vadd.xlane.f32.xlu0 %v3590
          %v3676 = vpop.xlane.xlu0 %3675
          %3677 = vadd.xlane.f32.xlu0 %v3591
          %v3678 = vpop.xlane.xlu0 %3677
          %3679 = vadd.xlane.f32.xlu0 %v3592
          %v3680 = vpop.xlane.xlu0 %3679
          %3681 = vadd.xlane.f32.xlu0 %v3593
          %v3682 = vpop.xlane.xlu0 %3681
          %3683 = vadd.xlane.f32.xlu0 %v3594
          %v3684 = vpop.xlane.xlu0 %3683
          %3685 = vadd.xlane.f32.xlu0 %v3595
          %v3686 = vpop.xlane.xlu0 %3685
          %3687 = vadd.xlane.f32.xlu0 %v3596
          %v3688 = vpop.xlane.xlu0 %3687
          %3689 = vadd.xlane.f32.xlu0 %v3597
          %v3690 = vpop.xlane.xlu0 %3689
          %3691 = vadd.xlane.f32.xlu0 %v3598
          %v3692 = vpop.xlane.xlu0 %3691
          %3693 = vadd.xlane.f32.xlu0 %v3599
          %v3694 = vpop.xlane.xlu0 %3693
          %3695 = vadd.xlane.f32.xlu0 %v3600
          %v3696 = vpop.xlane.xlu0 %3695
          %3697 = vadd.xlane.f32.xlu0 %v3601
          %v3698 = vpop.xlane.xlu0 %3697
          %3699 = vadd.xlane.f32.xlu0 %v3602
          %v3700 = vpop.xlane.xlu0 %3699
          %3701 = vadd.xlane.f32.xlu0 %v3603
          %v3702 = vpop.xlane.xlu0 %3701
          %3703 = vadd.xlane.f32.xlu0 %v3604
          %v3704 = vpop.xlane.xlu0 %3703
          %3705 = vadd.xlane.f32.xlu0 %v3605
          %v3706 = vpop.xlane.xlu0 %3705
          %3707 = vadd.xlane.f32.xlu0 %v3606
          %v3708 = vpop.xlane.xlu0 %3707
          %3709 = vadd.xlane.f32.xlu0 %v3607
          %v3710 = vpop.xlane.xlu0 %3709
          %3711 = vadd.xlane.f32.xlu0 %v3608
          %v3712 = vpop.xlane.xlu0 %3711
          %3713 = vadd.xlane.f32.xlu0 %v3609
          %v3714 = vpop.xlane.xlu0 %3713
          %3715 = vadd.xlane.f32.xlu0 %v3610
          %v3716 = vpop.xlane.xlu0 %3715
          %3717 = vadd.xlane.f32.xlu0 %v3611
          %v3718 = vpop.xlane.xlu0 %3717
          %3719 = vadd.xlane.f32.xlu0 %v3612
          %v3720 = vpop.xlane.xlu0 %3719
          %3721 = vadd.xlane.f32.xlu0 %v3613
          %v3722 = vpop.xlane.xlu0 %3721
          %3723 = vadd.xlane.f32.xlu0 %v3614
          %v3724 = vpop.xlane.xlu0 %3723
          %3725 = vadd.xlane.f32.xlu0 %v3615
          %v3726 = vpop.xlane.xlu0 %3725
          %3727 = vadd.xlane.f32.xlu0 %v3616
          %v3728 = vpop.xlane.xlu0 %3727
          %3729 = vadd.xlane.f32.xlu0 %v3617
          %v3730 = vpop.xlane.xlu0 %3729
          %3731 = vadd.xlane.f32.xlu0 %v3618
          %v3732 = vpop.xlane.xlu0 %3731
          %3733 = vadd.xlane.f32.xlu0 %v3619
          %v3734 = vpop.xlane.xlu0 %3733
          %3735 = vadd.xlane.f32.xlu0 %v3620
          %v3736 = vpop.xlane.xlu0 %3735
          %3737 = vadd.xlane.f32.xlu0 %v3621
          %v3738 = vpop.xlane.xlu0 %3737
          %3739 = vadd.xlane.f32.xlu0 %v3622
          %v3740 = vpop.xlane.xlu0 %3739
          %3741 = vadd.xlane.f32.xlu0 %v3623
          %v3742 = vpop.xlane.xlu0 %3741
          %3743 = vadd.xlane.f32.xlu0 %v3624
          %v3744 = vpop.xlane.xlu0 %3743
          %3745 = vadd.xlane.f32.xlu0 %v3625
          %v3746 = vpop.xlane.xlu0 %3745
          %3747 = vadd.xlane.f32.xlu0 %v3626
          %v3748 = vpop.xlane.xlu0 %3747
          %3749 = vadd.xlane.f32.xlu0 %v3627
          %v3750 = vpop.xlane.xlu0 %3749
          %3751 = vadd.xlane.f32.xlu0 %v3628
          %v3752 = vpop.xlane.xlu0 %3751
          %3753 = vadd.xlane.f32.xlu0 %v3629
          %v3754 = vpop.xlane.xlu0 %3753
          %3755 = vadd.xlane.f32.xlu0 %v3630
          %v3756 = vpop.xlane.xlu0 %3755
          %3757 = vadd.xlane.f32.xlu0 %v3631
          %v3758 = vpop.xlane.xlu0 %3757
          %3759 = vadd.xlane.f32.xlu0 %v3632
          %v3760 = vpop.xlane.xlu0 %3759
          %3761 = vadd.xlane.f32.xlu0 %v3633
          %v3762 = vpop.xlane.xlu0 %3761
          %3763 = vadd.xlane.f32.xlu0 %v3634
          %v3764 = vpop.xlane.xlu0 %3763
          %v3765 = vsel %vm1864, %v3635, 0.0
          %3766 = vadd.xlane.f32.xlu0 %v3765
          %v3767 = vpop.xlane.xlu0 %3766
          %v3768 = vmul.f32 %v3638, %v3440
          %v3769 = vmul.f32 %v3640, %v3440
          %v3770 = vmul.f32 %v3642, %v3440
          %v3771 = vmul.f32 %v3644, %v3440
          %v3772 = vmul.f32 %v3646, %v3440
          %v3773 = vmul.f32 %v3648, %v3440
          %v3774 = vmul.f32 %v3650, %v3440
          %v3775 = vmul.f32 %v3652, %v3440
          %v3776 = vmul.f32 %v3654, %v3440
          %v3777 = vmul.f32 %v3656, %v3440
          %v3778 = vmul.f32 %v3658, %v3440
          %v3779 = vmul.f32 %v3660, %v3440
          %v3780 = vmul.f32 %v3662, %v3440
          %v3781 = vmul.f32 %v3664, %v3440
          %v3782 = vmul.f32 %v3666, %v3440
          %v3783 = vmul.f32 %v3668, %v3440
          %v3784 = vmul.f32 %v3670, %v3440
          %v3785 = vmul.f32 %v3672, %v3440
          %v3786 = vmul.f32 %v3674, %v3440
          %v3787 = vmul.f32 %v3676, %v3440
          %v3788 = vmul.f32 %v3678, %v3440
          %v3789 = vmul.f32 %v3680, %v3440
          %v3790 = vmul.f32 %v3682, %v3440
          %v3791 = vmul.f32 %v3684, %v3440
          %v3792 = vmul.f32 %v3686, %v3440
          %v3793 = vmul.f32 %v3688, %v3440
          %v3794 = vmul.f32 %v3690, %v3440
          %v3795 = vmul.f32 %v3692, %v3440
          %v3796 = vmul.f32 %v3694, %v3440
          %v3797 = vmul.f32 %v3696, %v3440
          %v3798 = vmul.f32 %v3698, %v3440
          %v3799 = vmul.f32 %v3700, %v3440
          %v3800 = vmul.f32 %v3702, %v3440
          %v3801 = vmul.f32 %v3704, %v3440
          %v3802 = vmul.f32 %v3706, %v3440
          %v3803 = vmul.f32 %v3708, %v3440
          %v3804 = vmul.f32 %v3710, %v3440
          %v3805 = vmul.f32 %v3712, %v3440
          %v3806 = vmul.f32 %v3714, %v3440
          %v3807 = vmul.f32 %v3716, %v3440
          %v3808 = vmul.f32 %v3718, %v3440
          %v3809 = vmul.f32 %v3720, %v3440
          %v3810 = vmul.f32 %v3722, %v3440
          %v3811 = vmul.f32 %v3724, %v3440
          %v3812 = vmul.f32 %v3726, %v3440
          %v3813 = vmul.f32 %v3728, %v3440
          %v3814 = vmul.f32 %v3730, %v3440
          %v3815 = vmul.f32 %v3732, %v3440
          %v3816 = vmul.f32 %v3734, %v3440
          %v3817 = vmul.f32 %v3736, %v3440
          %v3818 = vmul.f32 %v3738, %v3440
          %v3819 = vmul.f32 %v3740, %v3440
          %v3820 = vmul.f32 %v3742, %v3440
          %v3821 = vmul.f32 %v3744, %v3440
          %v3822 = vmul.f32 %v3746, %v3440
          %v3823 = vmul.f32 %v3748, %v3440
          %v3824 = vmul.f32 %v3750, %v3440
          %v3825 = vmul.f32 %v3752, %v3440
          %v3826 = vmul.f32 %v3754, %v3440
          %v3827 = vmul.f32 %v3756, %v3440
          %v3828 = vmul.f32 %v3758, %v3440
          %v3829 = vmul.f32 %v3760, %v3440
          %v3830 = vmul.f32 %v3762, %v3440
          %v3831 = vmul.f32 %v3764, %v3440
          %v3832 = vmul.f32 %v3767, %v3440
          %v3833 = vadd.f32 %v3768, 1e-06
          %v3834 = vadd.f32 %v3769, 1e-06
          %v3835 = vadd.f32 %v3770, 1e-06
          %v3836 = vadd.f32 %v3771, 1e-06
          %v3837 = vadd.f32 %v3772, 1e-06
          %v3838 = vadd.f32 %v3773, 1e-06
          %v3839 = vadd.f32 %v3774, 1e-06
          %v3840 = vadd.f32 %v3775, 1e-06
          %v3841 = vadd.f32 %v3776, 1e-06
          %v3842 = vadd.f32 %v3777, 1e-06
          %v3843 = vadd.f32 %v3778, 1e-06
          %v3844 = vadd.f32 %v3779, 1e-06
          %v3845 = vadd.f32 %v3780, 1e-06
          %v3846 = vadd.f32 %v3781, 1e-06
          %v3847 = vadd.f32 %v3782, 1e-06
          %v3848 = vadd.f32 %v3783, 1e-06
          %v3849 = vadd.f32 %v3784, 1e-06
          %v3850 = vadd.f32 %v3785, 1e-06
          %v3851 = vadd.f32 %v3786, 1e-06
          %v3852 = vadd.f32 %v3787, 1e-06
          %v3853 = vadd.f32 %v3788, 1e-06
          %v3854 = vadd.f32 %v3789, 1e-06
          %v3855 = vadd.f32 %v3790, 1e-06
          %v3856 = vadd.f32 %v3791, 1e-06
          %v3857 = vadd.f32 %v3792, 1e-06
          %v3858 = vadd.f32 %v3793, 1e-06
          %v3859 = vadd.f32 %v3794, 1e-06
          %v3860 = vadd.f32 %v3795, 1e-06
          %v3861 = vadd.f32 %v3796, 1e-06
          %v3862 = vadd.f32 %v3797, 1e-06
          %v3863 = vadd.f32 %v3798, 1e-06
          %v3864 = vadd.f32 %v3799, 1e-06
          %v3865 = vadd.f32 %v3800, 1e-06
          %v3866 = vadd.f32 %v3801, 1e-06
          %v3867 = vadd.f32 %v3802, 1e-06
          %v3868 = vadd.f32 %v3803, 1e-06
          %v3869 = vadd.f32 %v3804, 1e-06
          %v3870 = vadd.f32 %v3805, 1e-06
          %v3871 = vadd.f32 %v3806, 1e-06
          %v3872 = vadd.f32 %v3807, 1e-06
          %v3873 = vadd.f32 %v3808, 1e-06
          %v3874 = vadd.f32 %v3809, 1e-06
          %v3875 = vadd.f32 %v3810, 1e-06
          %v3876 = vadd.f32 %v3811, 1e-06
          %v3877 = vadd.f32 %v3812, 1e-06
          %v3878 = vadd.f32 %v3813, 1e-06
          %v3879 = vadd.f32 %v3814, 1e-06
          %v3880 = vadd.f32 %v3815, 1e-06
          %v3881 = vadd.f32 %v3816, 1e-06
          %v3882 = vadd.f32 %v3817, 1e-06
          %v3883 = vadd.f32 %v3818, 1e-06
          %v3884 = vadd.f32 %v3819, 1e-06
          %v3885 = vadd.f32 %v3820, 1e-06
          %v3886 = vadd.f32 %v3821, 1e-06
          %v3887 = vadd.f32 %v3822, 1e-06
          %v3888 = vadd.f32 %v3823, 1e-06
          %v3889 = vadd.f32 %v3824, 1e-06
          %v3890 = vadd.f32 %v3825, 1e-06
          %v3891 = vadd.f32 %v3826, 1e-06
          %v3892 = vadd.f32 %v3827, 1e-06
          %v3893 = vadd.f32 %v3828, 1e-06
          %v3894 = vadd.f32 %v3829, 1e-06
          %v3895 = vadd.f32 %v3830, 1e-06
          %v3896 = vadd.f32 %v3831, 1e-06
          %v3897 = vadd.f32 %v3832, 1e-06
          %v3898 = vrsqrt.pop %v3833
          %v3899 = vrsqrt.pop %v3834
          %v3900 = vrsqrt.pop %v3835
          %v3901 = vrsqrt.pop %v3836
          %v3902 = vrsqrt.pop %v3837
          %v3903 = vrsqrt.pop %v3838
          %v3904 = vrsqrt.pop %v3839
          %v3905 = vrsqrt.pop %v3840
          %v3906 = vrsqrt.pop %v3841
          %v3907 = vrsqrt.pop %v3842
          %v3908 = vrsqrt.pop %v3843
          %v3909 = vrsqrt.pop %v3844
          %v3910 = vrsqrt.pop %v3845
          %v3911 = vrsqrt.pop %v3846
          %v3912 = vrsqrt.pop %v3847
          %v3913 = vrsqrt.pop %v3848
          %v3914 = vrsqrt.pop %v3849
          %v3915 = vrsqrt.pop %v3850
          %v3916 = vrsqrt.pop %v3851
          %v3917 = vrsqrt.pop %v3852
          %v3918 = vrsqrt.pop %v3853
          %v3919 = vrsqrt.pop %v3854
          %v3920 = vrsqrt.pop %v3855
          %v3921 = vrsqrt.pop %v3856
          %v3922 = vrsqrt.pop %v3857
          %v3923 = vrsqrt.pop %v3858
          %v3924 = vrsqrt.pop %v3859
          %v3925 = vrsqrt.pop %v3860
          %v3926 = vrsqrt.pop %v3861
          %v3927 = vrsqrt.pop %v3862
          %v3928 = vrsqrt.pop %v3863
          %v3929 = vrsqrt.pop %v3864
          %v3930 = vrsqrt.pop %v3865
          %v3931 = vrsqrt.pop %v3866
          %v3932 = vrsqrt.pop %v3867
          %v3933 = vrsqrt.pop %v3868
          %v3934 = vrsqrt.pop %v3869
          %v3935 = vrsqrt.pop %v3870
          %v3936 = vrsqrt.pop %v3871
          %v3937 = vrsqrt.pop %v3872
          %v3938 = vrsqrt.pop %v3873
          %v3939 = vrsqrt.pop %v3874
          %v3940 = vrsqrt.pop %v3875
          %v3941 = vrsqrt.pop %v3876
          %v3942 = vrsqrt.pop %v3877
          %v3943 = vrsqrt.pop %v3878
          %v3944 = vrsqrt.pop %v3879
          %v3945 = vrsqrt.pop %v3880
          %v3946 = vrsqrt.pop %v3881
          %v3947 = vrsqrt.pop %v3882
          %v3948 = vrsqrt.pop %v3883
          %v3949 = vrsqrt.pop %v3884
          %v3950 = vrsqrt.pop %v3885
          %v3951 = vrsqrt.pop %v3886
          %v3952 = vrsqrt.pop %v3887
          %v3953 = vrsqrt.pop %v3888
          %v3954 = vrsqrt.pop %v3889
          %v3955 = vrsqrt.pop %v3890
          %v3956 = vrsqrt.pop %v3891
          %v3957 = vrsqrt.pop %v3892
          %v3958 = vrsqrt.pop %v3893
          %v3959 = vrsqrt.pop %v3894
          %v3960 = vrsqrt.pop %v3895
          %v3961 = vrsqrt.pop %v3896
          %v3962 = vrsqrt.pop %v3897
          %v3963 = vmul.f32 %v3506, %v3898
          %v3964 = vmul.f32 %v3507, %v3899
          %v3965 = vmul.f32 %v3508, %v3900
          %v3966 = vmul.f32 %v3509, %v3901
          %v3967 = vmul.f32 %v3510, %v3902
          %v3968 = vmul.f32 %v3511, %v3903
          %v3969 = vmul.f32 %v3512, %v3904
          %v3970 = vmul.f32 %v3513, %v3905
          %v3971 = vmul.f32 %v3514, %v3906
          %v3972 = vmul.f32 %v3515, %v3907
          %v3973 = vmul.f32 %v3516, %v3908
          %v3974 = vmul.f32 %v3517, %v3909
          %v3975 = vmul.f32 %v3518, %v3910
          %v3976 = vmul.f32 %v3519, %v3911
          %v3977 = vmul.f32 %v3520, %v3912
          %v3978 = vmul.f32 %v3521, %v3913
          %v3979 = vmul.f32 %v3522, %v3914
          %v3980 = vmul.f32 %v3523, %v3915
          %v3981 = vmul.f32 %v3524, %v3916
          %v3982 = vmul.f32 %v3525, %v3917
          %v3983 = vmul.f32 %v3526, %v3918
          %v3984 = vmul.f32 %v3527, %v3919
          %v3985 = vmul.f32 %v3528, %v3920
          %v3986 = vmul.f32 %v3529, %v3921
          %v3987 = vmul.f32 %v3530, %v3922
          %v3988 = vmul.f32 %v3531, %v3923
          %v3989 = vmul.f32 %v3532, %v3924
          %v3990 = vmul.f32 %v3533, %v3925
          %v3991 = vmul.f32 %v3534, %v3926
          %v3992 = vmul.f32 %v3535, %v3927
          %v3993 = vmul.f32 %v3536, %v3928
          %v3994 = vmul.f32 %v3537, %v3929
          %v3995 = vmul.f32 %v3538, %v3930
          %v3996 = vmul.f32 %v3539, %v3931
          %v3997 = vmul.f32 %v3540, %v3932
          %v3998 = vmul.f32 %v3541, %v3933
          %v3999 = vmul.f32 %v3542, %v3934
          %v4000 = vmul.f32 %v3543, %v3935
          %v4001 = vmul.f32 %v3544, %v3936
          %v4002 = vmul.f32 %v3545, %v3937
          %v4003 = vmul.f32 %v3546, %v3938
          %v4004 = vmul.f32 %v3547, %v3939
          %v4005 = vmul.f32 %v3548, %v3940
          %v4006 = vmul.f32 %v3549, %v3941
          %v4007 = vmul.f32 %v3550, %v3942
          %v4008 = vmul.f32 %v3551, %v3943
          %v4009 = vmul.f32 %v3552, %v3944
          %v4010 = vmul.f32 %v3553, %v3945
          %v4011 = vmul.f32 %v3554, %v3946
          %v4012 = vmul.f32 %v3555, %v3947
          %v4013 = vmul.f32 %v3556, %v3948
          %v4014 = vmul.f32 %v3557, %v3949
          %v4015 = vmul.f32 %v3558, %v3950
          %v4016 = vmul.f32 %v3559, %v3951
          %v4017 = vmul.f32 %v3560, %v3952
          %v4018 = vmul.f32 %v3561, %v3953
          %v4019 = vmul.f32 %v3562, %v3954
          %v4020 = vmul.f32 %v3563, %v3955
          %v4021 = vmul.f32 %v3564, %v3956
          %v4022 = vmul.f32 %v3565, %v3957
          %v4023 = vmul.f32 %v3566, %v3958
          %v4024 = vmul.f32 %v3567, %v3959
          %v4025 = vmul.f32 %v3568, %v3960
          %v4026 = vmul.f32 %v3569, %v3961
          %v4027 = vmul.f32 %v3570, %v3962
          %v4028 = vld [vmem:[%s3] sm:$0x1]
          %v4030 = vlaneseq
          %v4031 = vshrl.u32 %v4030, 7
          %v4032 = vsub.s32 0, %v4031
          %v4033 = vrot.slane %v4028, %v4032
          %v4035 = vmul.f32 %v3963, %v4033
          %v4036 = vmul.f32 %v3964, %v4033
          %v4037 = vmul.f32 %v3965, %v4033
          %v4038 = vmul.f32 %v3966, %v4033
          %v4039 = vmul.f32 %v3967, %v4033
          %v4040 = vmul.f32 %v3968, %v4033
          %v4041 = vmul.f32 %v3969, %v4033
          %v4042 = vmul.f32 %v3970, %v4033
          %v4043 = vmul.f32 %v3971, %v4033
          %v4044 = vmul.f32 %v3972, %v4033
          %v4045 = vmul.f32 %v3973, %v4033
          %v4046 = vmul.f32 %v3974, %v4033
          %v4047 = vmul.f32 %v3975, %v4033
          %v4048 = vmul.f32 %v3976, %v4033
          %v4049 = vmul.f32 %v3977, %v4033
          %v4050 = vmul.f32 %v3978, %v4033
          %v4051 = vmul.f32 %v3979, %v4033
          %v4052 = vmul.f32 %v3980, %v4033
          %v4053 = vmul.f32 %v3981, %v4033
          %v4054 = vmul.f32 %v3982, %v4033
          %v4055 = vmul.f32 %v3983, %v4033
          %v4056 = vmul.f32 %v3984, %v4033
          %v4057 = vmul.f32 %v3985, %v4033
          %v4058 = vmul.f32 %v3986, %v4033
          %v4059 = vmul.f32 %v3987, %v4033
          %v4060 = vmul.f32 %v3988, %v4033
          %v4061 = vmul.f32 %v3989, %v4033
          %v4062 = vmul.f32 %v3990, %v4033
          %v4063 = vmul.f32 %v3991, %v4033
          %v4064 = vmul.f32 %v3992, %v4033
          %v4065 = vmul.f32 %v3993, %v4033
          %v4066 = vmul.f32 %v3994, %v4033
          %v4067 = vmul.f32 %v3995, %v4033
          %v4068 = vmul.f32 %v3996, %v4033
          %v4069 = vmul.f32 %v3997, %v4033
          %v4070 = vmul.f32 %v3998, %v4033
          %v4071 = vmul.f32 %v3999, %v4033
          %v4072 = vmul.f32 %v4000, %v4033
          %v4073 = vmul.f32 %v4001, %v4033
          %v4074 = vmul.f32 %v4002, %v4033
          %v4075 = vmul.f32 %v4003, %v4033
          %v4076 = vmul.f32 %v4004, %v4033
          %v4077 = vmul.f32 %v4005, %v4033
          %v4078 = vmul.f32 %v4006, %v4033
          %v4079 = vmul.f32 %v4007, %v4033
          %v4080 = vmul.f32 %v4008, %v4033
          %v4081 = vmul.f32 %v4009, %v4033
          %v4082 = vmul.f32 %v4010, %v4033
          %v4083 = vmul.f32 %v4011, %v4033
          %v4084 = vmul.f32 %v4012, %v4033
          %v4085 = vmul.f32 %v4013, %v4033
          %v4086 = vmul.f32 %v4014, %v4033
          %v4087 = vmul.f32 %v4015, %v4033
          %v4088 = vmul.f32 %v4016, %v4033
          %v4089 = vmul.f32 %v4017, %v4033
          %v4090 = vmul.f32 %v4018, %v4033
          %v4091 = vmul.f32 %v4019, %v4033
          %v4092 = vmul.f32 %v4020, %v4033
          %v4093 = vmul.f32 %v4021, %v4033
          %v4094 = vmul.f32 %v4022, %v4033
          %v4095 = vmul.f32 %v4023, %v4033
          %v4096 = vmul.f32 %v4024, %v4033
          %v4097 = vmul.f32 %v4025, %v4033
          %v4098 = vmul.f32 %v4026, %v4033
          %v4099 = vmul.f32 %v4027, %v4033
          %v4100 = vld [vmem:[%s4] sm:$0x1]
          %v4102 = vlaneseq
          %v4103 = vshrl.u32 %v4102, 7
          %v4104 = vsub.s32 0, %v4103
          %v4105 = vrot.slane %v4100, %v4104
          %v4107 = vadd.f32 %v4035, %v4105
          %v4108 = vadd.f32 %v4036, %v4105
          %v4109 = vadd.f32 %v4037, %v4105
          %v4110 = vadd.f32 %v4038, %v4105
          %v4111 = vadd.f32 %v4039, %v4105
          %v4112 = vadd.f32 %v4040, %v4105
          %v4113 = vadd.f32 %v4041, %v4105
          %v4114 = vadd.f32 %v4042, %v4105
          %v4115 = vadd.f32 %v4043, %v4105
          %v4116 = vadd.f32 %v4044, %v4105
          %v4117 = vadd.f32 %v4045, %v4105
          %v4118 = vadd.f32 %v4046, %v4105
          %v4119 = vadd.f32 %v4047, %v4105
          %v4120 = vadd.f32 %v4048, %v4105
          %v4121 = vadd.f32 %v4049, %v4105
          %v4122 = vadd.f32 %v4050, %v4105
          %v4123 = vadd.f32 %v4051, %v4105
          %v4124 = vadd.f32 %v4052, %v4105
          %v4125 = vadd.f32 %v4053, %v4105
          %v4126 = vadd.f32 %v4054, %v4105
          %v4127 = vadd.f32 %v4055, %v4105
          %v4128 = vadd.f32 %v4056, %v4105
          %v4129 = vadd.f32 %v4057, %v4105
          %v4130 = vadd.f32 %v4058, %v4105
          %v4131 = vadd.f32 %v4059, %v4105
          %v4132 = vadd.f32 %v4060, %v4105
          %v4133 = vadd.f32 %v4061, %v4105
          %v4134 = vadd.f32 %v4062, %v4105
          %v4135 = vadd.f32 %v4063, %v4105
          %v4136 = vadd.f32 %v4064, %v4105
          %v4137 = vadd.f32 %v4065, %v4105
          %v4138 = vadd.f32 %v4066, %v4105
          %v4139 = vadd.f32 %v4067, %v4105
          %v4140 = vadd.f32 %v4068, %v4105
          %v4141 = vadd.f32 %v4069, %v4105
          %v4142 = vadd.f32 %v4070, %v4105
          %v4143 = vadd.f32 %v4071, %v4105
          %v4144 = vadd.f32 %v4072, %v4105
          %v4145 = vadd.f32 %v4073, %v4105
          %v4146 = vadd.f32 %v4074, %v4105
          %v4147 = vadd.f32 %v4075, %v4105
          %v4148 = vadd.f32 %v4076, %v4105
          %v4149 = vadd.f32 %v4077, %v4105
          %v4150 = vadd.f32 %v4078, %v4105
          %v4151 = vadd.f32 %v4079, %v4105
          %v4152 = vadd.f32 %v4080, %v4105
          %v4153 = vadd.f32 %v4081, %v4105
          %v4154 = vadd.f32 %v4082, %v4105
          %v4155 = vadd.f32 %v4083, %v4105
          %v4156 = vadd.f32 %v4084, %v4105
          %v4157 = vadd.f32 %v4085, %v4105
          %v4158 = vadd.f32 %v4086, %v4105
          %v4159 = vadd.f32 %v4087, %v4105
          %v4160 = vadd.f32 %v4088, %v4105
          %v4161 = vadd.f32 %v4089, %v4105
          %v4162 = vadd.f32 %v4090, %v4105
          %v4163 = vadd.f32 %v4091, %v4105
          %v4164 = vadd.f32 %v4092, %v4105
          %v4165 = vadd.f32 %v4093, %v4105
          %v4166 = vadd.f32 %v4094, %v4105
          %v4167 = vadd.f32 %v4095, %v4105
          %v4168 = vadd.f32 %v4096, %v4105
          %v4169 = vadd.f32 %v4097, %v4105
          %v4170 = vadd.f32 %v4098, %v4105
          %v4171 = vadd.f32 %v4099, %v4105
          %v4172 = vpack.c.bf16 %v4108, %v4107
          %v4173 = vpack.c.bf16 %v4110, %v4109
          %v4174 = vpack.c.bf16 %v4112, %v4111
          %v4175 = vpack.c.bf16 %v4114, %v4113
          %v4176 = vpack.c.bf16 %v4116, %v4115
          %v4177 = vpack.c.bf16 %v4118, %v4117
          %v4178 = vpack.c.bf16 %v4120, %v4119
          %v4179 = vpack.c.bf16 %v4122, %v4121
          %v4180 = vpack.c.bf16 %v4124, %v4123
          %v4181 = vpack.c.bf16 %v4126, %v4125
          %v4182 = vpack.c.bf16 %v4128, %v4127
          %v4183 = vpack.c.bf16 %v4130, %v4129
          %v4184 = vpack.c.bf16 %v4132, %v4131
          %v4185 = vpack.c.bf16 %v4134, %v4133
          %v4186 = vpack.c.bf16 %v4136, %v4135
          %v4187 = vpack.c.bf16 %v4138, %v4137
          %v4188 = vpack.c.bf16 %v4140, %v4139
          %v4189 = vpack.c.bf16 %v4142, %v4141
          %v4190 = vpack.c.bf16 %v4144, %v4143
          %v4191 = vpack.c.bf16 %v4146, %v4145
          %v4192 = vpack.c.bf16 %v4148, %v4147
          %v4193 = vpack.c.bf16 %v4150, %v4149
          %v4194 = vpack.c.bf16 %v4152, %v4151
          %v4195 = vpack.c.bf16 %v4154, %v4153
          %v4196 = vpack.c.bf16 %v4156, %v4155
          %v4197 = vpack.c.bf16 %v4158, %v4157
          %v4198 = vpack.c.bf16 %v4160, %v4159
          %v4199 = vpack.c.bf16 %v4162, %v4161
          %v4200 = vpack.c.bf16 %v4164, %v4163
          %v4201 = vpack.c.bf16 %v4166, %v4165
          %v4202 = vpack.c.bf16 %v4168, %v4167
          %v4203 = vpack.c.bf16 %v4170, %v4169
          %v4204 = vpack.c.bf16 %v4171, %v4171
          %v4205 = vld [vmem:[%s5] sm:$0xff]
          %v4206 = vld [vmem:[%s5 + $0x8] sm:$0xf]
          %v4207 = vld [vmem:[%s5 + $0xc] sm:$0xff]
          %v4208 = vld [vmem:[%s5 + $0x14] sm:$0xf]
          %v4209 = vld [vmem:[%s5 + $0x18] sm:$0xff]
          %v4210 = vld [vmem:[%s5 + $0x20] sm:$0xf]
          %v4211 = vld [vmem:[%s5 + $0x24] sm:$0xff]
          %v4212 = vld [vmem:[%s5 + $0x2c] sm:$0xf]
          %v4213 = vld [vmem:[%s5 + $0x30] sm:$0xff]
          %v4214 = vld [vmem:[%s5 + $0x38] sm:$0xf]
          %v4215 = vld [vmem:[%s5 + $0x3c] sm:$0xff]
          %v4216 = vld [vmem:[%s5 + $0x44] sm:$0xf]
          %v4217 = vld [vmem:[%s5 + $0x48] sm:$0xff]
          %v4218 = vld [vmem:[%s5 + $0x50] sm:$0xf]
          %v4219 = vld [vmem:[%s5 + $0x54] sm:$0xff]
          %v4220 = vld [vmem:[%s5 + $0x5c] sm:$0xf]
          %v4221 = vld [vmem:[%s5 + $0x60] sm:$0xff]
          %v4222 = vld [vmem:[%s5 + $0x68] sm:$0xf]
          %v4223 = vld [vmem:[%s5 + $0x6c] sm:$0xff]
          %v4224 = vld [vmem:[%s5 + $0x74] sm:$0xf]
          %v4225 = vld [vmem:[%s5 + $0x78] sm:$0xff]
          %v4226 = vld [vmem:[%s5 + $0x80] sm:$0xf]
          %v4227 = vld [vmem:[%s5 + $0x84] sm:$0xff]
          %v4228 = vld [vmem:[%s5 + $0x8c] sm:$0xf]
          %v4229 = vld [vmem:[%s5 + $0x90] sm:$0xff]
          %v4230 = vld [vmem:[%s5 + $0x98] sm:$0xf]
          %v4231 = vld [vmem:[%s5 + $0x9c] sm:$0xff]
          %v4232 = vld [vmem:[%s5 + $0xa4] sm:$0xf]
          %v4233 = vld [vmem:[%s5 + $0xa8] sm:$0xff]
          %v4234 = vld [vmem:[%s5 + $0xb0] sm:$0xf]
          %v4235 = vld [vmem:[%s5 + $0xb4] sm:$0xff]
          %v4236 = vld [vmem:[%s5 + $0xbc] sm:$0xf]
          %v4237 = vld [vmem:[%s6] sm:$0x7]
          %v4239 = vlaneseq
          %v4240 = vshrl.u32 %v4239, 7
          %v4241 = vsub.s32 0, %v4240
          %v4242 = vrot.slane %v4237, %v4241
          %v4243 = vlaneseq
          %v4244 = vshrl.u32 %v4243, 7
          %v4245 = vsub.s32 1, %v4244
          %v4246 = vrot.slane %v4237, %v4245
          %v4247 = vlaneseq
          %v4248 = vshrl.u32 %v4247, 7
          %v4249 = vsub.s32 2, %v4248
          %v4250 = vrot.slane %v4237, %v4249
          %vm4254 = vsmask.f32 5376
          %v4256 = vshrl.u32 %v4172, 16
          %v4258 = vrot.slane %v4256, 2
          %v4259 = vshll.u32 %v4172, 16
          %v4261 = vrot.slane %v4259, 3
          %v4262 = vor.u32 %v4258, %v4261
          %v4264 = vshrl.u32 %v4173, 16
          %v4266 = vrot.slane %v4264, 2
          %v4267 = vshll.u32 %v4173, 16
          %v4269 = vrot.slane %v4267, 3
          %v4270 = vor.u32 %v4266, %v4269
          %v4271 = vsel %vm4254, %v4262, %v4270
          %v4273 = vshrl.u32 %v4174, 16
          %v4275 = vrot.slane %v4273, 2
          %v4276 = vshll.u32 %v4174, 16
          %v4278 = vrot.slane %v4276, 3
          %v4279 = vor.u32 %v4275, %v4278
          %v4280 = vsel %vm4254, %v4270, %v4279
          %v4282 = vshrl.u32 %v4175, 16
          %v4284 = vrot.slane %v4282, 2
          %v4285 = vshll.u32 %v4175, 16
          %v4287 = vrot.slane %v4285, 3
          %v4288 = vor.u32 %v4284, %v4287
          %v4289 = vsel %vm4254, %v4279, %v4288
          %v4291 = vshrl.u32 %v4176, 16
          %v4293 = vrot.slane %v4291, 2
          %v4294 = vshll.u32 %v4176, 16
          %v4296 = vrot.slane %v4294, 3
          %v4297 = vor.u32 %v4293, %v4296
          %v4298 = vsel %vm4254, %v4288, %v4297
          %v4300 = vshrl.u32 %v4177, 16
          %v4302 = vrot.slane %v4300, 2
          %v4303 = vshll.u32 %v4177, 16
          %v4305 = vrot.slane %v4303, 3
          %v4306 = vor.u32 %v4302, %v4305
          %v4307 = vsel %vm4254, %v4297, %v4306
          %v4309 = vshrl.u32 %v4178, 16
          %v4311 = vrot.slane %v4309, 2
          %v4312 = vshll.u32 %v4178, 16
          %v4314 = vrot.slane %v4312, 3
          %v4315 = vor.u32 %v4311, %v4314
          %v4316 = vsel %vm4254, %v4306, %v4315
          %v4318 = vshrl.u32 %v4179, 16
          %v4320 = vrot.slane %v4318, 2
          %v4321 = vshll.u32 %v4179, 16
          %v4323 = vrot.slane %v4321, 3
          %v4324 = vor.u32 %v4320, %v4323
          %v4325 = vsel %vm4254, %v4315, %v4324
          %v4327 = vshrl.u32 %v4180, 16
          %v4329 = vrot.slane %v4327, 2
          %v4330 = vshll.u32 %v4180, 16
          %v4332 = vrot.slane %v4330, 3
          %v4333 = vor.u32 %v4329, %v4332
          %v4334 = vsel %vm4254, %v4324, %v4333
          %v4336 = vshrl.u32 %v4181, 16
          %v4338 = vrot.slane %v4336, 2
          %v4339 = vshll.u32 %v4181, 16
          %v4341 = vrot.slane %v4339, 3
          %v4342 = vor.u32 %v4338, %v4341
          %v4343 = vsel %vm4254, %v4333, %v4342
          %v4345 = vshrl.u32 %v4182, 16
          %v4347 = vrot.slane %v4345, 2
          %v4348 = vshll.u32 %v4182, 16
          %v4350 = vrot.slane %v4348, 3
          %v4351 = vor.u32 %v4347, %v4350
          %v4352 = vsel %vm4254, %v4342, %v4351
          %v4354 = vshrl.u32 %v4183, 16
          %v4356 = vrot.slane %v4354, 2
          %v4357 = vshll.u32 %v4183, 16
          %v4359 = vrot.slane %v4357, 3
          %v4360 = vor.u32 %v4356, %v4359
          %v4361 = vsel %vm4254, %v4351, %v4360
          %v4363 = vshrl.u32 %v4184, 16
          %v4365 = vrot.slane %v4363, 2
          %v4366 = vshll.u32 %v4184, 16
          %v4368 = vrot.slane %v4366, 3
          %v4369 = vor.u32 %v4365, %v4368
          %v4370 = vsel %vm4254, %v4360, %v4369
          %v4372 = vshrl.u32 %v4185, 16
          %v4374 = vrot.slane %v4372, 2
          %v4375 = vshll.u32 %v4185, 16
          %v4377 = vrot.slane %v4375, 3
          %v4378 = vor.u32 %v4374, %v4377
          %v4379 = vsel %vm4254, %v4369, %v4378
          %v4381 = vshrl.u32 %v4186, 16
          %v4383 = vrot.slane %v4381, 2
          %v4384 = vshll.u32 %v4186, 16
          %v4386 = vrot.slane %v4384, 3
          %v4387 = vor.u32 %v4383, %v4386
          %v4388 = vsel %vm4254, %v4378, %v4387
          %v4390 = vshrl.u32 %v4187, 16
          %v4392 = vrot.slane %v4390, 2
          %v4393 = vshll.u32 %v4187, 16
          %v4395 = vrot.slane %v4393, 3
          %v4396 = vor.u32 %v4392, %v4395
          %v4397 = vsel %vm4254, %v4387, %v4396
          %v4399 = vshrl.u32 %v4188, 16
          %v4401 = vrot.slane %v4399, 2
          %v4402 = vshll.u32 %v4188, 16
          %v4404 = vrot.slane %v4402, 3
          %v4405 = vor.u32 %v4401, %v4404
          %v4406 = vsel %vm4254, %v4396, %v4405
          %v4408 = vshrl.u32 %v4189, 16
          %v4410 = vrot.slane %v4408, 2
          %v4411 = vshll.u32 %v4189, 16
          %v4413 = vrot.slane %v4411, 3
          %v4414 = vor.u32 %v4410, %v4413
          %v4415 = vsel %vm4254, %v4405, %v4414
          %v4417 = vshrl.u32 %v4190, 16
          %v4419 = vrot.slane %v4417, 2
          %v4420 = vshll.u32 %v4190, 16
          %v4422 = vrot.slane %v4420, 3
          %v4423 = vor.u32 %v4419, %v4422
          %v4424 = vsel %vm4254, %v4414, %v4423
          %v4426 = vshrl.u32 %v4191, 16
          %v4428 = vrot.slane %v4426, 2
          %v4429 = vshll.u32 %v4191, 16
          %v4431 = vrot.slane %v4429, 3
          %v4432 = vor.u32 %v4428, %v4431
          %v4433 = vsel %vm4254, %v4423, %v4432
          %v4435 = vshrl.u32 %v4192, 16
          %v4437 = vrot.slane %v4435, 2
          %v4438 = vshll.u32 %v4192, 16
          %v4440 = vrot.slane %v4438, 3
          %v4441 = vor.u32 %v4437, %v4440
          %v4442 = vsel %vm4254, %v4432, %v4441
          %v4444 = vshrl.u32 %v4193, 16
          %v4446 = vrot.slane %v4444, 2
          %v4447 = vshll.u32 %v4193, 16
          %v4449 = vrot.slane %v4447, 3
          %v4450 = vor.u32 %v4446, %v4449
          %v4451 = vsel %vm4254, %v4441, %v4450
          %v4453 = vshrl.u32 %v4194, 16
          %v4455 = vrot.slane %v4453, 2
          %v4456 = vshll.u32 %v4194, 16
          %v4458 = vrot.slane %v4456, 3
          %v4459 = vor.u32 %v4455, %v4458
          %v4460 = vsel %vm4254, %v4450, %v4459
          %v4462 = vshrl.u32 %v4195, 16
          %v4464 = vrot.slane %v4462, 2
          %v4465 = vshll.u32 %v4195, 16
          %v4467 = vrot.slane %v4465, 3
          %v4468 = vor.u32 %v4464, %v4467
          %v4469 = vsel %vm4254, %v4459, %v4468
          %v4471 = vshrl.u32 %v4196, 16
          %v4473 = vrot.slane %v4471, 2
          %v4474 = vshll.u32 %v4196, 16
          %v4476 = vrot.slane %v4474, 3
          %v4477 = vor.u32 %v4473, %v4476
          %v4478 = vsel %vm4254, %v4468, %v4477
          %v4480 = vshrl.u32 %v4197, 16
          %v4482 = vrot.slane %v4480, 2
          %v4483 = vshll.u32 %v4197, 16
          %v4485 = vrot.slane %v4483, 3
          %v4486 = vor.u32 %v4482, %v4485
          %v4487 = vsel %vm4254, %v4477, %v4486
          %v4489 = vshrl.u32 %v4198, 16
          %v4491 = vrot.slane %v4489, 2
          %v4492 = vshll.u32 %v4198, 16
          %v4494 = vrot.slane %v4492, 3
          %v4495 = vor.u32 %v4491, %v4494
          %v4496 = vsel %vm4254, %v4486, %v4495
          %v4498 = vshrl.u32 %v4199, 16
          %v4500 = vrot.slane %v4498, 2
          %v4501 = vshll.u32 %v4199, 16
          %v4503 = vrot.slane %v4501, 3
          %v4504 = vor.u32 %v4500, %v4503
          %v4505 = vsel %vm4254, %v4495, %v4504
          %v4507 = vshrl.u32 %v4200, 16
          %v4509 = vrot.slane %v4507, 2
          %v4510 = vshll.u32 %v4200, 16
          %v4512 = vrot.slane %v4510, 3
          %v4513 = vor.u32 %v4509, %v4512
          %v4514 = vsel %vm4254, %v4504, %v4513
          %v4516 = vshrl.u32 %v4201, 16
          %v4518 = vrot.slane %v4516, 2
          %v4519 = vshll.u32 %v4201, 16
          %v4521 = vrot.slane %v4519, 3
          %v4522 = vor.u32 %v4518, %v4521
          %v4523 = vsel %vm4254, %v4513, %v4522
          %v4525 = vshrl.u32 %v4202, 16
          %v4527 = vrot.slane %v4525, 2
          %v4528 = vshll.u32 %v4202, 16
          %v4530 = vrot.slane %v4528, 3
          %v4531 = vor.u32 %v4527, %v4530
          %v4532 = vsel %vm4254, %v4522, %v4531
          %v4534 = vshrl.u32 %v4203, 16
          %v4536 = vrot.slane %v4534, 2
          %v4537 = vshll.u32 %v4203, 16
          %v4539 = vrot.slane %v4537, 3
          %v4540 = vor.u32 %v4536, %v4539
          %v4541 = vsel %vm4254, %v4531, %v4540
          %v4543 = vshrl.u32 %v4204, 16
          %v4545 = vrot.slane %v4543, 2
          %v4546 = vshll.u32 %v4204, 16
          %v4548 = vrot.slane %v4546, 3
          %v4549 = vor.u32 %v4545, %v4548
          %v4550 = vsel %vm4254, %v4540, %v4549
          %v4615 = vunpack.c.l.b16 %v4205
          %v4616 = vunpack.c.h.b16 %v4205
          %v4617 = vunpack.c.l.b16 %v4206
          %v4618 = vunpack.c.l.b16 %v4207
          %v4619 = vunpack.c.h.b16 %v4207
          %v4620 = vunpack.c.l.b16 %v4208
          %v4621 = vunpack.c.l.b16 %v4209
          %v4622 = vunpack.c.h.b16 %v4209
          %v4623 = vunpack.c.l.b16 %v4210
          %v4624 = vunpack.c.l.b16 %v4211
          %v4625 = vunpack.c.h.b16 %v4211
          %v4626 = vunpack.c.l.b16 %v4212
          %v4627 = vunpack.c.l.b16 %v4213
          %v4628 = vunpack.c.h.b16 %v4213
          %v4629 = vunpack.c.l.b16 %v4214
          %v4630 = vunpack.c.l.b16 %v4215
          %v4631 = vunpack.c.h.b16 %v4215
          %v4632 = vunpack.c.l.b16 %v4216
          %v4633 = vunpack.c.l.b16 %v4217
          %v4634 = vunpack.c.h.b16 %v4217
          %v4635 = vunpack.c.l.b16 %v4218
          %v4636 = vunpack.c.l.b16 %v4219
          %v4637 = vunpack.c.h.b16 %v4219
          %v4638 = vunpack.c.l.b16 %v4220
          %v4639 = vunpack.c.l.b16 %v4221
          %v4640 = vunpack.c.h.b16 %v4221
          %v4641 = vunpack.c.l.b16 %v4222
          %v4642 = vunpack.c.l.b16 %v4223
          %v4643 = vunpack.c.h.b16 %v4223
          %v4644 = vunpack.c.l.b16 %v4224
          %v4645 = vunpack.c.l.b16 %v4225
          %v4646 = vunpack.c.h.b16 %v4225
          %v4647 = vunpack.c.l.b16 %v4226
          %v4648 = vunpack.c.l.b16 %v4227
          %v4649 = vunpack.c.h.b16 %v4227
          %v4650 = vunpack.c.l.b16 %v4228
          %v4651 = vunpack.c.l.b16 %v4229
          %v4652 = vunpack.c.h.b16 %v4229
          %v4653 = vunpack.c.l.b16 %v4230
          %v4654 = vunpack.c.l.b16 %v4231
          %v4655 = vunpack.c.h.b16 %v4231
          %v4656 = vunpack.c.l.b16 %v4232
          %v4657 = vunpack.c.l.b16 %v4233
          %v4658 = vunpack.c.h.b16 %v4233
          %v4659 = vunpack.c.l.b16 %v4234
          %v4660 = vunpack.c.l.b16 %v4235
          %v4661 = vunpack.c.h.b16 %v4235
          %v4662 = vunpack.c.l.b16 %v4236
          %v4663 = vpack.c.b16 %v4618, %v4615
          %v4664 = vpack.c.b16 %v4619, %v4616
          %v4665 = vpack.c.b16 %v4620, %v4617
          %v4666 = vpack.c.b16 %v4624, %v4621
          %v4667 = vpack.c.b16 %v4625, %v4622
          %v4668 = vpack.c.b16 %v4626, %v4623
          %v4669 = vpack.c.b16 %v4630, %v4627
          %v4670 = vpack.c.b16 %v4631, %v4628
          %v4671 = vpack.c.b16 %v4632, %v4629
          %v4672 = vpack.c.b16 %v4636, %v4633
          %v4673 = vpack.c.b16 %v4637, %v4634
          %v4674 = vpack.c.b16 %v4638, %v4635
          %v4675 = vpack.c.b16 %v4642, %v4639
          %v4676 = vpack.c.b16 %v4643, %v4640
          %v4677 = vpack.c.b16 %v4644, %v4641
          %v4678 = vpack.c.b16 %v4648, %v4645
          %v4679 = vpack.c.b16 %v4649, %v4646
          %v4680 = vpack.c.b16 %v4650, %v4647
          %v4681 = vpack.c.b16 %v4654, %v4651
          %v4682 = vpack.c.b16 %v4655, %v4652
          %v4683 = vpack.c.b16 %v4656, %v4653
          %v4684 = vpack.c.b16 %v4660, %v4657
          %v4685 = vpack.c.b16 %v4661, %v4658
          %v4686 = vpack.c.b16 %v4662, %v4659
          %4711 = vmatprep.subr.bf16.mxu0 %v4664
          %4712 = vmatpush1.bf16.msra.mxu0 %v4663
          %4713 = vmatprep.subr.bf16.mxu0 %v4667
          %4714 = vmatpush1.bf16.msra.mxu0 %v4666
          %4715 = vmatprep.subr.bf16.mxu0 %v4670
          %4716 = vmatpush1.bf16.msra.mxu0 %v4669
          %4717 = vmatprep.subr.bf16.mxu0 %v4673
          %4718 = vmatpush1.bf16.msra.mxu0 %v4672
          %4719 = vmatprep.subr.bf16.mxu0 %v4676
          %4720 = vmatpush1.bf16.msra.mxu0 %v4675
          %4721 = vmatprep.subr.bf16.mxu0 %v4679
          %4722 = vmatpush1.bf16.msra.mxu0 %v4678
          %4723 = vmatprep.subr.bf16.mxu0 %v4682
          %4724 = vmatpush1.bf16.msra.mxu0 %v4681
          %4725 = vmatprep.subr.bf16.mxu0 %v4685
          %4726 = vmatpush1.bf16.msra.mxu0 %v4684
          %4727 = vmatprep.subr.bf16.mxu0 0
          %4728 = vmatpush1.bf16.msra.mxu0 0
          %4729 = vmatprep.subr.bf16.mxu0 0
          %4730 = vmatpush1.bf16.msra.mxu0 0
          %4731 = vmatprep.subr.bf16.mxu0 0
          %4732 = vmatpush1.bf16.msra.mxu0 0
          %4733 = vmatprep.subr.bf16.mxu0 0
          %4734 = vmatpush1.bf16.msra.mxu0 0
          %4735 = vmatprep.subr.bf16.mxu0 0
          %4736 = vmatpush1.bf16.msra.mxu0 0
          %4737 = vmatprep.subr.bf16.mxu0 0
          %4738 = vmatpush1.bf16.msra.mxu0 0
          %4739 = vmatprep.subr.bf16.mxu0 0
          %4740 = vmatpush1.bf16.msra.mxu0 0
          %4741 = vmatprep.subr.bf16.mxu0 0
          %4742 = vmatpush1.bf16.msra.mxu0 0
          %4743 = vmatprep.mubr.bf16.mxu0 0
          %4744 = vmatmul.mubr.bf16.gmra.mrb[0].mxu0 %v4271
          %v4745 = vpop.f32.mrb[0].mxu0
          %v4746 = vadd.f32 %v4242, %v4745
          %v4747 = vpop.f32.mrb[0].mxu0
          %v4748 = vadd.f32 %v4246, %v4747
          %v4749 = vpop.f32.mrb[0].mxu0
          %v4750 = vadd.f32 %v4242, %v4749
          %v4751 = vpop.f32.mrb[0].mxu0
          %v4752 = vadd.f32 %v4246, %v4751
          %4753 = vmatprep.mubr.bf16.mxu0 0
          %4754 = vmatmul.mubr.bf16.gmra.mrb[0].mxu0 %v4280
          %v4755 = vpop.f32.mrb[0].mxu0
          %v4756 = vadd.f32 %v4242, %v4755
          %v4757 = vpop.f32.mrb[0].mxu0
          %v4758 = vadd.f32 %v4246, %v4757
          %v4759 = vpop.f32.mrb[0].mxu0
          %v4760 = vadd.f32 %v4242, %v4759
          %v4761 = vpop.f32.mrb[0].mxu0
          %v4762 = vadd.f32 %v4246, %v4761
          %4763 = vmatprep.mubr.bf16.mxu0 0
          %4764 = vmatmul.mubr.bf16.gmra.mrb[0].mxu0 %v4289
          %v4765 = vpop.f32.mrb[0].mxu0
          %v4766 = vadd.f32 %v4242, %v4765
          %v4767 = vpop.f32.mrb[0].mxu0
          %v4768 = vadd.f32 %v4246, %v4767
          %v4769 = vpop.f32.mrb[0].mxu0
          %v4770 = vadd.f32 %v4242, %v4769
          %v4771 = vpop.f32.mrb[0].mxu0
          %v4772 = vadd.f32 %v4246, %v4771
          %4773 = vmatprep.mubr.bf16.mxu0 0
          %4774 = vmatmul.mubr.bf16.gmra.mrb[0].mxu0 %v4298
          %v4775 = vpop.f32.mrb[0].mxu0
          %v4776 = vadd.f32 %v4242, %v4775
          %v4777 = vpop.f32.mrb[0].mxu0
          %v4778 = vadd.f32 %v4246, %v4777
          %v4779 = vpop.f32.mrb[0].mxu0
          %v4780 = vadd.f32 %v4242, %v4779
          %v4781 = vpop.f32.mrb[0].mxu0
          %v4782 = vadd.f32 %v4246, %v4781
          %4783 = vmatprep.mubr.bf16.mxu0 0
          %4784 = vmatmul.mubr.bf16.gmra.mrb[0].mxu0 %v4307
          %v4785 = vpop.f32.mrb[0].mxu0
          %v4786 = vadd.f32 %v4242, %v4785
          %v4787 = vpop.f32.mrb[0].mxu0
          %v4788 = vadd.f32 %v4246, %v4787
          %v4789 = vpop.f32.mrb[0].mxu0
          %v4790 = vadd.f32 %v4242, %v4789
          %v4791 = vpop.f32.mrb[0].mxu0
          %v4792 = vadd.f32 %v4246, %v4791
          %4793 = vmatprep.mubr.bf16.mxu0 0
          %4794 = vmatmul.mubr.bf16.gmra.mrb[0].mxu0 %v4316
          %v4795 = vpop.f32.mrb[0].mxu0
          %v4796 = vadd.f32 %v4242, %v4795
          %v4797 = vpop.f32.mrb[0].mxu0
          %v4798 = vadd.f32 %v4246, %v4797
          %v4799 = vpop.f32.mrb[0].mxu0
          %v4800 = vadd.f32 %v4242, %v4799
          %v4801 = vpop.f32.mrb[0].mxu0
          %v4802 = vadd.f32 %v4246, %v4801
          %4803 = vmatprep.mubr.bf16.mxu0 0
          %4804 = vmatmul.mubr.bf16.gmra.mrb[0].mxu0 %v4325
          %v4805 = vpop.f32.mrb[0].mxu0
          %v4806 = vadd.f32 %v4242, %v4805
          %v4807 = vpop.f32.mrb[0].mxu0
          %v4808 = vadd.f32 %v4246, %v4807
          %v4809 = vpop.f32.mrb[0].mxu0
          %v4810 = vadd.f32 %v4242, %v4809
          %v4811 = vpop.f32.mrb[0].mxu0
          %v4812 = vadd.f32 %v4246, %v4811
          %4813 = vmatprep.mubr.bf16.mxu0 0
          %4814 = vmatmul.mubr.bf16.gmra.mrb[0].mxu0 %v4334
          %v4815 = vpop.f32.mrb[0].mxu0
          %v4816 = vadd.f32 %v4242, %v4815
          %v4817 = vpop.f32.mrb[0].mxu0
          %v4818 = vadd.f32 %v4246, %v4817
          %v4819 = vpop.f32.mrb[0].mxu0
          %v4820 = vadd.f32 %v4242, %v4819
          %v4821 = vpop.f32.mrb[0].mxu0
          %v4822 = vadd.f32 %v4246, %v4821
          %4823 = vmatprep.mubr.bf16.mxu0 0
          %4824 = vmatmul.mubr.bf16.gmra.mrb[0].mxu0 %v4343
          %v4825 = vpop.f32.mrb[0].mxu0
          %v4826 = vadd.f32 %v4242, %v4825
          %v4827 = vpop.f32.mrb[0].mxu0
          %v4828 = vadd.f32 %v4246, %v4827
          %v4829 = vpop.f32.mrb[0].mxu0
          %v4830 = vadd.f32 %v4242, %v4829
          %v4831 = vpop.f32.mrb[0].mxu0
          %v4832 = vadd.f32 %v4246, %v4831
          %4833 = vmatprep.mubr.bf16.mxu0 0
          %4834 = vmatmul.mubr.bf16.gmra.mrb[0].mxu0 %v4352
          %v4835 = vpop.f32.mrb[0].mxu0
          %v4836 = vadd.f32 %v4242, %v4835
          %v4837 = vpop.f32.mrb[0].mxu0
          %v4838 = vadd.f32 %v4246, %v4837
          %v4839 = vpop.f32.mrb[0].mxu0
          %v4840 = vadd.f32 %v4242, %v4839
          %v4841 = vpop.f32.mrb[0].mxu0
          %v4842 = vadd.f32 %v4246, %v4841
          %4843 = vmatprep.mubr.bf16.mxu0 0
          %4844 = vmatmul.mubr.bf16.gmra.mrb[0].mxu0 %v4361
          %v4845 = vpop.f32.mrb[0].mxu0
          %v4846 = vadd.f32 %v4242, %v4845
          %v4847 = vpop.f32.mrb[0].mxu0
          %v4848 = vadd.f32 %v4246, %v4847
          %v4849 = vpop.f32.mrb[0].mxu0
          %v4850 = vadd.f32 %v4242, %v4849
          %v4851 = vpop.f32.mrb[0].mxu0
          %v4852 = vadd.f32 %v4246, %v4851
          %4853 = vmatprep.mubr.bf16.mxu0 0
          %4854 = vmatmul.mubr.bf16.gmra.mrb[0].mxu0 %v4370
          %v4855 = vpop.f32.mrb[0].mxu0
          %v4856 = vadd.f32 %v4242, %v4855
          %v4857 = vpop.f32.mrb[0].mxu0
          %v4858 = vadd.f32 %v4246, %v4857
          %v4859 = vpop.f32.mrb[0].mxu0
          %v4860 = vadd.f32 %v4242, %v4859
          %v4861 = vpop.f32.mrb[0].mxu0
          %v4862 = vadd.f32 %v4246, %v4861
          %4863 = vmatprep.mubr.bf16.mxu0 0
          %4864 = vmatmul.mubr.bf16.gmra.mrb[0].mxu0 %v4379
          %v4865 = vpop.f32.mrb[0].mxu0
          %v4866 = vadd.f32 %v4242, %v4865
          %v4867 = vpop.f32.mrb[0].mxu0
          %v4868 = vadd.f32 %v4246, %v4867
          %v4869 = vpop.f32.mrb[0].mxu0
          %v4870 = vadd.f32 %v4242, %v4869
          %v4871 = vpop.f32.mrb[0].mxu0
          %v4872 = vadd.f32 %v4246, %v4871
          %4873 = vmatprep.mubr.bf16.mxu0 0
          %4874 = vmatmul.mubr.bf16.gmra.mrb[0].mxu0 %v4388
          %v4875 = vpop.f32.mrb[0].mxu0
          %v4876 = vadd.f32 %v4242, %v4875
          %v4877 = vpop.f32.mrb[0].mxu0
          %v4878 = vadd.f32 %v4246, %v4877
          %v4879 = vpop.f32.mrb[0].mxu0
          %v4880 = vadd.f32 %v4242, %v4879
          %v4881 = vpop.f32.mrb[0].mxu0
          %v4882 = vadd.f32 %v4246, %v4881
          %4883 = vmatprep.mubr.bf16.mxu0 0
          %4884 = vmatmul.mubr.bf16.gmra.mrb[0].mxu0 %v4397
          %v4885 = vpop.f32.mrb[0].mxu0
          %v4886 = vadd.f32 %v4242, %v4885
          %v4887 = vpop.f32.mrb[0].mxu0
          %v4888 = vadd.f32 %v4246, %v4887
          %v4889 = vpop.f32.mrb[0].mxu0
          %v4890 = vadd.f32 %v4242, %v4889
          %v4891 = vpop.f32.mrb[0].mxu0
          %v4892 = vadd.f32 %v4246, %v4891
          %4893 = vmatprep.mubr.bf16.mxu0 0
          %4894 = vmatmul.mubr.bf16.gmra.mrb[0].mxu0 %v4406
          %v4895 = vpop.f32.mrb[0].mxu0
          %v4896 = vadd.f32 %v4242, %v4895
          %v4897 = vpop.f32.mrb[0].mxu0
          %v4898 = vadd.f32 %v4246, %v4897
          %v4899 = vpop.f32.mrb[0].mxu0
          %v4900 = vadd.f32 %v4242, %v4899
          %v4901 = vpop.f32.mrb[0].mxu0
          %v4902 = vadd.f32 %v4246, %v4901
          %4903 = vmatprep.mubr.bf16.mxu0 0
          %4904 = vmatmul.mubr.bf16.gmra.mrb[0].mxu0 %v4415
          %v4905 = vpop.f32.mrb[0].mxu0
          %v4906 = vadd.f32 %v4242, %v4905
          %v4907 = vpop.f32.mrb[0].mxu0
          %v4908 = vadd.f32 %v4246, %v4907
          %v4909 = vpop.f32.mrb[0].mxu0
          %v4910 = vadd.f32 %v4242, %v4909
          %v4911 = vpop.f32.mrb[0].mxu0
          %v4912 = vadd.f32 %v4246, %v4911
          %4913 = vmatprep.mubr.bf16.mxu0 0
          %4914 = vmatmul.mubr.bf16.gmra.mrb[0].mxu0 %v4424
          %v4915 = vpop.f32.mrb[0].mxu0
          %v4916 = vadd.f32 %v4242, %v4915
          %v4917 = vpop.f32.mrb[0].mxu0
          %v4918 = vadd.f32 %v4246, %v4917
          %v4919 = vpop.f32.mrb[0].mxu0
          %v4920 = vadd.f32 %v4242, %v4919
          %v4921 = vpop.f32.mrb[0].mxu0
          %v4922 = vadd.f32 %v4246, %v4921
          %4923 = vmatprep.mubr.bf16.mxu0 0
          %4924 = vmatmul.mubr.bf16.gmra.mrb[0].mxu0 %v4433
          %v4925 = vpop.f32.mrb[0].mxu0
          %v4926 = vadd.f32 %v4242, %v4925
          %v4927 = vpop.f32.mrb[0].mxu0
          %v4928 = vadd.f32 %v4246, %v4927
          %v4929 = vpop.f32.mrb[0].mxu0
          %v4930 = vadd.f32 %v4242, %v4929
          %v4931 = vpop.f32.mrb[0].mxu0
          %v4932 = vadd.f32 %v4246, %v4931
          %4933 = vmatprep.mubr.bf16.mxu0 0
          %4934 = vmatmul.mubr.bf16.gmra.mrb[0].mxu0 %v4442
          %v4935 = vpop.f32.mrb[0].mxu0
          %v4936 = vadd.f32 %v4242, %v4935
          %v4937 = vpop.f32.mrb[0].mxu0
          %v4938 = vadd.f32 %v4246, %v4937
          %v4939 = vpop.f32.mrb[0].mxu0
          %v4940 = vadd.f32 %v4242, %v4939
          %v4941 = vpop.f32.mrb[0].mxu0
          %v4942 = vadd.f32 %v4246, %v4941
          %4943 = vmatprep.mubr.bf16.mxu0 0
          %4944 = vmatmul.mubr.bf16.gmra.mrb[0].mxu0 %v4451
          %v4945 = vpop.f32.mrb[0].mxu0
          %v4946 = vadd.f32 %v4242, %v4945
          %v4947 = vpop.f32.mrb[0].mxu0
          %v4948 = vadd.f32 %v4246, %v4947
          %v4949 = vpop.f32.mrb[0].mxu0
          %v4950 = vadd.f32 %v4242, %v4949
          %v4951 = vpop.f32.mrb[0].mxu0
          %v4952 = vadd.f32 %v4246, %v4951
          %4953 = vmatprep.mubr.bf16.mxu0 0
          %4954 = vmatmul.mubr.bf16.gmra.mrb[0].mxu0 %v4460
          %v4955 = vpop.f32.mrb[0].mxu0
          %v4956 = vadd.f32 %v4242, %v4955
          %v4957 = vpop.f32.mrb[0].mxu0
          %v4958 = vadd.f32 %v4246, %v4957
          %v4959 = vpop.f32.mrb[0].mxu0
          %v4960 = vadd.f32 %v4242, %v4959
          %v4961 = vpop.f32.mrb[0].mxu0
          %v4962 = vadd.f32 %v4246, %v4961
          %4963 = vmatprep.mubr.bf16.mxu0 0
          %4964 = vmatmul.mubr.bf16.gmra.mrb[0].mxu0 %v4469
          %v4965 = vpop.f32.mrb[0].mxu0
          %v4966 = vadd.f32 %v4242, %v4965
          %v4967 = vpop.f32.mrb[0].mxu0
          %v4968 = vadd.f32 %v4246, %v4967
          %v4969 = vpop.f32.mrb[0].mxu0
          %v4970 = vadd.f32 %v4242, %v4969
          %v4971 = vpop.f32.mrb[0].mxu0
          %v4972 = vadd.f32 %v4246, %v4971
          %4973 = vmatprep.mubr.bf16.mxu0 0
          %4974 = vmatmul.mubr.bf16.gmra.mrb[0].mxu0 %v4478
          %v4975 = vpop.f32.mrb[0].mxu0
          %v4976 = vadd.f32 %v4242, %v4975
          %v4977 = vpop.f32.mrb[0].mxu0
          %v4978 = vadd.f32 %v4246, %v4977
          %v4979 = vpop.f32.mrb[0].mxu0
          %v4980 = vadd.f32 %v4242, %v4979
          %v4981 = vpop.f32.mrb[0].mxu0
          %v4982 = vadd.f32 %v4246, %v4981
          %4983 = vmatprep.mubr.bf16.mxu0 0
          %4984 = vmatmul.mubr.bf16.gmra.mrb[0].mxu0 %v4487
          %v4985 = vpop.f32.mrb[0].mxu0
          %v4986 = vadd.f32 %v4242, %v4985
          %v4987 = vpop.f32.mrb[0].mxu0
          %v4988 = vadd.f32 %v4246, %v4987
          %v4989 = vpop.f32.mrb[0].mxu0
          %v4990 = vadd.f32 %v4242, %v4989
          %v4991 = vpop.f32.mrb[0].mxu0
          %v4992 = vadd.f32 %v4246, %v4991
          %4993 = vmatprep.mubr.bf16.mxu0 0
          %4994 = vmatmul.mubr.bf16.gmra.mrb[0].mxu0 %v4496
          %v4995 = vpop.f32.mrb[0].mxu0
          %v4996 = vadd.f32 %v4242, %v4995
          %v4997 = vpop.f32.mrb[0].mxu0
          %v4998 = vadd.f32 %v4246, %v4997
          %v4999 = vpop.f32.mrb[0].mxu0
          %v5000 = vadd.f32 %v4242, %v4999
          %v5001 = vpop.f32.mrb[0].mxu0
          %v5002 = vadd.f32 %v4246, %v5001
          %5003 = vmatprep.mubr.bf16.mxu0 0
          %5004 = vmatmul.mubr.bf16.gmra.mrb[0].mxu0 %v4505
          %v5005 = vpop.f32.mrb[0].mxu0
          %v5006 = vadd.f32 %v4242, %v5005
          %v5007 = vpop.f32.mrb[0].mxu0
          %v5008 = vadd.f32 %v4246, %v5007
          %v5009 = vpop.f32.mrb[0].mxu0
          %v5010 = vadd.f32 %v4242, %v5009
          %v5011 = vpop.f32.mrb[0].mxu0
          %v5012 = vadd.f32 %v4246, %v5011
          %5013 = vmatprep.mubr.bf16.mxu0 0
          %5014 = vmatmul.mubr.bf16.gmra.mrb[0].mxu0 %v4514
          %v5015 = vpop.f32.mrb[0].mxu0
          %v5016 = vadd.f32 %v4242, %v5015
          %v5017 = vpop.f32.mrb[0].mxu0
          %v5018 = vadd.f32 %v4246, %v5017
          %v5019 = vpop.f32.mrb[0].mxu0
          %v5020 = vadd.f32 %v4242, %v5019
          %v5021 = vpop.f32.mrb[0].mxu0
          %v5022 = vadd.f32 %v4246, %v5021
          %5023 = vmatprep.mubr.bf16.mxu0 0
          %5024 = vmatmul.mubr.bf16.gmra.mrb[0].mxu0 %v4523
          %v5025 = vpop.f32.mrb[0].mxu0
          %v5026 = vadd.f32 %v4242, %v5025
          %v5027 = vpop.f32.mrb[0].mxu0
          %v5028 = vadd.f32 %v4246, %v5027
          %v5029 = vpop.f32.mrb[0].mxu0
          %v5030 = vadd.f32 %v4242, %v5029
          %v5031 = vpop.f32.mrb[0].mxu0
          %v5032 = vadd.f32 %v4246, %v5031
          %5033 = vmatprep.mubr.bf16.mxu0 0
          %5034 = vmatmul.mubr.bf16.gmra.mrb[0].mxu0 %v4532
          %v5035 = vpop.f32.mrb[0].mxu0
          %v5036 = vadd.f32 %v4242, %v5035
          %v5037 = vpop.f32.mrb[0].mxu0
          %v5038 = vadd.f32 %v4246, %v5037
          %v5039 = vpop.f32.mrb[0].mxu0
          %v5040 = vadd.f32 %v4242, %v5039
          %v5041 = vpop.f32.mrb[0].mxu0
          %v5042 = vadd.f32 %v4246, %v5041
          %5043 = vmatprep.mubr.bf16.mxu0 0
          %5044 = vmatmul.mubr.bf16.gmra.mrb[0].mxu0 %v4541
          %v5045 = vpop.f32.mrb[0].mxu0
          %v5046 = vadd.f32 %v4242, %v5045
          %v5047 = vpop.f32.mrb[0].mxu0
          %v5048 = vadd.f32 %v4246, %v5047
          %v5049 = vpop.f32.mrb[0].mxu0
          %v5050 = vadd.f32 %v4242, %v5049
          %v5051 = vpop.f32.mrb[0].mxu0
          %v5052 = vadd.f32 %v4246, %v5051
          %5053 = vmatprep.mubr.bf16.mxu0 0
          %5054 = vmatmul.mubr.bf16.gmra.mrb[0].mxu0 %v4550
          %v5055 = vpop.f32.mrb[0].mxu0
          %v5056 = vadd.f32 %v4242, %v5055
          %v5057 = vpop.f32.mrb[0].mxu0
          %v5058 = vadd.f32 %v4246, %v5057
          %v5059 = vpop.f32.mrb[0].mxu0
          %v5060 = vadd.f32 %v4242, %v5059
          %v5061 = vpop.f32.mrb[0].mxu0
          %v5062 = vadd.f32 %v4246, %v5061
          %5063 = vdwg.mxu0
          %5064 = vmatprep.subr.bf16.mxu0 0
          %5065 = vmatpush1.bf16.msra.mxu0 %v4665
          %5066 = vmatprep.subr.bf16.mxu0 0
          %5067 = vmatpush1.bf16.msra.mxu0 %v4668
          %5068 = vmatprep.subr.bf16.mxu0 0
          %5069 = vmatpush1.bf16.msra.mxu0 %v4671
          %5070 = vmatprep.subr.bf16.mxu0 0
          %5071 = vmatpush1.bf16.msra.mxu0 %v4674
          %5072 = vmatprep.subr.bf16.mxu0 0
          %5073 = vmatpush1.bf16.msra.mxu0 %v4677
          %5074 = vmatprep.subr.bf16.mxu0 0
          %5075 = vmatpush1.bf16.msra.mxu0 %v4680
          %5076 = vmatprep.subr.bf16.mxu0 0
          %5077 = vmatpush1.bf16.msra.mxu0 %v4683
          %5078 = vmatprep.subr.bf16.mxu0 0
          %5079 = vmatpush1.bf16.msra.mxu0 %v4686
          %5080 = vmatprep.subr.bf16.mxu0 0
          %5081 = vmatpush1.bf16.msra.mxu0 0
          %5082 = vmatprep.subr.bf16.mxu0 0
          %5083 = vmatpush1.bf16.msra.mxu0 0
          %5084 = vmatprep.subr.bf16.mxu0 0
          %5085 = vmatpush1.bf16.msra.mxu0 0
          %5086 = vmatprep.subr.bf16.mxu0 0
          %5087 = vmatpush1.bf16.msra.mxu0 0
          %5088 = vmatprep.subr.bf16.mxu0 0
          %5089 = vmatpush1.bf16.msra.mxu0 0
          %5090 = vmatprep.subr.bf16.mxu0 0
          %5091 = vmatpush1.bf16.msra.mxu0 0
          %5092 = vmatprep.subr.bf16.mxu0 0
          %5093 = vmatpush1.bf16.msra.mxu0 0
          %5094 = vmatprep.subr.bf16.mxu0 0
          %5095 = vmatpush1.bf16.msra.mxu0 0
          %5096 = vmatprep.mubr.bf16.mxu0 0
          %5097 = vmatmul.mubr.bf16.gmra.mrb[0].mxu0 %v4271
          %v5098 = vpop.f32.mrb[0].mxu0
          %v5099 = vadd.f32 %v4250, %v5098
          %v5100 = vpop.f32.mrb[0].mxu0
          %v5101 = vpop.f32.mrb[0].mxu0
          %v5102 = vadd.f32 %v4250, %v5101
          %v5103 = vpop.f32.mrb[0].mxu0
          %5104 = vmatprep.mubr.bf16.mxu0 0
          %5105 = vmatmul.mubr.bf16.gmra.mrb[0].mxu0 %v4280
          %v5106 = vpop.f32.mrb[0].mxu0
          %v5107 = vadd.f32 %v4250, %v5106
          %v5108 = vpop.f32.mrb[0].mxu0
          %v5109 = vpop.f32.mrb[0].mxu0
          %v5110 = vadd.f32 %v4250, %v5109
          %v5111 = vpop.f32.mrb[0].mxu0
          %5112 = vmatprep.mubr.bf16.mxu0 0
          %5113 = vmatmul.mubr.bf16.gmra.mrb[0].mxu0 %v4289
          %v5114 = vpop.f32.mrb[0].mxu0
          %v5115 = vadd.f32 %v4250, %v5114
          %v5116 = vpop.f32.mrb[0].mxu0
          %v5117 = vpop.f32.mrb[0].mxu0
          %v5118 = vadd.f32 %v4250, %v5117
          %v5119 = vpop.f32.mrb[0].mxu0
          %5120 = vmatprep.mubr.bf16.mxu0 0
          %5121 = vmatmul.mubr.bf16.gmra.mrb[0].mxu0 %v4298
          %v5122 = vpop.f32.mrb[0].mxu0
          %v5123 = vadd.f32 %v4250, %v5122
          %v5124 = vpop.f32.mrb[0].mxu0
          %v5125 = vpop.f32.mrb[0].mxu0
          %v5126 = vadd.f32 %v4250, %v5125
          %v5127 = vpop.f32.mrb[0].mxu0
          %5128 = vmatprep.mubr.bf16.mxu0 0
          %5129 = vmatmul.mubr.bf16.gmra.mrb[0].mxu0 %v4307
          %v5130 = vpop.f32.mrb[0].mxu0
          %v5131 = vadd.f32 %v4250, %v5130
          %v5132 = vpop.f32.mrb[0].mxu0
          %v5133 = vpop.f32.mrb[0].mxu0
          %v5134 = vadd.f32 %v4250, %v5133
          %v5135 = vpop.f32.mrb[0].mxu0
          %5136 = vmatprep.mubr.bf16.mxu0 0
          %5137 = vmatmul.mubr.bf16.gmra.mrb[0].mxu0 %v4316
          %v5138 = vpop.f32.mrb[0].mxu0
          %v5139 = vadd.f32 %v4250, %v5138
          %v5140 = vpop.f32.mrb[0].mxu0
          %v5141 = vpop.f32.mrb[0].mxu0
          %v5142 = vadd.f32 %v4250, %v5141
          %v5143 = vpop.f32.mrb[0].mxu0
          %5144 = vmatprep.mubr.bf16.mxu0 0
          %5145 = vmatmul.mubr.bf16.gmra.mrb[0].mxu0 %v4325
          %v5146 = vpop.f32.mrb[0].mxu0
          %v5147 = vadd.f32 %v4250, %v5146
          %v5148 = vpop.f32.mrb[0].mxu0
          %v5149 = vpop.f32.mrb[0].mxu0
          %v5150 = vadd.f32 %v4250, %v5149
          %v5151 = vpop.f32.mrb[0].mxu0
          %5152 = vmatprep.mubr.bf16.mxu0 0
          %5153 = vmatmul.mubr.bf16.gmra.mrb[0].mxu0 %v4334
          %v5154 = vpop.f32.mrb[0].mxu0
          %v5155 = vadd.f32 %v4250, %v5154
          %v5156 = vpop.f32.mrb[0].mxu0
          %v5157 = vpop.f32.mrb[0].mxu0
          %v5158 = vadd.f32 %v4250, %v5157
          %v5159 = vpop.f32.mrb[0].mxu0
          %5160 = vmatprep.mubr.bf16.mxu0 0
          %5161 = vmatmul.mubr.bf16.gmra.mrb[0].mxu0 %v4343
          %v5162 = vpop.f32.mrb[0].mxu0
          %v5163 = vadd.f32 %v4250, %v5162
          %v5164 = vpop.f32.mrb[0].mxu0
          %v5165 = vpop.f32.mrb[0].mxu0
          %v5166 = vadd.f32 %v4250, %v5165
          %v5167 = vpop.f32.mrb[0].mxu0
          %5168 = vmatprep.mubr.bf16.mxu0 0
          %5169 = vmatmul.mubr.bf16.gmra.mrb[0].mxu0 %v4352
          %v5170 = vpop.f32.mrb[0].mxu0
          %v5171 = vadd.f32 %v4250, %v5170
          %v5172 = vpop.f32.mrb[0].mxu0
          %v5173 = vpop.f32.mrb[0].mxu0
          %v5174 = vadd.f32 %v4250, %v5173
          %v5175 = vpop.f32.mrb[0].mxu0
          %5176 = vmatprep.mubr.bf16.mxu0 0
          %5177 = vmatmul.mubr.bf16.gmra.mrb[0].mxu0 %v4361
          %v5178 = vpop.f32.mrb[0].mxu0
          %v5179 = vadd.f32 %v4250, %v5178
          %v5180 = vpop.f32.mrb[0].mxu0
          %v5181 = vpop.f32.mrb[0].mxu0
          %v5182 = vadd.f32 %v4250, %v5181
          %v5183 = vpop.f32.mrb[0].mxu0
          %5184 = vmatprep.mubr.bf16.mxu0 0
          %5185 = vmatmul.mubr.bf16.gmra.mrb[0].mxu0 %v4370
          %v5186 = vpop.f32.mrb[0].mxu0
          %v5187 = vadd.f32 %v4250, %v5186
          %v5188 = vpop.f32.mrb[0].mxu0
          %v5189 = vpop.f32.mrb[0].mxu0
          %v5190 = vadd.f32 %v4250, %v5189
          %v5191 = vpop.f32.mrb[0].mxu0
          %5192 = vmatprep.mubr.bf16.mxu0 0
          %5193 = vmatmul.mubr.bf16.gmra.mrb[0].mxu0 %v4379
          %v5194 = vpop.f32.mrb[0].mxu0
          %v5195 = vadd.f32 %v4250, %v5194
          %v5196 = vpop.f32.mrb[0].mxu0
          %v5197 = vpop.f32.mrb[0].mxu0
          %v5198 = vadd.f32 %v4250, %v5197
          %v5199 = vpop.f32.mrb[0].mxu0
          %5200 = vmatprep.mubr.bf16.mxu0 0
          %5201 = vmatmul.mubr.bf16.gmra.mrb[0].mxu0 %v4388
          %v5202 = vpop.f32.mrb[0].mxu0
          %v5203 = vadd.f32 %v4250, %v5202
          %v5204 = vpop.f32.mrb[0].mxu0
          %v5205 = vpop.f32.mrb[0].mxu0
          %v5206 = vadd.f32 %v4250, %v5205
          %v5207 = vpop.f32.mrb[0].mxu0
          %5208 = vmatprep.mubr.bf16.mxu0 0
          %5209 = vmatmul.mubr.bf16.gmra.mrb[0].mxu0 %v4397
          %v5210 = vpop.f32.mrb[0].mxu0
          %v5211 = vadd.f32 %v4250, %v5210
          %v5212 = vpop.f32.mrb[0].mxu0
          %v5213 = vpop.f32.mrb[0].mxu0
          %v5214 = vadd.f32 %v4250, %v5213
          %v5215 = vpop.f32.mrb[0].mxu0
          %5216 = vmatprep.mubr.bf16.mxu0 0
          %5217 = vmatmul.mubr.bf16.gmra.mrb[0].mxu0 %v4406
          %v5218 = vpop.f32.mrb[0].mxu0
          %v5219 = vadd.f32 %v4250, %v5218
          %v5220 = vpop.f32.mrb[0].mxu0
          %v5221 = vpop.f32.mrb[0].mxu0
          %v5222 = vadd.f32 %v4250, %v5221
          %v5223 = vpop.f32.mrb[0].mxu0
          %5224 = vmatprep.mubr.bf16.mxu0 0
          %5225 = vmatmul.mubr.bf16.gmra.mrb[0].mxu0 %v4415
          %v5226 = vpop.f32.mrb[0].mxu0
          %v5227 = vadd.f32 %v4250, %v5226
          %v5228 = vpop.f32.mrb[0].mxu0
          %v5229 = vpop.f32.mrb[0].mxu0
          %v5230 = vadd.f32 %v4250, %v5229
          %v5231 = vpop.f32.mrb[0].mxu0
          %5232 = vmatprep.mubr.bf16.mxu0 0
          %5233 = vmatmul.mubr.bf16.gmra.mrb[0].mxu0 %v4424
          %v5234 = vpop.f32.mrb[0].mxu0
          %v5235 = vadd.f32 %v4250, %v5234
          %v5236 = vpop.f32.mrb[0].mxu0
          %v5237 = vpop.f32.mrb[0].mxu0
          %v5238 = vadd.f32 %v4250, %v5237
          %v5239 = vpop.f32.mrb[0].mxu0
          %5240 = vmatprep.mubr.bf16.mxu0 0
          %5241 = vmatmul.mubr.bf16.gmra.mrb[0].mxu0 %v4433
          %v5242 = vpop.f32.mrb[0].mxu0
          %v5243 = vadd.f32 %v4250, %v5242
          %v5244 = vpop.f32.mrb[0].mxu0
          %v5245 = vpop.f32.mrb[0].mxu0
          %v5246 = vadd.f32 %v4250, %v5245
          %v5247 = vpop.f32.mrb[0].mxu0
          %5248 = vmatprep.mubr.bf16.mxu0 0
          %5249 = vmatmul.mubr.bf16.gmra.mrb[0].mxu0 %v4442
          %v5250 = vpop.f32.mrb[0].mxu0
          %v5251 = vadd.f32 %v4250, %v5250
          %v5252 = vpop.f32.mrb[0].mxu0
          %v5253 = vpop.f32.mrb[0].mxu0
          %v5254 = vadd.f32 %v4250, %v5253
          %v5255 = vpop.f32.mrb[0].mxu0
          %5256 = vmatprep.mubr.bf16.mxu0 0
          %5257 = vmatmul.mubr.bf16.gmra.mrb[0].mxu0 %v4451
          %v5258 = vpop.f32.mrb[0].mxu0
          %v5259 = vadd.f32 %v4250, %v5258
          %v5260 = vpop.f32.mrb[0].mxu0
          %v5261 = vpop.f32.mrb[0].mxu0
          %v5262 = vadd.f32 %v4250, %v5261
          %v5263 = vpop.f32.mrb[0].mxu0
          %5264 = vmatprep.mubr.bf16.mxu0 0
          %5265 = vmatmul.mubr.bf16.gmra.mrb[0].mxu0 %v4460
          %v5266 = vpop.f32.mrb[0].mxu0
          %v5267 = vadd.f32 %v4250, %v5266
          %v5268 = vpop.f32.mrb[0].mxu0
          %v5269 = vpop.f32.mrb[0].mxu0
          %v5270 = vadd.f32 %v4250, %v5269
          %v5271 = vpop.f32.mrb[0].mxu0
          %5272 = vmatprep.mubr.bf16.mxu0 0
          %5273 = vmatmul.mubr.bf16.gmra.mrb[0].mxu0 %v4469
          %v5274 = vpop.f32.mrb[0].mxu0
          %v5275 = vadd.f32 %v4250, %v5274
          %v5276 = vpop.f32.mrb[0].mxu0
          %v5277 = vpop.f32.mrb[0].mxu0
          %v5278 = vadd.f32 %v4250, %v5277
          %v5279 = vpop.f32.mrb[0].mxu0
          %5280 = vmatprep.mubr.bf16.mxu0 0
          %5281 = vmatmul.mubr.bf16.gmra.mrb[0].mxu0 %v4478
          %v5282 = vpop.f32.mrb[0].mxu0
          %v5283 = vadd.f32 %v4250, %v5282
          %v5284 = vpop.f32.mrb[0].mxu0
          %v5285 = vpop.f32.mrb[0].mxu0
          %v5286 = vadd.f32 %v4250, %v5285
          %v5287 = vpop.f32.mrb[0].mxu0
          %5288 = vmatprep.mubr.bf16.mxu0 0
          %5289 = vmatmul.mubr.bf16.gmra.mrb[0].mxu0 %v4487
          %v5290 = vpop.f32.mrb[0].mxu0
          %v5291 = vadd.f32 %v4250, %v5290
          %v5292 = vpop.f32.mrb[0].mxu0
          %v5293 = vpop.f32.mrb[0].mxu0
          %v5294 = vadd.f32 %v4250, %v5293
          %v5295 = vpop.f32.mrb[0].mxu0
          %5296 = vmatprep.mubr.bf16.mxu0 0
          %5297 = vmatmul.mubr.bf16.gmra.mrb[0].mxu0 %v4496
          %v5298 = vpop.f32.mrb[0].mxu0
          %v5299 = vadd.f32 %v4250, %v5298
          %v5300 = vpop.f32.mrb[0].mxu0
          %v5301 = vpop.f32.mrb[0].mxu0
          %v5302 = vadd.f32 %v4250, %v5301
          %v5303 = vpop.f32.mrb[0].mxu0
          %5304 = vmatprep.mubr.bf16.mxu0 0
          %5305 = vmatmul.mubr.bf16.gmra.mrb[0].mxu0 %v4505
          %v5306 = vpop.f32.mrb[0].mxu0
          %v5307 = vadd.f32 %v4250, %v5306
          %v5308 = vpop.f32.mrb[0].mxu0
          %v5309 = vpop.f32.mrb[0].mxu0
          %v5310 = vadd.f32 %v4250, %v5309
          %v5311 = vpop.f32.mrb[0].mxu0
          %5312 = vmatprep.mubr.bf16.mxu0 0
          %5313 = vmatmul.mubr.bf16.gmra.mrb[0].mxu0 %v4514
          %v5314 = vpop.f32.mrb[0].mxu0
          %v5315 = vadd.f32 %v4250, %v5314
          %v5316 = vpop.f32.mrb[0].mxu0
          %v5317 = vpop.f32.mrb[0].mxu0
          %v5318 = vadd.f32 %v4250, %v5317
          %v5319 = vpop.f32.mrb[0].mxu0
          %5320 = vmatprep.mubr.bf16.mxu0 0
          %5321 = vmatmul.mubr.bf16.gmra.mrb[0].mxu0 %v4523
          %v5322 = vpop.f32.mrb[0].mxu0
          %v5323 = vadd.f32 %v4250, %v5322
          %v5324 = vpop.f32.mrb[0].mxu0
          %v5325 = vpop.f32.mrb[0].mxu0
          %v5326 = vadd.f32 %v4250, %v5325
          %v5327 = vpop.f32.mrb[0].mxu0
          %5328 = vmatprep.mubr.bf16.mxu0 0
          %5329 = vmatmul.mubr.bf16.gmra.mrb[0].mxu0 %v4532
          %v5330 = vpop.f32.mrb[0].mxu0
          %v5331 = vadd.f32 %v4250, %v5330
          %v5332 = vpop.f32.mrb[0].mxu0
          %v5333 = vpop.f32.mrb[0].mxu0
          %v5334 = vadd.f32 %v4250, %v5333
          %v5335 = vpop.f32.mrb[0].mxu0
          %5336 = vmatprep.mubr.bf16.mxu0 0
          %5337 = vmatmul.mubr.bf16.gmra.mrb[0].mxu0 %v4541
          %v5338 = vpop.f32.mrb[0].mxu0
          %v5339 = vadd.f32 %v4250, %v5338
          %v5340 = vpop.f32.mrb[0].mxu0
          %v5341 = vpop.f32.mrb[0].mxu0
          %v5342 = vadd.f32 %v4250, %v5341
          %v5343 = vpop.f32.mrb[0].mxu0
          %5344 = vmatprep.mubr.bf16.mxu0 0
          %5345 = vmatmul.mubr.bf16.gmra.mrb[0].mxu0 %v4550
          %v5346 = vpop.f32.mrb[0].mxu0
          %v5347 = vadd.f32 %v4250, %v5346
          %v5348 = vpop.f32.mrb[0].mxu0
          %v5349 = vpop.f32.mrb[0].mxu0
          %v5350 = vadd.f32 %v4250, %v5349
          %v5351 = vpop.f32.mrb[0].mxu0
          %5352 = vdwg.mxu0
          %v5353 = vmul.f32 %v4746, %v4746
          %v5354 = vmul.f32 %v4748, %v4748
          %v5355 = vmul.f32 %v5099, %v5099
          %v5356 = vmul.f32 %v4750, %v4750
          %v5357 = vmul.f32 %v4752, %v4752
          %v5358 = vmul.f32 %v5102, %v5102
          %v5359 = vmul.f32 %v4756, %v4756
          %v5360 = vmul.f32 %v4758, %v4758
          %v5361 = vmul.f32 %v5107, %v5107
          %v5362 = vmul.f32 %v4760, %v4760
          %v5363 = vmul.f32 %v4762, %v4762
          %v5364 = vmul.f32 %v5110, %v5110
          %v5365 = vmul.f32 %v4766, %v4766
          %v5366 = vmul.f32 %v4768, %v4768
          %v5367 = vmul.f32 %v5115, %v5115
          %v5368 = vmul.f32 %v4770, %v4770
          %v5369 = vmul.f32 %v4772, %v4772
          %v5370 = vmul.f32 %v5118, %v5118
          %v5371 = vmul.f32 %v4776, %v4776
          %v5372 = vmul.f32 %v4778, %v4778
          %v5373 = vmul.f32 %v5123, %v5123
          %v5374 = vmul.f32 %v4780, %v4780
          %v5375 = vmul.f32 %v4782, %v4782
          %v5376 = vmul.f32 %v5126, %v5126
          %v5377 = vmul.f32 %v4786, %v4786
          %v5378 = vmul.f32 %v4788, %v4788
          %v5379 = vmul.f32 %v5131, %v5131
          %v5380 = vmul.f32 %v4790, %v4790
          %v5381 = vmul.f32 %v4792, %v4792
          %v5382 = vmul.f32 %v5134, %v5134
          %v5383 = vmul.f32 %v4796, %v4796
          %v5384 = vmul.f32 %v4798, %v4798
          %v5385 = vmul.f32 %v5139, %v5139
          %v5386 = vmul.f32 %v4800, %v4800
          %v5387 = vmul.f32 %v4802, %v4802
          %v5388 = vmul.f32 %v5142, %v5142
          %v5389 = vmul.f32 %v4806, %v4806
          %v5390 = vmul.f32 %v4808, %v4808
          %v5391 = vmul.f32 %v5147, %v5147
          %v5392 = vmul.f32 %v4810, %v4810
          %v5393 = vmul.f32 %v4812, %v4812
          %v5394 = vmul.f32 %v5150, %v5150
          %v5395 = vmul.f32 %v4816, %v4816
          %v5396 = vmul.f32 %v4818, %v4818
          %v5397 = vmul.f32 %v5155, %v5155
          %v5398 = vmul.f32 %v4820, %v4820
          %v5399 = vmul.f32 %v4822, %v4822
          %v5400 = vmul.f32 %v5158, %v5158
          %v5401 = vmul.f32 %v4826, %v4826
          %v5402 = vmul.f32 %v4828, %v4828
          %v5403 = vmul.f32 %v5163, %v5163
          %v5404 = vmul.f32 %v4830, %v4830
          %v5405 = vmul.f32 %v4832, %v4832
          %v5406 = vmul.f32 %v5166, %v5166
          %v5407 = vmul.f32 %v4836, %v4836
          %v5408 = vmul.f32 %v4838, %v4838
          %v5409 = vmul.f32 %v5171, %v5171
          %v5410 = vmul.f32 %v4840, %v4840
          %v5411 = vmul.f32 %v4842, %v4842
          %v5412 = vmul.f32 %v5174, %v5174
          %v5413 = vmul.f32 %v4846, %v4846
          %v5414 = vmul.f32 %v4848, %v4848
          %v5415 = vmul.f32 %v5179, %v5179
          %v5416 = vmul.f32 %v4850, %v4850
          %v5417 = vmul.f32 %v4852, %v4852
          %v5418 = vmul.f32 %v5182, %v5182
          %v5419 = vmul.f32 %v4856, %v4856
          %v5420 = vmul.f32 %v4858, %v4858
          %v5421 = vmul.f32 %v5187, %v5187
          %v5422 = vmul.f32 %v4860, %v4860
          %v5423 = vmul.f32 %v4862, %v4862
          %v5424 = vmul.f32 %v5190, %v5190
          %v5425 = vmul.f32 %v4866, %v4866
          %v5426 = vmul.f32 %v4868, %v4868
          %v5427 = vmul.f32 %v5195, %v5195
          %v5428 = vmul.f32 %v4870, %v4870
          %v5429 = vmul.f32 %v4872, %v4872
          %v5430 = vmul.f32 %v5198, %v5198
          %v5431 = vmul.f32 %v4876, %v4876
          %v5432 = vmul.f32 %v4878, %v4878
          %v5433 = vmul.f32 %v5203, %v5203
          %v5434 = vmul.f32 %v4880, %v4880
          %v5435 = vmul.f32 %v4882, %v4882
          %v5436 = vmul.f32 %v5206, %v5206
          %v5437 = vmul.f32 %v4886, %v4886
          %v5438 = vmul.f32 %v4888, %v4888
          %v5439 = vmul.f32 %v5211, %v5211
          %v5440 = vmul.f32 %v4890, %v4890
          %v5441 = vmul.f32 %v4892, %v4892
          %v5442 = vmul.f32 %v5214, %v5214
          %v5443 = vmul.f32 %v4896, %v4896
          %v5444 = vmul.f32 %v4898, %v4898
          %v5445 = vmul.f32 %v5219, %v5219
          %v5446 = vmul.f32 %v4900, %v4900
          %v5447 = vmul.f32 %v4902, %v4902
          %v5448 = vmul.f32 %v5222, %v5222
          %v5449 = vmul.f32 %v4906, %v4906
          %v5450 = vmul.f32 %v4908, %v4908
          %v5451 = vmul.f32 %v5227, %v5227
          %v5452 = vmul.f32 %v4910, %v4910
          %v5453 = vmul.f32 %v4912, %v4912
          %v5454 = vmul.f32 %v5230, %v5230
          %v5455 = vmul.f32 %v4916, %v4916
          %v5456 = vmul.f32 %v4918, %v4918
          %v5457 = vmul.f32 %v5235, %v5235
          %v5458 = vmul.f32 %v4920, %v4920
          %v5459 = vmul.f32 %v4922, %v4922
          %v5460 = vmul.f32 %v5238, %v5238
          %v5461 = vmul.f32 %v4926, %v4926
          %v5462 = vmul.f32 %v4928, %v4928
          %v5463 = vmul.f32 %v5243, %v5243
          %v5464 = vmul.f32 %v4930, %v4930
          %v5465 = vmul.f32 %v4932, %v4932
          %v5466 = vmul.f32 %v5246, %v5246
          %v5467 = vmul.f32 %v4936, %v4936
          %v5468 = vmul.f32 %v4938, %v4938
          %v5469 = vmul.f32 %v5251, %v5251
          %v5470 = vmul.f32 %v4940, %v4940
          %v5471 = vmul.f32 %v4942, %v4942
          %v5472 = vmul.f32 %v5254, %v5254
          %v5473 = vmul.f32 %v4946, %v4946
          %v5474 = vmul.f32 %v4948, %v4948
          %v5475 = vmul.f32 %v5259, %v5259
          %v5476 = vmul.f32 %v4950, %v4950
          %v5477 = vmul.f32 %v4952, %v4952
          %v5478 = vmul.f32 %v5262, %v5262
          %v5479 = vmul.f32 %v4956, %v4956
          %v5480 = vmul.f32 %v4958, %v4958
          %v5481 = vmul.f32 %v5267, %v5267
          %v5482 = vmul.f32 %v4960, %v4960
          %v5483 = vmul.f32 %v4962, %v4962
          %v5484 = vmul.f32 %v5270, %v5270
          %v5485 = vmul.f32 %v4966, %v4966
          %v5486 = vmul.f32 %v4968, %v4968
          %v5487 = vmul.f32 %v5275, %v5275
          %v5488 = vmul.f32 %v4970, %v4970
          %v5489 = vmul.f32 %v4972, %v4972
          %v5490 = vmul.f32 %v5278, %v5278
          %v5491 = vmul.f32 %v4976, %v4976
          %v5492 = vmul.f32 %v4978, %v4978
          %v5493 = vmul.f32 %v5283, %v5283
          %v5494 = vmul.f32 %v4980, %v4980
          %v5495 = vmul.f32 %v4982, %v4982
          %v5496 = vmul.f32 %v5286, %v5286
          %v5497 = vmul.f32 %v4986, %v4986
          %v5498 = vmul.f32 %v4988, %v4988
          %v5499 = vmul.f32 %v5291, %v5291
          %v5500 = vmul.f32 %v4990, %v4990
          %v5501 = vmul.f32 %v4992, %v4992
          %v5502 = vmul.f32 %v5294, %v5294
          %v5503 = vmul.f32 %v4996, %v4996
          %v5504 = vmul.f32 %v4998, %v4998
          %v5505 = vmul.f32 %v5299, %v5299
          %v5506 = vmul.f32 %v5000, %v5000
          %v5507 = vmul.f32 %v5002, %v5002
          %v5508 = vmul.f32 %v5302, %v5302
          %v5509 = vmul.f32 %v5006, %v5006
          %v5510 = vmul.f32 %v5008, %v5008
          %v5511 = vmul.f32 %v5307, %v5307
          %v5512 = vmul.f32 %v5010, %v5010
          %v5513 = vmul.f32 %v5012, %v5012
          %v5514 = vmul.f32 %v5310, %v5310
          %v5515 = vmul.f32 %v5016, %v5016
          %v5516 = vmul.f32 %v5018, %v5018
          %v5517 = vmul.f32 %v5315, %v5315
          %v5518 = vmul.f32 %v5020, %v5020
          %v5519 = vmul.f32 %v5022, %v5022
          %v5520 = vmul.f32 %v5318, %v5318
          %v5521 = vmul.f32 %v5026, %v5026
          %v5522 = vmul.f32 %v5028, %v5028
          %v5523 = vmul.f32 %v5323, %v5323
          %v5524 = vmul.f32 %v5030, %v5030
          %v5525 = vmul.f32 %v5032, %v5032
          %v5526 = vmul.f32 %v5326, %v5326
          %v5527 = vmul.f32 %v5036, %v5036
          %v5528 = vmul.f32 %v5038, %v5038
          %v5529 = vmul.f32 %v5331, %v5331
          %v5530 = vmul.f32 %v5040, %v5040
          %v5531 = vmul.f32 %v5042, %v5042
          %v5532 = vmul.f32 %v5334, %v5334
          %v5533 = vmul.f32 %v5046, %v5046
          %v5534 = vmul.f32 %v5048, %v5048
          %v5535 = vmul.f32 %v5339, %v5339
          %v5536 = vmul.f32 %v5050, %v5050
          %v5537 = vmul.f32 %v5052, %v5052
          %v5538 = vmul.f32 %v5342, %v5342
          %v5539 = vmul.f32 %v5056, %v5056
          %v5540 = vmul.f32 %v5058, %v5058
          %v5541 = vmul.f32 %v5347, %v5347
          %v5542 = vmul.f32 %v5060, %v5060
          %v5543 = vmul.f32 %v5062, %v5062
          %v5544 = vmul.f32 %v5350, %v5350
          %v5545 = vmul.f32 %v4746, %v5353
          %v5546 = vmul.f32 %v4748, %v5354
          %v5547 = vmul.f32 %v5099, %v5355
          %v5548 = vmul.f32 %v4750, %v5356
          %v5549 = vmul.f32 %v4752, %v5357
          %v5550 = vmul.f32 %v5102, %v5358
          %v5551 = vmul.f32 %v4756, %v5359
          %v5552 = vmul.f32 %v4758, %v5360
          %v5553 = vmul.f32 %v5107, %v5361
          %v5554 = vmul.f32 %v4760, %v5362
          %v5555 = vmul.f32 %v4762, %v5363
          %v5556 = vmul.f32 %v5110, %v5364
          %v5557 = vmul.f32 %v4766, %v5365
          %v5558 = vmul.f32 %v4768, %v5366
          %v5559 = vmul.f32 %v5115, %v5367
          %v5560 = vmul.f32 %v4770, %v5368
          %v5561 = vmul.f32 %v4772, %v5369
          %v5562 = vmul.f32 %v5118, %v5370
          %v5563 = vmul.f32 %v4776, %v5371
          %v5564 = vmul.f32 %v4778, %v5372
          %v5565 = vmul.f32 %v5123, %v5373
          %v5566 = vmul.f32 %v4780, %v5374
          %v5567 = vmul.f32 %v4782, %v5375
          %v5568 = vmul.f32 %v5126, %v5376
          %v5569 = vmul.f32 %v4786, %v5377
          %v5570 = vmul.f32 %v4788, %v5378
          %v5571 = vmul.f32 %v5131, %v5379
          %v5572 = vmul.f32 %v4790, %v5380
          %v5573 = vmul.f32 %v4792, %v5381
          %v5574 = vmul.f32 %v5134, %v5382
          %v5575 = vmul.f32 %v4796, %v5383
          %v5576 = vmul.f32 %v4798, %v5384
          %v5577 = vmul.f32 %v5139, %v5385
          %v5578 = vmul.f32 %v4800, %v5386
          %v5579 = vmul.f32 %v4802, %v5387
          %v5580 = vmul.f32 %v5142, %v5388
          %v5581 = vmul.f32 %v4806, %v5389
          %v5582 = vmul.f32 %v4808, %v5390
          %v5583 = vmul.f32 %v5147, %v5391
          %v5584 = vmul.f32 %v4810, %v5392
          %v5585 = vmul.f32 %v4812, %v5393
          %v5586 = vmul.f32 %v5150, %v5394
          %v5587 = vmul.f32 %v4816, %v5395
          %v5588 = vmul.f32 %v4818, %v5396
          %v5589 = vmul.f32 %v5155, %v5397
          %v5590 = vmul.f32 %v4820, %v5398
          %v5591 = vmul.f32 %v4822, %v5399
          %v5592 = vmul.f32 %v5158, %v5400
          %v5593 = vmul.f32 %v4826, %v5401
          %v5594 = vmul.f32 %v4828, %v5402
          %v5595 = vmul.f32 %v5163, %v5403
          %v5596 = vmul.f32 %v4830, %v5404
          %v5597 = vmul.f32 %v4832, %v5405
          %v5598 = vmul.f32 %v5166, %v5406
          %v5599 = vmul.f32 %v4836, %v5407
          %v5600 = vmul.f32 %v4838, %v5408
          %v5601 = vmul.f32 %v5171, %v5409
          %v5602 = vmul.f32 %v4840, %v5410
          %v5603 = vmul.f32 %v4842, %v5411
          %v5604 = vmul.f32 %v5174, %v5412
          %v5605 = vmul.f32 %v4846, %v5413
          %v5606 = vmul.f32 %v4848, %v5414
          %v5607 = vmul.f32 %v5179, %v5415
          %v5608 = vmul.f32 %v4850, %v5416
          %v5609 = vmul.f32 %v4852, %v5417
          %v5610 = vmul.f32 %v5182, %v5418
          %v5611 = vmul.f32 %v4856, %v5419
          %v5612 = vmul.f32 %v4858, %v5420
          %v5613 = vmul.f32 %v5187, %v5421
          %v5614 = vmul.f32 %v4860, %v5422
          %v5615 = vmul.f32 %v4862, %v5423
          %v5616 = vmul.f32 %v5190, %v5424
          %v5617 = vmul.f32 %v4866, %v5425
          %v5618 = vmul.f32 %v4868, %v5426
          %v5619 = vmul.f32 %v5195, %v5427
          %v5620 = vmul.f32 %v4870, %v5428
          %v5621 = vmul.f32 %v4872, %v5429
          %v5622 = vmul.f32 %v5198, %v5430
          %v5623 = vmul.f32 %v4876, %v5431
          %v5624 = vmul.f32 %v4878, %v5432
          %v5625 = vmul.f32 %v5203, %v5433
          %v5626 = vmul.f32 %v4880, %v5434
          %v5627 = vmul.f32 %v4882, %v5435
          %v5628 = vmul.f32 %v5206, %v5436
          %v5629 = vmul.f32 %v4886, %v5437
          %v5630 = vmul.f32 %v4888, %v5438
          %v5631 = vmul.f32 %v5211, %v5439
          %v5632 = vmul.f32 %v4890, %v5440
          %v5633 = vmul.f32 %v4892, %v5441
          %v5634 = vmul.f32 %v5214, %v5442
          %v5635 = vmul.f32 %v4896, %v5443
          %v5636 = vmul.f32 %v4898, %v5444
          %v5637 = vmul.f32 %v5219, %v5445
          %v5638 = vmul.f32 %v4900, %v5446
          %v5639 = vmul.f32 %v4902, %v5447
          %v5640 = vmul.f32 %v5222, %v5448
          %v5641 = vmul.f32 %v4906, %v5449
          %v5642 = vmul.f32 %v4908, %v5450
          %v5643 = vmul.f32 %v5227, %v5451
          %v5644 = vmul.f32 %v4910, %v5452
          %v5645 = vmul.f32 %v4912, %v5453
          %v5646 = vmul.f32 %v5230, %v5454
          %v5647 = vmul.f32 %v4916, %v5455
          %v5648 = vmul.f32 %v4918, %v5456
          %v5649 = vmul.f32 %v5235, %v5457
          %v5650 = vmul.f32 %v4920, %v5458
          %v5651 = vmul.f32 %v4922, %v5459
          %v5652 = vmul.f32 %v5238, %v5460
          %v5653 = vmul.f32 %v4926, %v5461
          %v5654 = vmul.f32 %v4928, %v5462
          %v5655 = vmul.f32 %v5243, %v5463
          %v5656 = vmul.f32 %v4930, %v5464
          %v5657 = vmul.f32 %v4932, %v5465
          %v5658 = vmul.f32 %v5246, %v5466
          %v5659 = vmul.f32 %v4936, %v5467
          %v5660 = vmul.f32 %v4938, %v5468
          %v5661 = vmul.f32 %v5251, %v5469
          %v5662 = vmul.f32 %v4940, %v5470
          %v5663 = vmul.f32 %v4942, %v5471
          %v5664 = vmul.f32 %v5254, %v5472
          %v5665 = vmul.f32 %v4946, %v5473
          %v5666 = vmul.f32 %v4948, %v5474
          %v5667 = vmul.f32 %v5259, %v5475
          %v5668 = vmul.f32 %v4950, %v5476
          %v5669 = vmul.f32 %v4952, %v5477
          %v5670 = vmul.f32 %v5262, %v5478
          %v5671 = vmul.f32 %v4956, %v5479
          %v5672 = vmul.f32 %v4958, %v5480
          %v5673 = vmul.f32 %v5267, %v5481
          %v5674 = vmul.f32 %v4960, %v5482
          %v5675 = vmul.f32 %v4962, %v5483
          %v5676 = vmul.f32 %v5270, %v5484
          %v5677 = vmul.f32 %v4966, %v5485
          %v5678 = vmul.f32 %v4968, %v5486
          %v5679 = vmul.f32 %v5275, %v5487
          %v5680 = vmul.f32 %v4970, %v5488
          %v5681 = vmul.f32 %v4972, %v5489
          %v5682 = vmul.f32 %v5278, %v5490
          %v5683 = vmul.f32 %v4976, %v5491
          %v5684 = vmul.f32 %v4978, %v5492
          %v5685 = vmul.f32 %v5283, %v5493
          %v5686 = vmul.f32 %v4980, %v5494
          %v5687 = vmul.f32 %v4982, %v5495
          %v5688 = vmul.f32 %v5286, %v5496
          %v5689 = vmul.f32 %v4986, %v5497
          %v5690 = vmul.f32 %v4988, %v5498
          %v5691 = vmul.f32 %v5291, %v5499
          %v5692 = vmul.f32 %v4990, %v5500
          %v5693 = vmul.f32 %v4992, %v5501
          %v5694 = vmul.f32 %v5294, %v5502
          %v5695 = vmul.f32 %v4996, %v5503
          %v5696 = vmul.f32 %v4998, %v5504
          %v5697 = vmul.f32 %v5299, %v5505
          %v5698 = vmul.f32 %v5000, %v5506
          %v5699 = vmul.f32 %v5002, %v5507
          %v5700 = vmul.f32 %v5302, %v5508
          %v5701 = vmul.f32 %v5006, %v5509
          %v5702 = vmul.f32 %v5008, %v5510
          %v5703 = vmul.f32 %v5307, %v5511
          %v5704 = vmul.f32 %v5010, %v5512
          %v5705 = vmul.f32 %v5012, %v5513
          %v5706 = vmul.f32 %v5310, %v5514
          %v5707 = vmul.f32 %v5016, %v5515
          %v5708 = vmul.f32 %v5018, %v5516
          %v5709 = vmul.f32 %v5315, %v5517
          %v5710 = vmul.f32 %v5020, %v5518
          %v5711 = vmul.f32 %v5022, %v5519
          %v5712 = vmul.f32 %v5318, %v5520
          %v5713 = vmul.f32 %v5026, %v5521
          %v5714 = vmul.f32 %v5028, %v5522
          %v5715 = vmul.f32 %v5323, %v5523
          %v5716 = vmul.f32 %v5030, %v5524
          %v5717 = vmul.f32 %v5032, %v5525
          %v5718 = vmul.f32 %v5326, %v5526
          %v5719 = vmul.f32 %v5036, %v5527
          %v5720 = vmul.f32 %v5038, %v5528
          %v5721 = vmul.f32 %v5331, %v5529
          %v5722 = vmul.f32 %v5040, %v5530
          %v5723 = vmul.f32 %v5042, %v5531
          %v5724 = vmul.f32 %v5334, %v5532
          %v5725 = vmul.f32 %v5046, %v5533
          %v5726 = vmul.f32 %v5048, %v5534
          %v5727 = vmul.f32 %v5339, %v5535
          %v5728 = vmul.f32 %v5050, %v5536
          %v5729 = vmul.f32 %v5052, %v5537
          %v5730 = vmul.f32 %v5342, %v5538
          %v5731 = vmul.f32 %v5056, %v5539
          %v5732 = vmul.f32 %v5058, %v5540
          %v5733 = vmul.f32 %v5347, %v5541
          %v5734 = vmul.f32 %v5060, %v5542
          %v5735 = vmul.f32 %v5062, %v5543
          %v5736 = vmul.f32 %v5350, %v5544
          %v5737 = vmul.f32 %v5545, 0.044715
          %v5738 = vmul.f32 %v5546, 0.044715
          %v5739 = vmul.f32 %v5547, 0.044715
          %v5740 = vmul.f32 %v5548, 0.044715
          %v5741 = vmul.f32 %v5549, 0.044715
          %v5742 = vmul.f32 %v5550, 0.044715
          %v5743 = vmul.f32 %v5551, 0.044715
          %v5744 = vmul.f32 %v5552, 0.044715
          %v5745 = vmul.f32 %v5553, 0.044715
          %v5746 = vmul.f32 %v5554, 0.044715
          %v5747 = vmul.f32 %v5555, 0.044715
          %v5748 = vmul.f32 %v5556, 0.044715
          %v5749 = vmul.f32 %v5557, 0.044715
          %v5750 = vmul.f32 %v5558, 0.044715
          %v5751 = vmul.f32 %v5559, 0.044715
          %v5752 = vmul.f32 %v5560, 0.044715
          %v5753 = vmul.f32 %v5561, 0.044715
          %v5754 = vmul.f32 %v5562, 0.044715
          %v5755 = vmul.f32 %v5563, 0.044715
          %v5756 = vmul.f32 %v5564, 0.044715
          %v5757 = vmul.f32 %v5565, 0.044715
          %v5758 = vmul.f32 %v5566, 0.044715
          %v5759 = vmul.f32 %v5567, 0.044715
          %v5760 = vmul.f32 %v5568, 0.044715
          %v5761 = vmul.f32 %v5569, 0.044715
          %v5762 = vmul.f32 %v5570, 0.044715
          %v5763 = vmul.f32 %v5571, 0.044715
          %v5764 = vmul.f32 %v5572, 0.044715
          %v5765 = vmul.f32 %v5573, 0.044715
          %v5766 = vmul.f32 %v5574, 0.044715
          %v5767 = vmul.f32 %v5575, 0.044715
          %v5768 = vmul.f32 %v5576, 0.044715
          %v5769 = vmul.f32 %v5577, 0.044715
          %v5770 = vmul.f32 %v5578, 0.044715
          %v5771 = vmul.f32 %v5579, 0.044715
          %v5772 = vmul.f32 %v5580, 0.044715
          %v5773 = vmul.f32 %v5581, 0.044715
          %v5774 = vmul.f32 %v5582, 0.044715
          %v5775 = vmul.f32 %v5583, 0.044715
          %v5776 = vmul.f32 %v5584, 0.044715
          %v5777 = vmul.f32 %v5585, 0.044715
          %v5778 = vmul.f32 %v5586, 0.044715
          %v5779 = vmul.f32 %v5587, 0.044715
          %v5780 = vmul.f32 %v5588, 0.044715
          %v5781 = vmul.f32 %v5589, 0.044715
          %v5782 = vmul.f32 %v5590, 0.044715
          %v5783 = vmul.f32 %v5591, 0.044715
          %v5784 = vmul.f32 %v5592, 0.044715
          %v5785 = vmul.f32 %v5593, 0.044715
          %v5786 = vmul.f32 %v5594, 0.044715
          %v5787 = vmul.f32 %v5595, 0.044715
          %v5788 = vmul.f32 %v5596, 0.044715
          %v5789 = vmul.f32 %v5597, 0.044715
          %v5790 = vmul.f32 %v5598, 0.044715
          %v5791 = vmul.f32 %v5599, 0.044715
          %v5792 = vmul.f32 %v5600, 0.044715
          %v5793 = vmul.f32 %v5601, 0.044715
          %v5794 = vmul.f32 %v5602, 0.044715
          %v5795 = vmul.f32 %v5603, 0.044715
          %v5796 = vmul.f32 %v5604, 0.044715
          %v5797 = vmul.f32 %v5605, 0.044715
          %v5798 = vmul.f32 %v5606, 0.044715
          %v5799 = vmul.f32 %v5607, 0.044715
          %v5800 = vmul.f32 %v5608, 0.044715
          %v5801 = vmul.f32 %v5609, 0.044715
          %v5802 = vmul.f32 %v5610, 0.044715
          %v5803 = vmul.f32 %v5611, 0.044715
          %v5804 = vmul.f32 %v5612, 0.044715
          %v5805 = vmul.f32 %v5613, 0.044715
          %v5806 = vmul.f32 %v5614, 0.044715
          %v5807 = vmul.f32 %v5615, 0.044715
          %v5808 = vmul.f32 %v5616, 0.044715
          %v5809 = vmul.f32 %v5617, 0.044715
          %v5810 = vmul.f32 %v5618, 0.044715
          %v5811 = vmul.f32 %v5619, 0.044715
          %v5812 = vmul.f32 %v5620, 0.044715
          %v5813 = vmul.f32 %v5621, 0.044715
          %v5814 = vmul.f32 %v5622, 0.044715
          %v5815 = vmul.f32 %v5623, 0.044715
          %v5816 = vmul.f32 %v5624, 0.044715
          %v5817 = vmul.f32 %v5625, 0.044715
          %v5818 = vmul.f32 %v5626, 0.044715
          %v5819 = vmul.f32 %v5627, 0.044715
          %v5820 = vmul.f32 %v5628, 0.044715
          %v5821 = vmul.f32 %v5629, 0.044715
          %v5822 = vmul.f32 %v5630, 0.044715
          %v5823 = vmul.f32 %v5631, 0.044715
          %v5824 = vmul.f32 %v5632, 0.044715
          %v5825 = vmul.f32 %v5633, 0.044715
          %v5826 = vmul.f32 %v5634, 0.044715
          %v5827 = vmul.f32 %v5635, 0.044715
          %v5828 = vmul.f32 %v5636, 0.044715
          %v5829 = vmul.f32 %v5637, 0.044715
          %v5830 = vmul.f32 %v5638, 0.044715
          %v5831 = vmul.f32 %v5639, 0.044715
          %v5832 = vmul.f32 %v5640, 0.044715
          %v5833 = vmul.f32 %v5641, 0.044715
          %v5834 = vmul.f32 %v5642, 0.044715
          %v5835 = vmul.f32 %v5643, 0.044715
          %v5836 = vmul.f32 %v5644, 0.044715
          %v5837 = vmul.f32 %v5645, 0.044715
          %v5838 = vmul.f32 %v5646, 0.044715
          %v5839 = vmul.f32 %v5647, 0.044715
          %v5840 = vmul.f32 %v5648, 0.044715
          %v5841 = vmul.f32 %v5649, 0.044715
          %v5842 = vmul.f32 %v5650, 0.044715
          %v5843 = vmul.f32 %v5651, 0.044715
          %v5844 = vmul.f32 %v5652, 0.044715
          %v5845 = vmul.f32 %v5653, 0.044715
          %v5846 = vmul.f32 %v5654, 0.044715
          %v5847 = vmul.f32 %v5655, 0.044715
          %v5848 = vmul.f32 %v5656, 0.044715
          %v5849 = vmul.f32 %v5657, 0.044715
          %v5850 = vmul.f32 %v5658, 0.044715
          %v5851 = vmul.f32 %v5659, 0.044715
          %v5852 = vmul.f32 %v5660, 0.044715
          %v5853 = vmul.f32 %v5661, 0.044715
          %v5854 = vmul.f32 %v5662, 0.044715
          %v5855 = vmul.f32 %v5663, 0.044715
          %v5856 = vmul.f32 %v5664, 0.044715
          %v5857 = vmul.f32 %v5665, 0.044715
          %v5858 = vmul.f32 %v5666, 0.044715
          %v5859 = vmul.f32 %v5667, 0.044715
          %v5860 = vmul.f32 %v5668, 0.044715
          %v5861 = vmul.f32 %v5669, 0.044715
          %v5862 = vmul.f32 %v5670, 0.044715
          %v5863 = vmul.f32 %v5671, 0.044715
          %v5864 = vmul.f32 %v5672, 0.044715
          %v5865 = vmul.f32 %v5673, 0.044715
          %v5866 = vmul.f32 %v5674, 0.044715
          %v5867 = vmul.f32 %v5675, 0.044715
          %v5868 = vmul.f32 %v5676, 0.044715
          %v5869 = vmul.f32 %v5677, 0.044715
          %v5870 = vmul.f32 %v5678, 0.044715
          %v5871 = vmul.f32 %v5679, 0.044715
          %v5872 = vmul.f32 %v5680, 0.044715
          %v5873 = vmul.f32 %v5681, 0.044715
          %v5874 = vmul.f32 %v5682, 0.044715
          %v5875 = vmul.f32 %v5683, 0.044715
          %v5876 = vmul.f32 %v5684, 0.044715
          %v5877 = vmul.f32 %v5685, 0.044715
          %v5878 = vmul.f32 %v5686, 0.044715
          %v5879 = vmul.f32 %v5687, 0.044715
          %v5880 = vmul.f32 %v5688, 0.044715
          %v5881 = vmul.f32 %v5689, 0.044715
          %v5882 = vmul.f32 %v5690, 0.044715
          %v5883 = vmul.f32 %v5691, 0.044715
          %v5884 = vmul.f32 %v5692, 0.044715
          %v5885 = vmul.f32 %v5693, 0.044715
          %v5886 = vmul.f32 %v5694, 0.044715
          %v5887 = vmul.f32 %v5695, 0.044715
          %v5888 = vmul.f32 %v5696, 0.044715
          %v5889 = vmul.f32 %v5697, 0.044715
          %v5890 = vmul.f32 %v5698, 0.044715
          %v5891 = vmul.f32 %v5699, 0.044715
          %v5892 = vmul.f32 %v5700, 0.044715
          %v5893 = vmul.f32 %v5701, 0.044715
          %v5894 = vmul.f32 %v5702, 0.044715
          %v5895 = vmul.f32 %v5703, 0.044715
          %v5896 = vmul.f32 %v5704, 0.044715
          %v5897 = vmul.f32 %v5705, 0.044715
          %v5898 = vmul.f32 %v5706, 0.044715
          %v5899 = vmul.f32 %v5707, 0.044715
          %v5900 = vmul.f32 %v5708, 0.044715
          %v5901 = vmul.f32 %v5709, 0.044715
          %v5902 = vmul.f32 %v5710, 0.044715
          %v5903 = vmul.f32 %v5711, 0.044715
          %v5904 = vmul.f32 %v5712, 0.044715
          %v5905 = vmul.f32 %v5713, 0.044715
          %v5906 = vmul.f32 %v5714, 0.044715
          %v5907 = vmul.f32 %v5715, 0.044715
          %v5908 = vmul.f32 %v5716, 0.044715
          %v5909 = vmul.f32 %v5717, 0.044715
          %v5910 = vmul.f32 %v5718, 0.044715
          %v5911 = vmul.f32 %v5719, 0.044715
          %v5912 = vmul.f32 %v5720, 0.044715
          %v5913 = vmul.f32 %v5721, 0.044715
          %v5914 = vmul.f32 %v5722, 0.044715
          %v5915 = vmul.f32 %v5723, 0.044715
          %v5916 = vmul.f32 %v5724, 0.044715
          %v5917 = vmul.f32 %v5725, 0.044715
          %v5918 = vmul.f32 %v5726, 0.044715
          %v5919 = vmul.f32 %v5727, 0.044715
          %v5920 = vmul.f32 %v5728, 0.044715
          %v5921 = vmul.f32 %v5729, 0.044715
          %v5922 = vmul.f32 %v5730, 0.044715
          %v5923 = vmul.f32 %v5731, 0.044715
          %v5924 = vmul.f32 %v5732, 0.044715
          %v5925 = vmul.f32 %v5733, 0.044715
          %v5926 = vmul.f32 %v5734, 0.044715
          %v5927 = vmul.f32 %v5735, 0.044715
          %v5928 = vmul.f32 %v5736, 0.044715
          %v5929 = vadd.f32 %v4746, %v5737
          %v5930 = vadd.f32 %v4748, %v5738
          %v5931 = vadd.f32 %v5099, %v5739
          %v5932 = vadd.f32 %v4750, %v5740
          %v5933 = vadd.f32 %v4752, %v5741
          %v5934 = vadd.f32 %v5102, %v5742
          %v5935 = vadd.f32 %v4756, %v5743
          %v5936 = vadd.f32 %v4758, %v5744
          %v5937 = vadd.f32 %v5107, %v5745
          %v5938 = vadd.f32 %v4760, %v5746
          %v5939 = vadd.f32 %v4762, %v5747
          %v5940 = vadd.f32 %v5110, %v5748
          %v5941 = vadd.f32 %v4766, %v5749
          %v5942 = vadd.f32 %v4768, %v5750
          %v5943 = vadd.f32 %v5115, %v5751
          %v5944 = vadd.f32 %v4770, %v5752
          %v5945 = vadd.f32 %v4772, %v5753
          %v5946 = vadd.f32 %v5118, %v5754
          %v5947 = vadd.f32 %v4776, %v5755
          %v5948 = vadd.f32 %v4778, %v5756
          %v5949 = vadd.f32 %v5123, %v5757
          %v5950 = vadd.f32 %v4780, %v5758
          %v5951 = vadd.f32 %v4782, %v5759
          %v5952 = vadd.f32 %v5126, %v5760
          %v5953 = vadd.f32 %v4786, %v5761
          %v5954 = vadd.f32 %v4788, %v5762
          %v5955 = vadd.f32 %v5131, %v5763
          %v5956 = vadd.f32 %v4790, %v5764
          %v5957 = vadd.f32 %v4792, %v5765
          %v5958 = vadd.f32 %v5134, %v5766
          %v5959 = vadd.f32 %v4796, %v5767
          %v5960 = vadd.f32 %v4798, %v5768
          %v5961 = vadd.f32 %v5139, %v5769
          %v5962 = vadd.f32 %v4800, %v5770
          %v5963 = vadd.f32 %v4802, %v5771
          %v5964 = vadd.f32 %v5142, %v5772
          %v5965 = vadd.f32 %v4806, %v5773
          %v5966 = vadd.f32 %v4808, %v5774
          %v5967 = vadd.f32 %v5147, %v5775
          %v5968 = vadd.f32 %v4810, %v5776
          %v5969 = vadd.f32 %v4812, %v5777
          %v5970 = vadd.f32 %v5150, %v5778
          %v5971 = vadd.f32 %v4816, %v5779
          %v5972 = vadd.f32 %v4818, %v5780
          %v5973 = vadd.f32 %v5155, %v5781
          %v5974 = vadd.f32 %v4820, %v5782
          %v5975 = vadd.f32 %v4822, %v5783
          %v5976 = vadd.f32 %v5158, %v5784
          %v5977 = vadd.f32 %v4826, %v5785
          %v5978 = vadd.f32 %v4828, %v5786
          %v5979 = vadd.f32 %v5163, %v5787
          %v5980 = vadd.f32 %v4830, %v5788
          %v5981 = vadd.f32 %v4832, %v5789
          %v5982 = vadd.f32 %v5166, %v5790
          %v5983 = vadd.f32 %v4836, %v5791
          %v5984 = vadd.f32 %v4838, %v5792
          %v5985 = vadd.f32 %v5171, %v5793
          %v5986 = vadd.f32 %v4840, %v5794
          %v5987 = vadd.f32 %v4842, %v5795
          %v5988 = vadd.f32 %v5174, %v5796
          %v5989 = vadd.f32 %v4846, %v5797
          %v5990 = vadd.f32 %v4848, %v5798
          %v5991 = vadd.f32 %v5179, %v5799
          %v5992 = vadd.f32 %v4850, %v5800
          %v5993 = vadd.f32 %v4852, %v5801
          %v5994 = vadd.f32 %v5182, %v5802
          %v5995 = vadd.f32 %v4856, %v5803
          %v5996 = vadd.f32 %v4858, %v5804
          %v5997 = vadd.f32 %v5187, %v5805
          %v5998 = vadd.f32 %v4860, %v5806
          %v5999 = vadd.f32 %v4862, %v5807
          %v6000 = vadd.f32 %v5190, %v5808
          %v6001 = vadd.f32 %v4866, %v5809
          %v6002 = vadd.f32 %v4868, %v5810
          %v6003 = vadd.f32 %v5195, %v5811
          %v6004 = vadd.f32 %v4870, %v5812
          %v6005 = vadd.f32 %v4872, %v5813
          %v6006 = vadd.f32 %v5198, %v5814
          %v6007 = vadd.f32 %v4876, %v5815
          %v6008 = vadd.f32 %v4878, %v5816
          %v6009 = vadd.f32 %v5203, %v5817
          %v6010 = vadd.f32 %v4880, %v5818
          %v6011 = vadd.f32 %v4882, %v5819
          %v6012 = vadd.f32 %v5206, %v5820
          %v6013 = vadd.f32 %v4886, %v5821
          %v6014 = vadd.f32 %v4888, %v5822
          %v6015 = vadd.f32 %v5211, %v5823
          %v6016 = vadd.f32 %v4890, %v5824
          %v6017 = vadd.f32 %v4892, %v5825
          %v6018 = vadd.f32 %v5214, %v5826
          %v6019 = vadd.f32 %v4896, %v5827
          %v6020 = vadd.f32 %v4898, %v5828
          %v6021 = vadd.f32 %v5219, %v5829
          %v6022 = vadd.f32 %v4900, %v5830
          %v6023 = vadd.f32 %v4902, %v5831
          %v6024 = vadd.f32 %v5222, %v5832
          %v6025 = vadd.f32 %v4906, %v5833
          %v6026 = vadd.f32 %v4908, %v5834
          %v6027 = vadd.f32 %v5227, %v5835
          %v6028 = vadd.f32 %v4910, %v5836
          %v6029 = vadd.f32 %v4912, %v5837
          %v6030 = vadd.f32 %v5230, %v5838
          %v6031 = vadd.f32 %v4916, %v5839
          %v6032 = vadd.f32 %v4918, %v5840
          %v6033 = vadd.f32 %v5235, %v5841
          %v6034 = vadd.f32 %v4920, %v5842
          %v6035 = vadd.f32 %v4922, %v5843
          %v6036 = vadd.f32 %v5238, %v5844
          %v6037 = vadd.f32 %v4926, %v5845
          %v6038 = vadd.f32 %v4928, %v5846
          %v6039 = vadd.f32 %v5243, %v5847
          %v6040 = vadd.f32 %v4930, %v5848
          %v6041 = vadd.f32 %v4932, %v5849
          %v6042 = vadd.f32 %v5246, %v5850
          %v6043 = vadd.f32 %v4936, %v5851
          %v6044 = vadd.f32 %v4938, %v5852
          %v6045 = vadd.f32 %v5251, %v5853
          %v6046 = vadd.f32 %v4940, %v5854
          %v6047 = vadd.f32 %v4942, %v5855
          %v6048 = vadd.f32 %v5254, %v5856
          %v6049 = vadd.f32 %v4946, %v5857
          %v6050 = vadd.f32 %v4948, %v5858
          %v6051 = vadd.f32 %v5259, %v5859
          %v6052 = vadd.f32 %v4950, %v5860
          %v6053 = vadd.f32 %v4952, %v5861
          %v6054 = vadd.f32 %v5262, %v5862
          %v6055 = vadd.f32 %v4956, %v5863
          %v6056 = vadd.f32 %v4958, %v5864
          %v6057 = vadd.f32 %v5267, %v5865
          %v6058 = vadd.f32 %v4960, %v5866
          %v6059 = vadd.f32 %v4962, %v5867
          %v6060 = vadd.f32 %v5270, %v5868
          %v6061 = vadd.f32 %v4966, %v5869
          %v6062 = vadd.f32 %v4968, %v5870
          %v6063 = vadd.f32 %v5275, %v5871
          %v6064 = vadd.f32 %v4970, %v5872
          %v6065 = vadd.f32 %v4972, %v5873
          %v6066 = vadd.f32 %v5278, %v5874
          %v6067 = vadd.f32 %v4976, %v5875
          %v6068 = vadd.f32 %v4978, %v5876
          %v6069 = vadd.f32 %v5283, %v5877
          %v6070 = vadd.f32 %v4980, %v5878
          %v6071 = vadd.f32 %v4982, %v5879
          %v6072 = vadd.f32 %v5286, %v5880
          %v6073 = vadd.f32 %v4986, %v5881
          %v6074 = vadd.f32 %v4988, %v5882
          %v6075 = vadd.f32 %v5291, %v5883
          %v6076 = vadd.f32 %v4990, %v5884
          %v6077 = vadd.f32 %v4992, %v5885
          %v6078 = vadd.f32 %v5294, %v5886
          %v6079 = vadd.f32 %v4996, %v5887
          %v6080 = vadd.f32 %v4998, %v5888
          %v6081 = vadd.f32 %v5299, %v5889
          %v6082 = vadd.f32 %v5000, %v5890
          %v6083 = vadd.f32 %v5002, %v5891
          %v6084 = vadd.f32 %v5302, %v5892
          %v6085 = vadd.f32 %v5006, %v5893
          %v6086 = vadd.f32 %v5008, %v5894
          %v6087 = vadd.f32 %v5307, %v5895
          %v6088 = vadd.f32 %v5010, %v5896
          %v6089 = vadd.f32 %v5012, %v5897
          %v6090 = vadd.f32 %v5310, %v5898
          %v6091 = vadd.f32 %v5016, %v5899
          %v6092 = vadd.f32 %v5018, %v5900
          %v6093 = vadd.f32 %v5315, %v5901
          %v6094 = vadd.f32 %v5020, %v5902
          %v6095 = vadd.f32 %v5022, %v5903
          %v6096 = vadd.f32 %v5318, %v5904
          %v6097 = vadd.f32 %v5026, %v5905
          %v6098 = vadd.f32 %v5028, %v5906
          %v6099 = vadd.f32 %v5323, %v5907
          %v6100 = vadd.f32 %v5030, %v5908
          %v6101 = vadd.f32 %v5032, %v5909
          %v6102 = vadd.f32 %v5326, %v5910
          %v6103 = vadd.f32 %v5036, %v5911
          %v6104 = vadd.f32 %v5038, %v5912
          %v6105 = vadd.f32 %v5331, %v5913
          %v6106 = vadd.f32 %v5040, %v5914
          %v6107 = vadd.f32 %v5042, %v5915
          %v6108 = vadd.f32 %v5334, %v5916
          %v6109 = vadd.f32 %v5046, %v5917
          %v6110 = vadd.f32 %v5048, %v5918
          %v6111 = vadd.f32 %v5339, %v5919
          %v6112 = vadd.f32 %v5050, %v5920
          %v6113 = vadd.f32 %v5052, %v5921
          %v6114 = vadd.f32 %v5342, %v5922
          %v6115 = vadd.f32 %v5056, %v5923
          %v6116 = vadd.f32 %v5058, %v5924
          %v6117 = vadd.f32 %v5347, %v5925
          %v6118 = vadd.f32 %v5060, %v5926
          %v6119 = vadd.f32 %v5062, %v5927
          %v6120 = vadd.f32 %v5350, %v5928
          %v6121 = vmul.f32 %v5929, 0.7978846
          %v6122 = vmul.f32 %v5930, 0.7978846
          %v6123 = vmul.f32 %v5931, 0.7978846
          %v6124 = vmul.f32 %v5932, 0.7978846
          %v6125 = vmul.f32 %v5933, 0.7978846
          %v6126 = vmul.f32 %v5934, 0.7978846
          %v6127 = vmul.f32 %v5935, 0.7978846
          %v6128 = vmul.f32 %v5936, 0.7978846
          %v6129 = vmul.f32 %v5937, 0.7978846
          %v6130 = vmul.f32 %v5938, 0.7978846
          %v6131 = vmul.f32 %v5939, 0.7978846
          %v6132 = vmul.f32 %v5940, 0.7978846
          %v6133 = vmul.f32 %v5941, 0.7978846
          %v6134 = vmul.f32 %v5942, 0.7978846
          %v6135 = vmul.f32 %v5943, 0.7978846
          %v6136 = vmul.f32 %v5944, 0.7978846
          %v6137 = vmul.f32 %v5945, 0.7978846
          %v6138 = vmul.f32 %v5946, 0.7978846
          %v6139 = vmul.f32 %v5947, 0.7978846
          %v6140 = vmul.f32 %v5948, 0.7978846
          %v6141 = vmul.f32 %v5949, 0.7978846
          %v6142 = vmul.f32 %v5950, 0.7978846
          %v6143 = vmul.f32 %v5951, 0.7978846
          %v6144 = vmul.f32 %v5952, 0.7978846
          %v6145 = vmul.f32 %v5953, 0.7978846
          %v6146 = vmul.f32 %v5954, 0.7978846
          %v6147 = vmul.f32 %v5955, 0.7978846
          %v6148 = vmul.f32 %v5956, 0.7978846
          %v6149 = vmul.f32 %v5957, 0.7978846
          %v6150 = vmul.f32 %v5958, 0.7978846
          %v6151 = vmul.f32 %v5959, 0.7978846
          %v6152 = vmul.f32 %v5960, 0.7978846
          %v6153 = vmul.f32 %v5961, 0.7978846
          %v6154 = vmul.f32 %v5962, 0.7978846
          %v6155 = vmul.f32 %v5963, 0.7978846
          %v6156 = vmul.f32 %v5964, 0.7978846
          %v6157 = vmul.f32 %v5965, 0.7978846
          %v6158 = vmul.f32 %v5966, 0.7978846
          %v6159 = vmul.f32 %v5967, 0.7978846
          %v6160 = vmul.f32 %v5968, 0.7978846
          %v6161 = vmul.f32 %v5969, 0.7978846
          %v6162 = vmul.f32 %v5970, 0.7978846
          %v6163 = vmul.f32 %v5971, 0.7978846
          %v6164 = vmul.f32 %v5972, 0.7978846
          %v6165 = vmul.f32 %v5973, 0.7978846
          %v6166 = vmul.f32 %v5974, 0.7978846
          %v6167 = vmul.f32 %v5975, 0.7978846
          %v6168 = vmul.f32 %v5976, 0.7978846
          %v6169 = vmul.f32 %v5977, 0.7978846
          %v6170 = vmul.f32 %v5978, 0.7978846
          %v6171 = vmul.f32 %v5979, 0.7978846
          %v6172 = vmul.f32 %v5980, 0.7978846
          %v6173 = vmul.f32 %v5981, 0.7978846
          %v6174 = vmul.f32 %v5982, 0.7978846
          %v6175 = vmul.f32 %v5983, 0.7978846
          %v6176 = vmul.f32 %v5984, 0.7978846
          %v6177 = vmul.f32 %v5985, 0.7978846
          %v6178 = vmul.f32 %v5986, 0.7978846
          %v6179 = vmul.f32 %v5987, 0.7978846
          %v6180 = vmul.f32 %v5988, 0.7978846
          %v6181 = vmul.f32 %v5989, 0.7978846
          %v6182 = vmul.f32 %v5990, 0.7978846
          %v6183 = vmul.f32 %v5991, 0.7978846
          %v6184 = vmul.f32 %v5992, 0.7978846
          %v6185 = vmul.f32 %v5993, 0.7978846
          %v6186 = vmul.f32 %v5994, 0.7978846
          %v6187 = vmul.f32 %v5995, 0.7978846
          %v6188 = vmul.f32 %v5996, 0.7978846
          %v6189 = vmul.f32 %v5997, 0.7978846
          %v6190 = vmul.f32 %v5998, 0.7978846
          %v6191 = vmul.f32 %v5999, 0.7978846
          %v6192 = vmul.f32 %v6000, 0.7978846
          %v6193 = vmul.f32 %v6001, 0.7978846
          %v6194 = vmul.f32 %v6002, 0.7978846
          %v6195 = vmul.f32 %v6003, 0.7978846
          %v6196 = vmul.f32 %v6004, 0.7978846
          %v6197 = vmul.f32 %v6005, 0.7978846
          %v6198 = vmul.f32 %v6006, 0.7978846
          %v6199 = vmul.f32 %v6007, 0.7978846
          %v6200 = vmul.f32 %v6008, 0.7978846
          %v6201 = vmul.f32 %v6009, 0.7978846
          %v6202 = vmul.f32 %v6010, 0.7978846
          %v6203 = vmul.f32 %v6011, 0.7978846
          %v6204 = vmul.f32 %v6012, 0.7978846
          %v6205 = vmul.f32 %v6013, 0.7978846
          %v6206 = vmul.f32 %v6014, 0.7978846
          %v6207 = vmul.f32 %v6015, 0.7978846
          %v6208 = vmul.f32 %v6016, 0.7978846
          %v6209 = vmul.f32 %v6017, 0.7978846
          %v6210 = vmul.f32 %v6018, 0.7978846
          %v6211 = vmul.f32 %v6019, 0.7978846
          %v6212 = vmul.f32 %v6020, 0.7978846
          %v6213 = vmul.f32 %v6021, 0.7978846
          %v6214 = vmul.f32 %v6022, 0.7978846
          %v6215 = vmul.f32 %v6023, 0.7978846
          %v6216 = vmul.f32 %v6024, 0.7978846
          %v6217 = vmul.f32 %v6025, 0.7978846
          %v6218 = vmul.f32 %v6026, 0.7978846
          %v6219 = vmul.f32 %v6027, 0.7978846
          %v6220 = vmul.f32 %v6028, 0.7978846
          %v6221 = vmul.f32 %v6029, 0.7978846
          %v6222 = vmul.f32 %v6030, 0.7978846
          %v6223 = vmul.f32 %v6031, 0.7978846
          %v6224 = vmul.f32 %v6032, 0.7978846
          %v6225 = vmul.f32 %v6033, 0.7978846
          %v6226 = vmul.f32 %v6034, 0.7978846
          %v6227 = vmul.f32 %v6035, 0.7978846
          %v6228 = vmul.f32 %v6036, 0.7978846
          %v6229 = vmul.f32 %v6037, 0.7978846
          %v6230 = vmul.f32 %v6038, 0.7978846
          %v6231 = vmul.f32 %v6039, 0.7978846
          %v6232 = vmul.f32 %v6040, 0.7978846
          %v6233 = vmul.f32 %v6041, 0.7978846
          %v6234 = vmul.f32 %v6042, 0.7978846
          %v6235 = vmul.f32 %v6043, 0.7978846
          %v6236 = vmul.f32 %v6044, 0.7978846
          %v6237 = vmul.f32 %v6045, 0.7978846
          %v6238 = vmul.f32 %v6046, 0.7978846
          %v6239 = vmul.f32 %v6047, 0.7978846
          %v6240 = vmul.f32 %v6048, 0.7978846
          %v6241 = vmul.f32 %v6049, 0.7978846
          %v6242 = vmul.f32 %v6050, 0.7978846
          %v6243 = vmul.f32 %v6051, 0.7978846
          %v6244 = vmul.f32 %v6052, 0.7978846
          %v6245 = vmul.f32 %v6053, 0.7978846
          %v6246 = vmul.f32 %v6054, 0.7978846
          %v6247 = vmul.f32 %v6055, 0.7978846
          %v6248 = vmul.f32 %v6056, 0.7978846
          %v6249 = vmul.f32 %v6057, 0.7978846
          %v6250 = vmul.f32 %v6058, 0.7978846
          %v6251 = vmul.f32 %v6059, 0.7978846
          %v6252 = vmul.f32 %v6060, 0.7978846
          %v6253 = vmul.f32 %v6061, 0.7978846
          %v6254 = vmul.f32 %v6062, 0.7978846
          %v6255 = vmul.f32 %v6063, 0.7978846
          %v6256 = vmul.f32 %v6064, 0.7978846
          %v6257 = vmul.f32 %v6065, 0.7978846
          %v6258 = vmul.f32 %v6066, 0.7978846
          %v6259 = vmul.f32 %v6067, 0.7978846
          %v6260 = vmul.f32 %v6068, 0.7978846
          %v6261 = vmul.f32 %v6069, 0.7978846
          %v6262 = vmul.f32 %v6070, 0.7978846
          %v6263 = vmul.f32 %v6071, 0.7978846
          %v6264 = vmul.f32 %v6072, 0.7978846
          %v6265 = vmul.f32 %v6073, 0.7978846
          %v6266 = vmul.f32 %v6074, 0.7978846
          %v6267 = vmul.f32 %v6075, 0.7978846
          %v6268 = vmul.f32 %v6076, 0.7978846
          %v6269 = vmul.f32 %v6077, 0.7978846
          %v6270 = vmul.f32 %v6078, 0.7978846
          %v6271 = vmul.f32 %v6079, 0.7978846
          %v6272 = vmul.f32 %v6080, 0.7978846
          %v6273 = vmul.f32 %v6081, 0.7978846
          %v6274 = vmul.f32 %v6082, 0.7978846
          %v6275 = vmul.f32 %v6083, 0.7978846
          %v6276 = vmul.f32 %v6084, 0.7978846
          %v6277 = vmul.f32 %v6085, 0.7978846
          %v6278 = vmul.f32 %v6086, 0.7978846
          %v6279 = vmul.f32 %v6087, 0.7978846
          %v6280 = vmul.f32 %v6088, 0.7978846
          %v6281 = vmul.f32 %v6089, 0.7978846
          %v6282 = vmul.f32 %v6090, 0.7978846
          %v6283 = vmul.f32 %v6091, 0.7978846
          %v6284 = vmul.f32 %v6092, 0.7978846
          %v6285 = vmul.f32 %v6093, 0.7978846
          %v6286 = vmul.f32 %v6094, 0.7978846
          %v6287 = vmul.f32 %v6095, 0.7978846
          %v6288 = vmul.f32 %v6096, 0.7978846
          %v6289 = vmul.f32 %v6097, 0.7978846
          %v6290 = vmul.f32 %v6098, 0.7978846
          %v6291 = vmul.f32 %v6099, 0.7978846
          %v6292 = vmul.f32 %v6100, 0.7978846
          %v6293 = vmul.f32 %v6101, 0.7978846
          %v6294 = vmul.f32 %v6102, 0.7978846
          %v6295 = vmul.f32 %v6103, 0.7978846
          %v6296 = vmul.f32 %v6104, 0.7978846
          %v6297 = vmul.f32 %v6105, 0.7978846
          %v6298 = vmul.f32 %v6106, 0.7978846
          %v6299 = vmul.f32 %v6107, 0.7978846
          %v6300 = vmul.f32 %v6108, 0.7978846
          %v6301 = vmul.f32 %v6109, 0.7978846
          %v6302 = vmul.f32 %v6110, 0.7978846
          %v6303 = vmul.f32 %v6111, 0.7978846
          %v6304 = vmul.f32 %v6112, 0.7978846
          %v6305 = vmul.f32 %v6113, 0.7978846
          %v6306 = vmul.f32 %v6114, 0.7978846
          %v6307 = vmul.f32 %v6115, 0.7978846
          %v6308 = vmul.f32 %v6116, 0.7978846
          %v6309 = vmul.f32 %v6117, 0.7978846
          %v6310 = vmul.f32 %v6118, 0.7978846
          %v6311 = vmul.f32 %v6119, 0.7978846
          %v6312 = vmul.f32 %v6120, 0.7978846
          %v6313 = vtanh.pop %v6121
          %v6314 = vtanh.pop %v6122
          %v6315 = vtanh.pop %v6123
          %v6316 = vtanh.pop %v6124
          %v6317 = vtanh.pop %v6125
          %v6318 = vtanh.pop %v6126
          %v6319 = vtanh.pop %v6127
          %v6320 = vtanh.pop %v6128
          %v6321 = vtanh.pop %v6129
          %v6322 = vtanh.pop %v6130
          %v6323 = vtanh.pop %v6131
          %v6324 = vtanh.pop %v6132
          %v6325 = vtanh.pop %v6133
          %v6326 = vtanh.pop %v6134
          %v6327 = vtanh.pop %v6135
          %v6328 = vtanh.pop %v6136
          %v6329 = vtanh.pop %v6137
          %v6330 = vtanh.pop %v6138
          %v6331 = vtanh.pop %v6139
          %v6332 = vtanh.pop %v6140
          %v6333 = vtanh.pop %v6141
          %v6334 = vtanh.pop %v6142
          %v6335 = vtanh.pop %v6143
          %v6336 = vtanh.pop %v6144
          %v6337 = vtanh.pop %v6145
          %v6338 = vtanh.pop %v6146
          %v6339 = vtanh.pop %v6147
          %v6340 = vtanh.pop %v6148
          %v6341 = vtanh.pop %v6149
          %v6342 = vtanh.pop %v6150
          %v6343 = vtanh.pop %v6151
          %v6344 = vtanh.pop %v6152
          %v6345 = vtanh.pop %v6153
          %v6346 = vtanh.pop %v6154
          %v6347 = vtanh.pop %v6155
          %v6348 = vtanh.pop %v6156
          %v6349 = vtanh.pop %v6157
          %v6350 = vtanh.pop %v6158
          %v6351 = vtanh.pop %v6159
          %v6352 = vtanh.pop %v6160
          %v6353 = vtanh.pop %v6161
          %v6354 = vtanh.pop %v6162
          %v6355 = vtanh.pop %v6163
          %v6356 = vtanh.pop %v6164
          %v6357 = vtanh.pop %v6165
          %v6358 = vtanh.pop %v6166
          %v6359 = vtanh.pop %v6167
          %v6360 = vtanh.pop %v6168
          %v6361 = vtanh.pop %v6169
          %v6362 = vtanh.pop %v6170
          %v6363 = vtanh.pop %v6171
          %v6364 = vtanh.pop %v6172
          %v6365 = vtanh.pop %v6173
          %v6366 = vtanh.pop %v6174
          %v6367 = vtanh.pop %v6175
          %v6368 = vtanh.pop %v6176
          %v6369 = vtanh.pop %v6177
          %v6370 = vtanh.pop %v6178
          %v6371 = vtanh.pop %v6179
          %v6372 = vtanh.pop %v6180
          %v6373 = vtanh.pop %v6181
          %v6374 = vtanh.pop %v6182
          %v6375 = vtanh.pop %v6183
          %v6376 = vtanh.pop %v6184
          %v6377 = vtanh.pop %v6185
          %v6378 = vtanh.pop %v6186
          %v6379 = vtanh.pop %v6187
          %v6380 = vtanh.pop %v6188
          %v6381 = vtanh.pop %v6189
          %v6382 = vtanh.pop %v6190
          %v6383 = vtanh.pop %v6191
          %v6384 = vtanh.pop %v6192
          %v6385 = vtanh.pop %v6193
          %v6386 = vtanh.pop %v6194
          %v6387 = vtanh.pop %v6195
          %v6388 = vtanh.pop %v6196
          %v6389 = vtanh.pop %v6197
          %v6390 = vtanh.pop %v6198
          %v6391 = vtanh.pop %v6199
          %v6392 = vtanh.pop %v6200
          %v6393 = vtanh.pop %v6201
          %v6394 = vtanh.pop %v6202
          %v6395 = vtanh.pop %v6203
          %v6396 = vtanh.pop %v6204
          %v6397 = vtanh.pop %v6205
          %v6398 = vtanh.pop %v6206
          %v6399 = vtanh.pop %v6207
          %v6400 = vtanh.pop %v6208
          %v6401 = vtanh.pop %v6209
          %v6402 = vtanh.pop %v6210
          %v6403 = vtanh.pop %v6211
          %v6404 = vtanh.pop %v6212
          %v6405 = vtanh.pop %v6213
          %v6406 = vtanh.pop %v6214
          %v6407 = vtanh.pop %v6215
          %v6408 = vtanh.pop %v6216
          %v6409 = vtanh.pop %v6217
          %v6410 = vtanh.pop %v6218
          %v6411 = vtanh.pop %v6219
          %v6412 = vtanh.pop %v6220
          %v6413 = vtanh.pop %v6221
          %v6414 = vtanh.pop %v6222
          %v6415 = vtanh.pop %v6223
          %v6416 = vtanh.pop %v6224
          %v6417 = vtanh.pop %v6225
          %v6418 = vtanh.pop %v6226
          %v6419 = vtanh.pop %v6227
          %v6420 = vtanh.pop %v6228
          %v6421 = vtanh.pop %v6229
          %v6422 = vtanh.pop %v6230
          %v6423 = vtanh.pop %v6231
          %v6424 = vtanh.pop %v6232
          %v6425 = vtanh.pop %v6233
          %v6426 = vtanh.pop %v6234
          %v6427 = vtanh.pop %v6235
          %v6428 = vtanh.pop %v6236
          %v6429 = vtanh.pop %v6237
          %v6430 = vtanh.pop %v6238
          %v6431 = vtanh.pop %v6239
          %v6432 = vtanh.pop %v6240
          %v6433 = vtanh.pop %v6241
          %v6434 = vtanh.pop %v6242
          %v6435 = vtanh.pop %v6243
          %v6436 = vtanh.pop %v6244
          %v6437 = vtanh.pop %v6245
          %v6438 = vtanh.pop %v6246
          %v6439 = vtanh.pop %v6247
          %v6440 = vtanh.pop %v6248
          %v6441 = vtanh.pop %v6249
          %v6442 = vtanh.pop %v6250
          %v6443 = vtanh.pop %v6251
          %v6444 = vtanh.pop %v6252
          %v6445 = vtanh.pop %v6253
          %v6446 = vtanh.pop %v6254
          %v6447 = vtanh.pop %v6255
          %v6448 = vtanh.pop %v6256
          %v6449 = vtanh.pop %v6257
          %v6450 = vtanh.pop %v6258
          %v6451 = vtanh.pop %v6259
          %v6452 = vtanh.pop %v6260
          %v6453 = vtanh.pop %v6261
          %v6454 = vtanh.pop %v6262
          %v6455 = vtanh.pop %v6263
          %v6456 = vtanh.pop %v6264
          %v6457 = vtanh.pop %v6265
          %v6458 = vtanh.pop %v6266
          %v6459 = vtanh.pop %v6267
          %v6460 = vtanh.pop %v6268
          %v6461 = vtanh.pop %v6269
          %v6462 = vtanh.pop %v6270
          %v6463 = vtanh.pop %v6271
          %v6464 = vtanh.pop %v6272
          %v6465 = vtanh.pop %v6273
          %v6466 = vtanh.pop %v6274
          %v6467 = vtanh.pop %v6275
          %v6468 = vtanh.pop %v6276
          %v6469 = vtanh.pop %v6277
          %v6470 = vtanh.pop %v6278
          %v6471 = vtanh.pop %v6279
          %v6472 = vtanh.pop %v6280
          %v6473 = vtanh.pop %v6281
          %v6474 = vtanh.pop %v6282
          %v6475 = vtanh.pop %v6283
          %v6476 = vtanh.pop %v6284
          %v6477 = vtanh.pop %v6285
          %v6478 = vtanh.pop %v6286
          %v6479 = vtanh.pop %v6287
          %v6480 = vtanh.pop %v6288
          %v6481 = vtanh.pop %v6289
          %v6482 = vtanh.pop %v6290
          %v6483 = vtanh.pop %v6291
          %v6484 = vtanh.pop %v6292
          %v6485 = vtanh.pop %v6293
          %v6486 = vtanh.pop %v6294
          %v6487 = vtanh.pop %v6295
          %v6488 = vtanh.pop %v6296
          %v6489 = vtanh.pop %v6297
          %v6490 = vtanh.pop %v6298
          %v6491 = vtanh.pop %v6299
          %v6492 = vtanh.pop %v6300
          %v6493 = vtanh.pop %v6301
          %v6494 = vtanh.pop %v6302
          %v6495 = vtanh.pop %v6303
          %v6496 = vtanh.pop %v6304
          %v6497 = vtanh.pop %v6305
          %v6498 = vtanh.pop %v6306
          %v6499 = vtanh.pop %v6307
          %v6500 = vtanh.pop %v6308
          %v6501 = vtanh.pop %v6309
          %v6502 = vtanh.pop %v6310
          %v6503 = vtanh.pop %v6311
          %v6504 = vtanh.pop %v6312
          %v6505 = vadd.f32 %v6313, 1.0
          %v6506 = vadd.f32 %v6314, 1.0
          %v6507 = vadd.f32 %v6315, 1.0
          %v6508 = vadd.f32 %v6316, 1.0
          %v6509 = vadd.f32 %v6317, 1.0
          %v6510 = vadd.f32 %v6318, 1.0
          %v6511 = vadd.f32 %v6319, 1.0
          %v6512 = vadd.f32 %v6320, 1.0
          %v6513 = vadd.f32 %v6321, 1.0
          %v6514 = vadd.f32 %v6322, 1.0
          %v6515 = vadd.f32 %v6323, 1.0
          %v6516 = vadd.f32 %v6324, 1.0
          %v6517 = vadd.f32 %v6325, 1.0
          %v6518 = vadd.f32 %v6326, 1.0
          %v6519 = vadd.f32 %v6327, 1.0
          %v6520 = vadd.f32 %v6328, 1.0
          %v6521 = vadd.f32 %v6329, 1.0
          %v6522 = vadd.f32 %v6330, 1.0
          %v6523 = vadd.f32 %v6331, 1.0
          %v6524 = vadd.f32 %v6332, 1.0
          %v6525 = vadd.f32 %v6333, 1.0
          %v6526 = vadd.f32 %v6334, 1.0
          %v6527 = vadd.f32 %v6335, 1.0
          %v6528 = vadd.f32 %v6336, 1.0
          %v6529 = vadd.f32 %v6337, 1.0
          %v6530 = vadd.f32 %v6338, 1.0
          %v6531 = vadd.f32 %v6339, 1.0
          %v6532 = vadd.f32 %v6340, 1.0
          %v6533 = vadd.f32 %v6341, 1.0
          %v6534 = vadd.f32 %v6342, 1.0
          %v6535 = vadd.f32 %v6343, 1.0
          %v6536 = vadd.f32 %v6344, 1.0
          %v6537 = vadd.f32 %v6345, 1.0
          %v6538 = vadd.f32 %v6346, 1.0
          %v6539 = vadd.f32 %v6347, 1.0
          %v6540 = vadd.f32 %v6348, 1.0
          %v6541 = vadd.f32 %v6349, 1.0
          %v6542 = vadd.f32 %v6350, 1.0
          %v6543 = vadd.f32 %v6351, 1.0
          %v6544 = vadd.f32 %v6352, 1.0
          %v6545 = vadd.f32 %v6353, 1.0
          %v6546 = vadd.f32 %v6354, 1.0
          %v6547 = vadd.f32 %v6355, 1.0
          %v6548 = vadd.f32 %v6356, 1.0
          %v6549 = vadd.f32 %v6357, 1.0
          %v6550 = vadd.f32 %v6358, 1.0
          %v6551 = vadd.f32 %v6359, 1.0
          %v6552 = vadd.f32 %v6360, 1.0
          %v6553 = vadd.f32 %v6361, 1.0
          %v6554 = vadd.f32 %v6362, 1.0
          %v6555 = vadd.f32 %v6363, 1.0
          %v6556 = vadd.f32 %v6364, 1.0
          %v6557 = vadd.f32 %v6365, 1.0
          %v6558 = vadd.f32 %v6366, 1.0
          %v6559 = vadd.f32 %v6367, 1.0
          %v6560 = vadd.f32 %v6368, 1.0
          %v6561 = vadd.f32 %v6369, 1.0
          %v6562 = vadd.f32 %v6370, 1.0
          %v6563 = vadd.f32 %v6371, 1.0
          %v6564 = vadd.f32 %v6372, 1.0
          %v6565 = vadd.f32 %v6373, 1.0
          %v6566 = vadd.f32 %v6374, 1.0
          %v6567 = vadd.f32 %v6375, 1.0
          %v6568 = vadd.f32 %v6376, 1.0
          %v6569 = vadd.f32 %v6377, 1.0
          %v6570 = vadd.f32 %v6378, 1.0
          %v6571 = vadd.f32 %v6379, 1.0
          %v6572 = vadd.f32 %v6380, 1.0
          %v6573 = vadd.f32 %v6381, 1.0
          %v6574 = vadd.f32 %v6382, 1.0
          %v6575 = vadd.f32 %v6383, 1.0
          %v6576 = vadd.f32 %v6384, 1.0
          %v6577 = vadd.f32 %v6385, 1.0
          %v6578 = vadd.f32 %v6386, 1.0
          %v6579 = vadd.f32 %v6387, 1.0
          %v6580 = vadd.f32 %v6388, 1.0
          %v6581 = vadd.f32 %v6389, 1.0
          %v6582 = vadd.f32 %v6390, 1.0
          %v6583 = vadd.f32 %v6391, 1.0
          %v6584 = vadd.f32 %v6392, 1.0
          %v6585 = vadd.f32 %v6393, 1.0
          %v6586 = vadd.f32 %v6394, 1.0
          %v6587 = vadd.f32 %v6395, 1.0
          %v6588 = vadd.f32 %v6396, 1.0
          %v6589 = vadd.f32 %v6397, 1.0
          %v6590 = vadd.f32 %v6398, 1.0
          %v6591 = vadd.f32 %v6399, 1.0
          %v6592 = vadd.f32 %v6400, 1.0
          %v6593 = vadd.f32 %v6401, 1.0
          %v6594 = vadd.f32 %v6402, 1.0
          %v6595 = vadd.f32 %v6403, 1.0
          %v6596 = vadd.f32 %v6404, 1.0
          %v6597 = vadd.f32 %v6405, 1.0
          %v6598 = vadd.f32 %v6406, 1.0
          %v6599 = vadd.f32 %v6407, 1.0
          %v6600 = vadd.f32 %v6408, 1.0
          %v6601 = vadd.f32 %v6409, 1.0
          %v6602 = vadd.f32 %v6410, 1.0
          %v6603 = vadd.f32 %v6411, 1.0
          %v6604 = vadd.f32 %v6412, 1.0
          %v6605 = vadd.f32 %v6413, 1.0
          %v6606 = vadd.f32 %v6414, 1.0
          %v6607 = vadd.f32 %v6415, 1.0
          %v6608 = vadd.f32 %v6416, 1.0
          %v6609 = vadd.f32 %v6417, 1.0
          %v6610 = vadd.f32 %v6418, 1.0
          %v6611 = vadd.f32 %v6419, 1.0
          %v6612 = vadd.f32 %v6420, 1.0
          %v6613 = vadd.f32 %v6421, 1.0
          %v6614 = vadd.f32 %v6422, 1.0
          %v6615 = vadd.f32 %v6423, 1.0
          %v6616 = vadd.f32 %v6424, 1.0
          %v6617 = vadd.f32 %v6425, 1.0
          %v6618 = vadd.f32 %v6426, 1.0
          %v6619 = vadd.f32 %v6427, 1.0
          %v6620 = vadd.f32 %v6428, 1.0
          %v6621 = vadd.f32 %v6429, 1.0
          %v6622 = vadd.f32 %v6430, 1.0
          %v6623 = vadd.f32 %v6431, 1.0
          %v6624 = vadd.f32 %v6432, 1.0
          %v6625 = vadd.f32 %v6433, 1.0
          %v6626 = vadd.f32 %v6434, 1.0
          %v6627 = vadd.f32 %v6435, 1.0
          %v6628 = vadd.f32 %v6436, 1.0
          %v6629 = vadd.f32 %v6437, 1.0
          %v6630 = vadd.f32 %v6438, 1.0
          %v6631 = vadd.f32 %v6439, 1.0
          %v6632 = vadd.f32 %v6440, 1.0
          %v6633 = vadd.f32 %v6441, 1.0
          %v6634 = vadd.f32 %v6442, 1.0
          %v6635 = vadd.f32 %v6443, 1.0
          %v6636 = vadd.f32 %v6444, 1.0
          %v6637 = vadd.f32 %v6445, 1.0
          %v6638 = vadd.f32 %v6446, 1.0
          %v6639 = vadd.f32 %v6447, 1.0
          %v6640 = vadd.f32 %v6448, 1.0
          %v6641 = vadd.f32 %v6449, 1.0
          %v6642 = vadd.f32 %v6450, 1.0
          %v6643 = vadd.f32 %v6451, 1.0
          %v6644 = vadd.f32 %v6452, 1.0
          %v6645 = vadd.f32 %v6453, 1.0
          %v6646 = vadd.f32 %v6454, 1.0
          %v6647 = vadd.f32 %v6455, 1.0
          %v6648 = vadd.f32 %v6456, 1.0
          %v6649 = vadd.f32 %v6457, 1.0
          %v6650 = vadd.f32 %v6458, 1.0
          %v6651 = vadd.f32 %v6459, 1.0
          %v6652 = vadd.f32 %v6460, 1.0
          %v6653 = vadd.f32 %v6461, 1.0
          %v6654 = vadd.f32 %v6462, 1.0
          %v6655 = vadd.f32 %v6463, 1.0
          %v6656 = vadd.f32 %v6464, 1.0
          %v6657 = vadd.f32 %v6465, 1.0
          %v6658 = vadd.f32 %v6466, 1.0
          %v6659 = vadd.f32 %v6467, 1.0
          %v6660 = vadd.f32 %v6468, 1.0
          %v6661 = vadd.f32 %v6469, 1.0
          %v6662 = vadd.f32 %v6470, 1.0
          %v6663 = vadd.f32 %v6471, 1.0
          %v6664 = vadd.f32 %v6472, 1.0
          %v6665 = vadd.f32 %v6473, 1.0
          %v6666 = vadd.f32 %v6474, 1.0
          %v6667 = vadd.f32 %v6475, 1.0
          %v6668 = vadd.f32 %v6476, 1.0
          %v6669 = vadd.f32 %v6477, 1.0
          %v6670 = vadd.f32 %v6478, 1.0
          %v6671 = vadd.f32 %v6479, 1.0
          %v6672 = vadd.f32 %v6480, 1.0
          %v6673 = vadd.f32 %v6481, 1.0
          %v6674 = vadd.f32 %v6482, 1.0
          %v6675 = vadd.f32 %v6483, 1.0
          %v6676 = vadd.f32 %v6484, 1.0
          %v6677 = vadd.f32 %v6485, 1.0
          %v6678 = vadd.f32 %v6486, 1.0
          %v6679 = vadd.f32 %v6487, 1.0
          %v6680 = vadd.f32 %v6488, 1.0
          %v6681 = vadd.f32 %v6489, 1.0
          %v6682 = vadd.f32 %v6490, 1.0
          %v6683 = vadd.f32 %v6491, 1.0
          %v6684 = vadd.f32 %v6492, 1.0
          %v6685 = vadd.f32 %v6493, 1.0
          %v6686 = vadd.f32 %v6494, 1.0
          %v6687 = vadd.f32 %v6495, 1.0
          %v6688 = vadd.f32 %v6496, 1.0
          %v6689 = vadd.f32 %v6497, 1.0
          %v6690 = vadd.f32 %v6498, 1.0
          %v6691 = vadd.f32 %v6499, 1.0
          %v6692 = vadd.f32 %v6500, 1.0
          %v6693 = vadd.f32 %v6501, 1.0
          %v6694 = vadd.f32 %v6502, 1.0
          %v6695 = vadd.f32 %v6503, 1.0
          %v6696 = vadd.f32 %v6504, 1.0
          %v6697 = vmul.f32 %v6505, 0.5
          %v6698 = vmul.f32 %v6506, 0.5
          %v6699 = vmul.f32 %v6507, 0.5
          %v6700 = vmul.f32 %v6508, 0.5
          %v6701 = vmul.f32 %v6509, 0.5
          %v6702 = vmul.f32 %v6510, 0.5
          %v6703 = vmul.f32 %v6511, 0.5
          %v6704 = vmul.f32 %v6512, 0.5
          %v6705 = vmul.f32 %v6513, 0.5
          %v6706 = vmul.f32 %v6514, 0.5
          %v6707 = vmul.f32 %v6515, 0.5
          %v6708 = vmul.f32 %v6516, 0.5
          %v6709 = vmul.f32 %v6517, 0.5
          %v6710 = vmul.f32 %v6518, 0.5
          %v6711 = vmul.f32 %v6519, 0.5
          %v6712 = vmul.f32 %v6520, 0.5
          %v6713 = vmul.f32 %v6521, 0.5
          %v6714 = vmul.f32 %v6522, 0.5
          %v6715 = vmul.f32 %v6523, 0.5
          %v6716 = vmul.f32 %v6524, 0.5
          %v6717 = vmul.f32 %v6525, 0.5
          %v6718 = vmul.f32 %v6526, 0.5
          %v6719 = vmul.f32 %v6527, 0.5
          %v6720 = vmul.f32 %v6528, 0.5
          %v6721 = vmul.f32 %v6529, 0.5
          %v6722 = vmul.f32 %v6530, 0.5
          %v6723 = vmul.f32 %v6531, 0.5
          %v6724 = vmul.f32 %v6532, 0.5
          %v6725 = vmul.f32 %v6533, 0.5
          %v6726 = vmul.f32 %v6534, 0.5
          %v6727 = vmul.f32 %v6535, 0.5
          %v6728 = vmul.f32 %v6536, 0.5
          %v6729 = vmul.f32 %v6537, 0.5
          %v6730 = vmul.f32 %v6538, 0.5
          %v6731 = vmul.f32 %v6539, 0.5
          %v6732 = vmul.f32 %v6540, 0.5
          %v6733 = vmul.f32 %v6541, 0.5
          %v6734 = vmul.f32 %v6542, 0.5
          %v6735 = vmul.f32 %v6543, 0.5
          %v6736 = vmul.f32 %v6544, 0.5
          %v6737 = vmul.f32 %v6545, 0.5
          %v6738 = vmul.f32 %v6546, 0.5
          %v6739 = vmul.f32 %v6547, 0.5
          %v6740 = vmul.f32 %v6548, 0.5
          %v6741 = vmul.f32 %v6549, 0.5
          %v6742 = vmul.f32 %v6550, 0.5
          %v6743 = vmul.f32 %v6551, 0.5
          %v6744 = vmul.f32 %v6552, 0.5
          %v6745 = vmul.f32 %v6553, 0.5
          %v6746 = vmul.f32 %v6554, 0.5
          %v6747 = vmul.f32 %v6555, 0.5
          %v6748 = vmul.f32 %v6556, 0.5
          %v6749 = vmul.f32 %v6557, 0.5
          %v6750 = vmul.f32 %v6558, 0.5
          %v6751 = vmul.f32 %v6559, 0.5
          %v6752 = vmul.f32 %v6560, 0.5
          %v6753 = vmul.f32 %v6561, 0.5
          %v6754 = vmul.f32 %v6562, 0.5
          %v6755 = vmul.f32 %v6563, 0.5
          %v6756 = vmul.f32 %v6564, 0.5
          %v6757 = vmul.f32 %v6565, 0.5
          %v6758 = vmul.f32 %v6566, 0.5
          %v6759 = vmul.f32 %v6567, 0.5
          %v6760 = vmul.f32 %v6568, 0.5
          %v6761 = vmul.f32 %v6569, 0.5
          %v6762 = vmul.f32 %v6570, 0.5
          %v6763 = vmul.f32 %v6571, 0.5
          %v6764 = vmul.f32 %v6572, 0.5
          %v6765 = vmul.f32 %v6573, 0.5
          %v6766 = vmul.f32 %v6574, 0.5
          %v6767 = vmul.f32 %v6575, 0.5
          %v6768 = vmul.f32 %v6576, 0.5
          %v6769 = vmul.f32 %v6577, 0.5
          %v6770 = vmul.f32 %v6578, 0.5
          %v6771 = vmul.f32 %v6579, 0.5
          %v6772 = vmul.f32 %v6580, 0.5
          %v6773 = vmul.f32 %v6581, 0.5
          %v6774 = vmul.f32 %v6582, 0.5
          %v6775 = vmul.f32 %v6583, 0.5
          %v6776 = vmul.f32 %v6584, 0.5
          %v6777 = vmul.f32 %v6585, 0.5
          %v6778 = vmul.f32 %v6586, 0.5
          %v6779 = vmul.f32 %v6587, 0.5
          %v6780 = vmul.f32 %v6588, 0.5
          %v6781 = vmul.f32 %v6589, 0.5
          %v6782 = vmul.f32 %v6590, 0.5
          %v6783 = vmul.f32 %v6591, 0.5
          %v6784 = vmul.f32 %v6592, 0.5
          %v6785 = vmul.f32 %v6593, 0.5
          %v6786 = vmul.f32 %v6594, 0.5
          %v6787 = vmul.f32 %v6595, 0.5
          %v6788 = vmul.f32 %v6596, 0.5
          %v6789 = vmul.f32 %v6597, 0.5
          %v6790 = vmul.f32 %v6598, 0.5
          %v6791 = vmul.f32 %v6599, 0.5
          %v6792 = vmul.f32 %v6600, 0.5
          %v6793 = vmul.f32 %v6601, 0.5
          %v6794 = vmul.f32 %v6602, 0.5
          %v6795 = vmul.f32 %v6603, 0.5
          %v6796 = vmul.f32 %v6604, 0.5
          %v6797 = vmul.f32 %v6605, 0.5
          %v6798 = vmul.f32 %v6606, 0.5
          %v6799 = vmul.f32 %v6607, 0.5
          %v6800 = vmul.f32 %v6608, 0.5
          %v6801 = vmul.f32 %v6609, 0.5
          %v6802 = vmul.f32 %v6610, 0.5
          %v6803 = vmul.f32 %v6611, 0.5
          %v6804 = vmul.f32 %v6612, 0.5
          %v6805 = vmul.f32 %v6613, 0.5
          %v6806 = vmul.f32 %v6614, 0.5
          %v6807 = vmul.f32 %v6615, 0.5
          %v6808 = vmul.f32 %v6616, 0.5
          %v6809 = vmul.f32 %v6617, 0.5
          %v6810 = vmul.f32 %v6618, 0.5
          %v6811 = vmul.f32 %v6619, 0.5
          %v6812 = vmul.f32 %v6620, 0.5
          %v6813 = vmul.f32 %v6621, 0.5
          %v6814 = vmul.f32 %v6622, 0.5
          %v6815 = vmul.f32 %v6623, 0.5
          %v6816 = vmul.f32 %v6624, 0.5
          %v6817 = vmul.f32 %v6625, 0.5
          %v6818 = vmul.f32 %v6626, 0.5
          %v6819 = vmul.f32 %v6627, 0.5
          %v6820 = vmul.f32 %v6628, 0.5
          %v6821 = vmul.f32 %v6629, 0.5
          %v6822 = vmul.f32 %v6630, 0.5
          %v6823 = vmul.f32 %v6631, 0.5
          %v6824 = vmul.f32 %v6632, 0.5
          %v6825 = vmul.f32 %v6633, 0.5
          %v6826 = vmul.f32 %v6634, 0.5
          %v6827 = vmul.f32 %v6635, 0.5
          %v6828 = vmul.f32 %v6636, 0.5
          %v6829 = vmul.f32 %v6637, 0.5
          %v6830 = vmul.f32 %v6638, 0.5
          %v6831 = vmul.f32 %v6639, 0.5
          %v6832 = vmul.f32 %v6640, 0.5
          %v6833 = vmul.f32 %v6641, 0.5
          %v6834 = vmul.f32 %v6642, 0.5
          %v6835 = vmul.f32 %v6643, 0.5
          %v6836 = vmul.f32 %v6644, 0.5
          %v6837 = vmul.f32 %v6645, 0.5
          %v6838 = vmul.f32 %v6646, 0.5
          %v6839 = vmul.f32 %v6647, 0.5
          %v6840 = vmul.f32 %v6648, 0.5
          %v6841 = vmul.f32 %v6649, 0.5
          %v6842 = vmul.f32 %v6650, 0.5
          %v6843 = vmul.f32 %v6651, 0.5
          %v6844 = vmul.f32 %v6652, 0.5
          %v6845 = vmul.f32 %v6653, 0.5
          %v6846 = vmul.f32 %v6654, 0.5
          %v6847 = vmul.f32 %v6655, 0.5
          %v6848 = vmul.f32 %v6656, 0.5
          %v6849 = vmul.f32 %v6657, 0.5
          %v6850 = vmul.f32 %v6658, 0.5
          %v6851 = vmul.f32 %v6659, 0.5
          %v6852 = vmul.f32 %v6660, 0.5
          %v6853 = vmul.f32 %v6661, 0.5
          %v6854 = vmul.f32 %v6662, 0.5
          %v6855 = vmul.f32 %v6663, 0.5
          %v6856 = vmul.f32 %v6664, 0.5
          %v6857 = vmul.f32 %v6665, 0.5
          %v6858 = vmul.f32 %v6666, 0.5
          %v6859 = vmul.f32 %v6667, 0.5
          %v6860 = vmul.f32 %v6668, 0.5
          %v6861 = vmul.f32 %v6669, 0.5
          %v6862 = vmul.f32 %v6670, 0.5
          %v6863 = vmul.f32 %v6671, 0.5
          %v6864 = vmul.f32 %v6672, 0.5
          %v6865 = vmul.f32 %v6673, 0.5
          %v6866 = vmul.f32 %v6674, 0.5
          %v6867 = vmul.f32 %v6675, 0.5
          %v6868 = vmul.f32 %v6676, 0.5
          %v6869 = vmul.f32 %v6677, 0.5
          %v6870 = vmul.f32 %v6678, 0.5
          %v6871 = vmul.f32 %v6679, 0.5
          %v6872 = vmul.f32 %v6680, 0.5
          %v6873 = vmul.f32 %v6681, 0.5
          %v6874 = vmul.f32 %v6682, 0.5
          %v6875 = vmul.f32 %v6683, 0.5
          %v6876 = vmul.f32 %v6684, 0.5
          %v6877 = vmul.f32 %v6685, 0.5
          %v6878 = vmul.f32 %v6686, 0.5
          %v6879 = vmul.f32 %v6687, 0.5
          %v6880 = vmul.f32 %v6688, 0.5
          %v6881 = vmul.f32 %v6689, 0.5
          %v6882 = vmul.f32 %v6690, 0.5
          %v6883 = vmul.f32 %v6691, 0.5
          %v6884 = vmul.f32 %v6692, 0.5
          %v6885 = vmul.f32 %v6693, 0.5
          %v6886 = vmul.f32 %v6694, 0.5
          %v6887 = vmul.f32 %v6695, 0.5
          %v6888 = vmul.f32 %v6696, 0.5
          %v6889 = vmul.f32 %v4746, %v6697
          %v6890 = vmul.f32 %v4748, %v6698
          %v6891 = vmul.f32 %v5099, %v6699
          %v6892 = vmul.f32 %v4750, %v6700
          %v6893 = vmul.f32 %v4752, %v6701
          %v6894 = vmul.f32 %v5102, %v6702
          %v6895 = vmul.f32 %v4756, %v6703
          %v6896 = vmul.f32 %v4758, %v6704
          %v6897 = vmul.f32 %v5107, %v6705
          %v6898 = vmul.f32 %v4760, %v6706
          %v6899 = vmul.f32 %v4762, %v6707
          %v6900 = vmul.f32 %v5110, %v6708
          %v6901 = vmul.f32 %v4766, %v6709
          %v6902 = vmul.f32 %v4768, %v6710
          %v6903 = vmul.f32 %v5115, %v6711
          %v6904 = vmul.f32 %v4770, %v6712
          %v6905 = vmul.f32 %v4772, %v6713
          %v6906 = vmul.f32 %v5118, %v6714
          %v6907 = vmul.f32 %v4776, %v6715
          %v6908 = vmul.f32 %v4778, %v6716
          %v6909 = vmul.f32 %v5123, %v6717
          %v6910 = vmul.f32 %v4780, %v6718
          %v6911 = vmul.f32 %v4782, %v6719
          %v6912 = vmul.f32 %v5126, %v6720
          %v6913 = vmul.f32 %v4786, %v6721
          %v6914 = vmul.f32 %v4788, %v6722
          %v6915 = vmul.f32 %v5131, %v6723
          %v6916 = vmul.f32 %v4790, %v6724
          %v6917 = vmul.f32 %v4792, %v6725
          %v6918 = vmul.f32 %v5134, %v6726
          %v6919 = vmul.f32 %v4796, %v6727
          %v6920 = vmul.f32 %v4798, %v6728
          %v6921 = vmul.f32 %v5139, %v6729
          %v6922 = vmul.f32 %v4800, %v6730
          %v6923 = vmul.f32 %v4802, %v6731
          %v6924 = vmul.f32 %v5142, %v6732
          %v6925 = vmul.f32 %v4806, %v6733
          %v6926 = vmul.f32 %v4808, %v6734
          %v6927 = vmul.f32 %v5147, %v6735
          %v6928 = vmul.f32 %v4810, %v6736
          %v6929 = vmul.f32 %v4812, %v6737
          %v6930 = vmul.f32 %v5150, %v6738
          %v6931 = vmul.f32 %v4816, %v6739
          %v6932 = vmul.f32 %v4818, %v6740
          %v6933 = vmul.f32 %v5155, %v6741
          %v6934 = vmul.f32 %v4820, %v6742
          %v6935 = vmul.f32 %v4822, %v6743
          %v6936 = vmul.f32 %v5158, %v6744
          %v6937 = vmul.f32 %v4826, %v6745
          %v6938 = vmul.f32 %v4828, %v6746
          %v6939 = vmul.f32 %v5163, %v6747
          %v6940 = vmul.f32 %v4830, %v6748
          %v6941 = vmul.f32 %v4832, %v6749
          %v6942 = vmul.f32 %v5166, %v6750
          %v6943 = vmul.f32 %v4836, %v6751
          %v6944 = vmul.f32 %v4838, %v6752
          %v6945 = vmul.f32 %v5171, %v6753
          %v6946 = vmul.f32 %v4840, %v6754
          %v6947 = vmul.f32 %v4842, %v6755
          %v6948 = vmul.f32 %v5174, %v6756
          %v6949 = vmul.f32 %v4846, %v6757
          %v6950 = vmul.f32 %v4848, %v6758
          %v6951 = vmul.f32 %v5179, %v6759
          %v6952 = vmul.f32 %v4850, %v6760
          %v6953 = vmul.f32 %v4852, %v6761
          %v6954 = vmul.f32 %v5182, %v6762
          %v6955 = vmul.f32 %v4856, %v6763
          %v6956 = vmul.f32 %v4858, %v6764
          %v6957 = vmul.f32 %v5187, %v6765
          %v6958 = vmul.f32 %v4860, %v6766
          %v6959 = vmul.f32 %v4862, %v6767
          %v6960 = vmul.f32 %v5190, %v6768
          %v6961 = vmul.f32 %v4866, %v6769
          %v6962 = vmul.f32 %v4868, %v6770
          %v6963 = vmul.f32 %v5195, %v6771
          %v6964 = vmul.f32 %v4870, %v6772
          %v6965 = vmul.f32 %v4872, %v6773
          %v6966 = vmul.f32 %v5198, %v6774
          %v6967 = vmul.f32 %v4876, %v6775
          %v6968 = vmul.f32 %v4878, %v6776
          %v6969 = vmul.f32 %v5203, %v6777
          %v6970 = vmul.f32 %v4880, %v6778
          %v6971 = vmul.f32 %v4882, %v6779
          %v6972 = vmul.f32 %v5206, %v6780
          %v6973 = vmul.f32 %v4886, %v6781
          %v6974 = vmul.f32 %v4888, %v6782
          %v6975 = vmul.f32 %v5211, %v6783
          %v6976 = vmul.f32 %v4890, %v6784
          %v6977 = vmul.f32 %v4892, %v6785
          %v6978 = vmul.f32 %v5214, %v6786
          %v6979 = vmul.f32 %v4896, %v6787
          %v6980 = vmul.f32 %v4898, %v6788
          %v6981 = vmul.f32 %v5219, %v6789
          %v6982 = vmul.f32 %v4900, %v6790
          %v6983 = vmul.f32 %v4902, %v6791
          %v6984 = vmul.f32 %v5222, %v6792
          %v6985 = vmul.f32 %v4906, %v6793
          %v6986 = vmul.f32 %v4908, %v6794
          %v6987 = vmul.f32 %v5227, %v6795
          %v6988 = vmul.f32 %v4910, %v6796
          %v6989 = vmul.f32 %v4912, %v6797
          %v6990 = vmul.f32 %v5230, %v6798
          %v6991 = vmul.f32 %v4916, %v6799
          %v6992 = vmul.f32 %v4918, %v6800
          %v6993 = vmul.f32 %v5235, %v6801
          %v6994 = vmul.f32 %v4920, %v6802
          %v6995 = vmul.f32 %v4922, %v6803
          %v6996 = vmul.f32 %v5238, %v6804
          %v6997 = vmul.f32 %v4926, %v6805
          %v6998 = vmul.f32 %v4928, %v6806
          %v6999 = vmul.f32 %v5243, %v6807
          %v7000 = vmul.f32 %v4930, %v6808
          %v7001 = vmul.f32 %v4932, %v6809
          %v7002 = vmul.f32 %v5246, %v6810
          %v7003 = vmul.f32 %v4936, %v6811
          %v7004 = vmul.f32 %v4938, %v6812
          %v7005 = vmul.f32 %v5251, %v6813
          %v7006 = vmul.f32 %v4940, %v6814
          %v7007 = vmul.f32 %v4942, %v6815
          %v7008 = vmul.f32 %v5254, %v6816
          %v7009 = vmul.f32 %v4946, %v6817
          %v7010 = vmul.f32 %v4948, %v6818
          %v7011 = vmul.f32 %v5259, %v6819
          %v7012 = vmul.f32 %v4950, %v6820
          %v7013 = vmul.f32 %v4952, %v6821
          %v7014 = vmul.f32 %v5262, %v6822
          %v7015 = vmul.f32 %v4956, %v6823
          %v7016 = vmul.f32 %v4958, %v6824
          %v7017 = vmul.f32 %v5267, %v6825
          %v7018 = vmul.f32 %v4960, %v6826
          %v7019 = vmul.f32 %v4962, %v6827
          %v7020 = vmul.f32 %v5270, %v6828
          %v7021 = vmul.f32 %v4966, %v6829
          %v7022 = vmul.f32 %v4968, %v6830
          %v7023 = vmul.f32 %v5275, %v6831
          %v7024 = vmul.f32 %v4970, %v6832
          %v7025 = vmul.f32 %v4972, %v6833
          %v7026 = vmul.f32 %v5278, %v6834
          %v7027 = vmul.f32 %v4976, %v6835
          %v7028 = vmul.f32 %v4978, %v6836
          %v7029 = vmul.f32 %v5283, %v6837
          %v7030 = vmul.f32 %v4980, %v6838
          %v7031 = vmul.f32 %v4982, %v6839
          %v7032 = vmul.f32 %v5286, %v6840
          %v7033 = vmul.f32 %v4986, %v6841
          %v7034 = vmul.f32 %v4988, %v6842
          %v7035 = vmul.f32 %v5291, %v6843
          %v7036 = vmul.f32 %v4990, %v6844
          %v7037 = vmul.f32 %v4992, %v6845
          %v7038 = vmul.f32 %v5294, %v6846
          %v7039 = vmul.f32 %v4996, %v6847
          %v7040 = vmul.f32 %v4998, %v6848
          %v7041 = vmul.f32 %v5299, %v6849
          %v7042 = vmul.f32 %v5000, %v6850
          %v7043 = vmul.f32 %v5002, %v6851
          %v7044 = vmul.f32 %v5302, %v6852
          %v7045 = vmul.f32 %v5006, %v6853
          %v7046 = vmul.f32 %v5008, %v6854
          %v7047 = vmul.f32 %v5307, %v6855
          %v7048 = vmul.f32 %v5010, %v6856
          %v7049 = vmul.f32 %v5012, %v6857
          %v7050 = vmul.f32 %v5310, %v6858
          %v7051 = vmul.f32 %v5016, %v6859
          %v7052 = vmul.f32 %v5018, %v6860
          %v7053 = vmul.f32 %v5315, %v6861
          %v7054 = vmul.f32 %v5020, %v6862
          %v7055 = vmul.f32 %v5022, %v6863
          %v7056 = vmul.f32 %v5318, %v6864
          %v7057 = vmul.f32 %v5026, %v6865
          %v7058 = vmul.f32 %v5028, %v6866
          %v7059 = vmul.f32 %v5323, %v6867
          %v7060 = vmul.f32 %v5030, %v6868
          %v7061 = vmul.f32 %v5032, %v6869
          %v7062 = vmul.f32 %v5326, %v6870
          %v7063 = vmul.f32 %v5036, %v6871
          %v7064 = vmul.f32 %v5038, %v6872
          %v7065 = vmul.f32 %v5331, %v6873
          %v7066 = vmul.f32 %v5040, %v6874
          %v7067 = vmul.f32 %v5042, %v6875
          %v7068 = vmul.f32 %v5334, %v6876
          %v7069 = vmul.f32 %v5046, %v6877
          %v7070 = vmul.f32 %v5048, %v6878
          %v7071 = vmul.f32 %v5339, %v6879
          %v7072 = vmul.f32 %v5050, %v6880
          %v7073 = vmul.f32 %v5052, %v6881
          %v7074 = vmul.f32 %v5342, %v6882
          %v7075 = vmul.f32 %v5056, %v6883
          %v7076 = vmul.f32 %v5058, %v6884
          %v7077 = vmul.f32 %v5347, %v6885
          %v7078 = vmul.f32 %v5060, %v6886
          %v7079 = vmul.f32 %v5062, %v6887
          %v7080 = vmul.f32 %v5350, %v6888
          %v7081 = vld [vmem:[#allocation4] sm:$0x7]
          %v7082 = vmul.f32 %v6889, %v6889
          %v7083 = vmul.f32 %v6890, %v6890
          %v7084 = vmul.f32 %v6891, %v6891
          %v7085 = vmul.f32 %v6892, %v6892
          %v7086 = vmul.f32 %v6893, %v6893
          %v7087 = vmul.f32 %v6894, %v6894
          %v7088 = vmul.f32 %v6895, %v6895
          %v7089 = vmul.f32 %v6896, %v6896
          %v7090 = vmul.f32 %v6897, %v6897
          %v7091 = vmul.f32 %v6898, %v6898
          %v7092 = vmul.f32 %v6899, %v6899
          %v7093 = vmul.f32 %v6900, %v6900
          %v7094 = vmul.f32 %v6901, %v6901
          %v7095 = vmul.f32 %v6902, %v6902
          %v7096 = vmul.f32 %v6903, %v6903
          %v7097 = vmul.f32 %v6904, %v6904
          %v7098 = vmul.f32 %v6905, %v6905
          %v7099 = vmul.f32 %v6906, %v6906
          %v7100 = vmul.f32 %v6907, %v6907
          %v7101 = vmul.f32 %v6908, %v6908
          %v7102 = vmul.f32 %v6909, %v6909
          %v7103 = vmul.f32 %v6910, %v6910
          %v7104 = vmul.f32 %v6911, %v6911
          %v7105 = vmul.f32 %v6912, %v6912
          %v7106 = vmul.f32 %v6913, %v6913
          %v7107 = vmul.f32 %v6914, %v6914
          %v7108 = vmul.f32 %v6915, %v6915
          %v7109 = vmul.f32 %v6916, %v6916
          %v7110 = vmul.f32 %v6917, %v6917
          %v7111 = vmul.f32 %v6918, %v6918
          %v7112 = vmul.f32 %v6919, %v6919
          %v7113 = vmul.f32 %v6920, %v6920
          %v7114 = vmul.f32 %v6921, %v6921
          %v7115 = vmul.f32 %v6922, %v6922
          %v7116 = vmul.f32 %v6923, %v6923
          %v7117 = vmul.f32 %v6924, %v6924
          %v7118 = vmul.f32 %v6925, %v6925
          %v7119 = vmul.f32 %v6926, %v6926
          %v7120 = vmul.f32 %v6927, %v6927
          %v7121 = vmul.f32 %v6928, %v6928
          %v7122 = vmul.f32 %v6929, %v6929
          %v7123 = vmul.f32 %v6930, %v6930
          %v7124 = vmul.f32 %v6931, %v6931
          %v7125 = vmul.f32 %v6932, %v6932
          %v7126 = vmul.f32 %v6933, %v6933
          %v7127 = vmul.f32 %v6934, %v6934
          %v7128 = vmul.f32 %v6935, %v6935
          %v7129 = vmul.f32 %v6936, %v6936
          %v7130 = vmul.f32 %v6937, %v6937
          %v7131 = vmul.f32 %v6938, %v6938
          %v7132 = vmul.f32 %v6939, %v6939
          %v7133 = vmul.f32 %v6940, %v6940
          %v7134 = vmul.f32 %v6941, %v6941
          %v7135 = vmul.f32 %v6942, %v6942
          %v7136 = vmul.f32 %v6943, %v6943
          %v7137 = vmul.f32 %v6944, %v6944
          %v7138 = vmul.f32 %v6945, %v6945
          %v7139 = vmul.f32 %v6946, %v6946
          %v7140 = vmul.f32 %v6947, %v6947
          %v7141 = vmul.f32 %v6948, %v6948
          %v7142 = vmul.f32 %v6949, %v6949
          %v7143 = vmul.f32 %v6950, %v6950
          %v7144 = vmul.f32 %v6951, %v6951
          %v7145 = vmul.f32 %v6952, %v6952
          %v7146 = vmul.f32 %v6953, %v6953
          %v7147 = vmul.f32 %v6954, %v6954
          %v7148 = vmul.f32 %v6955, %v6955
          %v7149 = vmul.f32 %v6956, %v6956
          %v7150 = vmul.f32 %v6957, %v6957
          %v7151 = vmul.f32 %v6958, %v6958
          %v7152 = vmul.f32 %v6959, %v6959
          %v7153 = vmul.f32 %v6960, %v6960
          %v7154 = vmul.f32 %v6961, %v6961
          %v7155 = vmul.f32 %v6962, %v6962
          %v7156 = vmul.f32 %v6963, %v6963
          %v7157 = vmul.f32 %v6964, %v6964
          %v7158 = vmul.f32 %v6965, %v6965
          %v7159 = vmul.f32 %v6966, %v6966
          %v7160 = vmul.f32 %v6967, %v6967
          %v7161 = vmul.f32 %v6968, %v6968
          %v7162 = vmul.f32 %v6969, %v6969
          %v7163 = vmul.f32 %v6970, %v6970
          %v7164 = vmul.f32 %v6971, %v6971
          %v7165 = vmul.f32 %v6972, %v6972
          %v7166 = vmul.f32 %v6973, %v6973
          %v7167 = vmul.f32 %v6974, %v6974
          %v7168 = vmul.f32 %v6975, %v6975
          %v7169 = vmul.f32 %v6976, %v6976
          %v7170 = vmul.f32 %v6977, %v6977
          %v7171 = vmul.f32 %v6978, %v6978
          %v7172 = vmul.f32 %v6979, %v6979
          %v7173 = vmul.f32 %v6980, %v6980
          %v7174 = vmul.f32 %v6981, %v6981
          %v7175 = vmul.f32 %v6982, %v6982
          %v7176 = vmul.f32 %v6983, %v6983
          %v7177 = vmul.f32 %v6984, %v6984
          %v7178 = vmul.f32 %v6985, %v6985
          %v7179 = vmul.f32 %v6986, %v6986
          %v7180 = vmul.f32 %v6987, %v6987
          %v7181 = vmul.f32 %v6988, %v6988
          %v7182 = vmul.f32 %v6989, %v6989
          %v7183 = vmul.f32 %v6990, %v6990
          %v7184 = vmul.f32 %v6991, %v6991
          %v7185 = vmul.f32 %v6992, %v6992
          %v7186 = vmul.f32 %v6993, %v6993
          %v7187 = vmul.f32 %v6994, %v6994
          %v7188 = vmul.f32 %v6995, %v6995
          %v7189 = vmul.f32 %v6996, %v6996
          %v7190 = vmul.f32 %v6997, %v6997
          %v7191 = vmul.f32 %v6998, %v6998
          %v7192 = vmul.f32 %v6999, %v6999
          %v7193 = vmul.f32 %v7000, %v7000
          %v7194 = vmul.f32 %v7001, %v7001
          %v7195 = vmul.f32 %v7002, %v7002
          %v7196 = vmul.f32 %v7003, %v7003
          %v7197 = vmul.f32 %v7004, %v7004
          %v7198 = vmul.f32 %v7005, %v7005
          %v7199 = vmul.f32 %v7006, %v7006
          %v7200 = vmul.f32 %v7007, %v7007
          %v7201 = vmul.f32 %v7008, %v7008
          %v7202 = vmul.f32 %v7009, %v7009
          %v7203 = vmul.f32 %v7010, %v7010
          %v7204 = vmul.f32 %v7011, %v7011
          %v7205 = vmul.f32 %v7012, %v7012
          %v7206 = vmul.f32 %v7013, %v7013
          %v7207 = vmul.f32 %v7014, %v7014
          %v7208 = vmul.f32 %v7015, %v7015
          %v7209 = vmul.f32 %v7016, %v7016
          %v7210 = vmul.f32 %v7017, %v7017
          %v7211 = vmul.f32 %v7018, %v7018
          %v7212 = vmul.f32 %v7019, %v7019
          %v7213 = vmul.f32 %v7020, %v7020
          %v7214 = vmul.f32 %v7021, %v7021
          %v7215 = vmul.f32 %v7022, %v7022
          %v7216 = vmul.f32 %v7023, %v7023
          %v7217 = vmul.f32 %v7024, %v7024
          %v7218 = vmul.f32 %v7025, %v7025
          %v7219 = vmul.f32 %v7026, %v7026
          %v7220 = vmul.f32 %v7027, %v7027
          %v7221 = vmul.f32 %v7028, %v7028
          %v7222 = vmul.f32 %v7029, %v7029
          %v7223 = vmul.f32 %v7030, %v7030
          %v7224 = vmul.f32 %v7031, %v7031
          %v7225 = vmul.f32 %v7032, %v7032
          %v7226 = vmul.f32 %v7033, %v7033
          %v7227 = vmul.f32 %v7034, %v7034
          %v7228 = vmul.f32 %v7035, %v7035
          %v7229 = vmul.f32 %v7036, %v7036
          %v7230 = vmul.f32 %v7037, %v7037
          %v7231 = vmul.f32 %v7038, %v7038
          %v7232 = vmul.f32 %v7039, %v7039
          %v7233 = vmul.f32 %v7040, %v7040
          %v7234 = vmul.f32 %v7041, %v7041
          %v7235 = vmul.f32 %v7042, %v7042
          %v7236 = vmul.f32 %v7043, %v7043
          %v7237 = vmul.f32 %v7044, %v7044
          %v7238 = vmul.f32 %v7045, %v7045
          %v7239 = vmul.f32 %v7046, %v7046
          %v7240 = vmul.f32 %v7047, %v7047
          %v7241 = vmul.f32 %v7048, %v7048
          %v7242 = vmul.f32 %v7049, %v7049
          %v7243 = vmul.f32 %v7050, %v7050
          %v7244 = vmul.f32 %v7051, %v7051
          %v7245 = vmul.f32 %v7052, %v7052
          %v7246 = vmul.f32 %v7053, %v7053
          %v7247 = vmul.f32 %v7054, %v7054
          %v7248 = vmul.f32 %v7055, %v7055
          %v7249 = vmul.f32 %v7056, %v7056
          %v7250 = vmul.f32 %v7057, %v7057
          %v7251 = vmul.f32 %v7058, %v7058
          %v7252 = vmul.f32 %v7059, %v7059
          %v7253 = vmul.f32 %v7060, %v7060
          %v7254 = vmul.f32 %v7061, %v7061
          %v7255 = vmul.f32 %v7062, %v7062
          %v7256 = vmul.f32 %v7063, %v7063
          %v7257 = vmul.f32 %v7064, %v7064
          %v7258 = vmul.f32 %v7065, %v7065
          %v7259 = vmul.f32 %v7066, %v7066
          %v7260 = vmul.f32 %v7067, %v7067
          %v7261 = vmul.f32 %v7068, %v7068
          %v7262 = vmul.f32 %v7069, %v7069
          %v7263 = vmul.f32 %v7070, %v7070
          %v7264 = vmul.f32 %v7071, %v7071
          %v7265 = vmul.f32 %v7072, %v7072
          %v7266 = vmul.f32 %v7073, %v7073
          %v7267 = vmul.f32 %v7074, %v7074
          %v7268 = vmul.f32 %v7075, %v7075
          %v7269 = vmul.f32 %v7076, %v7076
          %v7270 = vmul.f32 %v7077, %v7077
          %v7271 = vmul.f32 %v7078, %v7078
          %v7272 = vmul.f32 %v7079, %v7079
          %v7273 = vmul.f32 %v7080, %v7080
          %v7274 = vadd.f32 %v7082, %v7085
          %v7275 = vadd.f32 %v7274, %v7088
          %v7276 = vadd.f32 %v7275, %v7091
          %v7277 = vadd.f32 %v7276, %v7094
          %v7278 = vadd.f32 %v7277, %v7097
          %v7279 = vadd.f32 %v7278, %v7100
          %v7280 = vadd.f32 %v7279, %v7103
          %v7281 = vadd.f32 %v7280, %v7106
          %v7282 = vadd.f32 %v7281, %v7109
          %v7283 = vadd.f32 %v7282, %v7112
          %v7284 = vadd.f32 %v7283, %v7115
          %v7285 = vadd.f32 %v7284, %v7118
          %v7286 = vadd.f32 %v7285, %v7121
          %v7287 = vadd.f32 %v7286, %v7124
          %v7288 = vadd.f32 %v7287, %v7127
          %v7289 = vadd.f32 %v7288, %v7130
          %v7290 = vadd.f32 %v7289, %v7133
          %v7291 = vadd.f32 %v7290, %v7136
          %v7292 = vadd.f32 %v7291, %v7139
          %v7293 = vadd.f32 %v7292, %v7142
          %v7294 = vadd.f32 %v7293, %v7145
          %v7295 = vadd.f32 %v7294, %v7148
          %v7296 = vadd.f32 %v7295, %v7151
          %v7297 = vadd.f32 %v7296, %v7154
          %v7298 = vadd.f32 %v7297, %v7157
          %v7299 = vadd.f32 %v7298, %v7160
          %v7300 = vadd.f32 %v7299, %v7163
          %v7301 = vadd.f32 %v7300, %v7166
          %v7302 = vadd.f32 %v7301, %v7169
          %v7303 = vadd.f32 %v7302, %v7172
          %v7304 = vadd.f32 %v7303, %v7175
          %v7305 = vadd.f32 %v7304, %v7178
          %v7306 = vadd.f32 %v7305, %v7181
          %v7307 = vadd.f32 %v7306, %v7184
          %v7308 = vadd.f32 %v7307, %v7187
          %v7309 = vadd.f32 %v7308, %v7190
          %v7310 = vadd.f32 %v7309, %v7193
          %v7311 = vadd.f32 %v7310, %v7196
          %v7312 = vadd.f32 %v7311, %v7199
          %v7313 = vadd.f32 %v7312, %v7202
          %v7314 = vadd.f32 %v7313, %v7205
          %v7315 = vadd.f32 %v7314, %v7208
          %v7316 = vadd.f32 %v7315, %v7211
          %v7317 = vadd.f32 %v7316, %v7214
          %v7318 = vadd.f32 %v7317, %v7217
          %v7319 = vadd.f32 %v7318, %v7220
          %v7320 = vadd.f32 %v7319, %v7223
          %v7321 = vadd.f32 %v7320, %v7226
          %v7322 = vadd.f32 %v7321, %v7229
          %v7323 = vadd.f32 %v7322, %v7232
          %v7324 = vadd.f32 %v7323, %v7235
          %v7325 = vadd.f32 %v7324, %v7238
          %v7326 = vadd.f32 %v7325, %v7241
          %v7327 = vadd.f32 %v7326, %v7244
          %v7328 = vadd.f32 %v7327, %v7247
          %v7329 = vadd.f32 %v7328, %v7250
          %v7330 = vadd.f32 %v7329, %v7253
          %v7331 = vadd.f32 %v7330, %v7256
          %v7332 = vadd.f32 %v7331, %v7259
          %v7333 = vadd.f32 %v7332, %v7262
          %v7334 = vadd.f32 %v7333, %v7265
          %v7335 = vadd.f32 %v7334, %v7268
          %v7336 = vadd.f32 %v7335, %v7271
          %v7337 = vrot.slane %v7336, 4
          %v7338 = vadd.f32 %v7336, %v7337
          %v7339 = vrot.slane %v7338, 2
          %v7340 = vadd.f32 %v7338, %v7339
          %v7341 = vrot.slane %v7340, 1
          %v7342 = vadd.f32 %v7340, %v7341
          %v7343 = vadd.f32 %v7083, %v7086
          %v7344 = vadd.f32 %v7343, %v7089
          %v7345 = vadd.f32 %v7344, %v7092
          %v7346 = vadd.f32 %v7345, %v7095
          %v7347 = vadd.f32 %v7346, %v7098
          %v7348 = vadd.f32 %v7347, %v7101
          %v7349 = vadd.f32 %v7348, %v7104
          %v7350 = vadd.f32 %v7349, %v7107
          %v7351 = vadd.f32 %v7350, %v7110
          %v7352 = vadd.f32 %v7351, %v7113
          %v7353 = vadd.f32 %v7352, %v7116
          %v7354 = vadd.f32 %v7353, %v7119
          %v7355 = vadd.f32 %v7354, %v7122
          %v7356 = vadd.f32 %v7355, %v7125
          %v7357 = vadd.f32 %v7356, %v7128
          %v7358 = vadd.f32 %v7357, %v7131
          %v7359 = vadd.f32 %v7358, %v7134
          %v7360 = vadd.f32 %v7359, %v7137
          %v7361 = vadd.f32 %v7360, %v7140
          %v7362 = vadd.f32 %v7361, %v7143
          %v7363 = vadd.f32 %v7362, %v7146
          %v7364 = vadd.f32 %v7363, %v7149
          %v7365 = vadd.f32 %v7364, %v7152
          %v7366 = vadd.f32 %v7365, %v7155
          %v7367 = vadd.f32 %v7366, %v7158
          %v7368 = vadd.f32 %v7367, %v7161
          %v7369 = vadd.f32 %v7368, %v7164
          %v7370 = vadd.f32 %v7369, %v7167
          %v7371 = vadd.f32 %v7370, %v7170
          %v7372 = vadd.f32 %v7371, %v7173
          %v7373 = vadd.f32 %v7372, %v7176
          %v7374 = vadd.f32 %v7373, %v7179
          %v7375 = vadd.f32 %v7374, %v7182
          %v7376 = vadd.f32 %v7375, %v7185
          %v7377 = vadd.f32 %v7376, %v7188
          %v7378 = vadd.f32 %v7377, %v7191
          %v7379 = vadd.f32 %v7378, %v7194
          %v7380 = vadd.f32 %v7379, %v7197
          %v7381 = vadd.f32 %v7380, %v7200
          %v7382 = vadd.f32 %v7381, %v7203
          %v7383 = vadd.f32 %v7382, %v7206
          %v7384 = vadd.f32 %v7383, %v7209
          %v7385 = vadd.f32 %v7384, %v7212
          %v7386 = vadd.f32 %v7385, %v7215
          %v7387 = vadd.f32 %v7386, %v7218
          %v7388 = vadd.f32 %v7387, %v7221
          %v7389 = vadd.f32 %v7388, %v7224
          %v7390 = vadd.f32 %v7389, %v7227
          %v7391 = vadd.f32 %v7390, %v7230
          %v7392 = vadd.f32 %v7391, %v7233
          %v7393 = vadd.f32 %v7392, %v7236
          %v7394 = vadd.f32 %v7393, %v7239
          %v7395 = vadd.f32 %v7394, %v7242
          %v7396 = vadd.f32 %v7395, %v7245
          %v7397 = vadd.f32 %v7396, %v7248
          %v7398 = vadd.f32 %v7397, %v7251
          %v7399 = vadd.f32 %v7398, %v7254
          %v7400 = vadd.f32 %v7399, %v7257
          %v7401 = vadd.f32 %v7400, %v7260
          %v7402 = vadd.f32 %v7401, %v7263
          %v7403 = vadd.f32 %v7402, %v7266
          %v7404 = vadd.f32 %v7403, %v7269
          %v7405 = vadd.f32 %v7404, %v7272
          %v7406 = vrot.slane %v7405, 4
          %v7407 = vadd.f32 %v7405, %v7406
          %v7408 = vrot.slane %v7407, 2
          %v7409 = vadd.f32 %v7407, %v7408
          %v7410 = vrot.slane %v7409, 1
          %v7411 = vadd.f32 %v7409, %v7410
          %v7412 = vadd.f32 %v7084, %v7087
          %v7413 = vadd.f32 %v7412, %v7090
          %v7414 = vadd.f32 %v7413, %v7093
          %v7415 = vadd.f32 %v7414, %v7096
          %v7416 = vadd.f32 %v7415, %v7099
          %v7417 = vadd.f32 %v7416, %v7102
          %v7418 = vadd.f32 %v7417, %v7105
          %v7419 = vadd.f32 %v7418, %v7108
          %v7420 = vadd.f32 %v7419, %v7111
          %v7421 = vadd.f32 %v7420, %v7114
          %v7422 = vadd.f32 %v7421, %v7117
          %v7423 = vadd.f32 %v7422, %v7120
          %v7424 = vadd.f32 %v7423, %v7123
          %v7425 = vadd.f32 %v7424, %v7126
          %v7426 = vadd.f32 %v7425, %v7129
          %v7427 = vadd.f32 %v7426, %v7132
          %v7428 = vadd.f32 %v7427, %v7135
          %v7429 = vadd.f32 %v7428, %v7138
          %v7430 = vadd.f32 %v7429, %v7141
          %v7431 = vadd.f32 %v7430, %v7144
          %v7432 = vadd.f32 %v7431, %v7147
          %v7433 = vadd.f32 %v7432, %v7150
          %v7434 = vadd.f32 %v7433, %v7153
          %v7435 = vadd.f32 %v7434, %v7156
          %v7436 = vadd.f32 %v7435, %v7159
          %v7437 = vadd.f32 %v7436, %v7162
          %v7438 = vadd.f32 %v7437, %v7165
          %v7439 = vadd.f32 %v7438, %v7168
          %v7440 = vadd.f32 %v7439, %v7171
          %v7441 = vadd.f32 %v7440, %v7174
          %v7442 = vadd.f32 %v7441, %v7177
          %v7443 = vadd.f32 %v7442, %v7180
          %v7444 = vadd.f32 %v7443, %v7183
          %v7445 = vadd.f32 %v7444, %v7186
          %v7446 = vadd.f32 %v7445, %v7189
          %v7447 = vadd.f32 %v7446, %v7192
          %v7448 = vadd.f32 %v7447, %v7195
          %v7449 = vadd.f32 %v7448, %v7198
          %v7450 = vadd.f32 %v7449, %v7201
          %v7451 = vadd.f32 %v7450, %v7204
          %v7452 = vadd.f32 %v7451, %v7207
          %v7453 = vadd.f32 %v7452, %v7210
          %v7454 = vadd.f32 %v7453, %v7213
          %v7455 = vadd.f32 %v7454, %v7216
          %v7456 = vadd.f32 %v7455, %v7219
          %v7457 = vadd.f32 %v7456, %v7222
          %v7458 = vadd.f32 %v7457, %v7225
          %v7459 = vadd.f32 %v7458, %v7228
          %v7460 = vadd.f32 %v7459, %v7231
          %v7461 = vadd.f32 %v7460, %v7234
          %v7462 = vadd.f32 %v7461, %v7237
          %v7463 = vadd.f32 %v7462, %v7240
          %v7464 = vadd.f32 %v7463, %v7243
          %v7465 = vadd.f32 %v7464, %v7246
          %v7466 = vadd.f32 %v7465, %v7249
          %v7467 = vadd.f32 %v7466, %v7252
          %v7468 = vadd.f32 %v7467, %v7255
          %v7469 = vadd.f32 %v7468, %v7258
          %v7470 = vadd.f32 %v7469, %v7261
          %v7471 = vadd.f32 %v7470, %v7264
          %v7472 = vadd.f32 %v7471, %v7267
          %v7473 = vadd.f32 %v7472, %v7270
          %v7474 = vadd.f32 %v7473, %v7273
          %v7475 = vrot.slane %v7474, 4
          %v7476 = vadd.f32 %v7474, %v7475
          %v7477 = vrot.slane %v7476, 2
          %v7478 = vadd.f32 %v7476, %v7477
          %v7479 = vrot.slane %v7478, 1
          %v7480 = vadd.f32 %v7478, %v7479
          %v7484 = vcombine.low %v7342, %v7411
          %v7486 = vunpack.c.l.s4 1966171168
          %v7487 = vunpack.c.0.s8 %v7486
          %v7488 = vlaneseq
          %v7489 = vshrl.u32 %v7488, 7
          %v7490 = vsub.s32 %v7487, %v7489
          %v7491 = vrot.slane %v7484, %v7490
          %v7493 = vunpack.c.l.s4 1966171168
          %v7494 = vunpack.c.0.s8 %v7493
          %v7495 = vlaneseq
          %v7496 = vshrl.u32 %v7495, 7
          %v7497 = vsub.s32 %v7494, %v7496
          %v7498 = vrot.slane %v7480, %v7497
          %v7499 = vcombine.low %v7491, %v7498
          %v7501 = vunpack.c.l.s4 1966171168
          %v7502 = vunpack.c.0.s8 %v7501
          %v7503 = vlaneseq
          %v7504 = vshrl.u32 %v7503, 7
          %v7505 = vsub.s32 %v7502, %v7504
          %v7506 = vrot.slane %v7499, %v7505
          %v7508 = vadd.f32 %v7081, %v7506
          %v7509 = vlaneseq
          %vm7510 = vcmp.ge.s32.totalorder %v7509, 0
          %vm7511 = vcmp.lt.s32.totalorder %v7509, 384
          %vm7512 = vmand %vm7510, %vm7511
          %7513 = vst.msk [vmem:[#allocation4] sm:$0x7] %vm7512, %v7508
          %s7514 = sshra.s32 %s730, 3
          %s7515 = sand.u32 %s730, 7
          %s7516 = smul.u32 %s7514, 3
          %s7517 = smul.addr %s7516, 8
          %s7518 = scalar_lea.vmem [#allocation3], %s7517
          %7519 = vst [vmem:[%s7518] sm:$0xff] %v6889
          %7520 = vst [vmem:[%s7518 + $0x8] sm:$0xff] %v6890
          %7521 = vst [vmem:[%s7518 + $0x10] sm:$0xff] %v6891
          %7522 = vst [vmem:[%s7518 + $0x18] sm:$0xff] %v6892
          %7523 = vst [vmem:[%s7518 + $0x20] sm:$0xff] %v6893
          %7524 = vst [vmem:[%s7518 + $0x28] sm:$0xff] %v6894
          %7525 = vst [vmem:[%s7518 + $0x30] sm:$0xff] %v6895
          %7526 = vst [vmem:[%s7518 + $0x38] sm:$0xff] %v6896
          %7527 = vst [vmem:[%s7518 + $0x40] sm:$0xff] %v6897
          %7528 = vst [vmem:[%s7518 + $0x48] sm:$0xff] %v6898
          %7529 = vst [vmem:[%s7518 + $0x50] sm:$0xff] %v6899
          %7530 = vst [vmem:[%s7518 + $0x58] sm:$0xff] %v6900
          %7531 = vst [vmem:[%s7518 + $0x60] sm:$0xff] %v6901
          %7532 = vst [vmem:[%s7518 + $0x68] sm:$0xff] %v6902
          %7533 = vst [vmem:[%s7518 + $0x70] sm:$0xff] %v6903
          %7534 = vst [vmem:[%s7518 + $0x78] sm:$0xff] %v6904
          %7535 = vst [vmem:[%s7518 + $0x80] sm:$0xff] %v6905
          %7536 = vst [vmem:[%s7518 + $0x88] sm:$0xff] %v6906
          %7537 = vst [vmem:[%s7518 + $0x90] sm:$0xff] %v6907
          %7538 = vst [vmem:[%s7518 + $0x98] sm:$0xff] %v6908
          %7539 = vst [vmem:[%s7518 + $0xa0] sm:$0xff] %v6909
          %7540 = vst [vmem:[%s7518 + $0xa8] sm:$0xff] %v6910
          %7541 = vst [vmem:[%s7518 + $0xb0] sm:$0xff] %v6911
          %7542 = vst [vmem:[%s7518 + $0xb8] sm:$0xff] %v6912
          %7543 = vst [vmem:[%s7518 + $0xc0] sm:$0xff] %v6913
          %7544 = vst [vmem:[%s7518 + $0xc8] sm:$0xff] %v6914
          %7545 = vst [vmem:[%s7518 + $0xd0] sm:$0xff] %v6915
          %7546 = vst [vmem:[%s7518 + $0xd8] sm:$0xff] %v6916
          %7547 = vst [vmem:[%s7518 + $0xe0] sm:$0xff] %v6917
          %7548 = vst [vmem:[%s7518 + $0xe8] sm:$0xff] %v6918
          %7549 = vst [vmem:[%s7518 + $0xf0] sm:$0xff] %v6919
          %7550 = vst [vmem:[%s7518 + $0xf8] sm:$0xff] %v6920
          %7551 = vst [vmem:[%s7518 + $0x100] sm:$0xff] %v6921
          %7552 = vst [vmem:[%s7518 + $0x108] sm:$0xff] %v6922
          %7553 = vst [vmem:[%s7518 + $0x110] sm:$0xff] %v6923
          %7554 = vst [vmem:[%s7518 + $0x118] sm:$0xff] %v6924
          %7555 = vst [vmem:[%s7518 + $0x120] sm:$0xff] %v6925
          %7556 = vst [vmem:[%s7518 + $0x128] sm:$0xff] %v6926
          %7557 = vst [vmem:[%s7518 + $0x130] sm:$0xff] %v6927
          %7558 = vst [vmem:[%s7518 + $0x138] sm:$0xff] %v6928
          %7559 = vst [vmem:[%s7518 + $0x140] sm:$0xff] %v6929
          %7560 = vst [vmem:[%s7518 + $0x148] sm:$0xff] %v6930
          %7561 = vst [vmem:[%s7518 + $0x150] sm:$0xff] %v6931
          %7562 = vst [vmem:[%s7518 + $0x158] sm:$0xff] %v6932
          %7563 = vst [vmem:[%s7518 + $0x160] sm:$0xff] %v6933
          %7564 = vst [vmem:[%s7518 + $0x168] sm:$0xff] %v6934
          %7565 = vst [vmem:[%s7518 + $0x170] sm:$0xff] %v6935
          %7566 = vst [vmem:[%s7518 + $0x178] sm:$0xff] %v6936
          %7567 = vst [vmem:[%s7518 + $0x180] sm:$0xff] %v6937
          %7568 = vst [vmem:[%s7518 + $0x188] sm:$0xff] %v6938
          %7569 = vst [vmem:[%s7518 + $0x190] sm:$0xff] %v6939
          %7570 = vst [vmem:[%s7518 + $0x198] sm:$0xff] %v6940
          %7571 = vst [vmem:[%s7518 + $0x1a0] sm:$0xff] %v6941
          %7572 = vst [vmem:[%s7518 + $0x1a8] sm:$0xff] %v6942
          %7573 = vst [vmem:[%s7518 + $0x1b0] sm:$0xff] %v6943
          %7574 = vst [vmem:[%s7518 + $0x1b8] sm:$0xff] %v6944
          %7575 = vst [vmem:[%s7518 + $0x1c0] sm:$0xff] %v6945
          %7576 = vst [vmem:[%s7518 + $0x1c8] sm:$0xff] %v6946
          %7577 = vst [vmem:[%s7518 + $0x1d0] sm:$0xff] %v6947
          %7578 = vst [vmem:[%s7518 + $0x1d8] sm:$0xff] %v6948
          %7579 = vst [vmem:[%s7518 + $0x1e0] sm:$0xff] %v6949
          %7580 = vst [vmem:[%s7518 + $0x1e8] sm:$0xff] %v6950
          %7581 = vst [vmem:[%s7518 + $0x1f0] sm:$0xff] %v6951
          %7582 = vst [vmem:[%s7518 + $0x1f8] sm:$0xff] %v6952
          %7583 = vst [vmem:[%s7518 + $0x200] sm:$0xff] %v6953
          %7584 = vst [vmem:[%s7518 + $0x208] sm:$0xff] %v6954
          %7585 = vst [vmem:[%s7518 + $0x210] sm:$0xff] %v6955
          %7586 = vst [vmem:[%s7518 + $0x218] sm:$0xff] %v6956
          %7587 = vst [vmem:[%s7518 + $0x220] sm:$0xff] %v6957
          %7588 = vst [vmem:[%s7518 + $0x228] sm:$0xff] %v6958
          %7589 = vst [vmem:[%s7518 + $0x230] sm:$0xff] %v6959
          %7590 = vst [vmem:[%s7518 + $0x238] sm:$0xff] %v6960
          %7591 = vst [vmem:[%s7518 + $0x240] sm:$0xff] %v6961
          %7592 = vst [vmem:[%s7518 + $0x248] sm:$0xff] %v6962
          %7593 = vst [vmem:[%s7518 + $0x250] sm:$0xff] %v6963
          %7594 = vst [vmem:[%s7518 + $0x258] sm:$0xff] %v6964
          %7595 = vst [vmem:[%s7518 + $0x260] sm:$0xff] %v6965
          %7596 = vst [vmem:[%s7518 + $0x268] sm:$0xff] %v6966
          %7597 = vst [vmem:[%s7518 + $0x270] sm:$0xff] %v6967
          %7598 = vst [vmem:[%s7518 + $0x278] sm:$0xff] %v6968
          %7599 = vst [vmem:[%s7518 + $0x280] sm:$0xff] %v6969
          %7600 = vst [vmem:[%s7518 + $0x288] sm:$0xff] %v6970
          %7601 = vst [vmem:[%s7518 + $0x290] sm:$0xff] %v6971
          %7602 = vst [vmem:[%s7518 + $0x298] sm:$0xff] %v6972
          %7603 = vst [vmem:[%s7518 + $0x2a0] sm:$0xff] %v6973
          %7604 = vst [vmem:[%s7518 + $0x2a8] sm:$0xff] %v6974
          %7605 = vst [vmem:[%s7518 + $0x2b0] sm:$0xff] %v6975
          %7606 = vst [vmem:[%s7518 + $0x2b8] sm:$0xff] %v6976
          %7607 = vst [vmem:[%s7518 + $0x2c0] sm:$0xff] %v6977
          %7608 = vst [vmem:[%s7518 + $0x2c8] sm:$0xff] %v6978
          %7609 = vst [vmem:[%s7518 + $0x2d0] sm:$0xff] %v6979
          %7610 = vst [vmem:[%s7518 + $0x2d8] sm:$0xff] %v6980
          %7611 = vst [vmem:[%s7518 + $0x2e0] sm:$0xff] %v6981
          %7612 = vst [vmem:[%s7518 + $0x2e8] sm:$0xff] %v6982
          %7613 = vst [vmem:[%s7518 + $0x2f0] sm:$0xff] %v6983
          %7614 = vst [vmem:[%s7518 + $0x2f8] sm:$0xff] %v6984
          %7615 = vst [vmem:[%s7518 + $0x300] sm:$0xff] %v6985
          %7616 = vst [vmem:[%s7518 + $0x308] sm:$0xff] %v6986
          %7617 = vst [vmem:[%s7518 + $0x310] sm:$0xff] %v6987
          %7618 = vst [vmem:[%s7518 + $0x318] sm:$0xff] %v6988
          %7619 = vst [vmem:[%s7518 + $0x320] sm:$0xff] %v6989
          %7620 = vst [vmem:[%s7518 + $0x328] sm:$0xff] %v6990
          %7621 = vst [vmem:[%s7518 + $0x330] sm:$0xff] %v6991
          %7622 = vst [vmem:[%s7518 + $0x338] sm:$0xff] %v6992
          %7623 = vst [vmem:[%s7518 + $0x340] sm:$0xff] %v6993
          %7624 = vst [vmem:[%s7518 + $0x348] sm:$0xff] %v6994
          %7625 = vst [vmem:[%s7518 + $0x350] sm:$0xff] %v6995
          %7626 = vst [vmem:[%s7518 + $0x358] sm:$0xff] %v6996
          %7627 = vst [vmem:[%s7518 + $0x360] sm:$0xff] %v6997
          %7628 = vst [vmem:[%s7518 + $0x368] sm:$0xff] %v6998
          %7629 = vst [vmem:[%s7518 + $0x370] sm:$0xff] %v6999
          %7630 = vst [vmem:[%s7518 + $0x378] sm:$0xff] %v7000
          %7631 = vst [vmem:[%s7518 + $0x380] sm:$0xff] %v7001
          %7632 = vst [vmem:[%s7518 + $0x388] sm:$0xff] %v7002
          %7633 = vst [vmem:[%s7518 + $0x390] sm:$0xff] %v7003
          %7634 = vst [vmem:[%s7518 + $0x398] sm:$0xff] %v7004
          %7635 = vst [vmem:[%s7518 + $0x3a0] sm:$0xff] %v7005
          %7636 = vst [vmem:[%s7518 + $0x3a8] sm:$0xff] %v7006
          %7637 = vst [vmem:[%s7518 + $0x3b0] sm:$0xff] %v7007
          %7638 = vst [vmem:[%s7518 + $0x3b8] sm:$0xff] %v7008
          %7639 = vst [vmem:[%s7518 + $0x3c0] sm:$0xff] %v7009
          %7640 = vst [vmem:[%s7518 + $0x3c8] sm:$0xff] %v7010
          %7641 = vst [vmem:[%s7518 + $0x3d0] sm:$0xff] %v7011
          %7642 = vst [vmem:[%s7518 + $0x3d8] sm:$0xff] %v7012
          %7643 = vst [vmem:[%s7518 + $0x3e0] sm:$0xff] %v7013
          %7644 = vst [vmem:[%s7518 + $0x3e8] sm:$0xff] %v7014
          %7645 = vst [vmem:[%s7518 + $0x3f0] sm:$0xff] %v7015
          %7646 = vst [vmem:[%s7518 + $0x3f8] sm:$0xff] %v7016
          %7647 = vst [vmem:[%s7518 + $0x400] sm:$0xff] %v7017
          %7648 = vst [vmem:[%s7518 + $0x408] sm:$0xff] %v7018
          %7649 = vst [vmem:[%s7518 + $0x410] sm:$0xff] %v7019
          %7650 = vst [vmem:[%s7518 + $0x418] sm:$0xff] %v7020
          %7651 = vst [vmem:[%s7518 + $0x420] sm:$0xff] %v7021
          %7652 = vst [vmem:[%s7518 + $0x428] sm:$0xff] %v7022
          %7653 = vst [vmem:[%s7518 + $0x430] sm:$0xff] %v7023
          %7654 = vst [vmem:[%s7518 + $0x438] sm:$0xff] %v7024
          %7655 = vst [vmem:[%s7518 + $0x440] sm:$0xff] %v7025
          %7656 = vst [vmem:[%s7518 + $0x448] sm:$0xff] %v7026
          %7657 = vst [vmem:[%s7518 + $0x450] sm:$0xff] %v7027
          %7658 = vst [vmem:[%s7518 + $0x458] sm:$0xff] %v7028
          %7659 = vst [vmem:[%s7518 + $0x460] sm:$0xff] %v7029
          %7660 = vst [vmem:[%s7518 + $0x468] sm:$0xff] %v7030
          %7661 = vst [vmem:[%s7518 + $0x470] sm:$0xff] %v7031
          %7662 = vst [vmem:[%s7518 + $0x478] sm:$0xff] %v7032
          %7663 = vst [vmem:[%s7518 + $0x480] sm:$0xff] %v7033
          %7664 = vst [vmem:[%s7518 + $0x488] sm:$0xff] %v7034
          %7665 = vst [vmem:[%s7518 + $0x490] sm:$0xff] %v7035
          %7666 = vst [vmem:[%s7518 + $0x498] sm:$0xff] %v7036
          %7667 = vst [vmem:[%s7518 + $0x4a0] sm:$0xff] %v7037
          %7668 = vst [vmem:[%s7518 + $0x4a8] sm:$0xff] %v7038
          %7669 = vst [vmem:[%s7518 + $0x4b0] sm:$0xff] %v7039
          %7670 = vst [vmem:[%s7518 + $0x4b8] sm:$0xff] %v7040
          %7671 = vst [vmem:[%s7518 + $0x4c0] sm:$0xff] %v7041
          %7672 = vst [vmem:[%s7518 + $0x4c8] sm:$0xff] %v7042
          %7673 = vst [vmem:[%s7518 + $0x4d0] sm:$0xff] %v7043
          %7674 = vst [vmem:[%s7518 + $0x4d8] sm:$0xff] %v7044
          %7675 = vst [vmem:[%s7518 + $0x4e0] sm:$0xff] %v7045
          %7676 = vst [vmem:[%s7518 + $0x4e8] sm:$0xff] %v7046
          %7677 = vst [vmem:[%s7518 + $0x4f0] sm:$0xff] %v7047
          %7678 = vst [vmem:[%s7518 + $0x4f8] sm:$0xff] %v7048
          %7679 = vst [vmem:[%s7518 + $0x500] sm:$0xff] %v7049
          %7680 = vst [vmem:[%s7518 + $0x508] sm:$0xff] %v7050
          %7681 = vst [vmem:[%s7518 + $0x510] sm:$0xff] %v7051
          %7682 = vst [vmem:[%s7518 + $0x518] sm:$0xff] %v7052
          %7683 = vst [vmem:[%s7518 + $0x520] sm:$0xff] %v7053
          %7684 = vst [vmem:[%s7518 + $0x528] sm:$0xff] %v7054
          %7685 = vst [vmem:[%s7518 + $0x530] sm:$0xff] %v7055
          %7686 = vst [vmem:[%s7518 + $0x538] sm:$0xff] %v7056
          %7687 = vst [vmem:[%s7518 + $0x540] sm:$0xff] %v7057
          %7688 = vst [vmem:[%s7518 + $0x548] sm:$0xff] %v7058
          %7689 = vst [vmem:[%s7518 + $0x550] sm:$0xff] %v7059
          %7690 = vst [vmem:[%s7518 + $0x558] sm:$0xff] %v7060
          %7691 = vst [vmem:[%s7518 + $0x560] sm:$0xff] %v7061
          %7692 = vst [vmem:[%s7518 + $0x568] sm:$0xff] %v7062
          %7693 = vst [vmem:[%s7518 + $0x570] sm:$0xff] %v7063
          %7694 = vst [vmem:[%s7518 + $0x578] sm:$0xff] %v7064
          %7695 = vst [vmem:[%s7518 + $0x580] sm:$0xff] %v7065
          %7696 = vst [vmem:[%s7518 + $0x588] sm:$0xff] %v7066
          %7697 = vst [vmem:[%s7518 + $0x590] sm:$0xff] %v7067
          %7698 = vst [vmem:[%s7518 + $0x598] sm:$0xff] %v7068
          %7699 = vst [vmem:[%s7518 + $0x5a0] sm:$0xff] %v7069
          %7700 = vst [vmem:[%s7518 + $0x5a8] sm:$0xff] %v7070
          %7701 = vst [vmem:[%s7518 + $0x5b0] sm:$0xff] %v7071
          %7702 = vst [vmem:[%s7518 + $0x5b8] sm:$0xff] %v7072
          %7703 = vst [vmem:[%s7518 + $0x5c0] sm:$0xff] %v7073
          %7704 = vst [vmem:[%s7518 + $0x5c8] sm:$0xff] %v7074
          %7705 = vst [vmem:[%s7518 + $0x5d0] sm:$0xff] %v7075
          %7706 = vst [vmem:[%s7518 + $0x5d8] sm:$0xff] %v7076
          %7707 = vst [vmem:[%s7518 + $0x5e0] sm:$0xff] %v7077
          %7708 = vst [vmem:[%s7518 + $0x5e8] sm:$0xff] %v7078
          %7709 = vst [vmem:[%s7518 + $0x5f0] sm:$0xff] %v7079
          %7710 = vst [vmem:[%s7518 + $0x5f8] sm:$0xff] %v7080
        $region84: #{convnext_block.1} parent=63 // pred_fallthru
          _
        %p7711 = scmp.eq.s32.totalorder %s34, 2
        // Predicated region
        $region85: #{convnext_block.1} parent=63 // pred_check
          %p7712 = pneg %p7711
        $region86: #{convnext_block.1} parent=63 // pred_check_branch
          %7714 = sbr.rel (%p7712) target = $region88
        $region87: #{convnext_block.1} parent=63 // pred_region
          %s7715 = smul.u32 %s35, 512
          %s7716 = sshra.s32 %s7715, 3
          %s7717 = sand.u32 %s7715, 7
          %s7718 = smul.u32 %s7716, 3
          %s7719 = smul.addr %s7718, 8
          %s7720 = scalar_lea.vmem [#allocation3], %s7719
          %v7721 = vld [vmem:[%s7720] sm:$0xff]
          %v7722 = vld [vmem:[%s7720 + $0x8] sm:$0xff]
          %v7723 = vld [vmem:[%s7720 + $0x10] sm:$0xff]
          %v7724 = vld [vmem:[%s7720 + $0x18] sm:$0xff]
          %v7725 = vld [vmem:[%s7720 + $0x20] sm:$0xff]
          %v7726 = vld [vmem:[%s7720 + $0x28] sm:$0xff]
          %v7727 = vld [vmem:[%s7720 + $0x30] sm:$0xff]
          %v7728 = vld [vmem:[%s7720 + $0x38] sm:$0xff]
          %v7729 = vld [vmem:[%s7720 + $0x40] sm:$0xff]
          %v7730 = vld [vmem:[%s7720 + $0x48] sm:$0xff]
          %v7731 = vld [vmem:[%s7720 + $0x50] sm:$0xff]
          %v7732 = vld [vmem:[%s7720 + $0x58] sm:$0xff]
          %v7733 = vld [vmem:[%s7720 + $0x60] sm:$0xff]
          %v7734 = vld [vmem:[%s7720 + $0x68] sm:$0xff]
          %v7735 = vld [vmem:[%s7720 + $0x70] sm:$0xff]
          %v7736 = vld [vmem:[%s7720 + $0x78] sm:$0xff]
          %v7737 = vld [vmem:[%s7720 + $0x80] sm:$0xff]
          %v7738 = vld [vmem:[%s7720 + $0x88] sm:$0xff]
          %v7739 = vld [vmem:[%s7720 + $0x90] sm:$0xff]
          %v7740 = vld [vmem:[%s7720 + $0x98] sm:$0xff]
          %v7741 = vld [vmem:[%s7720 + $0xa0] sm:$0xff]
          %v7742 = vld [vmem:[%s7720 + $0xa8] sm:$0xff]
          %v7743 = vld [vmem:[%s7720 + $0xb0] sm:$0xff]
          %v7744 = vld [vmem:[%s7720 + $0xb8] sm:$0xff]
          %v7745 = vld [vmem:[%s7720 + $0xc0] sm:$0xff]
          %v7746 = vld [vmem:[%s7720 + $0xc8] sm:$0xff]
          %v7747 = vld [vmem:[%s7720 + $0xd0] sm:$0xff]
          %v7748 = vld [vmem:[%s7720 + $0xd8] sm:$0xff]
          %v7749 = vld [vmem:[%s7720 + $0xe0] sm:$0xff]
          %v7750 = vld [vmem:[%s7720 + $0xe8] sm:$0xff]
          %v7751 = vld [vmem:[%s7720 + $0xf0] sm:$0xff]
          %v7752 = vld [vmem:[%s7720 + $0xf8] sm:$0xff]
          %v7753 = vld [vmem:[%s7720 + $0x100] sm:$0xff]
          %v7754 = vld [vmem:[%s7720 + $0x108] sm:$0xff]
          %v7755 = vld [vmem:[%s7720 + $0x110] sm:$0xff]
          %v7756 = vld [vmem:[%s7720 + $0x118] sm:$0xff]
          %v7757 = vld [vmem:[%s7720 + $0x120] sm:$0xff]
          %v7758 = vld [vmem:[%s7720 + $0x128] sm:$0xff]
          %v7759 = vld [vmem:[%s7720 + $0x130] sm:$0xff]
          %v7760 = vld [vmem:[%s7720 + $0x138] sm:$0xff]
          %v7761 = vld [vmem:[%s7720 + $0x140] sm:$0xff]
          %v7762 = vld [vmem:[%s7720 + $0x148] sm:$0xff]
          %v7763 = vld [vmem:[%s7720 + $0x150] sm:$0xff]
          %v7764 = vld [vmem:[%s7720 + $0x158] sm:$0xff]
          %v7765 = vld [vmem:[%s7720 + $0x160] sm:$0xff]
          %v7766 = vld [vmem:[%s7720 + $0x168] sm:$0xff]
          %v7767 = vld [vmem:[%s7720 + $0x170] sm:$0xff]
          %v7768 = vld [vmem:[%s7720 + $0x178] sm:$0xff]
          %v7769 = vld [vmem:[%s7720 + $0x180] sm:$0xff]
          %v7770 = vld [vmem:[%s7720 + $0x188] sm:$0xff]
          %v7771 = vld [vmem:[%s7720 + $0x190] sm:$0xff]
          %v7772 = vld [vmem:[%s7720 + $0x198] sm:$0xff]
          %v7773 = vld [vmem:[%s7720 + $0x1a0] sm:$0xff]
          %v7774 = vld [vmem:[%s7720 + $0x1a8] sm:$0xff]
          %v7775 = vld [vmem:[%s7720 + $0x1b0] sm:$0xff]
          %v7776 = vld [vmem:[%s7720 + $0x1b8] sm:$0xff]
          %v7777 = vld [vmem:[%s7720 + $0x1c0] sm:$0xff]
          %v7778 = vld [vmem:[%s7720 + $0x1c8] sm:$0xff]
          %v7779 = vld [vmem:[%s7720 + $0x1d0] sm:$0xff]
          %v7780 = vld [vmem:[%s7720 + $0x1d8] sm:$0xff]
          %v7781 = vld [vmem:[%s7720 + $0x1e0] sm:$0xff]
          %v7782 = vld [vmem:[%s7720 + $0x1e8] sm:$0xff]
          %v7783 = vld [vmem:[%s7720 + $0x1f0] sm:$0xff]
          %v7784 = vld [vmem:[%s7720 + $0x1f8] sm:$0xff]
          %v7785 = vld [vmem:[%s7720 + $0x200] sm:$0xff]
          %v7786 = vld [vmem:[%s7720 + $0x208] sm:$0xff]
          %v7787 = vld [vmem:[%s7720 + $0x210] sm:$0xff]
          %v7788 = vld [vmem:[%s7720 + $0x218] sm:$0xff]
          %v7789 = vld [vmem:[%s7720 + $0x220] sm:$0xff]
          %v7790 = vld [vmem:[%s7720 + $0x228] sm:$0xff]
          %v7791 = vld [vmem:[%s7720 + $0x230] sm:$0xff]
          %v7792 = vld [vmem:[%s7720 + $0x238] sm:$0xff]
          %v7793 = vld [vmem:[%s7720 + $0x240] sm:$0xff]
          %v7794 = vld [vmem:[%s7720 + $0x248] sm:$0xff]
          %v7795 = vld [vmem:[%s7720 + $0x250] sm:$0xff]
          %v7796 = vld [vmem:[%s7720 + $0x258] sm:$0xff]
          %v7797 = vld [vmem:[%s7720 + $0x260] sm:$0xff]
          %v7798 = vld [vmem:[%s7720 + $0x268] sm:$0xff]
          %v7799 = vld [vmem:[%s7720 + $0x270] sm:$0xff]
          %v7800 = vld [vmem:[%s7720 + $0x278] sm:$0xff]
          %v7801 = vld [vmem:[%s7720 + $0x280] sm:$0xff]
          %v7802 = vld [vmem:[%s7720 + $0x288] sm:$0xff]
          %v7803 = vld [vmem:[%s7720 + $0x290] sm:$0xff]
          %v7804 = vld [vmem:[%s7720 + $0x298] sm:$0xff]
          %v7805 = vld [vmem:[%s7720 + $0x2a0] sm:$0xff]
          %v7806 = vld [vmem:[%s7720 + $0x2a8] sm:$0xff]
          %v7807 = vld [vmem:[%s7720 + $0x2b0] sm:$0xff]
          %v7808 = vld [vmem:[%s7720 + $0x2b8] sm:$0xff]
          %v7809 = vld [vmem:[%s7720 + $0x2c0] sm:$0xff]
          %v7810 = vld [vmem:[%s7720 + $0x2c8] sm:$0xff]
          %v7811 = vld [vmem:[%s7720 + $0x2d0] sm:$0xff]
          %v7812 = vld [vmem:[%s7720 + $0x2d8] sm:$0xff]
          %v7813 = vld [vmem:[%s7720 + $0x2e0] sm:$0xff]
          %v7814 = vld [vmem:[%s7720 + $0x2e8] sm:$0xff]
          %v7815 = vld [vmem:[%s7720 + $0x2f0] sm:$0xff]
          %v7816 = vld [vmem:[%s7720 + $0x2f8] sm:$0xff]
          %v7817 = vld [vmem:[%s7720 + $0x300] sm:$0xff]
          %v7818 = vld [vmem:[%s7720 + $0x308] sm:$0xff]
          %v7819 = vld [vmem:[%s7720 + $0x310] sm:$0xff]
          %v7820 = vld [vmem:[%s7720 + $0x318] sm:$0xff]
          %v7821 = vld [vmem:[%s7720 + $0x320] sm:$0xff]
          %v7822 = vld [vmem:[%s7720 + $0x328] sm:$0xff]
          %v7823 = vld [vmem:[%s7720 + $0x330] sm:$0xff]
          %v7824 = vld [vmem:[%s7720 + $0x338] sm:$0xff]
          %v7825 = vld [vmem:[%s7720 + $0x340] sm:$0xff]
          %v7826 = vld [vmem:[%s7720 + $0x348] sm:$0xff]
          %v7827 = vld [vmem:[%s7720 + $0x350] sm:$0xff]
          %v7828 = vld [vmem:[%s7720 + $0x358] sm:$0xff]
          %v7829 = vld [vmem:[%s7720 + $0x360] sm:$0xff]
          %v7830 = vld [vmem:[%s7720 + $0x368] sm:$0xff]
          %v7831 = vld [vmem:[%s7720 + $0x370] sm:$0xff]
          %v7832 = vld [vmem:[%s7720 + $0x378] sm:$0xff]
          %v7833 = vld [vmem:[%s7720 + $0x380] sm:$0xff]
          %v7834 = vld [vmem:[%s7720 + $0x388] sm:$0xff]
          %v7835 = vld [vmem:[%s7720 + $0x390] sm:$0xff]
          %v7836 = vld [vmem:[%s7720 + $0x398] sm:$0xff]
          %v7837 = vld [vmem:[%s7720 + $0x3a0] sm:$0xff]
          %v7838 = vld [vmem:[%s7720 + $0x3a8] sm:$0xff]
          %v7839 = vld [vmem:[%s7720 + $0x3b0] sm:$0xff]
          %v7840 = vld [vmem:[%s7720 + $0x3b8] sm:$0xff]
          %v7841 = vld [vmem:[%s7720 + $0x3c0] sm:$0xff]
          %v7842 = vld [vmem:[%s7720 + $0x3c8] sm:$0xff]
          %v7843 = vld [vmem:[%s7720 + $0x3d0] sm:$0xff]
          %v7844 = vld [vmem:[%s7720 + $0x3d8] sm:$0xff]
          %v7845 = vld [vmem:[%s7720 + $0x3e0] sm:$0xff]
          %v7846 = vld [vmem:[%s7720 + $0x3e8] sm:$0xff]
          %v7847 = vld [vmem:[%s7720 + $0x3f0] sm:$0xff]
          %v7848 = vld [vmem:[%s7720 + $0x3f8] sm:$0xff]
          %v7849 = vld [vmem:[%s7720 + $0x400] sm:$0xff]
          %v7850 = vld [vmem:[%s7720 + $0x408] sm:$0xff]
          %v7851 = vld [vmem:[%s7720 + $0x410] sm:$0xff]
          %v7852 = vld [vmem:[%s7720 + $0x418] sm:$0xff]
          %v7853 = vld [vmem:[%s7720 + $0x420] sm:$0xff]
          %v7854 = vld [vmem:[%s7720 + $0x428] sm:$0xff]
          %v7855 = vld [vmem:[%s7720 + $0x430] sm:$0xff]
          %v7856 = vld [vmem:[%s7720 + $0x438] sm:$0xff]
          %v7857 = vld [vmem:[%s7720 + $0x440] sm:$0xff]
          %v7858 = vld [vmem:[%s7720 + $0x448] sm:$0xff]
          %v7859 = vld [vmem:[%s7720 + $0x450] sm:$0xff]
          %v7860 = vld [vmem:[%s7720 + $0x458] sm:$0xff]
          %v7861 = vld [vmem:[%s7720 + $0x460] sm:$0xff]
          %v7862 = vld [vmem:[%s7720 + $0x468] sm:$0xff]
          %v7863 = vld [vmem:[%s7720 + $0x470] sm:$0xff]
          %v7864 = vld [vmem:[%s7720 + $0x478] sm:$0xff]
          %v7865 = vld [vmem:[%s7720 + $0x480] sm:$0xff]
          %v7866 = vld [vmem:[%s7720 + $0x488] sm:$0xff]
          %v7867 = vld [vmem:[%s7720 + $0x490] sm:$0xff]
          %v7868 = vld [vmem:[%s7720 + $0x498] sm:$0xff]
          %v7869 = vld [vmem:[%s7720 + $0x4a0] sm:$0xff]
          %v7870 = vld [vmem:[%s7720 + $0x4a8] sm:$0xff]
          %v7871 = vld [vmem:[%s7720 + $0x4b0] sm:$0xff]
          %v7872 = vld [vmem:[%s7720 + $0x4b8] sm:$0xff]
          %v7873 = vld [vmem:[%s7720 + $0x4c0] sm:$0xff]
          %v7874 = vld [vmem:[%s7720 + $0x4c8] sm:$0xff]
          %v7875 = vld [vmem:[%s7720 + $0x4d0] sm:$0xff]
          %v7876 = vld [vmem:[%s7720 + $0x4d8] sm:$0xff]
          %v7877 = vld [vmem:[%s7720 + $0x4e0] sm:$0xff]
          %v7878 = vld [vmem:[%s7720 + $0x4e8] sm:$0xff]
          %v7879 = vld [vmem:[%s7720 + $0x4f0] sm:$0xff]
          %v7880 = vld [vmem:[%s7720 + $0x4f8] sm:$0xff]
          %v7881 = vld [vmem:[%s7720 + $0x500] sm:$0xff]
          %v7882 = vld [vmem:[%s7720 + $0x508] sm:$0xff]
          %v7883 = vld [vmem:[%s7720 + $0x510] sm:$0xff]
          %v7884 = vld [vmem:[%s7720 + $0x518] sm:$0xff]
          %v7885 = vld [vmem:[%s7720 + $0x520] sm:$0xff]
          %v7886 = vld [vmem:[%s7720 + $0x528] sm:$0xff]
          %v7887 = vld [vmem:[%s7720 + $0x530] sm:$0xff]
          %v7888 = vld [vmem:[%s7720 + $0x538] sm:$0xff]
          %v7889 = vld [vmem:[%s7720 + $0x540] sm:$0xff]
          %v7890 = vld [vmem:[%s7720 + $0x548] sm:$0xff]
          %v7891 = vld [vmem:[%s7720 + $0x550] sm:$0xff]
          %v7892 = vld [vmem:[%s7720 + $0x558] sm:$0xff]
          %v7893 = vld [vmem:[%s7720 + $0x560] sm:$0xff]
          %v7894 = vld [vmem:[%s7720 + $0x568] sm:$0xff]
          %v7895 = vld [vmem:[%s7720 + $0x570] sm:$0xff]
          %v7896 = vld [vmem:[%s7720 + $0x578] sm:$0xff]
          %v7897 = vld [vmem:[%s7720 + $0x580] sm:$0xff]
          %v7898 = vld [vmem:[%s7720 + $0x588] sm:$0xff]
          %v7899 = vld [vmem:[%s7720 + $0x590] sm:$0xff]
          %v7900 = vld [vmem:[%s7720 + $0x598] sm:$0xff]
          %v7901 = vld [vmem:[%s7720 + $0x5a0] sm:$0xff]
          %v7902 = vld [vmem:[%s7720 + $0x5a8] sm:$0xff]
          %v7903 = vld [vmem:[%s7720 + $0x5b0] sm:$0xff]
          %v7904 = vld [vmem:[%s7720 + $0x5b8] sm:$0xff]
          %v7905 = vld [vmem:[%s7720 + $0x5c0] sm:$0xff]
          %v7906 = vld [vmem:[%s7720 + $0x5c8] sm:$0xff]
          %v7907 = vld [vmem:[%s7720 + $0x5d0] sm:$0xff]
          %v7908 = vld [vmem:[%s7720 + $0x5d8] sm:$0xff]
          %v7909 = vld [vmem:[%s7720 + $0x5e0] sm:$0xff]
          %v7910 = vld [vmem:[%s7720 + $0x5e8] sm:$0xff]
          %v7911 = vld [vmem:[%s7720 + $0x5f0] sm:$0xff]
          %v7912 = vld [vmem:[%s7720 + $0x5f8] sm:$0xff]
          %v7913 = vld [vmem:[#allocation4] sm:$0x7]
          %v7914 = vrsqrt.pop %v7913
          %v7915 = vmul.f32 %v7913, %v7914
          %vm7916 = vcmp.eq.f32.partialorder %v7913, inf
          %v7917 = vsel %vm7916, %v7913, %v7915
          %vm7918 = vcmp.eq.f32.partialorder %v7913, 0.0
          %v7919 = vand.u32 %v7913, 2147483648
          %v7920 = vsel %vm7918, %v7919, %v7917
          %v7922 = vlaneseq
          %v7923 = vshrl.u32 %v7922, 7
          %v7924 = vsub.s32 0, %v7923
          %v7925 = vrot.slane %v7920, %v7924
          %v7926 = vlaneseq
          %v7927 = vshrl.u32 %v7926, 7
          %v7928 = vsub.s32 1, %v7927
          %v7929 = vrot.slane %v7920, %v7928
          %v7930 = vlaneseq
          %v7931 = vshrl.u32 %v7930, 7
          %v7932 = vsub.s32 2, %v7931
          %v7933 = vrot.slane %v7920, %v7932
          %vm7937 = vcmask 1040384
          %v7938 = vsel %vm7937, %v7925, 0.0
          %v7939 = vsel %vm7937, %v7929, 0.0
          %v7940 = vadd.f32 %v7938, %v7939
          %v7941 = vsel %vm7937, %v7933, 0.0
          %v7942 = vadd.f32 %v7940, %v7941
          %7943 = vadd.xlane.f32.xlu0 %v7942
          %v7944 = vpop.xlane.xlu0 %7943
          %v7945 = vrcp.pop 384.0
          %v7946 = vmul.f32 %v7944, %v7945
          %v7947 = vadd.f32 %v7946, 1e-06
          %v7949 = vlaneseq
          %v7950 = vshrl.u32 %v7949, 7
          %v7951 = vsub.s32 0, %v7950
          %v7952 = vrot.slane %v7947, %v7951
          %v7954 = vrcp.pop %v7952
          %v7955 = vmul.f32 %v7920, %v7954
          %v7956 = vld [vmem:[%s7] sm:$0x7]
          %v7958 = vlaneseq
          %v7959 = vshrl.u32 %v7958, 7
          %v7960 = vsub.s32 0, %v7959
          %v7961 = vrot.slane %v7955, %v7960
          %v7962 = vlaneseq
          %v7963 = vshrl.u32 %v7962, 7
          %v7964 = vsub.s32 1, %v7963
          %v7965 = vrot.slane %v7955, %v7964
          %v7966 = vlaneseq
          %v7967 = vshrl.u32 %v7966, 7
          %v7968 = vsub.s32 2, %v7967
          %v7969 = vrot.slane %v7955, %v7968
          %v7973 = vmul.f32 %v7721, %v7961
          %v7974 = vmul.f32 %v7722, %v7965
          %v7975 = vmul.f32 %v7723, %v7969
          %v7976 = vmul.f32 %v7724, %v7961
          %v7977 = vmul.f32 %v7725, %v7965
          %v7978 = vmul.f32 %v7726, %v7969
          %v7979 = vmul.f32 %v7727, %v7961
          %v7980 = vmul.f32 %v7728, %v7965
          %v7981 = vmul.f32 %v7729, %v7969
          %v7982 = vmul.f32 %v7730, %v7961
          %v7983 = vmul.f32 %v7731, %v7965
          %v7984 = vmul.f32 %v7732, %v7969
          %v7985 = vmul.f32 %v7733, %v7961
          %v7986 = vmul.f32 %v7734, %v7965
          %v7987 = vmul.f32 %v7735, %v7969
          %v7988 = vmul.f32 %v7736, %v7961
          %v7989 = vmul.f32 %v7737, %v7965
          %v7990 = vmul.f32 %v7738, %v7969
          %v7991 = vmul.f32 %v7739, %v7961
          %v7992 = vmul.f32 %v7740, %v7965
          %v7993 = vmul.f32 %v7741, %v7969
          %v7994 = vmul.f32 %v7742, %v7961
          %v7995 = vmul.f32 %v7743, %v7965
          %v7996 = vmul.f32 %v7744, %v7969
          %v7997 = vmul.f32 %v7745, %v7961
          %v7998 = vmul.f32 %v7746, %v7965
          %v7999 = vmul.f32 %v7747, %v7969
          %v8000 = vmul.f32 %v7748, %v7961
          %v8001 = vmul.f32 %v7749, %v7965
          %v8002 = vmul.f32 %v7750, %v7969
          %v8003 = vmul.f32 %v7751, %v7961
          %v8004 = vmul.f32 %v7752, %v7965
          %v8005 = vmul.f32 %v7753, %v7969
          %v8006 = vmul.f32 %v7754, %v7961
          %v8007 = vmul.f32 %v7755, %v7965
          %v8008 = vmul.f32 %v7756, %v7969
          %v8009 = vmul.f32 %v7757, %v7961
          %v8010 = vmul.f32 %v7758, %v7965
          %v8011 = vmul.f32 %v7759, %v7969
          %v8012 = vmul.f32 %v7760, %v7961
          %v8013 = vmul.f32 %v7761, %v7965
          %v8014 = vmul.f32 %v7762, %v7969
          %v8015 = vmul.f32 %v7763, %v7961
          %v8016 = vmul.f32 %v7764, %v7965
          %v8017 = vmul.f32 %v7765, %v7969
          %v8018 = vmul.f32 %v7766, %v7961
          %v8019 = vmul.f32 %v7767, %v7965
          %v8020 = vmul.f32 %v7768, %v7969
          %v8021 = vmul.f32 %v7769, %v7961
          %v8022 = vmul.f32 %v7770, %v7965
          %v8023 = vmul.f32 %v7771, %v7969
          %v8024 = vmul.f32 %v7772, %v7961
          %v8025 = vmul.f32 %v7773, %v7965
          %v8026 = vmul.f32 %v7774, %v7969
          %v8027 = vmul.f32 %v7775, %v7961
          %v8028 = vmul.f32 %v7776, %v7965
          %v8029 = vmul.f32 %v7777, %v7969
          %v8030 = vmul.f32 %v7778, %v7961
          %v8031 = vmul.f32 %v7779, %v7965
          %v8032 = vmul.f32 %v7780, %v7969
          %v8033 = vmul.f32 %v7781, %v7961
          %v8034 = vmul.f32 %v7782, %v7965
          %v8035 = vmul.f32 %v7783, %v7969
          %v8036 = vmul.f32 %v7784, %v7961
          %v8037 = vmul.f32 %v7785, %v7965
          %v8038 = vmul.f32 %v7786, %v7969
          %v8039 = vmul.f32 %v7787, %v7961
          %v8040 = vmul.f32 %v7788, %v7965
          %v8041 = vmul.f32 %v7789, %v7969
          %v8042 = vmul.f32 %v7790, %v7961
          %v8043 = vmul.f32 %v7791, %v7965
          %v8044 = vmul.f32 %v7792, %v7969
          %v8045 = vmul.f32 %v7793, %v7961
          %v8046 = vmul.f32 %v7794, %v7965
          %v8047 = vmul.f32 %v7795, %v7969
          %v8048 = vmul.f32 %v7796, %v7961
          %v8049 = vmul.f32 %v7797, %v7965
          %v8050 = vmul.f32 %v7798, %v7969
          %v8051 = vmul.f32 %v7799, %v7961
          %v8052 = vmul.f32 %v7800, %v7965
          %v8053 = vmul.f32 %v7801, %v7969
          %v8054 = vmul.f32 %v7802, %v7961
          %v8055 = vmul.f32 %v7803, %v7965
          %v8056 = vmul.f32 %v7804, %v7969
          %v8057 = vmul.f32 %v7805, %v7961
          %v8058 = vmul.f32 %v7806, %v7965
          %v8059 = vmul.f32 %v7807, %v7969
          %v8060 = vmul.f32 %v7808, %v7961
          %v8061 = vmul.f32 %v7809, %v7965
          %v8062 = vmul.f32 %v7810, %v7969
          %v8063 = vmul.f32 %v7811, %v7961
          %v8064 = vmul.f32 %v7812, %v7965
          %v8065 = vmul.f32 %v7813, %v7969
          %v8066 = vmul.f32 %v7814, %v7961
          %v8067 = vmul.f32 %v7815, %v7965
          %v8068 = vmul.f32 %v7816, %v7969
          %v8069 = vmul.f32 %v7817, %v7961
          %v8070 = vmul.f32 %v7818, %v7965
          %v8071 = vmul.f32 %v7819, %v7969
          %v8072 = vmul.f32 %v7820, %v7961
          %v8073 = vmul.f32 %v7821, %v7965
          %v8074 = vmul.f32 %v7822, %v7969
          %v8075 = vmul.f32 %v7823, %v7961
          %v8076 = vmul.f32 %v7824, %v7965
          %v8077 = vmul.f32 %v7825, %v7969
          %v8078 = vmul.f32 %v7826, %v7961
          %v8079 = vmul.f32 %v7827, %v7965
          %v8080 = vmul.f32 %v7828, %v7969
          %v8081 = vmul.f32 %v7829, %v7961
          %v8082 = vmul.f32 %v7830, %v7965
          %v8083 = vmul.f32 %v7831, %v7969
          %v8084 = vmul.f32 %v7832, %v7961
          %v8085 = vmul.f32 %v7833, %v7965
          %v8086 = vmul.f32 %v7834, %v7969
          %v8087 = vmul.f32 %v7835, %v7961
          %v8088 = vmul.f32 %v7836, %v7965
          %v8089 = vmul.f32 %v7837, %v7969
          %v8090 = vmul.f32 %v7838, %v7961
          %v8091 = vmul.f32 %v7839, %v7965
          %v8092 = vmul.f32 %v7840, %v7969
          %v8093 = vmul.f32 %v7841, %v7961
          %v8094 = vmul.f32 %v7842, %v7965
          %v8095 = vmul.f32 %v7843, %v7969
          %v8096 = vmul.f32 %v7844, %v7961
          %v8097 = vmul.f32 %v7845, %v7965
          %v8098 = vmul.f32 %v7846, %v7969
          %v8099 = vmul.f32 %v7847, %v7961
          %v8100 = vmul.f32 %v7848, %v7965
          %v8101 = vmul.f32 %v7849, %v7969
          %v8102 = vmul.f32 %v7850, %v7961
          %v8103 = vmul.f32 %v7851, %v7965
          %v8104 = vmul.f32 %v7852, %v7969
          %v8105 = vmul.f32 %v7853, %v7961
          %v8106 = vmul.f32 %v7854, %v7965
          %v8107 = vmul.f32 %v7855, %v7969
          %v8108 = vmul.f32 %v7856, %v7961
          %v8109 = vmul.f32 %v7857, %v7965
          %v8110 = vmul.f32 %v7858, %v7969
          %v8111 = vmul.f32 %v7859, %v7961
          %v8112 = vmul.f32 %v7860, %v7965
          %v8113 = vmul.f32 %v7861, %v7969
          %v8114 = vmul.f32 %v7862, %v7961
          %v8115 = vmul.f32 %v7863, %v7965
          %v8116 = vmul.f32 %v7864, %v7969
          %v8117 = vmul.f32 %v7865, %v7961
          %v8118 = vmul.f32 %v7866, %v7965
          %v8119 = vmul.f32 %v7867, %v7969
          %v8120 = vmul.f32 %v7868, %v7961
          %v8121 = vmul.f32 %v7869, %v7965
          %v8122 = vmul.f32 %v7870, %v7969
          %v8123 = vmul.f32 %v7871, %v7961
          %v8124 = vmul.f32 %v7872, %v7965
          %v8125 = vmul.f32 %v7873, %v7969
          %v8126 = vmul.f32 %v7874, %v7961
          %v8127 = vmul.f32 %v7875, %v7965
          %v8128 = vmul.f32 %v7876, %v7969
          %v8129 = vmul.f32 %v7877, %v7961
          %v8130 = vmul.f32 %v7878, %v7965
          %v8131 = vmul.f32 %v7879, %v7969
          %v8132 = vmul.f32 %v7880, %v7961
          %v8133 = vmul.f32 %v7881, %v7965
          %v8134 = vmul.f32 %v7882, %v7969
          %v8135 = vmul.f32 %v7883, %v7961
          %v8136 = vmul.f32 %v7884, %v7965
          %v8137 = vmul.f32 %v7885, %v7969
          %v8138 = vmul.f32 %v7886, %v7961
          %v8139 = vmul.f32 %v7887, %v7965
          %v8140 = vmul.f32 %v7888, %v7969
          %v8141 = vmul.f32 %v7889, %v7961
          %v8142 = vmul.f32 %v7890, %v7965
          %v8143 = vmul.f32 %v7891, %v7969
          %v8144 = vmul.f32 %v7892, %v7961
          %v8145 = vmul.f32 %v7893, %v7965
          %v8146 = vmul.f32 %v7894, %v7969
          %v8147 = vmul.f32 %v7895, %v7961
          %v8148 = vmul.f32 %v7896, %v7965
          %v8149 = vmul.f32 %v7897, %v7969
          %v8150 = vmul.f32 %v7898, %v7961
          %v8151 = vmul.f32 %v7899, %v7965
          %v8152 = vmul.f32 %v7900, %v7969
          %v8153 = vmul.f32 %v7901, %v7961
          %v8154 = vmul.f32 %v7902, %v7965
          %v8155 = vmul.f32 %v7903, %v7969
          %v8156 = vmul.f32 %v7904, %v7961
          %v8157 = vmul.f32 %v7905, %v7965
          %v8158 = vmul.f32 %v7906, %v7969
          %v8159 = vmul.f32 %v7907, %v7961
          %v8160 = vmul.f32 %v7908, %v7965
          %v8161 = vmul.f32 %v7909, %v7969
          %v8162 = vmul.f32 %v7910, %v7961
          %v8163 = vmul.f32 %v7911, %v7965
          %v8164 = vmul.f32 %v7912, %v7969
          %v8166 = vlaneseq
          %v8167 = vshrl.u32 %v8166, 7
          %v8168 = vsub.s32 0, %v8167
          %v8169 = vrot.slane %v7956, %v8168
          %v8170 = vlaneseq
          %v8171 = vshrl.u32 %v8170, 7
          %v8172 = vsub.s32 1, %v8171
          %v8173 = vrot.slane %v7956, %v8172
          %v8174 = vlaneseq
          %v8175 = vshrl.u32 %v8174, 7
          %v8176 = vsub.s32 2, %v8175
          %v8177 = vrot.slane %v7956, %v8176
          %v8181 = vmul.f32 %v8169, %v7973
          %v8182 = vmul.f32 %v8173, %v7974
          %v8183 = vmul.f32 %v8177, %v7975
          %v8184 = vmul.f32 %v8169, %v7976
          %v8185 = vmul.f32 %v8173, %v7977
          %v8186 = vmul.f32 %v8177, %v7978
          %v8187 = vmul.f32 %v8169, %v7979
          %v8188 = vmul.f32 %v8173, %v7980
          %v8189 = vmul.f32 %v8177, %v7981
          %v8190 = vmul.f32 %v8169, %v7982
          %v8191 = vmul.f32 %v8173, %v7983
          %v8192 = vmul.f32 %v8177, %v7984
          %v8193 = vmul.f32 %v8169, %v7985
          %v8194 = vmul.f32 %v8173, %v7986
          %v8195 = vmul.f32 %v8177, %v7987
          %v8196 = vmul.f32 %v8169, %v7988
          %v8197 = vmul.f32 %v8173, %v7989
          %v8198 = vmul.f32 %v8177, %v7990
          %v8199 = vmul.f32 %v8169, %v7991
          %v8200 = vmul.f32 %v8173, %v7992
          %v8201 = vmul.f32 %v8177, %v7993
          %v8202 = vmul.f32 %v8169, %v7994
          %v8203 = vmul.f32 %v8173, %v7995
          %v8204 = vmul.f32 %v8177, %v7996
          %v8205 = vmul.f32 %v8169, %v7997
          %v8206 = vmul.f32 %v8173, %v7998
          %v8207 = vmul.f32 %v8177, %v7999
          %v8208 = vmul.f32 %v8169, %v8000
          %v8209 = vmul.f32 %v8173, %v8001
          %v8210 = vmul.f32 %v8177, %v8002
          %v8211 = vmul.f32 %v8169, %v8003
          %v8212 = vmul.f32 %v8173, %v8004
          %v8213 = vmul.f32 %v8177, %v8005
          %v8214 = vmul.f32 %v8169, %v8006
          %v8215 = vmul.f32 %v8173, %v8007
          %v8216 = vmul.f32 %v8177, %v8008
          %v8217 = vmul.f32 %v8169, %v8009
          %v8218 = vmul.f32 %v8173, %v8010
          %v8219 = vmul.f32 %v8177, %v8011
          %v8220 = vmul.f32 %v8169, %v8012
          %v8221 = vmul.f32 %v8173, %v8013
          %v8222 = vmul.f32 %v8177, %v8014
          %v8223 = vmul.f32 %v8169, %v8015
          %v8224 = vmul.f32 %v8173, %v8016
          %v8225 = vmul.f32 %v8177, %v8017
          %v8226 = vmul.f32 %v8169, %v8018
          %v8227 = vmul.f32 %v8173, %v8019
          %v8228 = vmul.f32 %v8177, %v8020
          %v8229 = vmul.f32 %v8169, %v8021
          %v8230 = vmul.f32 %v8173, %v8022
          %v8231 = vmul.f32 %v8177, %v8023
          %v8232 = vmul.f32 %v8169, %v8024
          %v8233 = vmul.f32 %v8173, %v8025
          %v8234 = vmul.f32 %v8177, %v8026
          %v8235 = vmul.f32 %v8169, %v8027
          %v8236 = vmul.f32 %v8173, %v8028
          %v8237 = vmul.f32 %v8177, %v8029
          %v8238 = vmul.f32 %v8169, %v8030
          %v8239 = vmul.f32 %v8173, %v8031
          %v8240 = vmul.f32 %v8177, %v8032
          %v8241 = vmul.f32 %v8169, %v8033
          %v8242 = vmul.f32 %v8173, %v8034
          %v8243 = vmul.f32 %v8177, %v8035
          %v8244 = vmul.f32 %v8169, %v8036
          %v8245 = vmul.f32 %v8173, %v8037
          %v8246 = vmul.f32 %v8177, %v8038
          %v8247 = vmul.f32 %v8169, %v8039
          %v8248 = vmul.f32 %v8173, %v8040
          %v8249 = vmul.f32 %v8177, %v8041
          %v8250 = vmul.f32 %v8169, %v8042
          %v8251 = vmul.f32 %v8173, %v8043
          %v8252 = vmul.f32 %v8177, %v8044
          %v8253 = vmul.f32 %v8169, %v8045
          %v8254 = vmul.f32 %v8173, %v8046
          %v8255 = vmul.f32 %v8177, %v8047
          %v8256 = vmul.f32 %v8169, %v8048
          %v8257 = vmul.f32 %v8173, %v8049
          %v8258 = vmul.f32 %v8177, %v8050
          %v8259 = vmul.f32 %v8169, %v8051
          %v8260 = vmul.f32 %v8173, %v8052
          %v8261 = vmul.f32 %v8177, %v8053
          %v8262 = vmul.f32 %v8169, %v8054
          %v8263 = vmul.f32 %v8173, %v8055
          %v8264 = vmul.f32 %v8177, %v8056
          %v8265 = vmul.f32 %v8169, %v8057
          %v8266 = vmul.f32 %v8173, %v8058
          %v8267 = vmul.f32 %v8177, %v8059
          %v8268 = vmul.f32 %v8169, %v8060
          %v8269 = vmul.f32 %v8173, %v8061
          %v8270 = vmul.f32 %v8177, %v8062
          %v8271 = vmul.f32 %v8169, %v8063
          %v8272 = vmul.f32 %v8173, %v8064
          %v8273 = vmul.f32 %v8177, %v8065
          %v8274 = vmul.f32 %v8169, %v8066
          %v8275 = vmul.f32 %v8173, %v8067
          %v8276 = vmul.f32 %v8177, %v8068
          %v8277 = vmul.f32 %v8169, %v8069
          %v8278 = vmul.f32 %v8173, %v8070
          %v8279 = vmul.f32 %v8177, %v8071
          %v8280 = vmul.f32 %v8169, %v8072
          %v8281 = vmul.f32 %v8173, %v8073
          %v8282 = vmul.f32 %v8177, %v8074
          %v8283 = vmul.f32 %v8169, %v8075
          %v8284 = vmul.f32 %v8173, %v8076
          %v8285 = vmul.f32 %v8177, %v8077
          %v8286 = vmul.f32 %v8169, %v8078
          %v8287 = vmul.f32 %v8173, %v8079
          %v8288 = vmul.f32 %v8177, %v8080
          %v8289 = vmul.f32 %v8169, %v8081
          %v8290 = vmul.f32 %v8173, %v8082
          %v8291 = vmul.f32 %v8177, %v8083
          %v8292 = vmul.f32 %v8169, %v8084
          %v8293 = vmul.f32 %v8173, %v8085
          %v8294 = vmul.f32 %v8177, %v8086
          %v8295 = vmul.f32 %v8169, %v8087
          %v8296 = vmul.f32 %v8173, %v8088
          %v8297 = vmul.f32 %v8177, %v8089
          %v8298 = vmul.f32 %v8169, %v8090
          %v8299 = vmul.f32 %v8173, %v8091
          %v8300 = vmul.f32 %v8177, %v8092
          %v8301 = vmul.f32 %v8169, %v8093
          %v8302 = vmul.f32 %v8173, %v8094
          %v8303 = vmul.f32 %v8177, %v8095
          %v8304 = vmul.f32 %v8169, %v8096
          %v8305 = vmul.f32 %v8173, %v8097
          %v8306 = vmul.f32 %v8177, %v8098
          %v8307 = vmul.f32 %v8169, %v8099
          %v8308 = vmul.f32 %v8173, %v8100
          %v8309 = vmul.f32 %v8177, %v8101
          %v8310 = vmul.f32 %v8169, %v8102
          %v8311 = vmul.f32 %v8173, %v8103
          %v8312 = vmul.f32 %v8177, %v8104
          %v8313 = vmul.f32 %v8169, %v8105
          %v8314 = vmul.f32 %v8173, %v8106
          %v8315 = vmul.f32 %v8177, %v8107
          %v8316 = vmul.f32 %v8169, %v8108
          %v8317 = vmul.f32 %v8173, %v8109
          %v8318 = vmul.f32 %v8177, %v8110
          %v8319 = vmul.f32 %v8169, %v8111
          %v8320 = vmul.f32 %v8173, %v8112
          %v8321 = vmul.f32 %v8177, %v8113
          %v8322 = vmul.f32 %v8169, %v8114
          %v8323 = vmul.f32 %v8173, %v8115
          %v8324 = vmul.f32 %v8177, %v8116
          %v8325 = vmul.f32 %v8169, %v8117
          %v8326 = vmul.f32 %v8173, %v8118
          %v8327 = vmul.f32 %v8177, %v8119
          %v8328 = vmul.f32 %v8169, %v8120
          %v8329 = vmul.f32 %v8173, %v8121
          %v8330 = vmul.f32 %v8177, %v8122
          %v8331 = vmul.f32 %v8169, %v8123
          %v8332 = vmul.f32 %v8173, %v8124
          %v8333 = vmul.f32 %v8177, %v8125
          %v8334 = vmul.f32 %v8169, %v8126
          %v8335 = vmul.f32 %v8173, %v8127
          %v8336 = vmul.f32 %v8177, %v8128
          %v8337 = vmul.f32 %v8169, %v8129
          %v8338 = vmul.f32 %v8173, %v8130
          %v8339 = vmul.f32 %v8177, %v8131
          %v8340 = vmul.f32 %v8169, %v8132
          %v8341 = vmul.f32 %v8173, %v8133
          %v8342 = vmul.f32 %v8177, %v8134
          %v8343 = vmul.f32 %v8169, %v8135
          %v8344 = vmul.f32 %v8173, %v8136
          %v8345 = vmul.f32 %v8177, %v8137
          %v8346 = vmul.f32 %v8169, %v8138
          %v8347 = vmul.f32 %v8173, %v8139
          %v8348 = vmul.f32 %v8177, %v8140
          %v8349 = vmul.f32 %v8169, %v8141
          %v8350 = vmul.f32 %v8173, %v8142
          %v8351 = vmul.f32 %v8177, %v8143
          %v8352 = vmul.f32 %v8169, %v8144
          %v8353 = vmul.f32 %v8173, %v8145
          %v8354 = vmul.f32 %v8177, %v8146
          %v8355 = vmul.f32 %v8169, %v8147
          %v8356 = vmul.f32 %v8173, %v8148
          %v8357 = vmul.f32 %v8177, %v8149
          %v8358 = vmul.f32 %v8169, %v8150
          %v8359 = vmul.f32 %v8173, %v8151
          %v8360 = vmul.f32 %v8177, %v8152
          %v8361 = vmul.f32 %v8169, %v8153
          %v8362 = vmul.f32 %v8173, %v8154
          %v8363 = vmul.f32 %v8177, %v8155
          %v8364 = vmul.f32 %v8169, %v8156
          %v8365 = vmul.f32 %v8173, %v8157
          %v8366 = vmul.f32 %v8177, %v8158
          %v8367 = vmul.f32 %v8169, %v8159
          %v8368 = vmul.f32 %v8173, %v8160
          %v8369 = vmul.f32 %v8177, %v8161
          %v8370 = vmul.f32 %v8169, %v8162
          %v8371 = vmul.f32 %v8173, %v8163
          %v8372 = vmul.f32 %v8177, %v8164
          %v8373 = vld [vmem:[%s8] sm:$0x7]
          %v8375 = vlaneseq
          %v8376 = vshrl.u32 %v8375, 7
          %v8377 = vsub.s32 0, %v8376
          %v8378 = vrot.slane %v8373, %v8377
          %v8379 = vlaneseq
          %v8380 = vshrl.u32 %v8379, 7
          %v8381 = vsub.s32 1, %v8380
          %v8382 = vrot.slane %v8373, %v8381
          %v8383 = vlaneseq
          %v8384 = vshrl.u32 %v8383, 7
          %v8385 = vsub.s32 2, %v8384
          %v8386 = vrot.slane %v8373, %v8385
          %v8390 = vadd.f32 %v8181, %v8378
          %v8391 = vadd.f32 %v8182, %v8382
          %v8392 = vadd.f32 %v8183, %v8386
          %v8393 = vadd.f32 %v8184, %v8378
          %v8394 = vadd.f32 %v8185, %v8382
          %v8395 = vadd.f32 %v8186, %v8386
          %v8396 = vadd.f32 %v8187, %v8378
          %v8397 = vadd.f32 %v8188, %v8382
          %v8398 = vadd.f32 %v8189, %v8386
          %v8399 = vadd.f32 %v8190, %v8378
          %v8400 = vadd.f32 %v8191, %v8382
          %v8401 = vadd.f32 %v8192, %v8386
          %v8402 = vadd.f32 %v8193, %v8378
          %v8403 = vadd.f32 %v8194, %v8382
          %v8404 = vadd.f32 %v8195, %v8386
          %v8405 = vadd.f32 %v8196, %v8378
          %v8406 = vadd.f32 %v8197, %v8382
          %v8407 = vadd.f32 %v8198, %v8386
          %v8408 = vadd.f32 %v8199, %v8378
          %v8409 = vadd.f32 %v8200, %v8382
          %v8410 = vadd.f32 %v8201, %v8386
          %v8411 = vadd.f32 %v8202, %v8378
          %v8412 = vadd.f32 %v8203, %v8382
          %v8413 = vadd.f32 %v8204, %v8386
          %v8414 = vadd.f32 %v8205, %v8378
          %v8415 = vadd.f32 %v8206, %v8382
          %v8416 = vadd.f32 %v8207, %v8386
          %v8417 = vadd.f32 %v8208, %v8378
          %v8418 = vadd.f32 %v8209, %v8382
          %v8419 = vadd.f32 %v8210, %v8386
          %v8420 = vadd.f32 %v8211, %v8378
          %v8421 = vadd.f32 %v8212, %v8382
          %v8422 = vadd.f32 %v8213, %v8386
          %v8423 = vadd.f32 %v8214, %v8378
          %v8424 = vadd.f32 %v8215, %v8382
          %v8425 = vadd.f32 %v8216, %v8386
          %v8426 = vadd.f32 %v8217, %v8378
          %v8427 = vadd.f32 %v8218, %v8382
          %v8428 = vadd.f32 %v8219, %v8386
          %v8429 = vadd.f32 %v8220, %v8378
          %v8430 = vadd.f32 %v8221, %v8382
          %v8431 = vadd.f32 %v8222, %v8386
          %v8432 = vadd.f32 %v8223, %v8378
          %v8433 = vadd.f32 %v8224, %v8382
          %v8434 = vadd.f32 %v8225, %v8386
          %v8435 = vadd.f32 %v8226, %v8378
          %v8436 = vadd.f32 %v8227, %v8382
          %v8437 = vadd.f32 %v8228, %v8386
          %v8438 = vadd.f32 %v8229, %v8378
          %v8439 = vadd.f32 %v8230, %v8382
          %v8440 = vadd.f32 %v8231, %v8386
          %v8441 = vadd.f32 %v8232, %v8378
          %v8442 = vadd.f32 %v8233, %v8382
          %v8443 = vadd.f32 %v8234, %v8386
          %v8444 = vadd.f32 %v8235, %v8378
          %v8445 = vadd.f32 %v8236, %v8382
          %v8446 = vadd.f32 %v8237, %v8386
          %v8447 = vadd.f32 %v8238, %v8378
          %v8448 = vadd.f32 %v8239, %v8382
          %v8449 = vadd.f32 %v8240, %v8386
          %v8450 = vadd.f32 %v8241, %v8378
          %v8451 = vadd.f32 %v8242, %v8382
          %v8452 = vadd.f32 %v8243, %v8386
          %v8453 = vadd.f32 %v8244, %v8378
          %v8454 = vadd.f32 %v8245, %v8382
          %v8455 = vadd.f32 %v8246, %v8386
          %v8456 = vadd.f32 %v8247, %v8378
          %v8457 = vadd.f32 %v8248, %v8382
          %v8458 = vadd.f32 %v8249, %v8386
          %v8459 = vadd.f32 %v8250, %v8378
          %v8460 = vadd.f32 %v8251, %v8382
          %v8461 = vadd.f32 %v8252, %v8386
          %v8462 = vadd.f32 %v8253, %v8378
          %v8463 = vadd.f32 %v8254, %v8382
          %v8464 = vadd.f32 %v8255, %v8386
          %v8465 = vadd.f32 %v8256, %v8378
          %v8466 = vadd.f32 %v8257, %v8382
          %v8467 = vadd.f32 %v8258, %v8386
          %v8468 = vadd.f32 %v8259, %v8378
          %v8469 = vadd.f32 %v8260, %v8382
          %v8470 = vadd.f32 %v8261, %v8386
          %v8471 = vadd.f32 %v8262, %v8378
          %v8472 = vadd.f32 %v8263, %v8382
          %v8473 = vadd.f32 %v8264, %v8386
          %v8474 = vadd.f32 %v8265, %v8378
          %v8475 = vadd.f32 %v8266, %v8382
          %v8476 = vadd.f32 %v8267, %v8386
          %v8477 = vadd.f32 %v8268, %v8378
          %v8478 = vadd.f32 %v8269, %v8382
          %v8479 = vadd.f32 %v8270, %v8386
          %v8480 = vadd.f32 %v8271, %v8378
          %v8481 = vadd.f32 %v8272, %v8382
          %v8482 = vadd.f32 %v8273, %v8386
          %v8483 = vadd.f32 %v8274, %v8378
          %v8484 = vadd.f32 %v8275, %v8382
          %v8485 = vadd.f32 %v8276, %v8386
          %v8486 = vadd.f32 %v8277, %v8378
          %v8487 = vadd.f32 %v8278, %v8382
          %v8488 = vadd.f32 %v8279, %v8386
          %v8489 = vadd.f32 %v8280, %v8378
          %v8490 = vadd.f32 %v8281, %v8382
          %v8491 = vadd.f32 %v8282, %v8386
          %v8492 = vadd.f32 %v8283, %v8378
          %v8493 = vadd.f32 %v8284, %v8382
          %v8494 = vadd.f32 %v8285, %v8386
          %v8495 = vadd.f32 %v8286, %v8378
          %v8496 = vadd.f32 %v8287, %v8382
          %v8497 = vadd.f32 %v8288, %v8386
          %v8498 = vadd.f32 %v8289, %v8378
          %v8499 = vadd.f32 %v8290, %v8382
          %v8500 = vadd.f32 %v8291, %v8386
          %v8501 = vadd.f32 %v8292, %v8378
          %v8502 = vadd.f32 %v8293, %v8382
          %v8503 = vadd.f32 %v8294, %v8386
          %v8504 = vadd.f32 %v8295, %v8378
          %v8505 = vadd.f32 %v8296, %v8382
          %v8506 = vadd.f32 %v8297, %v8386
          %v8507 = vadd.f32 %v8298, %v8378
          %v8508 = vadd.f32 %v8299, %v8382
          %v8509 = vadd.f32 %v8300, %v8386
          %v8510 = vadd.f32 %v8301, %v8378
          %v8511 = vadd.f32 %v8302, %v8382
          %v8512 = vadd.f32 %v8303, %v8386
          %v8513 = vadd.f32 %v8304, %v8378
          %v8514 = vadd.f32 %v8305, %v8382
          %v8515 = vadd.f32 %v8306, %v8386
          %v8516 = vadd.f32 %v8307, %v8378
          %v8517 = vadd.f32 %v8308, %v8382
          %v8518 = vadd.f32 %v8309, %v8386
          %v8519 = vadd.f32 %v8310, %v8378
          %v8520 = vadd.f32 %v8311, %v8382
          %v8521 = vadd.f32 %v8312, %v8386
          %v8522 = vadd.f32 %v8313, %v8378
          %v8523 = vadd.f32 %v8314, %v8382
          %v8524 = vadd.f32 %v8315, %v8386
          %v8525 = vadd.f32 %v8316, %v8378
          %v8526 = vadd.f32 %v8317, %v8382
          %v8527 = vadd.f32 %v8318, %v8386
          %v8528 = vadd.f32 %v8319, %v8378
          %v8529 = vadd.f32 %v8320, %v8382
          %v8530 = vadd.f32 %v8321, %v8386
          %v8531 = vadd.f32 %v8322, %v8378
          %v8532 = vadd.f32 %v8323, %v8382
          %v8533 = vadd.f32 %v8324, %v8386
          %v8534 = vadd.f32 %v8325, %v8378
          %v8535 = vadd.f32 %v8326, %v8382
          %v8536 = vadd.f32 %v8327, %v8386
          %v8537 = vadd.f32 %v8328, %v8378
          %v8538 = vadd.f32 %v8329, %v8382
          %v8539 = vadd.f32 %v8330, %v8386
          %v8540 = vadd.f32 %v8331, %v8378
          %v8541 = vadd.f32 %v8332, %v8382
          %v8542 = vadd.f32 %v8333, %v8386
          %v8543 = vadd.f32 %v8334, %v8378
          %v8544 = vadd.f32 %v8335, %v8382
          %v8545 = vadd.f32 %v8336, %v8386
          %v8546 = vadd.f32 %v8337, %v8378
          %v8547 = vadd.f32 %v8338, %v8382
          %v8548 = vadd.f32 %v8339, %v8386
          %v8549 = vadd.f32 %v8340, %v8378
          %v8550 = vadd.f32 %v8341, %v8382
          %v8551 = vadd.f32 %v8342, %v8386
          %v8552 = vadd.f32 %v8343, %v8378
          %v8553 = vadd.f32 %v8344, %v8382
          %v8554 = vadd.f32 %v8345, %v8386
          %v8555 = vadd.f32 %v8346, %v8378
          %v8556 = vadd.f32 %v8347, %v8382
          %v8557 = vadd.f32 %v8348, %v8386
          %v8558 = vadd.f32 %v8349, %v8378
          %v8559 = vadd.f32 %v8350, %v8382
          %v8560 = vadd.f32 %v8351, %v8386
          %v8561 = vadd.f32 %v8352, %v8378
          %v8562 = vadd.f32 %v8353, %v8382
          %v8563 = vadd.f32 %v8354, %v8386
          %v8564 = vadd.f32 %v8355, %v8378
          %v8565 = vadd.f32 %v8356, %v8382
          %v8566 = vadd.f32 %v8357, %v8386
          %v8567 = vadd.f32 %v8358, %v8378
          %v8568 = vadd.f32 %v8359, %v8382
          %v8569 = vadd.f32 %v8360, %v8386
          %v8570 = vadd.f32 %v8361, %v8378
          %v8571 = vadd.f32 %v8362, %v8382
          %v8572 = vadd.f32 %v8363, %v8386
          %v8573 = vadd.f32 %v8364, %v8378
          %v8574 = vadd.f32 %v8365, %v8382
          %v8575 = vadd.f32 %v8366, %v8386
          %v8576 = vadd.f32 %v8367, %v8378
          %v8577 = vadd.f32 %v8368, %v8382
          %v8578 = vadd.f32 %v8369, %v8386
          %v8579 = vadd.f32 %v8370, %v8378
          %v8580 = vadd.f32 %v8371, %v8382
          %v8581 = vadd.f32 %v8372, %v8386
          %v8582 = vadd.f32 %v8390, %v7721
          %v8583 = vadd.f32 %v8391, %v7722
          %v8584 = vadd.f32 %v8392, %v7723
          %v8585 = vadd.f32 %v8393, %v7724
          %v8586 = vadd.f32 %v8394, %v7725
          %v8587 = vadd.f32 %v8395, %v7726
          %v8588 = vadd.f32 %v8396, %v7727
          %v8589 = vadd.f32 %v8397, %v7728
          %v8590 = vadd.f32 %v8398, %v7729
          %v8591 = vadd.f32 %v8399, %v7730
          %v8592 = vadd.f32 %v8400, %v7731
          %v8593 = vadd.f32 %v8401, %v7732
          %v8594 = vadd.f32 %v8402, %v7733
          %v8595 = vadd.f32 %v8403, %v7734
          %v8596 = vadd.f32 %v8404, %v7735
          %v8597 = vadd.f32 %v8405, %v7736
          %v8598 = vadd.f32 %v8406, %v7737
          %v8599 = vadd.f32 %v8407, %v7738
          %v8600 = vadd.f32 %v8408, %v7739
          %v8601 = vadd.f32 %v8409, %v7740
          %v8602 = vadd.f32 %v8410, %v7741
          %v8603 = vadd.f32 %v8411, %v7742
          %v8604 = vadd.f32 %v8412, %v7743
          %v8605 = vadd.f32 %v8413, %v7744
          %v8606 = vadd.f32 %v8414, %v7745
          %v8607 = vadd.f32 %v8415, %v7746
          %v8608 = vadd.f32 %v8416, %v7747
          %v8609 = vadd.f32 %v8417, %v7748
          %v8610 = vadd.f32 %v8418, %v7749
          %v8611 = vadd.f32 %v8419, %v7750
          %v8612 = vadd.f32 %v8420, %v7751
          %v8613 = vadd.f32 %v8421, %v7752
          %v8614 = vadd.f32 %v8422, %v7753
          %v8615 = vadd.f32 %v8423, %v7754
          %v8616 = vadd.f32 %v8424, %v7755
          %v8617 = vadd.f32 %v8425, %v7756
          %v8618 = vadd.f32 %v8426, %v7757
          %v8619 = vadd.f32 %v8427, %v7758
          %v8620 = vadd.f32 %v8428, %v7759
          %v8621 = vadd.f32 %v8429, %v7760
          %v8622 = vadd.f32 %v8430, %v7761
          %v8623 = vadd.f32 %v8431, %v7762
          %v8624 = vadd.f32 %v8432, %v7763
          %v8625 = vadd.f32 %v8433, %v7764
          %v8626 = vadd.f32 %v8434, %v7765
          %v8627 = vadd.f32 %v8435, %v7766
          %v8628 = vadd.f32 %v8436, %v7767
          %v8629 = vadd.f32 %v8437, %v7768
          %v8630 = vadd.f32 %v8438, %v7769
          %v8631 = vadd.f32 %v8439, %v7770
          %v8632 = vadd.f32 %v8440, %v7771
          %v8633 = vadd.f32 %v8441, %v7772
          %v8634 = vadd.f32 %v8442, %v7773
          %v8635 = vadd.f32 %v8443, %v7774
          %v8636 = vadd.f32 %v8444, %v7775
          %v8637 = vadd.f32 %v8445, %v7776
          %v8638 = vadd.f32 %v8446, %v7777
          %v8639 = vadd.f32 %v8447, %v7778
          %v8640 = vadd.f32 %v8448, %v7779
          %v8641 = vadd.f32 %v8449, %v7780
          %v8642 = vadd.f32 %v8450, %v7781
          %v8643 = vadd.f32 %v8451, %v7782
          %v8644 = vadd.f32 %v8452, %v7783
          %v8645 = vadd.f32 %v8453, %v7784
          %v8646 = vadd.f32 %v8454, %v7785
          %v8647 = vadd.f32 %v8455, %v7786
          %v8648 = vadd.f32 %v8456, %v7787
          %v8649 = vadd.f32 %v8457, %v7788
          %v8650 = vadd.f32 %v8458, %v7789
          %v8651 = vadd.f32 %v8459, %v7790
          %v8652 = vadd.f32 %v8460, %v7791
          %v8653 = vadd.f32 %v8461, %v7792
          %v8654 = vadd.f32 %v8462, %v7793
          %v8655 = vadd.f32 %v8463, %v7794
          %v8656 = vadd.f32 %v8464, %v7795
          %v8657 = vadd.f32 %v8465, %v7796
          %v8658 = vadd.f32 %v8466, %v7797
          %v8659 = vadd.f32 %v8467, %v7798
          %v8660 = vadd.f32 %v8468, %v7799
          %v8661 = vadd.f32 %v8469, %v7800
          %v8662 = vadd.f32 %v8470, %v7801
          %v8663 = vadd.f32 %v8471, %v7802
          %v8664 = vadd.f32 %v8472, %v7803
          %v8665 = vadd.f32 %v8473, %v7804
          %v8666 = vadd.f32 %v8474, %v7805
          %v8667 = vadd.f32 %v8475, %v7806
          %v8668 = vadd.f32 %v8476, %v7807
          %v8669 = vadd.f32 %v8477, %v7808
          %v8670 = vadd.f32 %v8478, %v7809
          %v8671 = vadd.f32 %v8479, %v7810
          %v8672 = vadd.f32 %v8480, %v7811
          %v8673 = vadd.f32 %v8481, %v7812
          %v8674 = vadd.f32 %v8482, %v7813
          %v8675 = vadd.f32 %v8483, %v7814
          %v8676 = vadd.f32 %v8484, %v7815
          %v8677 = vadd.f32 %v8485, %v7816
          %v8678 = vadd.f32 %v8486, %v7817
          %v8679 = vadd.f32 %v8487, %v7818
          %v8680 = vadd.f32 %v8488, %v7819
          %v8681 = vadd.f32 %v8489, %v7820
          %v8682 = vadd.f32 %v8490, %v7821
          %v8683 = vadd.f32 %v8491, %v7822
          %v8684 = vadd.f32 %v8492, %v7823
          %v8685 = vadd.f32 %v8493, %v7824
          %v8686 = vadd.f32 %v8494, %v7825
          %v8687 = vadd.f32 %v8495, %v7826
          %v8688 = vadd.f32 %v8496, %v7827
          %v8689 = vadd.f32 %v8497, %v7828
          %v8690 = vadd.f32 %v8498, %v7829
          %v8691 = vadd.f32 %v8499, %v7830
          %v8692 = vadd.f32 %v8500, %v7831
          %v8693 = vadd.f32 %v8501, %v7832
          %v8694 = vadd.f32 %v8502, %v7833
          %v8695 = vadd.f32 %v8503, %v7834
          %v8696 = vadd.f32 %v8504, %v7835
          %v8697 = vadd.f32 %v8505, %v7836
          %v8698 = vadd.f32 %v8506, %v7837
          %v8699 = vadd.f32 %v8507, %v7838
          %v8700 = vadd.f32 %v8508, %v7839
          %v8701 = vadd.f32 %v8509, %v7840
          %v8702 = vadd.f32 %v8510, %v7841
          %v8703 = vadd.f32 %v8511, %v7842
          %v8704 = vadd.f32 %v8512, %v7843
          %v8705 = vadd.f32 %v8513, %v7844
          %v8706 = vadd.f32 %v8514, %v7845
          %v8707 = vadd.f32 %v8515, %v7846
          %v8708 = vadd.f32 %v8516, %v7847
          %v8709 = vadd.f32 %v8517, %v7848
          %v8710 = vadd.f32 %v8518, %v7849
          %v8711 = vadd.f32 %v8519, %v7850
          %v8712 = vadd.f32 %v8520, %v7851
          %v8713 = vadd.f32 %v8521, %v7852
          %v8714 = vadd.f32 %v8522, %v7853
          %v8715 = vadd.f32 %v8523, %v7854
          %v8716 = vadd.f32 %v8524, %v7855
          %v8717 = vadd.f32 %v8525, %v7856
          %v8718 = vadd.f32 %v8526, %v7857
          %v8719 = vadd.f32 %v8527, %v7858
          %v8720 = vadd.f32 %v8528, %v7859
          %v8721 = vadd.f32 %v8529, %v7860
          %v8722 = vadd.f32 %v8530, %v7861
          %v8723 = vadd.f32 %v8531, %v7862
          %v8724 = vadd.f32 %v8532, %v7863
          %v8725 = vadd.f32 %v8533, %v7864
          %v8726 = vadd.f32 %v8534, %v7865
          %v8727 = vadd.f32 %v8535, %v7866
          %v8728 = vadd.f32 %v8536, %v7867
          %v8729 = vadd.f32 %v8537, %v7868
          %v8730 = vadd.f32 %v8538, %v7869
          %v8731 = vadd.f32 %v8539, %v7870
          %v8732 = vadd.f32 %v8540, %v7871
          %v8733 = vadd.f32 %v8541, %v7872
          %v8734 = vadd.f32 %v8542, %v7873
          %v8735 = vadd.f32 %v8543, %v7874
          %v8736 = vadd.f32 %v8544, %v7875
          %v8737 = vadd.f32 %v8545, %v7876
          %v8738 = vadd.f32 %v8546, %v7877
          %v8739 = vadd.f32 %v8547, %v7878
          %v8740 = vadd.f32 %v8548, %v7879
          %v8741 = vadd.f32 %v8549, %v7880
          %v8742 = vadd.f32 %v8550, %v7881
          %v8743 = vadd.f32 %v8551, %v7882
          %v8744 = vadd.f32 %v8552, %v7883
          %v8745 = vadd.f32 %v8553, %v7884
          %v8746 = vadd.f32 %v8554, %v7885
          %v8747 = vadd.f32 %v8555, %v7886
          %v8748 = vadd.f32 %v8556, %v7887
          %v8749 = vadd.f32 %v8557, %v7888
          %v8750 = vadd.f32 %v8558, %v7889
          %v8751 = vadd.f32 %v8559, %v7890
          %v8752 = vadd.f32 %v8560, %v7891
          %v8753 = vadd.f32 %v8561, %v7892
          %v8754 = vadd.f32 %v8562, %v7893
          %v8755 = vadd.f32 %v8563, %v7894
          %v8756 = vadd.f32 %v8564, %v7895
          %v8757 = vadd.f32 %v8565, %v7896
          %v8758 = vadd.f32 %v8566, %v7897
          %v8759 = vadd.f32 %v8567, %v7898
          %v8760 = vadd.f32 %v8568, %v7899
          %v8761 = vadd.f32 %v8569, %v7900
          %v8762 = vadd.f32 %v8570, %v7901
          %v8763 = vadd.f32 %v8571, %v7902
          %v8764 = vadd.f32 %v8572, %v7903
          %v8765 = vadd.f32 %v8573, %v7904
          %v8766 = vadd.f32 %v8574, %v7905
          %v8767 = vadd.f32 %v8575, %v7906
          %v8768 = vadd.f32 %v8576, %v7907
          %v8769 = vadd.f32 %v8577, %v7908
          %v8770 = vadd.f32 %v8578, %v7909
          %v8771 = vadd.f32 %v8579, %v7910
          %v8772 = vadd.f32 %v8580, %v7911
          %v8773 = vadd.f32 %v8581, %v7912
          %v8774 = vpack.c.bf16 %v8585, %v8582
          %v8775 = vpack.c.bf16 %v8586, %v8583
          %v8776 = vpack.c.bf16 %v8587, %v8584
          %v8777 = vpack.c.bf16 %v8591, %v8588
          %v8778 = vpack.c.bf16 %v8592, %v8589
          %v8779 = vpack.c.bf16 %v8593, %v8590
          %v8780 = vpack.c.bf16 %v8597, %v8594
          %v8781 = vpack.c.bf16 %v8598, %v8595
          %v8782 = vpack.c.bf16 %v8599, %v8596
          %v8783 = vpack.c.bf16 %v8603, %v8600
          %v8784 = vpack.c.bf16 %v8604, %v8601
          %v8785 = vpack.c.bf16 %v8605, %v8602
          %v8786 = vpack.c.bf16 %v8609, %v8606
          %v8787 = vpack.c.bf16 %v8610, %v8607
          %v8788 = vpack.c.bf16 %v8611, %v8608
          %v8789 = vpack.c.bf16 %v8615, %v8612
          %v8790 = vpack.c.bf16 %v8616, %v8613
          %v8791 = vpack.c.bf16 %v8617, %v8614
          %v8792 = vpack.c.bf16 %v8621, %v8618
          %v8793 = vpack.c.bf16 %v8622, %v8619
          %v8794 = vpack.c.bf16 %v8623, %v8620
          %v8795 = vpack.c.bf16 %v8627, %v8624
          %v8796 = vpack.c.bf16 %v8628, %v8625
          %v8797 = vpack.c.bf16 %v8629, %v8626
          %v8798 = vpack.c.bf16 %v8633, %v8630
          %v8799 = vpack.c.bf16 %v8634, %v8631
          %v8800 = vpack.c.bf16 %v8635, %v8632
          %v8801 = vpack.c.bf16 %v8639, %v8636
          %v8802 = vpack.c.bf16 %v8640, %v8637
          %v8803 = vpack.c.bf16 %v8641, %v8638
          %v8804 = vpack.c.bf16 %v8645, %v8642
          %v8805 = vpack.c.bf16 %v8646, %v8643
          %v8806 = vpack.c.bf16 %v8647, %v8644
          %v8807 = vpack.c.bf16 %v8651, %v8648
          %v8808 = vpack.c.bf16 %v8652, %v8649
          %v8809 = vpack.c.bf16 %v8653, %v8650
          %v8810 = vpack.c.bf16 %v8657, %v8654
          %v8811 = vpack.c.bf16 %v8658, %v8655
          %v8812 = vpack.c.bf16 %v8659, %v8656
          %v8813 = vpack.c.bf16 %v8663, %v8660
          %v8814 = vpack.c.bf16 %v8664, %v8661
          %v8815 = vpack.c.bf16 %v8665, %v8662
          %v8816 = vpack.c.bf16 %v8669, %v8666
          %v8817 = vpack.c.bf16 %v8670, %v8667
          %v8818 = vpack.c.bf16 %v8671, %v8668
          %v8819 = vpack.c.bf16 %v8675, %v8672
          %v8820 = vpack.c.bf16 %v8676, %v8673
          %v8821 = vpack.c.bf16 %v8677, %v8674
          %v8822 = vpack.c.bf16 %v8681, %v8678
          %v8823 = vpack.c.bf16 %v8682, %v8679
          %v8824 = vpack.c.bf16 %v8683, %v8680
          %v8825 = vpack.c.bf16 %v8687, %v8684
          %v8826 = vpack.c.bf16 %v8688, %v8685
          %v8827 = vpack.c.bf16 %v8689, %v8686
          %v8828 = vpack.c.bf16 %v8693, %v8690
          %v8829 = vpack.c.bf16 %v8694, %v8691
          %v8830 = vpack.c.bf16 %v8695, %v8692
          %v8831 = vpack.c.bf16 %v8699, %v8696
          %v8832 = vpack.c.bf16 %v8700, %v8697
          %v8833 = vpack.c.bf16 %v8701, %v8698
          %v8834 = vpack.c.bf16 %v8705, %v8702
          %v8835 = vpack.c.bf16 %v8706, %v8703
          %v8836 = vpack.c.bf16 %v8707, %v8704
          %v8837 = vpack.c.bf16 %v8711, %v8708
          %v8838 = vpack.c.bf16 %v8712, %v8709
          %v8839 = vpack.c.bf16 %v8713, %v8710
          %v8840 = vpack.c.bf16 %v8717, %v8714
          %v8841 = vpack.c.bf16 %v8718, %v8715
          %v8842 = vpack.c.bf16 %v8719, %v8716
          %v8843 = vpack.c.bf16 %v8723, %v8720
          %v8844 = vpack.c.bf16 %v8724, %v8721
          %v8845 = vpack.c.bf16 %v8725, %v8722
          %v8846 = vpack.c.bf16 %v8729, %v8726
          %v8847 = vpack.c.bf16 %v8730, %v8727
          %v8848 = vpack.c.bf16 %v8731, %v8728
          %v8849 = vpack.c.bf16 %v8735, %v8732
          %v8850 = vpack.c.bf16 %v8736, %v8733
          %v8851 = vpack.c.bf16 %v8737, %v8734
          %v8852 = vpack.c.bf16 %v8741, %v8738
          %v8853 = vpack.c.bf16 %v8742, %v8739
          %v8854 = vpack.c.bf16 %v8743, %v8740
          %v8855 = vpack.c.bf16 %v8747, %v8744
          %v8856 = vpack.c.bf16 %v8748, %v8745
          %v8857 = vpack.c.bf16 %v8749, %v8746
          %v8858 = vpack.c.bf16 %v8753, %v8750
          %v8859 = vpack.c.bf16 %v8754, %v8751
          %v8860 = vpack.c.bf16 %v8755, %v8752
          %v8861 = vpack.c.bf16 %v8759, %v8756
          %v8862 = vpack.c.bf16 %v8760, %v8757
          %v8863 = vpack.c.bf16 %v8761, %v8758
          %v8864 = vpack.c.bf16 %v8765, %v8762
          %v8865 = vpack.c.bf16 %v8766, %v8763
          %v8866 = vpack.c.bf16 %v8767, %v8764
          %v8867 = vpack.c.bf16 %v8771, %v8768
          %v8868 = vpack.c.bf16 %v8772, %v8769
          %v8869 = vpack.c.bf16 %v8773, %v8770
          %v8870 = vld [vmem:[%s9] sm:$0xf]
          %v8871 = vld [vmem:[%s9 + $0x4] sm:$0xf]
          %v8872 = vld [vmem:[%s9 + $0x8] sm:$0xf]
          %v8873 = vld [vmem:[%s9 + $0xc] sm:$0xf]
          %v8874 = vld [vmem:[%s9 + $0x10] sm:$0xf]
          %v8875 = vld [vmem:[%s9 + $0x14] sm:$0xf]
          %v8876 = vld [vmem:[%s9 + $0x18] sm:$0xf]
          %v8877 = vld [vmem:[%s9 + $0x1c] sm:$0xf]
          %v8878 = vld [vmem:[%s9 + $0x20] sm:$0xf]
          %v8879 = vld [vmem:[%s9 + $0x24] sm:$0xf]
          %v8880 = vld [vmem:[%s9 + $0x28] sm:$0xf]
          %v8881 = vld [vmem:[%s9 + $0x2c] sm:$0xf]
          %v8882 = vld [vmem:[%s9 + $0x30] sm:$0xf]
          %v8883 = vld [vmem:[%s9 + $0x34] sm:$0xf]
          %v8884 = vld [vmem:[%s9 + $0x38] sm:$0xf]
          %v8885 = vld [vmem:[%s9 + $0x3c] sm:$0xf]
          %v8886 = vld [vmem:[%s9 + $0x40] sm:$0xf]
          %v8887 = vld [vmem:[%s9 + $0x44] sm:$0xf]
          %v8888 = vld [vmem:[%s9 + $0x48] sm:$0xf]
          %v8889 = vld [vmem:[%s9 + $0x4c] sm:$0xf]
          %v8890 = vld [vmem:[%s9 + $0x50] sm:$0xf]
          %v8891 = vld [vmem:[%s9 + $0x54] sm:$0xf]
          %v8892 = vld [vmem:[%s9 + $0x58] sm:$0xf]
          %v8893 = vld [vmem:[%s9 + $0x5c] sm:$0xf]
          %v8894 = vld [vmem:[%s9 + $0x60] sm:$0xf]
          %v8895 = vld [vmem:[%s9 + $0x64] sm:$0xf]
          %v8896 = vld [vmem:[%s9 + $0x68] sm:$0xf]
          %v8897 = vld [vmem:[%s9 + $0x6c] sm:$0xf]
          %v8898 = vld [vmem:[%s9 + $0x70] sm:$0xf]
          %v8899 = vld [vmem:[%s9 + $0x74] sm:$0xf]
          %v8900 = vld [vmem:[%s9 + $0x78] sm:$0xf]
          %v8901 = vld [vmem:[%s9 + $0x7c] sm:$0xf]
          %v8902 = vld [vmem:[%s9 + $0x80] sm:$0xf]
          %v8903 = vld [vmem:[%s9 + $0x84] sm:$0xf]
          %v8904 = vld [vmem:[%s9 + $0x88] sm:$0xf]
          %v8905 = vld [vmem:[%s9 + $0x8c] sm:$0xf]
          %v8906 = vld [vmem:[%s9 + $0x90] sm:$0xf]
          %v8907 = vld [vmem:[%s9 + $0x94] sm:$0xf]
          %v8908 = vld [vmem:[%s9 + $0x98] sm:$0xf]
          %v8909 = vld [vmem:[%s9 + $0x9c] sm:$0xf]
          %v8910 = vld [vmem:[%s9 + $0xa0] sm:$0xf]
          %v8911 = vld [vmem:[%s9 + $0xa4] sm:$0xf]
          %v8912 = vld [vmem:[%s9 + $0xa8] sm:$0xf]
          %v8913 = vld [vmem:[%s9 + $0xac] sm:$0xf]
          %v8914 = vld [vmem:[%s9 + $0xb0] sm:$0xf]
          %v8915 = vld [vmem:[%s9 + $0xb4] sm:$0xf]
          %v8916 = vld [vmem:[%s9 + $0xb8] sm:$0xf]
          %v8917 = vld [vmem:[%s9 + $0xbc] sm:$0xf]
          %v8918 = vld [vmem:[%s10] sm:$0x1]
          %v8920 = vlaneseq
          %v8921 = vshrl.u32 %v8920, 7
          %v8922 = vsub.s32 0, %v8921
          %v8923 = vrot.slane %v8918, %v8922
          %v8973 = vunpack.c.l.b16 %v8870
          %v8974 = vunpack.c.l.b16 %v8871
          %v8975 = vunpack.c.l.b16 %v8872
          %v8976 = vunpack.c.l.b16 %v8873
          %v8977 = vunpack.c.l.b16 %v8874
          %v8978 = vunpack.c.l.b16 %v8875
          %v8979 = vunpack.c.l.b16 %v8876
          %v8980 = vunpack.c.l.b16 %v8877
          %v8981 = vunpack.c.l.b16 %v8878
          %v8982 = vunpack.c.l.b16 %v8879
          %v8983 = vunpack.c.l.b16 %v8880
          %v8984 = vunpack.c.l.b16 %v8881
          %v8985 = vunpack.c.l.b16 %v8882
          %v8986 = vunpack.c.l.b16 %v8883
          %v8987 = vunpack.c.l.b16 %v8884
          %v8988 = vunpack.c.l.b16 %v8885
          %v8989 = vunpack.c.l.b16 %v8886
          %v8990 = vunpack.c.l.b16 %v8887
          %v8991 = vunpack.c.l.b16 %v8888
          %v8992 = vunpack.c.l.b16 %v8889
          %v8993 = vunpack.c.l.b16 %v8890
          %v8994 = vunpack.c.l.b16 %v8891
          %v8995 = vunpack.c.l.b16 %v8892
          %v8996 = vunpack.c.l.b16 %v8893
          %v8997 = vunpack.c.l.b16 %v8894
          %v8998 = vunpack.c.l.b16 %v8895
          %v8999 = vunpack.c.l.b16 %v8896
          %v9000 = vunpack.c.l.b16 %v8897
          %v9001 = vunpack.c.l.b16 %v8898
          %v9002 = vunpack.c.l.b16 %v8899
          %v9003 = vunpack.c.l.b16 %v8900
          %v9004 = vunpack.c.l.b16 %v8901
          %v9005 = vunpack.c.l.b16 %v8902
          %v9006 = vunpack.c.l.b16 %v8903
          %v9007 = vunpack.c.l.b16 %v8904
          %v9008 = vunpack.c.l.b16 %v8905
          %v9009 = vunpack.c.l.b16 %v8906
          %v9010 = vunpack.c.l.b16 %v8907
          %v9011 = vunpack.c.l.b16 %v8908
          %v9012 = vunpack.c.l.b16 %v8909
          %v9013 = vunpack.c.l.b16 %v8910
          %v9014 = vunpack.c.l.b16 %v8911
          %v9015 = vunpack.c.l.b16 %v8912
          %v9016 = vunpack.c.l.b16 %v8913
          %v9017 = vunpack.c.l.b16 %v8914
          %v9018 = vunpack.c.l.b16 %v8915
          %v9019 = vunpack.c.l.b16 %v8916
          %v9020 = vunpack.c.l.b16 %v8917
          %v9021 = vpack.c.b16 %v8974, %v8973
          %v9022 = vpack.c.b16 %v8976, %v8975
          %v9023 = vpack.c.b16 %v8978, %v8977
          %v9024 = vpack.c.b16 %v8980, %v8979
          %v9025 = vpack.c.b16 %v8982, %v8981
          %v9026 = vpack.c.b16 %v8984, %v8983
          %v9027 = vpack.c.b16 %v8986, %v8985
          %v9028 = vpack.c.b16 %v8988, %v8987
          %v9029 = vpack.c.b16 %v8990, %v8989
          %v9030 = vpack.c.b16 %v8992, %v8991
          %v9031 = vpack.c.b16 %v8994, %v8993
          %v9032 = vpack.c.b16 %v8996, %v8995
          %v9033 = vpack.c.b16 %v8998, %v8997
          %v9034 = vpack.c.b16 %v9000, %v8999
          %v9035 = vpack.c.b16 %v9002, %v9001
          %v9036 = vpack.c.b16 %v9004, %v9003
          %v9037 = vpack.c.b16 %v9006, %v9005
          %v9038 = vpack.c.b16 %v9008, %v9007
          %v9039 = vpack.c.b16 %v9010, %v9009
          %v9040 = vpack.c.b16 %v9012, %v9011
          %v9041 = vpack.c.b16 %v9014, %v9013
          %v9042 = vpack.c.b16 %v9016, %v9015
          %v9043 = vpack.c.b16 %v9018, %v9017
          %v9044 = vpack.c.b16 %v9020, %v9019
          %9069 = vmatprep.subr.bf16.mxu0 0
          %9070 = vmatpush1.bf16.msra.mxu0 %v9021
          %9071 = vmatprep.subr.bf16.mxu0 0
          %9072 = vmatpush1.bf16.msra.mxu0 %v9022
          %9073 = vmatprep.subr.bf16.mxu0 0
          %9074 = vmatpush1.bf16.msra.mxu0 %v9023
          %9075 = vmatprep.subr.bf16.mxu0 0
          %9076 = vmatpush1.bf16.msra.mxu0 %v9024
          %9077 = vmatprep.subr.bf16.mxu0 0
          %9078 = vmatpush1.bf16.msra.mxu0 %v9025
          %9079 = vmatprep.subr.bf16.mxu0 0
          %9080 = vmatpush1.bf16.msra.mxu0 %v9026
          %9081 = vmatprep.subr.bf16.mxu0 0
          %9082 = vmatpush1.bf16.msra.mxu0 %v9027
          %9083 = vmatprep.subr.bf16.mxu0 0
          %9084 = vmatpush1.bf16.msra.mxu0 %v9028
          %9085 = vmatprep.subr.bf16.mxu0 0
          %9086 = vmatpush1.bf16.msra.mxu0 %v9029
          %9087 = vmatprep.subr.bf16.mxu0 0
          %9088 = vmatpush1.bf16.msra.mxu0 %v9030
          %9089 = vmatprep.subr.bf16.mxu0 0
          %9090 = vmatpush1.bf16.msra.mxu0 %v9031
          %9091 = vmatprep.subr.bf16.mxu0 0
          %9092 = vmatpush1.bf16.msra.mxu0 %v9032
          %9093 = vmatprep.subr.bf16.mxu0 0
          %9094 = vmatpush1.bf16.msra.mxu0 %v9033
          %9095 = vmatprep.subr.bf16.mxu0 0
          %9096 = vmatpush1.bf16.msra.mxu0 %v9034
          %9097 = vmatprep.subr.bf16.mxu0 0
          %9098 = vmatpush1.bf16.msra.mxu0 %v9035
          %9099 = vmatprep.subr.bf16.mxu0 0
          %9100 = vmatpush1.bf16.msra.mxu0 %v9036
          %9101 = vmatprep.mubr.bf16.mxu0 %v8775
          %9102 = vmatmul.mubr.bf16.gmra.mrb[0].mxu0 %v8774
          %v9103 = vpop.f32.mrb[0].mxu0
          %v9104 = vadd.f32 %v8923, %v9103
          %v9105 = vpop.f32.mrb[0].mxu0
          %v9106 = vpop.f32.mrb[0].mxu0
          %v9107 = vadd.f32 %v8923, %v9106
          %v9108 = vpop.f32.mrb[0].mxu0
          %9109 = vmatprep.mubr.bf16.mxu0 %v8778
          %9110 = vmatmul.mubr.bf16.gmra.mrb[0].mxu0 %v8777
          %v9111 = vpop.f32.mrb[0].mxu0
          %v9112 = vadd.f32 %v8923, %v9111
          %v9113 = vpop.f32.mrb[0].mxu0
          %v9114 = vpop.f32.mrb[0].mxu0
          %v9115 = vadd.f32 %v8923, %v9114
          %v9116 = vpop.f32.mrb[0].mxu0
          %9117 = vmatprep.mubr.bf16.mxu0 %v8781
          %9118 = vmatmul.mubr.bf16.gmra.mrb[0].mxu0 %v8780
          %v9119 = vpop.f32.mrb[0].mxu0
          %v9120 = vadd.f32 %v8923, %v9119
          %v9121 = vpop.f32.mrb[0].mxu0
          %v9122 = vpop.f32.mrb[0].mxu0
          %v9123 = vadd.f32 %v8923, %v9122
          %v9124 = vpop.f32.mrb[0].mxu0
          %9125 = vmatprep.mubr.bf16.mxu0 %v8784
          %9126 = vmatmul.mubr.bf16.gmra.mrb[0].mxu0 %v8783
          %v9127 = vpop.f32.mrb[0].mxu0
          %v9128 = vadd.f32 %v8923, %v9127
          %v9129 = vpop.f32.mrb[0].mxu0
          %v9130 = vpop.f32.mrb[0].mxu0
          %v9131 = vadd.f32 %v8923, %v9130
          %v9132 = vpop.f32.mrb[0].mxu0
          %9133 = vmatprep.mubr.bf16.mxu0 %v8787
          %9134 = vmatmul.mubr.bf16.gmra.mrb[0].mxu0 %v8786
          %v9135 = vpop.f32.mrb[0].mxu0
          %v9136 = vadd.f32 %v8923, %v9135
          %v9137 = vpop.f32.mrb[0].mxu0
          %v9138 = vpop.f32.mrb[0].mxu0
          %v9139 = vadd.f32 %v8923, %v9138
          %v9140 = vpop.f32.mrb[0].mxu0
          %9141 = vmatprep.mubr.bf16.mxu0 %v8790
          %9142 = vmatmul.mubr.bf16.gmra.mrb[0].mxu0 %v8789
          %v9143 = vpop.f32.mrb[0].mxu0
          %v9144 = vadd.f32 %v8923, %v9143
          %v9145 = vpop.f32.mrb[0].mxu0
          %v9146 = vpop.f32.mrb[0].mxu0
          %v9147 = vadd.f32 %v8923, %v9146
          %v9148 = vpop.f32.mrb[0].mxu0
          %9149 = vmatprep.mubr.bf16.mxu0 %v8793
          %9150 = vmatmul.mubr.bf16.gmra.mrb[0].mxu0 %v8792
          %v9151 = vpop.f32.mrb[0].mxu0
          %v9152 = vadd.f32 %v8923, %v9151
          %v9153 = vpop.f32.mrb[0].mxu0
          %v9154 = vpop.f32.mrb[0].mxu0
          %v9155 = vadd.f32 %v8923, %v9154
          %v9156 = vpop.f32.mrb[0].mxu0
          %9157 = vmatprep.mubr.bf16.mxu0 %v8796
          %9158 = vmatmul.mubr.bf16.gmra.mrb[0].mxu0 %v8795
          %v9159 = vpop.f32.mrb[0].mxu0
          %v9160 = vadd.f32 %v8923, %v9159
          %v9161 = vpop.f32.mrb[0].mxu0
          %v9162 = vpop.f32.mrb[0].mxu0
          %v9163 = vadd.f32 %v8923, %v9162
          %v9164 = vpop.f32.mrb[0].mxu0
          %9165 = vmatprep.mubr.bf16.mxu0 %v8799
          %9166 = vmatmul.mubr.bf16.gmra.mrb[0].mxu0 %v8798
          %v9167 = vpop.f32.mrb[0].mxu0
          %v9168 = vadd.f32 %v8923, %v9167
          %v9169 = vpop.f32.mrb[0].mxu0
          %v9170 = vpop.f32.mrb[0].mxu0
          %v9171 = vadd.f32 %v8923, %v9170
          %v9172 = vpop.f32.mrb[0].mxu0
          %9173 = vmatprep.mubr.bf16.mxu0 %v8802
          %9174 = vmatmul.mubr.bf16.gmra.mrb[0].mxu0 %v8801
          %v9175 = vpop.f32.mrb[0].mxu0
          %v9176 = vadd.f32 %v8923, %v9175
          %v9177 = vpop.f32.mrb[0].mxu0
          %v9178 = vpop.f32.mrb[0].mxu0
          %v9179 = vadd.f32 %v8923, %v9178
          %v9180 = vpop.f32.mrb[0].mxu0
          %9181 = vmatprep.mubr.bf16.mxu0 %v8805
          %9182 = vmatmul.mubr.bf16.gmra.mrb[0].mxu0 %v8804
          %v9183 = vpop.f32.mrb[0].mxu0
          %v9184 = vadd.f32 %v8923, %v9183
          %v9185 = vpop.f32.mrb[0].mxu0
          %v9186 = vpop.f32.mrb[0].mxu0
          %v9187 = vadd.f32 %v8923, %v9186
          %v9188 = vpop.f32.mrb[0].mxu0
          %9189 = vmatprep.mubr.bf16.mxu0 %v8808
          %9190 = vmatmul.mubr.bf16.gmra.mrb[0].mxu0 %v8807
          %v9191 = vpop.f32.mrb[0].mxu0
          %v9192 = vadd.f32 %v8923, %v9191
          %v9193 = vpop.f32.mrb[0].mxu0
          %v9194 = vpop.f32.mrb[0].mxu0
          %v9195 = vadd.f32 %v8923, %v9194
          %v9196 = vpop.f32.mrb[0].mxu0
          %9197 = vmatprep.mubr.bf16.mxu0 %v8811
          %9198 = vmatmul.mubr.bf16.gmra.mrb[0].mxu0 %v8810
          %v9199 = vpop.f32.mrb[0].mxu0
          %v9200 = vadd.f32 %v8923, %v9199
          %v9201 = vpop.f32.mrb[0].mxu0
          %v9202 = vpop.f32.mrb[0].mxu0
          %v9203 = vadd.f32 %v8923, %v9202
          %v9204 = vpop.f32.mrb[0].mxu0
          %9205 = vmatprep.mubr.bf16.mxu0 %v8814
          %9206 = vmatmul.mubr.bf16.gmra.mrb[0].mxu0 %v8813
          %v9207 = vpop.f32.mrb[0].mxu0
          %v9208 = vadd.f32 %v8923, %v9207
          %v9209 = vpop.f32.mrb[0].mxu0
          %v9210 = vpop.f32.mrb[0].mxu0
          %v9211 = vadd.f32 %v8923, %v9210
          %v9212 = vpop.f32.mrb[0].mxu0
          %9213 = vmatprep.mubr.bf16.mxu0 %v8817
          %9214 = vmatmul.mubr.bf16.gmra.mrb[0].mxu0 %v8816
          %v9215 = vpop.f32.mrb[0].mxu0
          %v9216 = vadd.f32 %v8923, %v9215
          %v9217 = vpop.f32.mrb[0].mxu0
          %v9218 = vpop.f32.mrb[0].mxu0
          %v9219 = vadd.f32 %v8923, %v9218
          %v9220 = vpop.f32.mrb[0].mxu0
          %9221 = vmatprep.mubr.bf16.mxu0 %v8820
          %9222 = vmatmul.mubr.bf16.gmra.mrb[0].mxu0 %v8819
          %v9223 = vpop.f32.mrb[0].mxu0
          %v9224 = vadd.f32 %v8923, %v9223
          %v9225 = vpop.f32.mrb[0].mxu0
          %v9226 = vpop.f32.mrb[0].mxu0
          %v9227 = vadd.f32 %v8923, %v9226
          %v9228 = vpop.f32.mrb[0].mxu0
          %9229 = vmatprep.mubr.bf16.mxu0 %v8823
          %9230 = vmatmul.mubr.bf16.gmra.mrb[0].mxu0 %v8822
          %v9231 = vpop.f32.mrb[0].mxu0
          %v9232 = vadd.f32 %v8923, %v9231
          %v9233 = vpop.f32.mrb[0].mxu0
          %v9234 = vpop.f32.mrb[0].mxu0
          %v9235 = vadd.f32 %v8923, %v9234
          %v9236 = vpop.f32.mrb[0].mxu0
          %9237 = vmatprep.mubr.bf16.mxu0 %v8826
          %9238 = vmatmul.mubr.bf16.gmra.mrb[0].mxu0 %v8825
          %v9239 = vpop.f32.mrb[0].mxu0
          %v9240 = vadd.f32 %v8923, %v9239
          %v9241 = vpop.f32.mrb[0].mxu0
          %v9242 = vpop.f32.mrb[0].mxu0
          %v9243 = vadd.f32 %v8923, %v9242
          %v9244 = vpop.f32.mrb[0].mxu0
          %9245 = vmatprep.mubr.bf16.mxu0 %v8829
          %9246 = vmatmul.mubr.bf16.gmra.mrb[0].mxu0 %v8828
          %v9247 = vpop.f32.mrb[0].mxu0
          %v9248 = vadd.f32 %v8923, %v9247
          %v9249 = vpop.f32.mrb[0].mxu0
          %v9250 = vpop.f32.mrb[0].mxu0
          %v9251 = vadd.f32 %v8923, %v9250
          %v9252 = vpop.f32.mrb[0].mxu0
          %9253 = vmatprep.mubr.bf16.mxu0 %v8832
          %9254 = vmatmul.mubr.bf16.gmra.mrb[0].mxu0 %v8831
          %v9255 = vpop.f32.mrb[0].mxu0
          %v9256 = vadd.f32 %v8923, %v9255
          %v9257 = vpop.f32.mrb[0].mxu0
          %v9258 = vpop.f32.mrb[0].mxu0
          %v9259 = vadd.f32 %v8923, %v9258
          %v9260 = vpop.f32.mrb[0].mxu0
          %9261 = vmatprep.mubr.bf16.mxu0 %v8835
          %9262 = vmatmul.mubr.bf16.gmra.mrb[0].mxu0 %v8834
          %v9263 = vpop.f32.mrb[0].mxu0
          %v9264 = vadd.f32 %v8923, %v9263
          %v9265 = vpop.f32.mrb[0].mxu0
          %v9266 = vpop.f32.mrb[0].mxu0
          %v9267 = vadd.f32 %v8923, %v9266
          %v9268 = vpop.f32.mrb[0].mxu0
          %9269 = vmatprep.mubr.bf16.mxu0 %v8838
          %9270 = vmatmul.mubr.bf16.gmra.mrb[0].mxu0 %v8837
          %v9271 = vpop.f32.mrb[0].mxu0
          %v9272 = vadd.f32 %v8923, %v9271
          %v9273 = vpop.f32.mrb[0].mxu0
          %v9274 = vpop.f32.mrb[0].mxu0
          %v9275 = vadd.f32 %v8923, %v9274
          %v9276 = vpop.f32.mrb[0].mxu0
          %9277 = vmatprep.mubr.bf16.mxu0 %v8841
          %9278 = vmatmul.mubr.bf16.gmra.mrb[0].mxu0 %v8840
          %v9279 = vpop.f32.mrb[0].mxu0
          %v9280 = vadd.f32 %v8923, %v9279
          %v9281 = vpop.f32.mrb[0].mxu0
          %v9282 = vpop.f32.mrb[0].mxu0
          %v9283 = vadd.f32 %v8923, %v9282
          %v9284 = vpop.f32.mrb[0].mxu0
          %9285 = vmatprep.mubr.bf16.mxu0 %v8844
          %9286 = vmatmul.mubr.bf16.gmra.mrb[0].mxu0 %v8843
          %v9287 = vpop.f32.mrb[0].mxu0
          %v9288 = vadd.f32 %v8923, %v9287
          %v9289 = vpop.f32.mrb[0].mxu0
          %v9290 = vpop.f32.mrb[0].mxu0
          %v9291 = vadd.f32 %v8923, %v9290
          %v9292 = vpop.f32.mrb[0].mxu0
          %9293 = vmatprep.mubr.bf16.mxu0 %v8847
          %9294 = vmatmul.mubr.bf16.gmra.mrb[0].mxu0 %v8846
          %v9295 = vpop.f32.mrb[0].mxu0
          %v9296 = vadd.f32 %v8923, %v9295
          %v9297 = vpop.f32.mrb[0].mxu0
          %v9298 = vpop.f32.mrb[0].mxu0
          %v9299 = vadd.f32 %v8923, %v9298
          %v9300 = vpop.f32.mrb[0].mxu0
          %9301 = vmatprep.mubr.bf16.mxu0 %v8850
          %9302 = vmatmul.mubr.bf16.gmra.mrb[0].mxu0 %v8849
          %v9303 = vpop.f32.mrb[0].mxu0
          %v9304 = vadd.f32 %v8923, %v9303
          %v9305 = vpop.f32.mrb[0].mxu0
          %v9306 = vpop.f32.mrb[0].mxu0
          %v9307 = vadd.f32 %v8923, %v9306
          %v9308 = vpop.f32.mrb[0].mxu0
          %9309 = vmatprep.mubr.bf16.mxu0 %v8853
          %9310 = vmatmul.mubr.bf16.gmra.mrb[0].mxu0 %v8852
          %v9311 = vpop.f32.mrb[0].mxu0
          %v9312 = vadd.f32 %v8923, %v9311
          %v9313 = vpop.f32.mrb[0].mxu0
          %v9314 = vpop.f32.mrb[0].mxu0
          %v9315 = vadd.f32 %v8923, %v9314
          %v9316 = vpop.f32.mrb[0].mxu0
          %9317 = vmatprep.mubr.bf16.mxu0 %v8856
          %9318 = vmatmul.mubr.bf16.gmra.mrb[0].mxu0 %v8855
          %v9319 = vpop.f32.mrb[0].mxu0
          %v9320 = vadd.f32 %v8923, %v9319
          %v9321 = vpop.f32.mrb[0].mxu0
          %v9322 = vpop.f32.mrb[0].mxu0
          %v9323 = vadd.f32 %v8923, %v9322
          %v9324 = vpop.f32.mrb[0].mxu0
          %9325 = vmatprep.mubr.bf16.mxu0 %v8859
          %9326 = vmatmul.mubr.bf16.gmra.mrb[0].mxu0 %v8858
          %v9327 = vpop.f32.mrb[0].mxu0
          %v9328 = vadd.f32 %v8923, %v9327
          %v9329 = vpop.f32.mrb[0].mxu0
          %v9330 = vpop.f32.mrb[0].mxu0
          %v9331 = vadd.f32 %v8923, %v9330
          %v9332 = vpop.f32.mrb[0].mxu0
          %9333 = vmatprep.mubr.bf16.mxu0 %v8862
          %9334 = vmatmul.mubr.bf16.gmra.mrb[0].mxu0 %v8861
          %v9335 = vpop.f32.mrb[0].mxu0
          %v9336 = vadd.f32 %v8923, %v9335
          %v9337 = vpop.f32.mrb[0].mxu0
          %v9338 = vpop.f32.mrb[0].mxu0
          %v9339 = vadd.f32 %v8923, %v9338
          %v9340 = vpop.f32.mrb[0].mxu0
          %9341 = vmatprep.mubr.bf16.mxu0 %v8865
          %9342 = vmatmul.mubr.bf16.gmra.mrb[0].mxu0 %v8864
          %v9343 = vpop.f32.mrb[0].mxu0
          %v9344 = vadd.f32 %v8923, %v9343
          %v9345 = vpop.f32.mrb[0].mxu0
          %v9346 = vpop.f32.mrb[0].mxu0
          %v9347 = vadd.f32 %v8923, %v9346
          %v9348 = vpop.f32.mrb[0].mxu0
          %9349 = vmatprep.mubr.bf16.mxu0 %v8868
          %9350 = vmatmul.mubr.bf16.gmra.mrb[0].mxu0 %v8867
          %v9351 = vpop.f32.mrb[0].mxu0
          %v9352 = vadd.f32 %v8923, %v9351
          %v9353 = vpop.f32.mrb[0].mxu0
          %v9354 = vpop.f32.mrb[0].mxu0
          %v9355 = vadd.f32 %v8923, %v9354
          %v9356 = vpop.f32.mrb[0].mxu0
          %9357 = vdwg.mxu0
          %9358 = vmatprep.subr.bf16.mxu0 0
          %9359 = vmatpush1.bf16.msra.mxu0 %v9037
          %9360 = vmatprep.subr.bf16.mxu0 0
          %9361 = vmatpush1.bf16.msra.mxu0 %v9038
          %9362 = vmatprep.subr.bf16.mxu0 0
          %9363 = vmatpush1.bf16.msra.mxu0 %v9039
          %9364 = vmatprep.subr.bf16.mxu0 0
          %9365 = vmatpush1.bf16.msra.mxu0 %v9040
          %9366 = vmatprep.subr.bf16.mxu0 0
          %9367 = vmatpush1.bf16.msra.mxu0 %v9041
          %9368 = vmatprep.subr.bf16.mxu0 0
          %9369 = vmatpush1.bf16.msra.mxu0 %v9042
          %9370 = vmatprep.subr.bf16.mxu0 0
          %9371 = vmatpush1.bf16.msra.mxu0 %v9043
          %9372 = vmatprep.subr.bf16.mxu0 0
          %9373 = vmatpush1.bf16.msra.mxu0 %v9044
          %9374 = vmatprep.subr.bf16.mxu0 0
          %9375 = vmatpush1.bf16.msra.mxu0 0
          %9376 = vmatprep.subr.bf16.mxu0 0
          %9377 = vmatpush1.bf16.msra.mxu0 0
          %9378 = vmatprep.subr.bf16.mxu0 0
          %9379 = vmatpush1.bf16.msra.mxu0 0
          %9380 = vmatprep.subr.bf16.mxu0 0
          %9381 = vmatpush1.bf16.msra.mxu0 0
          %9382 = vmatprep.subr.bf16.mxu0 0
          %9383 = vmatpush1.bf16.msra.mxu0 0
          %9384 = vmatprep.subr.bf16.mxu0 0
          %9385 = vmatpush1.bf16.msra.mxu0 0
          %9386 = vmatprep.subr.bf16.mxu0 0
          %9387 = vmatpush1.bf16.msra.mxu0 0
          %9388 = vmatprep.subr.bf16.mxu0 0
          %9389 = vmatpush1.bf16.msra.mxu0 0
          %9390 = vmatprep.mubr.bf16.mxu0 0
          %9391 = vmatmul.mubr.bf16.gmra.mrb[0].mxu0 %v8776
          %v9392 = vpop.f32.mrb[0].mxu0
          %v9393 = vadd.f32 %v9104, %v9392
          %v9394 = vpop.f32.mrb[0].mxu0
          %v9395 = vpop.f32.mrb[0].mxu0
          %v9396 = vadd.f32 %v9107, %v9395
          %v9397 = vpop.f32.mrb[0].mxu0
          %9398 = vmatprep.mubr.bf16.mxu0 0
          %9399 = vmatmul.mubr.bf16.gmra.mrb[0].mxu0 %v8779
          %v9400 = vpop.f32.mrb[0].mxu0
          %v9401 = vadd.f32 %v9112, %v9400
          %v9402 = vpop.f32.mrb[0].mxu0
          %v9403 = vpop.f32.mrb[0].mxu0
          %v9404 = vadd.f32 %v9115, %v9403
          %v9405 = vpop.f32.mrb[0].mxu0
          %9406 = vmatprep.mubr.bf16.mxu0 0
          %9407 = vmatmul.mubr.bf16.gmra.mrb[0].mxu0 %v8782
          %v9408 = vpop.f32.mrb[0].mxu0
          %v9409 = vadd.f32 %v9120, %v9408
          %v9410 = vpop.f32.mrb[0].mxu0
          %v9411 = vpop.f32.mrb[0].mxu0
          %v9412 = vadd.f32 %v9123, %v9411
          %v9413 = vpop.f32.mrb[0].mxu0
          %9414 = vmatprep.mubr.bf16.mxu0 0
          %9415 = vmatmul.mubr.bf16.gmra.mrb[0].mxu0 %v8785
          %v9416 = vpop.f32.mrb[0].mxu0
          %v9417 = vadd.f32 %v9128, %v9416
          %v9418 = vpop.f32.mrb[0].mxu0
          %v9419 = vpop.f32.mrb[0].mxu0
          %v9420 = vadd.f32 %v9131, %v9419
          %v9421 = vpop.f32.mrb[0].mxu0
          %9422 = vmatprep.mubr.bf16.mxu0 0
          %9423 = vmatmul.mubr.bf16.gmra.mrb[0].mxu0 %v8788
          %v9424 = vpop.f32.mrb[0].mxu0
          %v9425 = vadd.f32 %v9136, %v9424
          %v9426 = vpop.f32.mrb[0].mxu0
          %v9427 = vpop.f32.mrb[0].mxu0
          %v9428 = vadd.f32 %v9139, %v9427
          %v9429 = vpop.f32.mrb[0].mxu0
          %9430 = vmatprep.mubr.bf16.mxu0 0
          %9431 = vmatmul.mubr.bf16.gmra.mrb[0].mxu0 %v8791
          %v9432 = vpop.f32.mrb[0].mxu0
          %v9433 = vadd.f32 %v9144, %v9432
          %v9434 = vpop.f32.mrb[0].mxu0
          %v9435 = vpop.f32.mrb[0].mxu0
          %v9436 = vadd.f32 %v9147, %v9435
          %v9437 = vpop.f32.mrb[0].mxu0
          %9438 = vmatprep.mubr.bf16.mxu0 0
          %9439 = vmatmul.mubr.bf16.gmra.mrb[0].mxu0 %v8794
          %v9440 = vpop.f32.mrb[0].mxu0
          %v9441 = vadd.f32 %v9152, %v9440
          %v9442 = vpop.f32.mrb[0].mxu0
          %v9443 = vpop.f32.mrb[0].mxu0
          %v9444 = vadd.f32 %v9155, %v9443
          %v9445 = vpop.f32.mrb[0].mxu0
          %9446 = vmatprep.mubr.bf16.mxu0 0
          %9447 = vmatmul.mubr.bf16.gmra.mrb[0].mxu0 %v8797
          %v9448 = vpop.f32.mrb[0].mxu0
          %v9449 = vadd.f32 %v9160, %v9448
          %v9450 = vpop.f32.mrb[0].mxu0
          %v9451 = vpop.f32.mrb[0].mxu0
          %v9452 = vadd.f32 %v9163, %v9451
          %v9453 = vpop.f32.mrb[0].mxu0
          %9454 = vmatprep.mubr.bf16.mxu0 0
          %9455 = vmatmul.mubr.bf16.gmra.mrb[0].mxu0 %v8800
          %v9456 = vpop.f32.mrb[0].mxu0
          %v9457 = vadd.f32 %v9168, %v9456
          %v9458 = vpop.f32.mrb[0].mxu0
          %v9459 = vpop.f32.mrb[0].mxu0
          %v9460 = vadd.f32 %v9171, %v9459
          %v9461 = vpop.f32.mrb[0].mxu0
          %9462 = vmatprep.mubr.bf16.mxu0 0
          %9463 = vmatmul.mubr.bf16.gmra.mrb[0].mxu0 %v8803
          %v9464 = vpop.f32.mrb[0].mxu0
          %v9465 = vadd.f32 %v9176, %v9464
          %v9466 = vpop.f32.mrb[0].mxu0
          %v9467 = vpop.f32.mrb[0].mxu0
          %v9468 = vadd.f32 %v9179, %v9467
          %v9469 = vpop.f32.mrb[0].mxu0
          %9470 = vmatprep.mubr.bf16.mxu0 0
          %9471 = vmatmul.mubr.bf16.gmra.mrb[0].mxu0 %v8806
          %v9472 = vpop.f32.mrb[0].mxu0
          %v9473 = vadd.f32 %v9184, %v9472
          %v9474 = vpop.f32.mrb[0].mxu0
          %v9475 = vpop.f32.mrb[0].mxu0
          %v9476 = vadd.f32 %v9187, %v9475
          %v9477 = vpop.f32.mrb[0].mxu0
          %9478 = vmatprep.mubr.bf16.mxu0 0
          %9479 = vmatmul.mubr.bf16.gmra.mrb[0].mxu0 %v8809
          %v9480 = vpop.f32.mrb[0].mxu0
          %v9481 = vadd.f32 %v9192, %v9480
          %v9482 = vpop.f32.mrb[0].mxu0
          %v9483 = vpop.f32.mrb[0].mxu0
          %v9484 = vadd.f32 %v9195, %v9483
          %v9485 = vpop.f32.mrb[0].mxu0
          %9486 = vmatprep.mubr.bf16.mxu0 0
          %9487 = vmatmul.mubr.bf16.gmra.mrb[0].mxu0 %v8812
          %v9488 = vpop.f32.mrb[0].mxu0
          %v9489 = vadd.f32 %v9200, %v9488
          %v9490 = vpop.f32.mrb[0].mxu0
          %v9491 = vpop.f32.mrb[0].mxu0
          %v9492 = vadd.f32 %v9203, %v9491
          %v9493 = vpop.f32.mrb[0].mxu0
          %9494 = vmatprep.mubr.bf16.mxu0 0
          %9495 = vmatmul.mubr.bf16.gmra.mrb[0].mxu0 %v8815
          %v9496 = vpop.f32.mrb[0].mxu0
          %v9497 = vadd.f32 %v9208, %v9496
          %v9498 = vpop.f32.mrb[0].mxu0
          %v9499 = vpop.f32.mrb[0].mxu0
          %v9500 = vadd.f32 %v9211, %v9499
          %v9501 = vpop.f32.mrb[0].mxu0
          %9502 = vmatprep.mubr.bf16.mxu0 0
          %9503 = vmatmul.mubr.bf16.gmra.mrb[0].mxu0 %v8818
          %v9504 = vpop.f32.mrb[0].mxu0
          %v9505 = vadd.f32 %v9216, %v9504
          %v9506 = vpop.f32.mrb[0].mxu0
          %v9507 = vpop.f32.mrb[0].mxu0
          %v9508 = vadd.f32 %v9219, %v9507
          %v9509 = vpop.f32.mrb[0].mxu0
          %9510 = vmatprep.mubr.bf16.mxu0 0
          %9511 = vmatmul.mubr.bf16.gmra.mrb[0].mxu0 %v8821
          %v9512 = vpop.f32.mrb[0].mxu0
          %v9513 = vadd.f32 %v9224, %v9512
          %v9514 = vpop.f32.mrb[0].mxu0
          %v9515 = vpop.f32.mrb[0].mxu0
          %v9516 = vadd.f32 %v9227, %v9515
          %v9517 = vpop.f32.mrb[0].mxu0
          %9518 = vmatprep.mubr.bf16.mxu0 0
          %9519 = vmatmul.mubr.bf16.gmra.mrb[0].mxu0 %v8824
          %v9520 = vpop.f32.mrb[0].mxu0
          %v9521 = vadd.f32 %v9232, %v9520
          %v9522 = vpop.f32.mrb[0].mxu0
          %v9523 = vpop.f32.mrb[0].mxu0
          %v9524 = vadd.f32 %v9235, %v9523
          %v9525 = vpop.f32.mrb[0].mxu0
          %9526 = vmatprep.mubr.bf16.mxu0 0
          %9527 = vmatmul.mubr.bf16.gmra.mrb[0].mxu0 %v8827
          %v9528 = vpop.f32.mrb[0].mxu0
          %v9529 = vadd.f32 %v9240, %v9528
          %v9530 = vpop.f32.mrb[0].mxu0
          %v9531 = vpop.f32.mrb[0].mxu0
          %v9532 = vadd.f32 %v9243, %v9531
          %v9533 = vpop.f32.mrb[0].mxu0
          %9534 = vmatprep.mubr.bf16.mxu0 0
          %9535 = vmatmul.mubr.bf16.gmra.mrb[0].mxu0 %v8830
          %v9536 = vpop.f32.mrb[0].mxu0
          %v9537 = vadd.f32 %v9248, %v9536
          %v9538 = vpop.f32.mrb[0].mxu0
          %v9539 = vpop.f32.mrb[0].mxu0
          %v9540 = vadd.f32 %v9251, %v9539
          %v9541 = vpop.f32.mrb[0].mxu0
          %9542 = vmatprep.mubr.bf16.mxu0 0
          %9543 = vmatmul.mubr.bf16.gmra.mrb[0].mxu0 %v8833
          %v9544 = vpop.f32.mrb[0].mxu0
          %v9545 = vadd.f32 %v9256, %v9544
          %v9546 = vpop.f32.mrb[0].mxu0
          %v9547 = vpop.f32.mrb[0].mxu0
          %v9548 = vadd.f32 %v9259, %v9547
          %v9549 = vpop.f32.mrb[0].mxu0
          %9550 = vmatprep.mubr.bf16.mxu0 0
          %9551 = vmatmul.mubr.bf16.gmra.mrb[0].mxu0 %v8836
          %v9552 = vpop.f32.mrb[0].mxu0
          %v9553 = vadd.f32 %v9264, %v9552
          %v9554 = vpop.f32.mrb[0].mxu0
          %v9555 = vpop.f32.mrb[0].mxu0
          %v9556 = vadd.f32 %v9267, %v9555
          %v9557 = vpop.f32.mrb[0].mxu0
          %9558 = vmatprep.mubr.bf16.mxu0 0
          %9559 = vmatmul.mubr.bf16.gmra.mrb[0].mxu0 %v8839
          %v9560 = vpop.f32.mrb[0].mxu0
          %v9561 = vadd.f32 %v9272, %v9560
          %v9562 = vpop.f32.mrb[0].mxu0
          %v9563 = vpop.f32.mrb[0].mxu0
          %v9564 = vadd.f32 %v9275, %v9563
          %v9565 = vpop.f32.mrb[0].mxu0
          %9566 = vmatprep.mubr.bf16.mxu0 0
          %9567 = vmatmul.mubr.bf16.gmra.mrb[0].mxu0 %v8842
          %v9568 = vpop.f32.mrb[0].mxu0
          %v9569 = vadd.f32 %v9280, %v9568
          %v9570 = vpop.f32.mrb[0].mxu0
          %v9571 = vpop.f32.mrb[0].mxu0
          %v9572 = vadd.f32 %v9283, %v9571
          %v9573 = vpop.f32.mrb[0].mxu0
          %9574 = vmatprep.mubr.bf16.mxu0 0
          %9575 = vmatmul.mubr.bf16.gmra.mrb[0].mxu0 %v8845
          %v9576 = vpop.f32.mrb[0].mxu0
          %v9577 = vadd.f32 %v9288, %v9576
          %v9578 = vpop.f32.mrb[0].mxu0
          %v9579 = vpop.f32.mrb[0].mxu0
          %v9580 = vadd.f32 %v9291, %v9579
          %v9581 = vpop.f32.mrb[0].mxu0
          %9582 = vmatprep.mubr.bf16.mxu0 0
          %9583 = vmatmul.mubr.bf16.gmra.mrb[0].mxu0 %v8848
          %v9584 = vpop.f32.mrb[0].mxu0
          %v9585 = vadd.f32 %v9296, %v9584
          %v9586 = vpop.f32.mrb[0].mxu0
          %v9587 = vpop.f32.mrb[0].mxu0
          %v9588 = vadd.f32 %v9299, %v9587
          %v9589 = vpop.f32.mrb[0].mxu0
          %9590 = vmatprep.mubr.bf16.mxu0 0
          %9591 = vmatmul.mubr.bf16.gmra.mrb[0].mxu0 %v8851
          %v9592 = vpop.f32.mrb[0].mxu0
          %v9593 = vadd.f32 %v9304, %v9592
          %v9594 = vpop.f32.mrb[0].mxu0
          %v9595 = vpop.f32.mrb[0].mxu0
          %v9596 = vadd.f32 %v9307, %v9595
          %v9597 = vpop.f32.mrb[0].mxu0
          %9598 = vmatprep.mubr.bf16.mxu0 0
          %9599 = vmatmul.mubr.bf16.gmra.mrb[0].mxu0 %v8854
          %v9600 = vpop.f32.mrb[0].mxu0
          %v9601 = vadd.f32 %v9312, %v9600
          %v9602 = vpop.f32.mrb[0].mxu0
          %v9603 = vpop.f32.mrb[0].mxu0
          %v9604 = vadd.f32 %v9315, %v9603
          %v9605 = vpop.f32.mrb[0].mxu0
          %9606 = vmatprep.mubr.bf16.mxu0 0
          %9607 = vmatmul.mubr.bf16.gmra.mrb[0].mxu0 %v8857
          %v9608 = vpop.f32.mrb[0].mxu0
          %v9609 = vadd.f32 %v9320, %v9608
          %v9610 = vpop.f32.mrb[0].mxu0
          %v9611 = vpop.f32.mrb[0].mxu0
          %v9612 = vadd.f32 %v9323, %v9611
          %v9613 = vpop.f32.mrb[0].mxu0
          %9614 = vmatprep.mubr.bf16.mxu0 0
          %9615 = vmatmul.mubr.bf16.gmra.mrb[0].mxu0 %v8860
          %v9616 = vpop.f32.mrb[0].mxu0
          %v9617 = vadd.f32 %v9328, %v9616
          %v9618 = vpop.f32.mrb[0].mxu0
          %v9619 = vpop.f32.mrb[0].mxu0
          %v9620 = vadd.f32 %v9331, %v9619
          %v9621 = vpop.f32.mrb[0].mxu0
          %9622 = vmatprep.mubr.bf16.mxu0 0
          %9623 = vmatmul.mubr.bf16.gmra.mrb[0].mxu0 %v8863
          %v9624 = vpop.f32.mrb[0].mxu0
          %v9625 = vadd.f32 %v9336, %v9624
          %v9626 = vpop.f32.mrb[0].mxu0
          %v9627 = vpop.f32.mrb[0].mxu0
          %v9628 = vadd.f32 %v9339, %v9627
          %v9629 = vpop.f32.mrb[0].mxu0
          %9630 = vmatprep.mubr.bf16.mxu0 0
          %9631 = vmatmul.mubr.bf16.gmra.mrb[0].mxu0 %v8866
          %v9632 = vpop.f32.mrb[0].mxu0
          %v9633 = vadd.f32 %v9344, %v9632
          %v9634 = vpop.f32.mrb[0].mxu0
          %v9635 = vpop.f32.mrb[0].mxu0
          %v9636 = vadd.f32 %v9347, %v9635
          %v9637 = vpop.f32.mrb[0].mxu0
          %9638 = vmatprep.mubr.bf16.mxu0 0
          %9639 = vmatmul.mubr.bf16.gmra.mrb[0].mxu0 %v8869
          %v9640 = vpop.f32.mrb[0].mxu0
          %v9641 = vadd.f32 %v9352, %v9640
          %v9642 = vpop.f32.mrb[0].mxu0
          %v9643 = vpop.f32.mrb[0].mxu0
          %v9644 = vadd.f32 %v9355, %v9643
          %v9645 = vpop.f32.mrb[0].mxu0
          %9646 = vdwg.mxu0
          %s9647 = sadd.s32 %s7715, 8
          %s9648 = scalar_lea.vmem [#allocation2], %s9647
          %v9649 = vld [vmem:[%s9648] sm:$0xff]
          %v9650 = vld [vmem:[%s9648 + $0x8] sm:$0xff]
          %v9651 = vld [vmem:[%s9648 + $0x10] sm:$0xff]
          %v9652 = vld [vmem:[%s9648 + $0x18] sm:$0xff]
          %v9653 = vld [vmem:[%s9648 + $0x20] sm:$0xff]
          %v9654 = vld [vmem:[%s9648 + $0x28] sm:$0xff]
          %v9655 = vld [vmem:[%s9648 + $0x30] sm:$0xff]
          %v9656 = vld [vmem:[%s9648 + $0x38] sm:$0xff]
          %v9657 = vld [vmem:[%s9648 + $0x40] sm:$0xff]
          %v9658 = vld [vmem:[%s9648 + $0x48] sm:$0xff]
          %v9659 = vld [vmem:[%s9648 + $0x50] sm:$0xff]
          %v9660 = vld [vmem:[%s9648 + $0x58] sm:$0xff]
          %v9661 = vld [vmem:[%s9648 + $0x60] sm:$0xff]
          %v9662 = vld [vmem:[%s9648 + $0x68] sm:$0xff]
          %v9663 = vld [vmem:[%s9648 + $0x70] sm:$0xff]
          %v9664 = vld [vmem:[%s9648 + $0x78] sm:$0xff]
          %v9665 = vld [vmem:[%s9648 + $0x80] sm:$0xff]
          %v9666 = vld [vmem:[%s9648 + $0x88] sm:$0xff]
          %v9667 = vld [vmem:[%s9648 + $0x90] sm:$0xff]
          %v9668 = vld [vmem:[%s9648 + $0x98] sm:$0xff]
          %v9669 = vld [vmem:[%s9648 + $0xa0] sm:$0xff]
          %v9670 = vld [vmem:[%s9648 + $0xa8] sm:$0xff]
          %v9671 = vld [vmem:[%s9648 + $0xb0] sm:$0xff]
          %v9672 = vld [vmem:[%s9648 + $0xb8] sm:$0xff]
          %v9673 = vld [vmem:[%s9648 + $0xc0] sm:$0xff]
          %v9674 = vld [vmem:[%s9648 + $0xc8] sm:$0xff]
          %v9675 = vld [vmem:[%s9648 + $0xd0] sm:$0xff]
          %v9676 = vld [vmem:[%s9648 + $0xd8] sm:$0xff]
          %v9677 = vld [vmem:[%s9648 + $0xe0] sm:$0xff]
          %v9678 = vld [vmem:[%s9648 + $0xe8] sm:$0xff]
          %v9679 = vld [vmem:[%s9648 + $0xf0] sm:$0xff]
          %v9680 = vld [vmem:[%s9648 + $0xf8] sm:$0xff]
          %v9681 = vld [vmem:[%s9648 + $0x100] sm:$0xff]
          %v9682 = vld [vmem:[%s9648 + $0x108] sm:$0xff]
          %v9683 = vld [vmem:[%s9648 + $0x110] sm:$0xff]
          %v9684 = vld [vmem:[%s9648 + $0x118] sm:$0xff]
          %v9685 = vld [vmem:[%s9648 + $0x120] sm:$0xff]
          %v9686 = vld [vmem:[%s9648 + $0x128] sm:$0xff]
          %v9687 = vld [vmem:[%s9648 + $0x130] sm:$0xff]
          %v9688 = vld [vmem:[%s9648 + $0x138] sm:$0xff]
          %v9689 = vld [vmem:[%s9648 + $0x140] sm:$0xff]
          %v9690 = vld [vmem:[%s9648 + $0x148] sm:$0xff]
          %v9691 = vld [vmem:[%s9648 + $0x150] sm:$0xff]
          %v9692 = vld [vmem:[%s9648 + $0x158] sm:$0xff]
          %v9693 = vld [vmem:[%s9648 + $0x160] sm:$0xff]
          %v9694 = vld [vmem:[%s9648 + $0x168] sm:$0xff]
          %v9695 = vld [vmem:[%s9648 + $0x170] sm:$0xff]
          %v9696 = vld [vmem:[%s9648 + $0x178] sm:$0xff]
          %v9697 = vld [vmem:[%s9648 + $0x180] sm:$0xff]
          %v9698 = vld [vmem:[%s9648 + $0x188] sm:$0xff]
          %v9699 = vld [vmem:[%s9648 + $0x190] sm:$0xff]
          %v9700 = vld [vmem:[%s9648 + $0x198] sm:$0xff]
          %v9701 = vld [vmem:[%s9648 + $0x1a0] sm:$0xff]
          %v9702 = vld [vmem:[%s9648 + $0x1a8] sm:$0xff]
          %v9703 = vld [vmem:[%s9648 + $0x1b0] sm:$0xff]
          %v9704 = vld [vmem:[%s9648 + $0x1b8] sm:$0xff]
          %v9705 = vld [vmem:[%s9648 + $0x1c0] sm:$0xff]
          %v9706 = vld [vmem:[%s9648 + $0x1c8] sm:$0xff]
          %v9707 = vld [vmem:[%s9648 + $0x1d0] sm:$0xff]
          %v9708 = vld [vmem:[%s9648 + $0x1d8] sm:$0xff]
          %v9709 = vld [vmem:[%s9648 + $0x1e0] sm:$0xff]
          %v9710 = vld [vmem:[%s9648 + $0x1e8] sm:$0xff]
          %v9711 = vld [vmem:[%s9648 + $0x1f0] sm:$0xff]
          %v9712 = vld [vmem:[%s9648 + $0x1f8] sm:$0xff]
          %v9713 = vadd.f32 %v9649, %v9393
          %v9714 = vadd.f32 %v9650, %v9396
          %v9715 = vadd.f32 %v9651, %v9401
          %v9716 = vadd.f32 %v9652, %v9404
          %v9717 = vadd.f32 %v9653, %v9409
          %v9718 = vadd.f32 %v9654, %v9412
          %v9719 = vadd.f32 %v9655, %v9417
          %v9720 = vadd.f32 %v9656, %v9420
          %v9721 = vadd.f32 %v9657, %v9425
          %v9722 = vadd.f32 %v9658, %v9428
          %v9723 = vadd.f32 %v9659, %v9433
          %v9724 = vadd.f32 %v9660, %v9436
          %v9725 = vadd.f32 %v9661, %v9441
          %v9726 = vadd.f32 %v9662, %v9444
          %v9727 = vadd.f32 %v9663, %v9449
          %v9728 = vadd.f32 %v9664, %v9452
          %v9729 = vadd.f32 %v9665, %v9457
          %v9730 = vadd.f32 %v9666, %v9460
          %v9731 = vadd.f32 %v9667, %v9465
          %v9732 = vadd.f32 %v9668, %v9468
          %v9733 = vadd.f32 %v9669, %v9473
          %v9734 = vadd.f32 %v9670, %v9476
          %v9735 = vadd.f32 %v9671, %v9481
          %v9736 = vadd.f32 %v9672, %v9484
          %v9737 = vadd.f32 %v9673, %v9489
          %v9738 = vadd.f32 %v9674, %v9492
          %v9739 = vadd.f32 %v9675, %v9497
          %v9740 = vadd.f32 %v9676, %v9500
          %v9741 = vadd.f32 %v9677, %v9505
          %v9742 = vadd.f32 %v9678, %v9508
          %v9743 = vadd.f32 %v9679, %v9513
          %v9744 = vadd.f32 %v9680, %v9516
          %v9745 = vadd.f32 %v9681, %v9521
          %v9746 = vadd.f32 %v9682, %v9524
          %v9747 = vadd.f32 %v9683, %v9529
          %v9748 = vadd.f32 %v9684, %v9532
          %v9749 = vadd.f32 %v9685, %v9537
          %v9750 = vadd.f32 %v9686, %v9540
          %v9751 = vadd.f32 %v9687, %v9545
          %v9752 = vadd.f32 %v9688, %v9548
          %v9753 = vadd.f32 %v9689, %v9553
          %v9754 = vadd.f32 %v9690, %v9556
          %v9755 = vadd.f32 %v9691, %v9561
          %v9756 = vadd.f32 %v9692, %v9564
          %v9757 = vadd.f32 %v9693, %v9569
          %v9758 = vadd.f32 %v9694, %v9572
          %v9759 = vadd.f32 %v9695, %v9577
          %v9760 = vadd.f32 %v9696, %v9580
          %v9761 = vadd.f32 %v9697, %v9585
          %v9762 = vadd.f32 %v9698, %v9588
          %v9763 = vadd.f32 %v9699, %v9593
          %v9764 = vadd.f32 %v9700, %v9596
          %v9765 = vadd.f32 %v9701, %v9601
          %v9766 = vadd.f32 %v9702, %v9604
          %v9767 = vadd.f32 %v9703, %v9609
          %v9768 = vadd.f32 %v9704, %v9612
          %v9769 = vadd.f32 %v9705, %v9617
          %v9770 = vadd.f32 %v9706, %v9620
          %v9771 = vadd.f32 %v9707, %v9625
          %v9772 = vadd.f32 %v9708, %v9628
          %v9773 = vadd.f32 %v9709, %v9633
          %v9774 = vadd.f32 %v9710, %v9636
          %v9775 = vadd.f32 %v9711, %v9641
          %v9776 = vadd.f32 %v9712, %v9644
          %9777 = vxpose.xlu0.b32.start [1/16] %v9713, 128
          %9778 = vxpose.xlu0.b32.cont [2/16] %v9714, 128
          %9779 = vxpose.xlu0.b32.cont [3/16] %v9715, 128
          %9780 = vxpose.xlu0.b32.cont [4/16] %v9716, 128
          %9781 = vxpose.xlu0.b32.cont [5/16] %v9717, 128
          %9782 = vxpose.xlu0.b32.cont [6/16] %v9718, 128
          %9783 = vxpose.xlu0.b32.cont [7/16] %v9719, 128
          %9784 = vxpose.xlu0.b32.cont [8/16] %v9720, 128
          %9785 = vxpose.xlu0.b32.cont [9/16] %v9721, 128
          %9786 = vxpose.xlu0.b32.cont [10/16] %v9722, 128
          %9787 = vxpose.xlu0.b32.cont [11/16] %v9723, 128
          %9788 = vxpose.xlu0.b32.cont [12/16] %v9724, 128
          %9789 = vxpose.xlu0.b32.cont [13/16] %v9725, 128
          %9790 = vxpose.xlu0.b32.cont [14/16] %v9726, 128
          %9791 = vxpose.xlu0.b32.cont [15/16] %v9727, 128
          %9792 = vxpose.xlu0.b32.end [16/16] %v9728, 128
          %v9793 = vpop.trf.xlu0
          %v9794 = vpop.trf.xlu0
          %v9795 = vpop.trf.xlu0
          %v9796 = vpop.trf.xlu0
          %v9797 = vpop.trf.xlu0
          %v9798 = vpop.trf.xlu0
          %v9799 = vpop.trf.xlu0
          %v9800 = vpop.trf.xlu0
          %v9801 = vpop.trf.xlu0
          %v9802 = vpop.trf.xlu0
          %v9803 = vpop.trf.xlu0
          %v9804 = vpop.trf.xlu0
          %v9805 = vpop.trf.xlu0
          %v9806 = vpop.trf.xlu0
          %v9807 = vpop.trf.xlu0
          %v9808 = vpop.trf.xlu0
          %9809 = vxpose.xlu0.b32.start [1/16] %v9729, 128
          %9810 = vxpose.xlu0.b32.cont [2/16] %v9730, 128
          %9811 = vxpose.xlu0.b32.cont [3/16] %v9731, 128
          %9812 = vxpose.xlu0.b32.cont [4/16] %v9732, 128
          %9813 = vxpose.xlu0.b32.cont [5/16] %v9733, 128
          %9814 = vxpose.xlu0.b32.cont [6/16] %v9734, 128
          %9815 = vxpose.xlu0.b32.cont [7/16] %v9735, 128
          %9816 = vxpose.xlu0.b32.cont [8/16] %v9736, 128
          %9817 = vxpose.xlu0.b32.cont [9/16] %v9737, 128
          %9818 = vxpose.xlu0.b32.cont [10/16] %v9738, 128
          %9819 = vxpose.xlu0.b32.cont [11/16] %v9739, 128
          %9820 = vxpose.xlu0.b32.cont [12/16] %v9740, 128
          %9821 = vxpose.xlu0.b32.cont [13/16] %v9741, 128
          %9822 = vxpose.xlu0.b32.cont [14/16] %v9742, 128
          %9823 = vxpose.xlu0.b32.cont [15/16] %v9743, 128
          %9824 = vxpose.xlu0.b32.end [16/16] %v9744, 128
          %v9825 = vpop.trf.xlu0
          %v9826 = vpop.trf.xlu0
          %v9827 = vpop.trf.xlu0
          %v9828 = vpop.trf.xlu0
          %v9829 = vpop.trf.xlu0
          %v9830 = vpop.trf.xlu0
          %v9831 = vpop.trf.xlu0
          %v9832 = vpop.trf.xlu0
          %v9833 = vpop.trf.xlu0
          %v9834 = vpop.trf.xlu0
          %v9835 = vpop.trf.xlu0
          %v9836 = vpop.trf.xlu0
          %v9837 = vpop.trf.xlu0
          %v9838 = vpop.trf.xlu0
          %v9839 = vpop.trf.xlu0
          %v9840 = vpop.trf.xlu0
          %9841 = vxpose.xlu0.b32.start [1/16] %v9745, 128
          %9842 = vxpose.xlu0.b32.cont [2/16] %v9746, 128
          %9843 = vxpose.xlu0.b32.cont [3/16] %v9747, 128
          %9844 = vxpose.xlu0.b32.cont [4/16] %v9748, 128
          %9845 = vxpose.xlu0.b32.cont [5/16] %v9749, 128
          %9846 = vxpose.xlu0.b32.cont [6/16] %v9750, 128
          %9847 = vxpose.xlu0.b32.cont [7/16] %v9751, 128
          %9848 = vxpose.xlu0.b32.cont [8/16] %v9752, 128
          %9849 = vxpose.xlu0.b32.cont [9/16] %v9753, 128
          %9850 = vxpose.xlu0.b32.cont [10/16] %v9754, 128
          %9851 = vxpose.xlu0.b32.cont [11/16] %v9755, 128
          %9852 = vxpose.xlu0.b32.cont [12/16] %v9756, 128
          %9853 = vxpose.xlu0.b32.cont [13/16] %v9757, 128
          %9854 = vxpose.xlu0.b32.cont [14/16] %v9758, 128
          %9855 = vxpose.xlu0.b32.cont [15/16] %v9759, 128
          %9856 = vxpose.xlu0.b32.end [16/16] %v9760, 128
          %v9857 = vpop.trf.xlu0
          %v9858 = vpop.trf.xlu0
          %v9859 = vpop.trf.xlu0
          %v9860 = vpop.trf.xlu0
          %v9861 = vpop.trf.xlu0
          %v9862 = vpop.trf.xlu0
          %v9863 = vpop.trf.xlu0
          %v9864 = vpop.trf.xlu0
          %v9865 = vpop.trf.xlu0
          %v9866 = vpop.trf.xlu0
          %v9867 = vpop.trf.xlu0
          %v9868 = vpop.trf.xlu0
          %v9869 = vpop.trf.xlu0
          %v9870 = vpop.trf.xlu0
          %v9871 = vpop.trf.xlu0
          %v9872 = vpop.trf.xlu0
          %9873 = vxpose.xlu0.b32.start [1/16] %v9761, 128
          %9874 = vxpose.xlu0.b32.cont [2/16] %v9762, 128
          %9875 = vxpose.xlu0.b32.cont [3/16] %v9763, 128
          %9876 = vxpose.xlu0.b32.cont [4/16] %v9764, 128
          %9877 = vxpose.xlu0.b32.cont [5/16] %v9765, 128
          %9878 = vxpose.xlu0.b32.cont [6/16] %v9766, 128
          %9879 = vxpose.xlu0.b32.cont [7/16] %v9767, 128
          %9880 = vxpose.xlu0.b32.cont [8/16] %v9768, 128
          %9881 = vxpose.xlu0.b32.cont [9/16] %v9769, 128
          %9882 = vxpose.xlu0.b32.cont [10/16] %v9770, 128
          %9883 = vxpose.xlu0.b32.cont [11/16] %v9771, 128
          %9884 = vxpose.xlu0.b32.cont [12/16] %v9772, 128
          %9885 = vxpose.xlu0.b32.cont [13/16] %v9773, 128
          %9886 = vxpose.xlu0.b32.cont [14/16] %v9774, 128
          %9887 = vxpose.xlu0.b32.cont [15/16] %v9775, 128
          %9888 = vxpose.xlu0.b32.end [16/16] %v9776, 128
          %v9889 = vpop.trf.xlu0
          %v9890 = vpop.trf.xlu0
          %v9891 = vpop.trf.xlu0
          %v9892 = vpop.trf.xlu0
          %v9893 = vpop.trf.xlu0
          %v9894 = vpop.trf.xlu0
          %v9895 = vpop.trf.xlu0
          %v9896 = vpop.trf.xlu0
          %v9897 = vpop.trf.xlu0
          %v9898 = vpop.trf.xlu0
          %v9899 = vpop.trf.xlu0
          %v9900 = vpop.trf.xlu0
          %v9901 = vpop.trf.xlu0
          %v9902 = vpop.trf.xlu0
          %v9903 = vpop.trf.xlu0
          %v9904 = vpop.trf.xlu0
          %9905 = vst [vmem:[%s439] sm:$0xff] %v9793
          %9906 = vst [vmem:[%s439 + $0x8] sm:$0xff] %v9825
          %9907 = vst [vmem:[%s439 + $0x10] sm:$0xff] %v9857
          %9908 = vst [vmem:[%s439 + $0x18] sm:$0xff] %v9889
          %9909 = vst [vmem:[%s439 + $0x20] sm:$0xff] %v9794
          %9910 = vst [vmem:[%s439 + $0x28] sm:$0xff] %v9826
          %9911 = vst [vmem:[%s439 + $0x30] sm:$0xff] %v9858
          %9912 = vst [vmem:[%s439 + $0x38] sm:$0xff] %v9890
          %9913 = vst [vmem:[%s439 + $0x40] sm:$0xff] %v9795
          %9914 = vst [vmem:[%s439 + $0x48] sm:$0xff] %v9827
          %9915 = vst [vmem:[%s439 + $0x50] sm:$0xff] %v9859
          %9916 = vst [vmem:[%s439 + $0x58] sm:$0xff] %v9891
          %9917 = vst [vmem:[%s439 + $0x60] sm:$0xff] %v9796
          %9918 = vst [vmem:[%s439 + $0x68] sm:$0xff] %v9828
          %9919 = vst [vmem:[%s439 + $0x70] sm:$0xff] %v9860
          %9920 = vst [vmem:[%s439 + $0x78] sm:$0xff] %v9892
          %9921 = vst [vmem:[%s439 + $0x80] sm:$0xff] %v9797
          %9922 = vst [vmem:[%s439 + $0x88] sm:$0xff] %v9829
          %9923 = vst [vmem:[%s439 + $0x90] sm:$0xff] %v9861
          %9924 = vst [vmem:[%s439 + $0x98] sm:$0xff] %v9893
          %9925 = vst [vmem:[%s439 + $0xa0] sm:$0xff] %v9798
          %9926 = vst [vmem:[%s439 + $0xa8] sm:$0xff] %v9830
          %9927 = vst [vmem:[%s439 + $0xb0] sm:$0xff] %v9862
          %9928 = vst [vmem:[%s439 + $0xb8] sm:$0xff] %v9894
          %9929 = vst [vmem:[%s439 + $0xc0] sm:$0xff] %v9799
          %9930 = vst [vmem:[%s439 + $0xc8] sm:$0xff] %v9831
          %9931 = vst [vmem:[%s439 + $0xd0] sm:$0xff] %v9863
          %9932 = vst [vmem:[%s439 + $0xd8] sm:$0xff] %v9895
          %9933 = vst [vmem:[%s439 + $0xe0] sm:$0xff] %v9800
          %9934 = vst [vmem:[%s439 + $0xe8] sm:$0xff] %v9832
          %9935 = vst [vmem:[%s439 + $0xf0] sm:$0xff] %v9864
          %9936 = vst [vmem:[%s439 + $0xf8] sm:$0xff] %v9896
          %9937 = vst [vmem:[%s439 + $0x100] sm:$0xff] %v9801
          %9938 = vst [vmem:[%s439 + $0x108] sm:$0xff] %v9833
          %9939 = vst [vmem:[%s439 + $0x110] sm:$0xff] %v9865
          %9940 = vst [vmem:[%s439 + $0x118] sm:$0xff] %v9897
          %9941 = vst [vmem:[%s439 + $0x120] sm:$0xff] %v9802
          %9942 = vst [vmem:[%s439 + $0x128] sm:$0xff] %v9834
          %9943 = vst [vmem:[%s439 + $0x130] sm:$0xff] %v9866
          %9944 = vst [vmem:[%s439 + $0x138] sm:$0xff] %v9898
          %9945 = vst [vmem:[%s439 + $0x140] sm:$0xff] %v9803
          %9946 = vst [vmem:[%s439 + $0x148] sm:$0xff] %v9835
          %9947 = vst [vmem:[%s439 + $0x150] sm:$0xff] %v9867
          %9948 = vst [vmem:[%s439 + $0x158] sm:$0xff] %v9899
          %9949 = vst [vmem:[%s439 + $0x160] sm:$0xff] %v9804
          %9950 = vst [vmem:[%s439 + $0x168] sm:$0xff] %v9836
          %9951 = vst [vmem:[%s439 + $0x170] sm:$0xff] %v9868
          %9952 = vst [vmem:[%s439 + $0x178] sm:$0xff] %v9900
          %9953 = vst [vmem:[%s439 + $0x180] sm:$0xff] %v9805
          %9954 = vst [vmem:[%s439 + $0x188] sm:$0xff] %v9837
          %9955 = vst [vmem:[%s439 + $0x190] sm:$0xff] %v9869
          %9956 = vst [vmem:[%s439 + $0x198] sm:$0xff] %v9901
          %9957 = vst [vmem:[%s439 + $0x1a0] sm:$0xff] %v9806
          %9958 = vst [vmem:[%s439 + $0x1a8] sm:$0xff] %v9838
          %9959 = vst [vmem:[%s439 + $0x1b0] sm:$0xff] %v9870
          %9960 = vst [vmem:[%s439 + $0x1b8] sm:$0xff] %v9902
          %9961 = vst [vmem:[%s439 + $0x1c0] sm:$0xff] %v9807
          %9962 = vst [vmem:[%s439 + $0x1c8] sm:$0xff] %v9839
          %9963 = vst [vmem:[%s439 + $0x1d0] sm:$0xff] %v9871
          %9964 = vst [vmem:[%s439 + $0x1d8] sm:$0xff] %v9903
          %9965 = vst [vmem:[%s439 + $0x1e0] sm:$0xff] %v9808
          %9966 = vst [vmem:[%s439 + $0x1e8] sm:$0xff] %v9840
          %9967 = vst [vmem:[%s439 + $0x1f0] sm:$0xff] %v9872
          %9968 = vst [vmem:[%s439 + $0x1f8] sm:$0xff] %v9904
        $region88: #{convnext_block.1} parent=63 // pred_fallthru
          _
        %s9969 = sand.u32 %s303, 1
        %s9970 = scalar_lea.sflag [#allocation7], %s9969
        %s9971 = sand.u32 %s303, 1
        %s9972 = smul.addr %s9971, 512
        %s9973 = scalar_lea.vmem [#allocation8], %s9972
        // Predicated region
        $region89: #{convnext_block.1} parent=63 // pred_check
          %p9974 = pneg %p313
        $region90: #{convnext_block.1} parent=63 // pred_check_branch
          %9976 = sbr.rel (%p9974) target = $region92
        $region91: #{convnext_block.1} parent=63 // pred_region
          %p9977 = scmp.eq.s32.totalorder %s34, 2
          %s9978 = scalar_select %p9977, %s35, 0
          %s9979 = smul.u32 4, %s9978
          %s9981 = ssub.s32 8192, 8192
          %9982 = vsyncadd %s9970, %s9981
          %s9983 = smul.addr %s33, 128
          %s9984 = sadd.s32 %s9979, %s9983
          %s9985 = smul.addr %s9984, 128
          %s9986 = scalar_lea.hbm %s11, %s9985
          %s9987 = sshll.u32 %s9973, 4
          %s9988 = int_to_ptr.vmem [resolvable:$true] %s9987
          %9993 = dma.vmem_to_hbm [thread:$0]  %s9988, 8192, %s9986, %s9970, 512, 1024, 32
        $region92: #{convnext_block.1} parent=63 // pred_fallthru
          _
      $region64: #{convnext_block.1} parent=5 // pred_fallthru
        _
      %p9994 = scmp.le.s32.totalorder 2, %s23
      // Predicated region
      $region93: #{convnext_block.1} parent=5 // pred_check
        %p9995 = pneg %p9994
      $region94: #{convnext_block.1} parent=5 // pred_check_branch
        %9997 = sbr.rel (%p9995) target = $region96
      $region95: #{convnext_block.1} parent=5 // pred_region
        %s9998 = ssub.s32 %s23, 2
        // Predicated region
        $region97: #{convnext_block.1} parent=95 // pred_check
          %p9999 = pneg %p319
        $region98: #{convnext_block.1} parent=95 // pred_check_branch
          %10001 = sbr.rel (%p9999) target = $region100
        $region99: #{convnext_block.1} parent=95 // pred_region
          %s10002 = sand.u32 %s304, 1
          %s10003 = scalar_lea.sflag [#allocation7], %s10002
          %s10004 = sand.u32 %s304, 1
          %s10005 = smul.addr %s10004, 512
          %s10006 = scalar_lea.vmem [#allocation8], %s10005
          %10007 = dma.done %s10003, 8192
        $region100: #{convnext_block.1} parent=95 // pred_fallthru
          _
      $region96: #{convnext_block.1} parent=5 // pred_fallthru
        _
    $region6: #{convnext_block.1} parent=1 // loop_footer
      %s27 = sadd.s32 1, %s23
    $region7: #{convnext_block.1} parent=1 // loop_footer_branch
      %22 = sbr.rel target = $region3
    $region8: #{convnext_block.1} parent=1 // loop_exit
      _
    %10008 = vsyncpa [#allocation6], 1
    %s10009 = scalar_lea.sflag [#allocation6], 1
    %10010 = vsyncpa %s10009, 1
    %10011 = vsyncpa [#allocation7], 1
    %s10012 = scalar_lea.sflag [#allocation7], 1
    %10013 = vsyncpa %s10012, 1

</llo_original>
